<compile_context>
chip_gen: v7x
topology: tpu7x:2x2x1
jax: 0.10.0
libtpu: 0.0.40
codegen_flags: <defaults>
</compile_context>

<pallas_src>
import functools

import jax
import jax.numpy as jnp
from jax.experimental import pallas as pl
from jax.experimental.pallas import tpu as pltpu


# ----------------------------------------------------------------------------
# Fused per-image kernel: conv1 -> conv2 -> conv3 -> fc, one grid step == image.
# ----------------------------------------------------------------------------
def _encoder_kernel(x4_ref, w1_ref, b1_ref, w2_ref, b2_ref, w3_ref, b3_ref,
                    wfc_ref, bfc_ref, out_ref, ph2_ref, pad3_ref,
                    *, c_dim, img_size):
    S = img_size
    Q = S // 4          # conv2 / conv3 output spatial size
    C1 = 64             # conv channel width (fixed by the module)

    # --------------------------------------------------------------- conv1 ---
    # x4_ref[0, u*4+v, m, n, c] == padded1[4m+u, 4n+v, c]   (padding=1, plus two
    # trailing zero rows/cols so the stride-4 phase split is rectangular; the
    # extra rows are never read).
    # The im2col rows are grouped by output parity (pi, pj) so conv2's stride-2
    # phases become contiguous slices of conv1's output.
    parity_blocks = []
    for pi in range(2):
        for pj in range(2):
            taps = []
            for kh in range(4):
                th = 2 * pi + kh
                u, qh = th % 4, th // 4
                for kw in range(4):
                    tw = 2 * pj + kw
                    v, qw = tw % 4, tw // 4
                    taps.append(x4_ref[0, u * 4 + v, qh:qh + Q, qw:qw + Q, :])
            blk = jnp.concatenate(taps, axis=-1)             # (Q, Q, 16*c_dim)
            parity_blocks.append(blk.reshape(Q * Q, 16 * c_dim))
    a1 = jnp.concatenate(parity_blocks, axis=0)              # (4*Q*Q, 16*c_dim)
    o1 = jnp.dot(a1, w1_ref[...], preferred_element_type=jnp.float32)
    o1 = jnp.maximum(o1 + b1_ref[...], 0.0).astype(jnp.bfloat16)

    # --------------------------------------------------------------- conv2 ---
    # ph2_ref[a, b, r, s, :] == zero-padded conv1 output at [2r + a, 2s + b].
    # (Zero every step: with a "parallel" grid each core must see a clean pad.)
    ph2_ref[...] = jnp.zeros_like(ph2_ref)
    for pi in range(2):
        for pj in range(2):
            blk = o1[(2 * pi + pj) * Q * Q:(2 * pi + pj + 1) * Q * Q, :]
            ph2_ref[1 - pi, 1 - pj, pi:pi + Q, pj:pj + Q, :] = blk.reshape(Q, Q, C1)
    taps = []
    for kh in range(4):
        for kw in range(4):
            taps.append(ph2_ref[kh % 2, kw % 2,
                                kh // 2:kh // 2 + Q, kw // 2:kw // 2 + Q, :])
    a2 = jnp.concatenate(taps, axis=-1).reshape(Q * Q, 16 * C1)
    o2 = jnp.dot(a2, w2_ref[...], preferred_element_type=jnp.float32)
    o2 = jnp.maximum(o2 + b2_ref[...], 0.0).astype(jnp.bfloat16)

    # --------------------------------------------------------------- conv3 ---
    # ZeroPad2d((1, 2, 1, 2)) then 4x4 stride-1 conv.
    pad3_ref[...] = jnp.zeros_like(pad3_ref)
    pad3_ref[1:1 + Q, 1:1 + Q, :] = o2.reshape(Q, Q, C1)
    taps = []
    for kh in range(4):
        for kw in range(4):
            taps.append(pad3_ref[kh:kh + Q, kw:kw + Q, :])
    a3 = jnp.concatenate(taps, axis=-1).reshape(Q * Q, 16 * C1)
    o3 = jnp.dot(a3, w3_ref[...], preferred_element_type=jnp.float32)
    o3 = jnp.maximum(o3 + b3_ref[...], 0.0).astype(jnp.bfloat16)

    # ------------------------------------------------------------------ fc ---
    # o3 rows are already (h, w)-row-major with channels in lanes, so the
    # (h, w, c) flatten is a lane concatenation of its rows.
    xf = jnp.concatenate([o3[p:p + 1, :] for p in range(Q * Q)], axis=1)
    z = jnp.dot(xf, wfc_ref[...], preferred_element_type=jnp.float32)
    out_ref[0] = z + bfc_ref[...]


# ----------------------------------------------------------------------------
# Forward wrapper: one-time XLA input prep + a single pallas_call.
# ----------------------------------------------------------------------------
def encoder_forward(x, p):
    """x: (N, c_dim, H, W) float32 (PyTorch NCHW). Returns (N, z_dim) float32."""
    n, c_dim, s, _ = x.shape
    q = s // 4
    z_dim = p["fcb"].shape[-1]

    # Single input prep (XLA, once per forward): NCHW->NHWC, conv1 padding, and
    # stride-4 phase split packed as a leading tap axis (u*4+v).
    xh = jnp.transpose(x, (0, 2, 3, 1)).astype(jnp.bfloat16)
    xp = jnp.pad(xh, ((0, 0), (1, 3), (1, 3), (0, 0)))        # (n, s+4, s+4, c)
    x4 = xp.reshape(n, q + 1, 4, q + 1, 4, c_dim)
    x4 = x4.transpose(0, 2, 4, 1, 3, 5).reshape(n, 16, q + 1, q + 1, c_dim)

    kern = functools.partial(_encoder_kernel, c_dim=c_dim, img_size=s)

    def full(a):  # whole-array (un-tiled) block, broadcast over the batch grid
        return pl.BlockSpec(a.shape, lambda i, _nd=a.ndim: (0,) * _nd)

    out = pl.pallas_call(
        kern,
        out_shape=jax.ShapeDtypeStruct((n, 1, z_dim), jnp.float32),
        grid=(n,),
        in_specs=[
            pl.BlockSpec((1, 16, q + 1, q + 1, c_dim),
                         lambda i: (i, 0, 0, 0, 0)),
            full(p["w1"]), full(p["b1"]),
            full(p["w2"]), full(p["b2"]),
            full(p["w3"]), full(p["b3"]),
            full(p["fcw_t"]), full(p["fcb"]),
        ],
        out_specs=pl.BlockSpec((1, 1, z_dim), lambda i: (i, 0, 0)),
        scratch_shapes=[
            pltpu.VMEM((2, 2, q + 1, q + 1, 64), jnp.bfloat16),   # conv2 phases
            pltpu.VMEM((q + 3, q + 3, 64), jnp.bfloat16),         # conv3 padded
        ],
        compiler_params=pltpu.CompilerParams(
            dimension_semantics=("parallel",)),
    )(x4, p["w1"], p["b1"], p["w2"], p["b2"], p["w3"], p["b3"],
      p["fcw_t"], p["fcb"])
    return out.reshape(n, z_dim)


# ----------------------------------------------------------------------------
# One-time parameter packing (run once, outside the jitted forward).
# ----------------------------------------------------------------------------
def prepare_params(params, img_size):
    """Conv weights -> (k*k*Cin, Cout) bf16 with rows in (kh, kw, cin) order;
    biases -> (1, Cout) f32; fc weight -> (K, z_dim) bf16 with rows permuted to
    the (h, w, c) flatten order so it matches PyTorch's NCHW view(N, -1)."""
    def conv_w(w):
        cout, cin, kh, kw = w.shape
        return (jnp.transpose(w, (2, 3, 1, 0))
                .reshape(kh * kw * cin, cout).astype(jnp.bfloat16))

    hf = img_size // 4
    fcw = params["fcw"]                                   # (z_dim, 64*hf*hf)
    z_dim = fcw.shape[0]
    fcw_hwc = (fcw.reshape(z_dim, 64, hf, hf)
               .transpose(0, 2, 3, 1).reshape(z_dim, hf * hf * 64))
    return {
        "w1": conv_w(params["w1"]),
        "b1": params["b1"].reshape(1, -1).astype(jnp.float32),
        "w2": conv_w(params["w2"]),
        "b2": params["b2"].reshape(1, -1).astype(jnp.float32),
        "w3": conv_w(params["w3"]),
        "b3": params["b3"].reshape(1, -1).astype(jnp.float32),
        "fcw_t": fcw_hwc.T.astype(jnp.bfloat16),          # (K, z_dim)
        "fcb": params["fcb"].reshape(1, -1).astype(jnp.float32),
    }


# ----------------------------------------------------------------------------
# Pure-JAX reference (same bf16 rounding of operands, f32 math) + init.
# ----------------------------------------------------------------------------
def encoder_reference(x, params):
    bf = lambda a: a.astype(jnp.bfloat16).astype(jnp.float32)
    h = bf(jnp.transpose(x, (0, 2, 3, 1)))

    def conv(h, w, b, stride, pad):
        wq = bf(jnp.transpose(w, (2, 3, 1, 0)))
        y = jax.lax.conv_general_dilated(
            h, wq, (stride, stride), pad,
            dimension_numbers=("NHWC", "HWIO", "NHWC"))
        return bf(jax.nn.relu(y + b.reshape(1, 1, 1, -1)))

    h = conv(h, params["w1"], params["b1"], 2, ((1, 1), (1, 1)))
    h = conv(h, params["w2"], params["b2"], 2, ((1, 1), (1, 1)))
    h = conv(h, params["w3"], params["b3"], 1, ((1, 2), (1, 2)))
    n = h.shape[0]
    hc = jnp.transpose(h, (0, 3, 1, 2)).reshape(n, -1)    # PyTorch NCHW flatten
    return hc @ bf(params["fcw"]).T + params["fcb"].reshape(1, -1)


def init_params(key, z_dim, c_dim, img_size):
    ks = jax.random.split(key, 8)
    flat = 64 * img_size * img_size // 16

    def u(k, shape, fan_in):
        bound = 1.0 / jnp.sqrt(fan_in)
        return jax.random.uniform(k, shape, jnp.float32, -bound, bound)

    return {
        "w1": u(ks[0], (64, c_dim, 4, 4), c_dim * 16),
        "b1": u(ks[1], (64,), c_dim * 16),
        "w2": u(ks[2], (64, 64, 4, 4), 64 * 16),
        "b2": u(ks[3], (64,), 64 * 16),
        "w3": u(ks[4], (64, 64, 4, 4), 64 * 16),
        "b3": u(ks[5], (64,), 64 * 16),
        "fcw": u(ks[6], (z_dim, flat), flat),
        "fcb": u(ks[7], (z_dim,), flat),
    }


if __name__ == "__main__":
    z_dim, c_dim, img_size, batch = 32, 4, 32, 2
    key = jax.random.PRNGKey(0)
    kx, kp = jax.random.split(key)
    x = jax.random.normal(kx, (batch, c_dim, img_size, img_size), jnp.float32)
    params = init_params(kp, z_dim, c_dim, img_size)
    prep = prepare_params(params, img_size)          # hoisted weight packing

    z = jax.jit(encoder_forward)(x, prep)
    jax.block_until_ready(z)
    assert z.shape == (batch, z_dim), z.shape

    z_ref = encoder_reference(x, params)
    err = float(jnp.max(jnp.abs(z - z_ref)))
    assert err < 2e-2, f"max abs error vs reference: {err}"
    print("KERNEL_OK")
</pallas_src>

<mosaic_0001>
module attributes {stable_mosaic.version = 11 : i64} {
  func.func @_encoder_kernel(%arg0: i32, %arg1: memref<1x16x9x9x4xbf16, #tpu.memory_space<vmem>>, %arg2: memref<64x64xbf16, #tpu.memory_space<vmem>>, %arg3: memref<1x64xf32, #tpu.memory_space<vmem>>, %arg4: memref<1024x64xbf16, #tpu.memory_space<vmem>>, %arg5: memref<1x64xf32, #tpu.memory_space<vmem>>, %arg6: memref<1024x64xbf16, #tpu.memory_space<vmem>>, %arg7: memref<1x64xf32, #tpu.memory_space<vmem>>, %arg8: memref<4096x32xbf16, #tpu.memory_space<vmem>>, %arg9: memref<1x32xf32, #tpu.memory_space<vmem>>, %arg10: memref<1x1x32xf32, #tpu.memory_space<vmem>>, %arg11: memref<2x2x9x9x64xbf16, #tpu.memory_space<vmem>>, %arg12: memref<11x11x64xbf16, #tpu.memory_space<vmem>>) attributes {dimension_semantics = [#tpu.dimension_semantics<parallel>], iteration_bounds = array<i64: 2>, scalar_prefetch = 0 : i64, scratch_operands = 2 : i64, tpu.core_type = #tpu.core_type<tc>, window_params = [{transform_indices = @transform_0, window_bounds = array<i64: 1, 16, 9, 9, 4>}, {pipeline_mode = #tpu.pipeline_mode<synchronous>, transform_indices = @transform_1, window_bounds = array<i64: 64, 64>}, {pipeline_mode = #tpu.pipeline_mode<synchronous>, transform_indices = @transform_2, window_bounds = array<i64: 1, 64>}, {pipeline_mode = #tpu.pipeline_mode<synchronous>, transform_indices = @transform_3, window_bounds = array<i64: 1024, 64>}, {pipeline_mode = #tpu.pipeline_mode<synchronous>, transform_indices = @transform_4, window_bounds = array<i64: 1, 64>}, {pipeline_mode = #tpu.pipeline_mode<synchronous>, transform_indices = @transform_5, window_bounds = array<i64: 1024, 64>}, {pipeline_mode = #tpu.pipeline_mode<synchronous>, transform_indices = @transform_6, window_bounds = array<i64: 1, 64>}, {pipeline_mode = #tpu.pipeline_mode<synchronous>, transform_indices = @transform_7, window_bounds = array<i64: 4096, 32>}, {pipeline_mode = #tpu.pipeline_mode<synchronous>, transform_indices = @transform_8, window_bounds = array<i64: 1, 32>}, {transform_indices = @transform_9, window_bounds = array<i64: 1, 1, 32>}]} {
    %c0 = arith.constant 0 : index
    %c0_0 = arith.constant 0 : index
    %c0_1 = arith.constant 0 : index
    %c0_2 = arith.constant 0 : index
    %c0_3 = arith.constant 0 : index
    %0 = vector.load %arg1[%c0, %c0_0, %c0_1, %c0_2, %c0_3] : memref<1x16x9x9x4xbf16, #tpu.memory_space<vmem>>, vector<1x1x8x8x4xbf16>
    %1 = vector.shape_cast %0 : vector<1x1x8x8x4xbf16> to vector<8x8x4xbf16>
    %c0_4 = arith.constant 0 : index
    %c1 = arith.constant 1 : index
    %c0_5 = arith.constant 0 : index
    %c0_6 = arith.constant 0 : index
    %c0_7 = arith.constant 0 : index
    %2 = vector.load %arg1[%c0_4, %c1, %c0_5, %c0_6, %c0_7] : memref<1x16x9x9x4xbf16, #tpu.memory_space<vmem>>, vector<1x1x8x8x4xbf16>
    %3 = vector.shape_cast %2 : vector<1x1x8x8x4xbf16> to vector<8x8x4xbf16>
    %c0_8 = arith.constant 0 : index
    %c2 = arith.constant 2 : index
    %c0_9 = arith.constant 0 : index
    %c0_10 = arith.constant 0 : index
    %c0_11 = arith.constant 0 : index
    %4 = vector.load %arg1[%c0_8, %c2, %c0_9, %c0_10, %c0_11] : memref<1x16x9x9x4xbf16, #tpu.memory_space<vmem>>, vector<1x1x8x8x4xbf16>
    %5 = vector.shape_cast %4 : vector<1x1x8x8x4xbf16> to vector<8x8x4xbf16>
    %c0_12 = arith.constant 0 : index
    %c3 = arith.constant 3 : index
    %c0_13 = arith.constant 0 : index
    %c0_14 = arith.constant 0 : index
    %c0_15 = arith.constant 0 : index
    %6 = vector.load %arg1[%c0_12, %c3, %c0_13, %c0_14, %c0_15] : memref<1x16x9x9x4xbf16, #tpu.memory_space<vmem>>, vector<1x1x8x8x4xbf16>
    %7 = vector.shape_cast %6 : vector<1x1x8x8x4xbf16> to vector<8x8x4xbf16>
    %c0_16 = arith.constant 0 : index
    %c4 = arith.constant 4 : index
    %c0_17 = arith.constant 0 : index
    %c0_18 = arith.constant 0 : index
    %c0_19 = arith.constant 0 : index
    %8 = vector.load %arg1[%c0_16, %c4, %c0_17, %c0_18, %c0_19] : memref<1x16x9x9x4xbf16, #tpu.memory_space<vmem>>, vector<1x1x8x8x4xbf16>
    %9 = vector.shape_cast %8 : vector<1x1x8x8x4xbf16> to vector<8x8x4xbf16>
    %c0_20 = arith.constant 0 : index
    %c5 = arith.constant 5 : index
    %c0_21 = arith.constant 0 : index
    %c0_22 = arith.constant 0 : index
    %c0_23 = arith.constant 0 : index
    %10 = vector.load %arg1[%c0_20, %c5, %c0_21, %c0_22, %c0_23] : memref<1x16x9x9x4xbf16, #tpu.memory_space<vmem>>, vector<1x1x8x8x4xbf16>
    %11 = vector.shape_cast %10 : vector<1x1x8x8x4xbf16> to vector<8x8x4xbf16>
    %c0_24 = arith.constant 0 : index
    %c6 = arith.constant 6 : index
    %c0_25 = arith.constant 0 : index
    %c0_26 = arith.constant 0 : index
    %c0_27 = arith.constant 0 : index
    %12 = vector.load %arg1[%c0_24, %c6, %c0_25, %c0_26, %c0_27] : memref<1x16x9x9x4xbf16, #tpu.memory_space<vmem>>, vector<1x1x8x8x4xbf16>
    %13 = vector.shape_cast %12 : vector<1x1x8x8x4xbf16> to vector<8x8x4xbf16>
    %c0_28 = arith.constant 0 : index
    %c7 = arith.constant 7 : index
    %c0_29 = arith.constant 0 : index
    %c0_30 = arith.constant 0 : index
    %c0_31 = arith.constant 0 : index
    %14 = vector.load %arg1[%c0_28, %c7, %c0_29, %c0_30, %c0_31] : memref<1x16x9x9x4xbf16, #tpu.memory_space<vmem>>, vector<1x1x8x8x4xbf16>
    %15 = vector.shape_cast %14 : vector<1x1x8x8x4xbf16> to vector<8x8x4xbf16>
    %c0_32 = arith.constant 0 : index
    %c8 = arith.constant 8 : index
    %c0_33 = arith.constant 0 : index
    %c0_34 = arith.constant 0 : index
    %c0_35 = arith.constant 0 : index
    %16 = vector.load %arg1[%c0_32, %c8, %c0_33, %c0_34, %c0_35] : memref<1x16x9x9x4xbf16, #tpu.memory_space<vmem>>, vector<1x1x8x8x4xbf16>
    %17 = vector.shape_cast %16 : vector<1x1x8x8x4xbf16> to vector<8x8x4xbf16>
    %c0_36 = arith.constant 0 : index
    %c9 = arith.constant 9 : index
    %c0_37 = arith.constant 0 : index
    %c0_38 = arith.constant 0 : index
    %c0_39 = arith.constant 0 : index
    %18 = vector.load %arg1[%c0_36, %c9, %c0_37, %c0_38, %c0_39] : memref<1x16x9x9x4xbf16, #tpu.memory_space<vmem>>, vector<1x1x8x8x4xbf16>
    %19 = vector.shape_cast %18 : vector<1x1x8x8x4xbf16> to vector<8x8x4xbf16>
    %c0_40 = arith.constant 0 : index
    %c10 = arith.constant 10 : index
    %c0_41 = arith.constant 0 : index
    %c0_42 = arith.constant 0 : index
    %c0_43 = arith.constant 0 : index
    %20 = vector.load %arg1[%c0_40, %c10, %c0_41, %c0_42, %c0_43] : memref<1x16x9x9x4xbf16, #tpu.memory_space<vmem>>, vector<1x1x8x8x4xbf16>
    %21 = vector.shape_cast %20 : vector<1x1x8x8x4xbf16> to vector<8x8x4xbf16>
    %c0_44 = arith.constant 0 : index
    %c11 = arith.constant 11 : index
    %c0_45 = arith.constant 0 : index
    %c0_46 = arith.constant 0 : index
    %c0_47 = arith.constant 0 : index
    %22 = vector.load %arg1[%c0_44, %c11, %c0_45, %c0_46, %c0_47] : memref<1x16x9x9x4xbf16, #tpu.memory_space<vmem>>, vector<1x1x8x8x4xbf16>
    %23 = vector.shape_cast %22 : vector<1x1x8x8x4xbf16> to vector<8x8x4xbf16>
    %c0_48 = arith.constant 0 : index
    %c12 = arith.constant 12 : index
    %c0_49 = arith.constant 0 : index
    %c0_50 = arith.constant 0 : index
    %c0_51 = arith.constant 0 : index
    %24 = vector.load %arg1[%c0_48, %c12, %c0_49, %c0_50, %c0_51] : memref<1x16x9x9x4xbf16, #tpu.memory_space<vmem>>, vector<1x1x8x8x4xbf16>
    %25 = vector.shape_cast %24 : vector<1x1x8x8x4xbf16> to vector<8x8x4xbf16>
    %c0_52 = arith.constant 0 : index
    %c13 = arith.constant 13 : index
    %c0_53 = arith.constant 0 : index
    %c0_54 = arith.constant 0 : index
    %c0_55 = arith.constant 0 : index
    %26 = vector.load %arg1[%c0_52, %c13, %c0_53, %c0_54, %c0_55] : memref<1x16x9x9x4xbf16, #tpu.memory_space<vmem>>, vector<1x1x8x8x4xbf16>
    %27 = vector.shape_cast %26 : vector<1x1x8x8x4xbf16> to vector<8x8x4xbf16>
    %c0_56 = arith.constant 0 : index
    %c14 = arith.constant 14 : index
    %c0_57 = arith.constant 0 : index
    %c0_58 = arith.constant 0 : index
    %c0_59 = arith.constant 0 : index
    %28 = vector.load %arg1[%c0_56, %c14, %c0_57, %c0_58, %c0_59] : memref<1x16x9x9x4xbf16, #tpu.memory_space<vmem>>, vector<1x1x8x8x4xbf16>
    %29 = vector.shape_cast %28 : vector<1x1x8x8x4xbf16> to vector<8x8x4xbf16>
    %c0_60 = arith.constant 0 : index
    %c15 = arith.constant 15 : index
    %c0_61 = arith.constant 0 : index
    %c0_62 = arith.constant 0 : index
    %c0_63 = arith.constant 0 : index
    %30 = vector.load %arg1[%c0_60, %c15, %c0_61, %c0_62, %c0_63] : memref<1x16x9x9x4xbf16, #tpu.memory_space<vmem>>, vector<1x1x8x8x4xbf16>
    %31 = vector.shape_cast %30 : vector<1x1x8x8x4xbf16> to vector<8x8x4xbf16>
    %32 = tpu.concatenate %1, %3, %5, %7, %9, %11, %13, %15, %17, %19, %21, %23, %25, %27, %29, %31 in 2 : vector<8x8x4xbf16>, vector<8x8x4xbf16>, vector<8x8x4xbf16>, vector<8x8x4xbf16>, vector<8x8x4xbf16>, vector<8x8x4xbf16>, vector<8x8x4xbf16>, vector<8x8x4xbf16>, vector<8x8x4xbf16>, vector<8x8x4xbf16>, vector<8x8x4xbf16>, vector<8x8x4xbf16>, vector<8x8x4xbf16>, vector<8x8x4xbf16>, vector<8x8x4xbf16>, vector<8x8x4xbf16> -> vector<8x8x64xbf16>
    %33 = vector.shape_cast %32 : vector<8x8x64xbf16> to vector<64x64xbf16>
    %c0_64 = arith.constant 0 : index
    %c2_65 = arith.constant 2 : index
    %c0_66 = arith.constant 0 : index
    %c0_67 = arith.constant 0 : index
    %c0_68 = arith.constant 0 : index
    %34 = vector.load %arg1[%c0_64, %c2_65, %c0_66, %c0_67, %c0_68] : memref<1x16x9x9x4xbf16, #tpu.memory_space<vmem>>, vector<1x1x8x8x4xbf16>
    %35 = vector.shape_cast %34 : vector<1x1x8x8x4xbf16> to vector<8x8x4xbf16>
    %c0_69 = arith.constant 0 : index
    %c3_70 = arith.constant 3 : index
    %c0_71 = arith.constant 0 : index
    %c0_72 = arith.constant 0 : index
    %c0_73 = arith.constant 0 : index
    %36 = vector.load %arg1[%c0_69, %c3_70, %c0_71, %c0_72, %c0_73] : memref<1x16x9x9x4xbf16, #tpu.memory_space<vmem>>, vector<1x1x8x8x4xbf16>
    %37 = vector.shape_cast %36 : vector<1x1x8x8x4xbf16> to vector<8x8x4xbf16>
    %c0_74 = arith.constant 0 : index
    %c0_75 = arith.constant 0 : index
    %c0_76 = arith.constant 0 : index
    %c1_77 = arith.constant 1 : index
    %c0_78 = arith.constant 0 : index
    %38 = vector.load %arg1[%c0_74, %c0_75, %c0_76, %c1_77, %c0_78] : memref<1x16x9x9x4xbf16, #tpu.memory_space<vmem>>, vector<1x1x8x8x4xbf16>
    %39 = vector.shape_cast %38 : vector<1x1x8x8x4xbf16> to vector<8x8x4xbf16>
    %c0_79 = arith.constant 0 : index
    %c1_80 = arith.constant 1 : index
    %c0_81 = arith.constant 0 : index
    %c1_82 = arith.constant 1 : index
    %c0_83 = arith.constant 0 : index
    %40 = vector.load %arg1[%c0_79, %c1_80, %c0_81, %c1_82, %c0_83] : memref<1x16x9x9x4xbf16, #tpu.memory_space<vmem>>, vector<1x1x8x8x4xbf16>
    %41 = vector.shape_cast %40 : vector<1x1x8x8x4xbf16> to vector<8x8x4xbf16>
    %c0_84 = arith.constant 0 : index
    %c6_85 = arith.constant 6 : index
    %c0_86 = arith.constant 0 : index
    %c0_87 = arith.constant 0 : index
    %c0_88 = arith.constant 0 : index
    %42 = vector.load %arg1[%c0_84, %c6_85, %c0_86, %c0_87, %c0_88] : memref<1x16x9x9x4xbf16, #tpu.memory_space<vmem>>, vector<1x1x8x8x4xbf16>
    %43 = vector.shape_cast %42 : vector<1x1x8x8x4xbf16> to vector<8x8x4xbf16>
    %c0_89 = arith.constant 0 : index
    %c7_90 = arith.constant 7 : index
    %c0_91 = arith.constant 0 : index
    %c0_92 = arith.constant 0 : index
    %c0_93 = arith.constant 0 : index
    %44 = vector.load %arg1[%c0_89, %c7_90, %c0_91, %c0_92, %c0_93] : memref<1x16x9x9x4xbf16, #tpu.memory_space<vmem>>, vector<1x1x8x8x4xbf16>
    %45 = vector.shape_cast %44 : vector<1x1x8x8x4xbf16> to vector<8x8x4xbf16>
    %c0_94 = arith.constant 0 : index
    %c4_95 = arith.constant 4 : index
    %c0_96 = arith.constant 0 : index
    %c1_97 = arith.constant 1 : index
    %c0_98 = arith.constant 0 : index
    %46 = vector.load %arg1[%c0_94, %c4_95, %c0_96, %c1_97, %c0_98] : memref<1x16x9x9x4xbf16, #tpu.memory_space<vmem>>, vector<1x1x8x8x4xbf16>
    %47 = vector.shape_cast %46 : vector<1x1x8x8x4xbf16> to vector<8x8x4xbf16>
    %c0_99 = arith.constant 0 : index
    %c5_100 = arith.constant 5 : index
    %c0_101 = arith.constant 0 : index
    %c1_102 = arith.constant 1 : index
    %c0_103 = arith.constant 0 : index
    %48 = vector.load %arg1[%c0_99, %c5_100, %c0_101, %c1_102, %c0_103] : memref<1x16x9x9x4xbf16, #tpu.memory_space<vmem>>, vector<1x1x8x8x4xbf16>
    %49 = vector.shape_cast %48 : vector<1x1x8x8x4xbf16> to vector<8x8x4xbf16>
    %c0_104 = arith.constant 0 : index
    %c10_105 = arith.constant 10 : index
    %c0_106 = arith.constant 0 : index
    %c0_107 = arith.constant 0 : index
    %c0_108 = arith.constant 0 : index
    %50 = vector.load %arg1[%c0_104, %c10_105, %c0_106, %c0_107, %c0_108] : memref<1x16x9x9x4xbf16, #tpu.memory_space<vmem>>, vector<1x1x8x8x4xbf16>
    %51 = vector.shape_cast %50 : vector<1x1x8x8x4xbf16> to vector<8x8x4xbf16>
    %c0_109 = arith.constant 0 : index
    %c11_110 = arith.constant 11 : index
    %c0_111 = arith.constant 0 : index
    %c0_112 = arith.constant 0 : index
    %c0_113 = arith.constant 0 : index
    %52 = vector.load %arg1[%c0_109, %c11_110, %c0_111, %c0_112, %c0_113] : memref<1x16x9x9x4xbf16, #tpu.memory_space<vmem>>, vector<1x1x8x8x4xbf16>
    %53 = vector.shape_cast %52 : vector<1x1x8x8x4xbf16> to vector<8x8x4xbf16>
    %c0_114 = arith.constant 0 : index
    %c8_115 = arith.constant 8 : index
    %c0_116 = arith.constant 0 : index
    %c1_117 = arith.constant 1 : index
    %c0_118 = arith.constant 0 : index
    %54 = vector.load %arg1[%c0_114, %c8_115, %c0_116, %c1_117, %c0_118] : memref<1x16x9x9x4xbf16, #tpu.memory_space<vmem>>, vector<1x1x8x8x4xbf16>
    %55 = vector.shape_cast %54 : vector<1x1x8x8x4xbf16> to vector<8x8x4xbf16>
    %c0_119 = arith.constant 0 : index
    %c9_120 = arith.constant 9 : index
    %c0_121 = arith.constant 0 : index
    %c1_122 = arith.constant 1 : index
    %c0_123 = arith.constant 0 : index
    %56 = vector.load %arg1[%c0_119, %c9_120, %c0_121, %c1_122, %c0_123] : memref<1x16x9x9x4xbf16, #tpu.memory_space<vmem>>, vector<1x1x8x8x4xbf16>
    %57 = vector.shape_cast %56 : vector<1x1x8x8x4xbf16> to vector<8x8x4xbf16>
    %c0_124 = arith.constant 0 : index
    %c14_125 = arith.constant 14 : index
    %c0_126 = arith.constant 0 : index
    %c0_127 = arith.constant 0 : index
    %c0_128 = arith.constant 0 : index
    %58 = vector.load %arg1[%c0_124, %c14_125, %c0_126, %c0_127, %c0_128] : memref<1x16x9x9x4xbf16, #tpu.memory_space<vmem>>, vector<1x1x8x8x4xbf16>
    %59 = vector.shape_cast %58 : vector<1x1x8x8x4xbf16> to vector<8x8x4xbf16>
    %c0_129 = arith.constant 0 : index
    %c15_130 = arith.constant 15 : index
    %c0_131 = arith.constant 0 : index
    %c0_132 = arith.constant 0 : index
    %c0_133 = arith.constant 0 : index
    %60 = vector.load %arg1[%c0_129, %c15_130, %c0_131, %c0_132, %c0_133] : memref<1x16x9x9x4xbf16, #tpu.memory_space<vmem>>, vector<1x1x8x8x4xbf16>
    %61 = vector.shape_cast %60 : vector<1x1x8x8x4xbf16> to vector<8x8x4xbf16>
    %c0_134 = arith.constant 0 : index
    %c12_135 = arith.constant 12 : index
    %c0_136 = arith.constant 0 : index
    %c1_137 = arith.constant 1 : index
    %c0_138 = arith.constant 0 : index
    %62 = vector.load %arg1[%c0_134, %c12_135, %c0_136, %c1_137, %c0_138] : memref<1x16x9x9x4xbf16, #tpu.memory_space<vmem>>, vector<1x1x8x8x4xbf16>
    %63 = vector.shape_cast %62 : vector<1x1x8x8x4xbf16> to vector<8x8x4xbf16>
    %c0_139 = arith.constant 0 : index
    %c13_140 = arith.constant 13 : index
    %c0_141 = arith.constant 0 : index
    %c1_142 = arith.constant 1 : index
    %c0_143 = arith.constant 0 : index
    %64 = vector.load %arg1[%c0_139, %c13_140, %c0_141, %c1_142, %c0_143] : memref<1x16x9x9x4xbf16, #tpu.memory_space<vmem>>, vector<1x1x8x8x4xbf16>
    %65 = vector.shape_cast %64 : vector<1x1x8x8x4xbf16> to vector<8x8x4xbf16>
    %66 = tpu.concatenate %35, %37, %39, %41, %43, %45, %47, %49, %51, %53, %55, %57, %59, %61, %63, %65 in 2 : vector<8x8x4xbf16>, vector<8x8x4xbf16>, vector<8x8x4xbf16>, vector<8x8x4xbf16>, vector<8x8x4xbf16>, vector<8x8x4xbf16>, vector<8x8x4xbf16>, vector<8x8x4xbf16>, vector<8x8x4xbf16>, vector<8x8x4xbf16>, vector<8x8x4xbf16>, vector<8x8x4xbf16>, vector<8x8x4xbf16>, vector<8x8x4xbf16>, vector<8x8x4xbf16>, vector<8x8x4xbf16> -> vector<8x8x64xbf16>
    %67 = vector.shape_cast %66 : vector<8x8x64xbf16> to vector<64x64xbf16>
    %c0_144 = arith.constant 0 : index
    %c8_145 = arith.constant 8 : index
    %c0_146 = arith.constant 0 : index
    %c0_147 = arith.constant 0 : index
    %c0_148 = arith.constant 0 : index
    %68 = vector.load %arg1[%c0_144, %c8_145, %c0_146, %c0_147, %c0_148] : memref<1x16x9x9x4xbf16, #tpu.memory_space<vmem>>, vector<1x1x8x8x4xbf16>
    %69 = vector.shape_cast %68 : vector<1x1x8x8x4xbf16> to vector<8x8x4xbf16>
    %c0_149 = arith.constant 0 : index
    %c9_150 = arith.constant 9 : index
    %c0_151 = arith.constant 0 : index
    %c0_152 = arith.constant 0 : index
    %c0_153 = arith.constant 0 : index
    %70 = vector.load %arg1[%c0_149, %c9_150, %c0_151, %c0_152, %c0_153] : memref<1x16x9x9x4xbf16, #tpu.memory_space<vmem>>, vector<1x1x8x8x4xbf16>
    %71 = vector.shape_cast %70 : vector<1x1x8x8x4xbf16> to vector<8x8x4xbf16>
    %c0_154 = arith.constant 0 : index
    %c10_155 = arith.constant 10 : index
    %c0_156 = arith.constant 0 : index
    %c0_157 = arith.constant 0 : index
    %c0_158 = arith.constant 0 : index
    %72 = vector.load %arg1[%c0_154, %c10_155, %c0_156, %c0_157, %c0_158] : memref<1x16x9x9x4xbf16, #tpu.memory_space<vmem>>, vector<1x1x8x8x4xbf16>
    %73 = vector.shape_cast %72 : vector<1x1x8x8x4xbf16> to vector<8x8x4xbf16>
    %c0_159 = arith.constant 0 : index
    %c11_160 = arith.constant 11 : index
    %c0_161 = arith.constant 0 : index
    %c0_162 = arith.constant 0 : index
    %c0_163 = arith.constant 0 : index
    %74 = vector.load %arg1[%c0_159, %c11_160, %c0_161, %c0_162, %c0_163] : memref<1x16x9x9x4xbf16, #tpu.memory_space<vmem>>, vector<1x1x8x8x4xbf16>
    %75 = vector.shape_cast %74 : vector<1x1x8x8x4xbf16> to vector<8x8x4xbf16>
    %c0_164 = arith.constant 0 : index
    %c12_165 = arith.constant 12 : index
    %c0_166 = arith.constant 0 : index
    %c0_167 = arith.constant 0 : index
    %c0_168 = arith.constant 0 : index
    %76 = vector.load %arg1[%c0_164, %c12_165, %c0_166, %c0_167, %c0_168] : memref<1x16x9x9x4xbf16, #tpu.memory_space<vmem>>, vector<1x1x8x8x4xbf16>
    %77 = vector.shape_cast %76 : vector<1x1x8x8x4xbf16> to vector<8x8x4xbf16>
    %c0_169 = arith.constant 0 : index
    %c13_170 = arith.constant 13 : index
    %c0_171 = arith.constant 0 : index
    %c0_172 = arith.constant 0 : index
    %c0_173 = arith.constant 0 : index
    %78 = vector.load %arg1[%c0_169, %c13_170, %c0_171, %c0_172, %c0_173] : memref<1x16x9x9x4xbf16, #tpu.memory_space<vmem>>, vector<1x1x8x8x4xbf16>
    %79 = vector.shape_cast %78 : vector<1x1x8x8x4xbf16> to vector<8x8x4xbf16>
    %c0_174 = arith.constant 0 : index
    %c14_175 = arith.constant 14 : index
    %c0_176 = arith.constant 0 : index
    %c0_177 = arith.constant 0 : index
    %c0_178 = arith.constant 0 : index
    %80 = vector.load %arg1[%c0_174, %c14_175, %c0_176, %c0_177, %c0_178] : memref<1x16x9x9x4xbf16, #tpu.memory_space<vmem>>, vector<1x1x8x8x4xbf16>
    %81 = vector.shape_cast %80 : vector<1x1x8x8x4xbf16> to vector<8x8x4xbf16>
    %c0_179 = arith.constant 0 : index
    %c15_180 = arith.constant 15 : index
    %c0_181 = arith.constant 0 : index
    %c0_182 = arith.constant 0 : index
    %c0_183 = arith.constant 0 : index
    %82 = vector.load %arg1[%c0_179, %c15_180, %c0_181, %c0_182, %c0_183] : memref<1x16x9x9x4xbf16, #tpu.memory_space<vmem>>, vector<1x1x8x8x4xbf16>
    %83 = vector.shape_cast %82 : vector<1x1x8x8x4xbf16> to vector<8x8x4xbf16>
    %c0_184 = arith.constant 0 : index
    %c0_185 = arith.constant 0 : index
    %c1_186 = arith.constant 1 : index
    %c0_187 = arith.constant 0 : index
    %c0_188 = arith.constant 0 : index
    %84 = vector.load %arg1[%c0_184, %c0_185, %c1_186, %c0_187, %c0_188] : memref<1x16x9x9x4xbf16, #tpu.memory_space<vmem>>, vector<1x1x8x8x4xbf16>
    %85 = vector.shape_cast %84 : vector<1x1x8x8x4xbf16> to vector<8x8x4xbf16>
    %c0_189 = arith.constant 0 : index
    %c1_190 = arith.constant 1 : index
    %c1_191 = arith.constant 1 : index
    %c0_192 = arith.constant 0 : index
    %c0_193 = arith.constant 0 : index
    %86 = vector.load %arg1[%c0_189, %c1_190, %c1_191, %c0_192, %c0_193] : memref<1x16x9x9x4xbf16, #tpu.memory_space<vmem>>, vector<1x1x8x8x4xbf16>
    %87 = vector.shape_cast %86 : vector<1x1x8x8x4xbf16> to vector<8x8x4xbf16>
    %c0_194 = arith.constant 0 : index
    %c2_195 = arith.constant 2 : index
    %c1_196 = arith.constant 1 : index
    %c0_197 = arith.constant 0 : index
    %c0_198 = arith.constant 0 : index
    %88 = vector.load %arg1[%c0_194, %c2_195, %c1_196, %c0_197, %c0_198] : memref<1x16x9x9x4xbf16, #tpu.memory_space<vmem>>, vector<1x1x8x8x4xbf16>
    %89 = vector.shape_cast %88 : vector<1x1x8x8x4xbf16> to vector<8x8x4xbf16>
    %c0_199 = arith.constant 0 : index
    %c3_200 = arith.constant 3 : index
    %c1_201 = arith.constant 1 : index
    %c0_202 = arith.constant 0 : index
    %c0_203 = arith.constant 0 : index
    %90 = vector.load %arg1[%c0_199, %c3_200, %c1_201, %c0_202, %c0_203] : memref<1x16x9x9x4xbf16, #tpu.memory_space<vmem>>, vector<1x1x8x8x4xbf16>
    %91 = vector.shape_cast %90 : vector<1x1x8x8x4xbf16> to vector<8x8x4xbf16>
    %c0_204 = arith.constant 0 : index
    %c4_205 = arith.constant 4 : index
    %c1_206 = arith.constant 1 : index
    %c0_207 = arith.constant 0 : index
    %c0_208 = arith.constant 0 : index
    %92 = vector.load %arg1[%c0_204, %c4_205, %c1_206, %c0_207, %c0_208] : memref<1x16x9x9x4xbf16, #tpu.memory_space<vmem>>, vector<1x1x8x8x4xbf16>
    %93 = vector.shape_cast %92 : vector<1x1x8x8x4xbf16> to vector<8x8x4xbf16>
    %c0_209 = arith.constant 0 : index
    %c5_210 = arith.constant 5 : index
    %c1_211 = arith.constant 1 : index
    %c0_212 = arith.constant 0 : index
    %c0_213 = arith.constant 0 : index
    %94 = vector.load %arg1[%c0_209, %c5_210, %c1_211, %c0_212, %c0_213] : memref<1x16x9x9x4xbf16, #tpu.memory_space<vmem>>, vector<1x1x8x8x4xbf16>
    %95 = vector.shape_cast %94 : vector<1x1x8x8x4xbf16> to vector<8x8x4xbf16>
    %c0_214 = arith.constant 0 : index
    %c6_215 = arith.constant 6 : index
    %c1_216 = arith.constant 1 : index
    %c0_217 = arith.constant 0 : index
    %c0_218 = arith.constant 0 : index
    %96 = vector.load %arg1[%c0_214, %c6_215, %c1_216, %c0_217, %c0_218] : memref<1x16x9x9x4xbf16, #tpu.memory_space<vmem>>, vector<1x1x8x8x4xbf16>
    %97 = vector.shape_cast %96 : vector<1x1x8x8x4xbf16> to vector<8x8x4xbf16>
    %c0_219 = arith.constant 0 : index
    %c7_220 = arith.constant 7 : index
    %c1_221 = arith.constant 1 : index
    %c0_222 = arith.constant 0 : index
    %c0_223 = arith.constant 0 : index
    %98 = vector.load %arg1[%c0_219, %c7_220, %c1_221, %c0_222, %c0_223] : memref<1x16x9x9x4xbf16, #tpu.memory_space<vmem>>, vector<1x1x8x8x4xbf16>
    %99 = vector.shape_cast %98 : vector<1x1x8x8x4xbf16> to vector<8x8x4xbf16>
    %100 = tpu.concatenate %69, %71, %73, %75, %77, %79, %81, %83, %85, %87, %89, %91, %93, %95, %97, %99 in 2 : vector<8x8x4xbf16>, vector<8x8x4xbf16>, vector<8x8x4xbf16>, vector<8x8x4xbf16>, vector<8x8x4xbf16>, vector<8x8x4xbf16>, vector<8x8x4xbf16>, vector<8x8x4xbf16>, vector<8x8x4xbf16>, vector<8x8x4xbf16>, vector<8x8x4xbf16>, vector<8x8x4xbf16>, vector<8x8x4xbf16>, vector<8x8x4xbf16>, vector<8x8x4xbf16>, vector<8x8x4xbf16> -> vector<8x8x64xbf16>
    %101 = vector.shape_cast %100 : vector<8x8x64xbf16> to vector<64x64xbf16>
    %c0_224 = arith.constant 0 : index
    %c10_225 = arith.constant 10 : index
    %c0_226 = arith.constant 0 : index
    %c0_227 = arith.constant 0 : index
    %c0_228 = arith.constant 0 : index
    %102 = vector.load %arg1[%c0_224, %c10_225, %c0_226, %c0_227, %c0_228] : memref<1x16x9x9x4xbf16, #tpu.memory_space<vmem>>, vector<1x1x8x8x4xbf16>
    %103 = vector.shape_cast %102 : vector<1x1x8x8x4xbf16> to vector<8x8x4xbf16>
    %c0_229 = arith.constant 0 : index
    %c11_230 = arith.constant 11 : index
    %c0_231 = arith.constant 0 : index
    %c0_232 = arith.constant 0 : index
    %c0_233 = arith.constant 0 : index
    %104 = vector.load %arg1[%c0_229, %c11_230, %c0_231, %c0_232, %c0_233] : memref<1x16x9x9x4xbf16, #tpu.memory_space<vmem>>, vector<1x1x8x8x4xbf16>
    %105 = vector.shape_cast %104 : vector<1x1x8x8x4xbf16> to vector<8x8x4xbf16>
    %c0_234 = arith.constant 0 : index
    %c8_235 = arith.constant 8 : index
    %c0_236 = arith.constant 0 : index
    %c1_237 = arith.constant 1 : index
    %c0_238 = arith.constant 0 : index
    %106 = vector.load %arg1[%c0_234, %c8_235, %c0_236, %c1_237, %c0_238] : memref<1x16x9x9x4xbf16, #tpu.memory_space<vmem>>, vector<1x1x8x8x4xbf16>
    %107 = vector.shape_cast %106 : vector<1x1x8x8x4xbf16> to vector<8x8x4xbf16>
    %c0_239 = arith.constant 0 : index
    %c9_240 = arith.constant 9 : index
    %c0_241 = arith.constant 0 : index
    %c1_242 = arith.constant 1 : index
    %c0_243 = arith.constant 0 : index
    %108 = vector.load %arg1[%c0_239, %c9_240, %c0_241, %c1_242, %c0_243] : memref<1x16x9x9x4xbf16, #tpu.memory_space<vmem>>, vector<1x1x8x8x4xbf16>
    %109 = vector.shape_cast %108 : vector<1x1x8x8x4xbf16> to vector<8x8x4xbf16>
    %c0_244 = arith.constant 0 : index
    %c14_245 = arith.constant 14 : index
    %c0_246 = arith.constant 0 : index
    %c0_247 = arith.constant 0 : index
    %c0_248 = arith.constant 0 : index
    %110 = vector.load %arg1[%c0_244, %c14_245, %c0_246, %c0_247, %c0_248] : memref<1x16x9x9x4xbf16, #tpu.memory_space<vmem>>, vector<1x1x8x8x4xbf16>
    %111 = vector.shape_cast %110 : vector<1x1x8x8x4xbf16> to vector<8x8x4xbf16>
    %c0_249 = arith.constant 0 : index
    %c15_250 = arith.constant 15 : index
    %c0_251 = arith.constant 0 : index
    %c0_252 = arith.constant 0 : index
    %c0_253 = arith.constant 0 : index
    %112 = vector.load %arg1[%c0_249, %c15_250, %c0_251, %c0_252, %c0_253] : memref<1x16x9x9x4xbf16, #tpu.memory_space<vmem>>, vector<1x1x8x8x4xbf16>
    %113 = vector.shape_cast %112 : vector<1x1x8x8x4xbf16> to vector<8x8x4xbf16>
    %c0_254 = arith.constant 0 : index
    %c12_255 = arith.constant 12 : index
    %c0_256 = arith.constant 0 : index
    %c1_257 = arith.constant 1 : index
    %c0_258 = arith.constant 0 : index
    %114 = vector.load %arg1[%c0_254, %c12_255, %c0_256, %c1_257, %c0_258] : memref<1x16x9x9x4xbf16, #tpu.memory_space<vmem>>, vector<1x1x8x8x4xbf16>
    %115 = vector.shape_cast %114 : vector<1x1x8x8x4xbf16> to vector<8x8x4xbf16>
    %c0_259 = arith.constant 0 : index
    %c13_260 = arith.constant 13 : index
    %c0_261 = arith.constant 0 : index
    %c1_262 = arith.constant 1 : index
    %c0_263 = arith.constant 0 : index
    %116 = vector.load %arg1[%c0_259, %c13_260, %c0_261, %c1_262, %c0_263] : memref<1x16x9x9x4xbf16, #tpu.memory_space<vmem>>, vector<1x1x8x8x4xbf16>
    %117 = vector.shape_cast %116 : vector<1x1x8x8x4xbf16> to vector<8x8x4xbf16>
    %c0_264 = arith.constant 0 : index
    %c2_265 = arith.constant 2 : index
    %c1_266 = arith.constant 1 : index
    %c0_267 = arith.constant 0 : index
    %c0_268 = arith.constant 0 : index
    %118 = vector.load %arg1[%c0_264, %c2_265, %c1_266, %c0_267, %c0_268] : memref<1x16x9x9x4xbf16, #tpu.memory_space<vmem>>, vector<1x1x8x8x4xbf16>
    %119 = vector.shape_cast %118 : vector<1x1x8x8x4xbf16> to vector<8x8x4xbf16>
    %c0_269 = arith.constant 0 : index
    %c3_270 = arith.constant 3 : index
    %c1_271 = arith.constant 1 : index
    %c0_272 = arith.constant 0 : index
    %c0_273 = arith.constant 0 : index
    %120 = vector.load %arg1[%c0_269, %c3_270, %c1_271, %c0_272, %c0_273] : memref<1x16x9x9x4xbf16, #tpu.memory_space<vmem>>, vector<1x1x8x8x4xbf16>
    %121 = vector.shape_cast %120 : vector<1x1x8x8x4xbf16> to vector<8x8x4xbf16>
    %c0_274 = arith.constant 0 : index
    %c0_275 = arith.constant 0 : index
    %c1_276 = arith.constant 1 : index
    %c1_277 = arith.constant 1 : index
    %c0_278 = arith.constant 0 : index
    %122 = vector.load %arg1[%c0_274, %c0_275, %c1_276, %c1_277, %c0_278] : memref<1x16x9x9x4xbf16, #tpu.memory_space<vmem>>, vector<1x1x8x8x4xbf16>
    %123 = vector.shape_cast %122 : vector<1x1x8x8x4xbf16> to vector<8x8x4xbf16>
    %c0_279 = arith.constant 0 : index
    %c1_280 = arith.constant 1 : index
    %c1_281 = arith.constant 1 : index
    %c1_282 = arith.constant 1 : index
    %c0_283 = arith.constant 0 : index
    %124 = vector.load %arg1[%c0_279, %c1_280, %c1_281, %c1_282, %c0_283] : memref<1x16x9x9x4xbf16, #tpu.memory_space<vmem>>, vector<1x1x8x8x4xbf16>
    %125 = vector.shape_cast %124 : vector<1x1x8x8x4xbf16> to vector<8x8x4xbf16>
    %c0_284 = arith.constant 0 : index
    %c6_285 = arith.constant 6 : index
    %c1_286 = arith.constant 1 : index
    %c0_287 = arith.constant 0 : index
    %c0_288 = arith.constant 0 : index
    %126 = vector.load %arg1[%c0_284, %c6_285, %c1_286, %c0_287, %c0_288] : memref<1x16x9x9x4xbf16, #tpu.memory_space<vmem>>, vector<1x1x8x8x4xbf16>
    %127 = vector.shape_cast %126 : vector<1x1x8x8x4xbf16> to vector<8x8x4xbf16>
    %c0_289 = arith.constant 0 : index
    %c7_290 = arith.constant 7 : index
    %c1_291 = arith.constant 1 : index
    %c0_292 = arith.constant 0 : index
    %c0_293 = arith.constant 0 : index
    %128 = vector.load %arg1[%c0_289, %c7_290, %c1_291, %c0_292, %c0_293] : memref<1x16x9x9x4xbf16, #tpu.memory_space<vmem>>, vector<1x1x8x8x4xbf16>
    %129 = vector.shape_cast %128 : vector<1x1x8x8x4xbf16> to vector<8x8x4xbf16>
    %c0_294 = arith.constant 0 : index
    %c4_295 = arith.constant 4 : index
    %c1_296 = arith.constant 1 : index
    %c1_297 = arith.constant 1 : index
    %c0_298 = arith.constant 0 : index
    %130 = vector.load %arg1[%c0_294, %c4_295, %c1_296, %c1_297, %c0_298] : memref<1x16x9x9x4xbf16, #tpu.memory_space<vmem>>, vector<1x1x8x8x4xbf16>
    %131 = vector.shape_cast %130 : vector<1x1x8x8x4xbf16> to vector<8x8x4xbf16>
    %c0_299 = arith.constant 0 : index
    %c5_300 = arith.constant 5 : index
    %c1_301 = arith.constant 1 : index
    %c1_302 = arith.constant 1 : index
    %c0_303 = arith.constant 0 : index
    %132 = vector.load %arg1[%c0_299, %c5_300, %c1_301, %c1_302, %c0_303] : memref<1x16x9x9x4xbf16, #tpu.memory_space<vmem>>, vector<1x1x8x8x4xbf16>
    %133 = vector.shape_cast %132 : vector<1x1x8x8x4xbf16> to vector<8x8x4xbf16>
    %134 = tpu.concatenate %103, %105, %107, %109, %111, %113, %115, %117, %119, %121, %123, %125, %127, %129, %131, %133 in 2 : vector<8x8x4xbf16>, vector<8x8x4xbf16>, vector<8x8x4xbf16>, vector<8x8x4xbf16>, vector<8x8x4xbf16>, vector<8x8x4xbf16>, vector<8x8x4xbf16>, vector<8x8x4xbf16>, vector<8x8x4xbf16>, vector<8x8x4xbf16>, vector<8x8x4xbf16>, vector<8x8x4xbf16>, vector<8x8x4xbf16>, vector<8x8x4xbf16>, vector<8x8x4xbf16>, vector<8x8x4xbf16> -> vector<8x8x64xbf16>
    %135 = vector.shape_cast %134 : vector<8x8x64xbf16> to vector<64x64xbf16>
    %136 = tpu.concatenate %33, %67, %101, %135 in 0 : vector<64x64xbf16>, vector<64x64xbf16>, vector<64x64xbf16>, vector<64x64xbf16> -> vector<256x64xbf16>
    %c0_304 = arith.constant 0 : index
    %c0_305 = arith.constant 0 : index
    %137 = vector.load %arg2[%c0_304, %c0_305] : memref<64x64xbf16, #tpu.memory_space<vmem>>, vector<64x64xbf16>
    %cst = arith.constant dense<0.000000e+00> : vector<256x64xf32>
    %138 = tpu.matmul %136, %137, %cst {dimension_numbers = #tpu.dot_dimension_numbers<[1], [0], [0], [1], [0, 0, 1, 1], [], []>} : vector<256x64xbf16>, vector<64x64xbf16>, vector<256x64xf32> -> vector<256x64xf32>
    %c0_306 = arith.constant 0 : index
    %c0_307 = arith.constant 0 : index
    %139 = vector.load %arg3[%c0_306, %c0_307] : memref<1x64xf32, #tpu.memory_space<vmem>>, vector<1x64xf32>
    %140 = vector.broadcast %139 : vector<1x64xf32> to vector<256x64xf32>
    %141 = arith.addf %138, %140 : vector<256x64xf32>
    %cst_308 = arith.constant 0.000000e+00 : f32
    %142 = vector.broadcast %cst_308 : f32 to vector<256x64xf32>
    %143 = arith.maximumf %141, %142 : vector<256x64xf32>
    %144 = arith.truncf %143 : vector<256x64xf32> to vector<256x64xbf16>
    %cst_309 = arith.constant 0.000000e+00 : bf16
    %145 = vector.broadcast %cst_309 : bf16 to vector<2x2x9x9x64xbf16>
    %c0_310 = arith.constant 0 : index
    %c0_311 = arith.constant 0 : index
    %c0_312 = arith.constant 0 : index
    %c0_313 = arith.constant 0 : index
    %c0_314 = arith.constant 0 : index
    %146 = vector.load %arg11[%c0_310, %c0_311, %c0_312, %c0_313, %c0_314] : memref<2x2x9x9x64xbf16, #tpu.memory_space<vmem>>, vector<2x2x9x9x64xbf16>
    tpu.vector_store %arg11[%c0_310, %c0_311, %c0_312, %c0_313, %c0_314], %145 {strides = array<i32>} : memref<2x2x9x9x64xbf16, #tpu.memory_space<vmem>>, vector<2x2x9x9x64xbf16>,
    %147 = vector.extract_strided_slice %144 {offsets = [0, 0], sizes = [64, 64], strides = [1, 1]} : vector<256x64xbf16> to vector<64x64xbf16>
    %148 = vector.shape_cast %147 : vector<64x64xbf16> to vector<8x8x64xbf16>
    %c1_315 = arith.constant 1 : index
    %c1_316 = arith.constant 1 : index
    %c0_317 = arith.constant 0 : index
    %c0_318 = arith.constant 0 : index
    %c0_319 = arith.constant 0 : index
    %149 = vector.load %arg11[%c1_315, %c1_316, %c0_317, %c0_318, %c0_319] : memref<2x2x9x9x64xbf16, #tpu.memory_space<vmem>>, vector<1x1x8x8x64xbf16>
    %150 = vector.shape_cast %149 : vector<1x1x8x8x64xbf16> to vector<8x8x64xbf16>
    %151 = vector.shape_cast %148 : vector<8x8x64xbf16> to vector<1x1x8x8x64xbf16>
    tpu.vector_store %arg11[%c1_315, %c1_316, %c0_317, %c0_318, %c0_319], %151 {strides = array<i32>} : memref<2x2x9x9x64xbf16, #tpu.memory_space<vmem>>, vector<1x1x8x8x64xbf16>,
    %152 = vector.extract_strided_slice %144 {offsets = [64, 0], sizes = [64, 64], strides = [1, 1]} : vector<256x64xbf16> to vector<64x64xbf16>
    %153 = vector.shape_cast %152 : vector<64x64xbf16> to vector<8x8x64xbf16>
    %c1_320 = arith.constant 1 : index
    %c0_321 = arith.constant 0 : index
    %c0_322 = arith.constant 0 : index
    %c1_323 = arith.constant 1 : index
    %c0_324 = arith.constant 0 : index
    %154 = vector.load %arg11[%c1_320, %c0_321, %c0_322, %c1_323, %c0_324] : memref<2x2x9x9x64xbf16, #tpu.memory_space<vmem>>, vector<1x1x8x8x64xbf16>
    %155 = vector.shape_cast %154 : vector<1x1x8x8x64xbf16> to vector<8x8x64xbf16>
    %156 = vector.shape_cast %153 : vector<8x8x64xbf16> to vector<1x1x8x8x64xbf16>
    tpu.vector_store %arg11[%c1_320, %c0_321, %c0_322, %c1_323, %c0_324], %156 {strides = array<i32>} : memref<2x2x9x9x64xbf16, #tpu.memory_space<vmem>>, vector<1x1x8x8x64xbf16>,
    %157 = vector.extract_strided_slice %144 {offsets = [128, 0], sizes = [64, 64], strides = [1, 1]} : vector<256x64xbf16> to vector<64x64xbf16>
    %158 = vector.shape_cast %157 : vector<64x64xbf16> to vector<8x8x64xbf16>
    %c0_325 = arith.constant 0 : index
    %c1_326 = arith.constant 1 : index
    %c1_327 = arith.constant 1 : index
    %c0_328 = arith.constant 0 : index
    %c0_329 = arith.constant 0 : index
    %159 = vector.load %arg11[%c0_325, %c1_326, %c1_327, %c0_328, %c0_329] : memref<2x2x9x9x64xbf16, #tpu.memory_space<vmem>>, vector<1x1x8x8x64xbf16>
    %160 = vector.shape_cast %159 : vector<1x1x8x8x64xbf16> to vector<8x8x64xbf16>
    %161 = vector.shape_cast %158 : vector<8x8x64xbf16> to vector<1x1x8x8x64xbf16>
    tpu.vector_store %arg11[%c0_325, %c1_326, %c1_327, %c0_328, %c0_329], %161 {strides = array<i32>} : memref<2x2x9x9x64xbf16, #tpu.memory_space<vmem>>, vector<1x1x8x8x64xbf16>,
    %162 = vector.extract_strided_slice %144 {offsets = [192, 0], sizes = [64, 64], strides = [1, 1]} : vector<256x64xbf16> to vector<64x64xbf16>
    %163 = vector.shape_cast %162 : vector<64x64xbf16> to vector<8x8x64xbf16>
    %c0_330 = arith.constant 0 : index
    %c0_331 = arith.constant 0 : index
    %c1_332 = arith.constant 1 : index
    %c1_333 = arith.constant 1 : index
    %c0_334 = arith.constant 0 : index
    %164 = vector.load %arg11[%c0_330, %c0_331, %c1_332, %c1_333, %c0_334] : memref<2x2x9x9x64xbf16, #tpu.memory_space<vmem>>, vector<1x1x8x8x64xbf16>
    %165 = vector.shape_cast %164 : vector<1x1x8x8x64xbf16> to vector<8x8x64xbf16>
    %166 = vector.shape_cast %163 : vector<8x8x64xbf16> to vector<1x1x8x8x64xbf16>
    tpu.vector_store %arg11[%c0_330, %c0_331, %c1_332, %c1_333, %c0_334], %166 {strides = array<i32>} : memref<2x2x9x9x64xbf16, #tpu.memory_space<vmem>>, vector<1x1x8x8x64xbf16>,
    %c0_335 = arith.constant 0 : index
    %c0_336 = arith.constant 0 : index
    %c0_337 = arith.constant 0 : index
    %c0_338 = arith.constant 0 : index
    %c0_339 = arith.constant 0 : index
    %167 = vector.load %arg11[%c0_335, %c0_336, %c0_337, %c0_338, %c0_339] : memref<2x2x9x9x64xbf16, #tpu.memory_space<vmem>>, vector<1x1x8x8x64xbf16>
    %168 = vector.shape_cast %167 : vector<1x1x8x8x64xbf16> to vector<8x8x64xbf16>
    %c0_340 = arith.constant 0 : index
    %c1_341 = arith.constant 1 : index
    %c0_342 = arith.constant 0 : index
    %c0_343 = arith.constant 0 : index
    %c0_344 = arith.constant 0 : index
    %169 = vector.load %arg11[%c0_340, %c1_341, %c0_342, %c0_343, %c0_344] : memref<2x2x9x9x64xbf16, #tpu.memory_space<vmem>>, vector<1x1x8x8x64xbf16>
    %170 = vector.shape_cast %169 : vector<1x1x8x8x64xbf16> to vector<8x8x64xbf16>
    %c0_345 = arith.constant 0 : index
    %c0_346 = arith.constant 0 : index
    %c0_347 = arith.constant 0 : index
    %c1_348 = arith.constant 1 : index
    %c0_349 = arith.constant 0 : index
    %171 = vector.load %arg11[%c0_345, %c0_346, %c0_347, %c1_348, %c0_349] : memref<2x2x9x9x64xbf16, #tpu.memory_space<vmem>>, vector<1x1x8x8x64xbf16>
    %172 = vector.shape_cast %171 : vector<1x1x8x8x64xbf16> to vector<8x8x64xbf16>
    %c0_350 = arith.constant 0 : index
    %c1_351 = arith.constant 1 : index
    %c0_352 = arith.constant 0 : index
    %c1_353 = arith.constant 1 : index
    %c0_354 = arith.constant 0 : index
    %173 = vector.load %arg11[%c0_350, %c1_351, %c0_352, %c1_353, %c0_354] : memref<2x2x9x9x64xbf16, #tpu.memory_space<vmem>>, vector<1x1x8x8x64xbf16>
    %174 = vector.shape_cast %173 : vector<1x1x8x8x64xbf16> to vector<8x8x64xbf16>
    %c1_355 = arith.constant 1 : index
    %c0_356 = arith.constant 0 : index
    %c0_357 = arith.constant 0 : index
    %c0_358 = arith.constant 0 : index
    %c0_359 = arith.constant 0 : index
    %175 = vector.load %arg11[%c1_355, %c0_356, %c0_357, %c0_358, %c0_359] : memref<2x2x9x9x64xbf16, #tpu.memory_space<vmem>>, vector<1x1x8x8x64xbf16>
    %176 = vector.shape_cast %175 : vector<1x1x8x8x64xbf16> to vector<8x8x64xbf16>
    %c1_360 = arith.constant 1 : index
    %c1_361 = arith.constant 1 : index
    %c0_362 = arith.constant 0 : index
    %c0_363 = arith.constant 0 : index
    %c0_364 = arith.constant 0 : index
    %177 = vector.load %arg11[%c1_360, %c1_361, %c0_362, %c0_363, %c0_364] : memref<2x2x9x9x64xbf16, #tpu.memory_space<vmem>>, vector<1x1x8x8x64xbf16>
    %178 = vector.shape_cast %177 : vector<1x1x8x8x64xbf16> to vector<8x8x64xbf16>
    %c1_365 = arith.constant 1 : index
    %c0_366 = arith.constant 0 : index
    %c0_367 = arith.constant 0 : index
    %c1_368 = arith.constant 1 : index
    %c0_369 = arith.constant 0 : index
    %179 = vector.load %arg11[%c1_365, %c0_366, %c0_367, %c1_368, %c0_369] : memref<2x2x9x9x64xbf16, #tpu.memory_space<vmem>>, vector<1x1x8x8x64xbf16>
    %180 = vector.shape_cast %179 : vector<1x1x8x8x64xbf16> to vector<8x8x64xbf16>
    %c1_370 = arith.constant 1 : index
    %c1_371 = arith.constant 1 : index
    %c0_372 = arith.constant 0 : index
    %c1_373 = arith.constant 1 : index
    %c0_374 = arith.constant 0 : index
    %181 = vector.load %arg11[%c1_370, %c1_371, %c0_372, %c1_373, %c0_374] : memref<2x2x9x9x64xbf16, #tpu.memory_space<vmem>>, vector<1x1x8x8x64xbf16>
    %182 = vector.shape_cast %181 : vector<1x1x8x8x64xbf16> to vector<8x8x64xbf16>
    %c0_375 = arith.constant 0 : index
    %c0_376 = arith.constant 0 : index
    %c1_377 = arith.constant 1 : index
    %c0_378 = arith.constant 0 : index
    %c0_379 = arith.constant 0 : index
    %183 = vector.load %arg11[%c0_375, %c0_376, %c1_377, %c0_378, %c0_379] : memref<2x2x9x9x64xbf16, #tpu.memory_space<vmem>>, vector<1x1x8x8x64xbf16>
    %184 = vector.shape_cast %183 : vector<1x1x8x8x64xbf16> to vector<8x8x64xbf16>
    %c0_380 = arith.constant 0 : index
    %c1_381 = arith.constant 1 : index
    %c1_382 = arith.constant 1 : index
    %c0_383 = arith.constant 0 : index
    %c0_384 = arith.constant 0 : index
    %185 = vector.load %arg11[%c0_380, %c1_381, %c1_382, %c0_383, %c0_384] : memref<2x2x9x9x64xbf16, #tpu.memory_space<vmem>>, vector<1x1x8x8x64xbf16>
    %186 = vector.shape_cast %185 : vector<1x1x8x8x64xbf16> to vector<8x8x64xbf16>
    %c0_385 = arith.constant 0 : index
    %c0_386 = arith.constant 0 : index
    %c1_387 = arith.constant 1 : index
    %c1_388 = arith.constant 1 : index
    %c0_389 = arith.constant 0 : index
    %187 = vector.load %arg11[%c0_385, %c0_386, %c1_387, %c1_388, %c0_389] : memref<2x2x9x9x64xbf16, #tpu.memory_space<vmem>>, vector<1x1x8x8x64xbf16>
    %188 = vector.shape_cast %187 : vector<1x1x8x8x64xbf16> to vector<8x8x64xbf16>
    %c0_390 = arith.constant 0 : index
    %c1_391 = arith.constant 1 : index
    %c1_392 = arith.constant 1 : index
    %c1_393 = arith.constant 1 : index
    %c0_394 = arith.constant 0 : index
    %189 = vector.load %arg11[%c0_390, %c1_391, %c1_392, %c1_393, %c0_394] : memref<2x2x9x9x64xbf16, #tpu.memory_space<vmem>>, vector<1x1x8x8x64xbf16>
    %190 = vector.shape_cast %189 : vector<1x1x8x8x64xbf16> to vector<8x8x64xbf16>
    %c1_395 = arith.constant 1 : index
    %c0_396 = arith.constant 0 : index
    %c1_397 = arith.constant 1 : index
    %c0_398 = arith.constant 0 : index
    %c0_399 = arith.constant 0 : index
    %191 = vector.load %arg11[%c1_395, %c0_396, %c1_397, %c0_398, %c0_399] : memref<2x2x9x9x64xbf16, #tpu.memory_space<vmem>>, vector<1x1x8x8x64xbf16>
    %192 = vector.shape_cast %191 : vector<1x1x8x8x64xbf16> to vector<8x8x64xbf16>
    %c1_400 = arith.constant 1 : index
    %c1_401 = arith.constant 1 : index
    %c1_402 = arith.constant 1 : index
    %c0_403 = arith.constant 0 : index
    %c0_404 = arith.constant 0 : index
    %193 = vector.load %arg11[%c1_400, %c1_401, %c1_402, %c0_403, %c0_404] : memref<2x2x9x9x64xbf16, #tpu.memory_space<vmem>>, vector<1x1x8x8x64xbf16>
    %194 = vector.shape_cast %193 : vector<1x1x8x8x64xbf16> to vector<8x8x64xbf16>
    %c1_405 = arith.constant 1 : index
    %c0_406 = arith.constant 0 : index
    %c1_407 = arith.constant 1 : index
    %c1_408 = arith.constant 1 : index
    %c0_409 = arith.constant 0 : index
    %195 = vector.load %arg11[%c1_405, %c0_406, %c1_407, %c1_408, %c0_409] : memref<2x2x9x9x64xbf16, #tpu.memory_space<vmem>>, vector<1x1x8x8x64xbf16>
    %196 = vector.shape_cast %195 : vector<1x1x8x8x64xbf16> to vector<8x8x64xbf16>
    %c1_410 = arith.constant 1 : index
    %c1_411 = arith.constant 1 : index
    %c1_412 = arith.constant 1 : index
    %c1_413 = arith.constant 1 : index
    %c0_414 = arith.constant 0 : index
    %197 = vector.load %arg11[%c1_410, %c1_411, %c1_412, %c1_413, %c0_414] : memref<2x2x9x9x64xbf16, #tpu.memory_space<vmem>>, vector<1x1x8x8x64xbf16>
    %198 = vector.shape_cast %197 : vector<1x1x8x8x64xbf16> to vector<8x8x64xbf16>
    %199 = tpu.concatenate %168, %170, %172, %174, %176, %178, %180, %182, %184, %186, %188, %190, %192, %194, %196, %198 in 2 : vector<8x8x64xbf16>, vector<8x8x64xbf16>, vector<8x8x64xbf16>, vector<8x8x64xbf16>, vector<8x8x64xbf16>, vector<8x8x64xbf16>, vector<8x8x64xbf16>, vector<8x8x64xbf16>, vector<8x8x64xbf16>, vector<8x8x64xbf16>, vector<8x8x64xbf16>, vector<8x8x64xbf16>, vector<8x8x64xbf16>, vector<8x8x64xbf16>, vector<8x8x64xbf16>, vector<8x8x64xbf16> -> vector<8x8x1024xbf16>
    %200 = vector.shape_cast %199 : vector<8x8x1024xbf16> to vector<64x1024xbf16>
    %c0_415 = arith.constant 0 : index
    %c0_416 = arith.constant 0 : index
    %201 = vector.load %arg4[%c0_415, %c0_416] : memref<1024x64xbf16, #tpu.memory_space<vmem>>, vector<1024x64xbf16>
    %cst_417 = arith.constant dense<0.000000e+00> : vector<64x64xf32>
    %202 = tpu.matmul %200, %201, %cst_417 {dimension_numbers = #tpu.dot_dimension_numbers<[1], [0], [0], [1], [0, 0, 1, 1], [], []>} : vector<64x1024xbf16>, vector<1024x64xbf16>, vector<64x64xf32> -> vector<64x64xf32>
    %c0_418 = arith.constant 0 : index
    %c0_419 = arith.constant 0 : index
    %203 = vector.load %arg5[%c0_418, %c0_419] : memref<1x64xf32, #tpu.memory_space<vmem>>, vector<1x64xf32>
    %204 = vector.broadcast %203 : vector<1x64xf32> to vector<64x64xf32>
    %205 = arith.addf %202, %204 : vector<64x64xf32>
    %cst_420 = arith.constant 0.000000e+00 : f32
    %206 = vector.broadcast %cst_420 : f32 to vector<64x64xf32>
    %207 = arith.maximumf %205, %206 : vector<64x64xf32>
    %208 = arith.truncf %207 : vector<64x64xf32> to vector<64x64xbf16>
    %cst_421 = arith.constant 0.000000e+00 : bf16
    %209 = vector.broadcast %cst_421 : bf16 to vector<11x11x64xbf16>
    %c0_422 = arith.constant 0 : index
    %c0_423 = arith.constant 0 : index
    %c0_424 = arith.constant 0 : index
    %210 = vector.load %arg12[%c0_422, %c0_423, %c0_424] : memref<11x11x64xbf16, #tpu.memory_space<vmem>>, vector<11x11x64xbf16>
    tpu.vector_store %arg12[%c0_422, %c0_423, %c0_424], %209 {strides = array<i32>} : memref<11x11x64xbf16, #tpu.memory_space<vmem>>, vector<11x11x64xbf16>,
    %211 = vector.shape_cast %208 : vector<64x64xbf16> to vector<8x8x64xbf16>
    %c1_425 = arith.constant 1 : index
    %c1_426 = arith.constant 1 : index
    %c0_427 = arith.constant 0 : index
    %212 = vector.load %arg12[%c1_425, %c1_426, %c0_427] : memref<11x11x64xbf16, #tpu.memory_space<vmem>>, vector<8x8x64xbf16>
    tpu.vector_store %arg12[%c1_425, %c1_426, %c0_427], %211 {strides = array<i32>} : memref<11x11x64xbf16, #tpu.memory_space<vmem>>, vector<8x8x64xbf16>,
    %c0_428 = arith.constant 0 : index
    %c0_429 = arith.constant 0 : index
    %c0_430 = arith.constant 0 : index
    %213 = vector.load %arg12[%c0_428, %c0_429, %c0_430] : memref<11x11x64xbf16, #tpu.memory_space<vmem>>, vector<8x8x64xbf16>
    %c0_431 = arith.constant 0 : index
    %c1_432 = arith.constant 1 : index
    %c0_433 = arith.constant 0 : index
    %214 = vector.load %arg12[%c0_431, %c1_432, %c0_433] : memref<11x11x64xbf16, #tpu.memory_space<vmem>>, vector<8x8x64xbf16>
    %c0_434 = arith.constant 0 : index
    %c2_435 = arith.constant 2 : index
    %c0_436 = arith.constant 0 : index
    %215 = vector.load %arg12[%c0_434, %c2_435, %c0_436] : memref<11x11x64xbf16, #tpu.memory_space<vmem>>, vector<8x8x64xbf16>
    %c0_437 = arith.constant 0 : index
    %c3_438 = arith.constant 3 : index
    %c0_439 = arith.constant 0 : index
    %216 = vector.load %arg12[%c0_437, %c3_438, %c0_439] : memref<11x11x64xbf16, #tpu.memory_space<vmem>>, vector<8x8x64xbf16>
    %c1_440 = arith.constant 1 : index
    %c0_441 = arith.constant 0 : index
    %c0_442 = arith.constant 0 : index
    %217 = vector.load %arg12[%c1_440, %c0_441, %c0_442] : memref<11x11x64xbf16, #tpu.memory_space<vmem>>, vector<8x8x64xbf16>
    %c1_443 = arith.constant 1 : index
    %c1_444 = arith.constant 1 : index
    %c0_445 = arith.constant 0 : index
    %218 = vector.load %arg12[%c1_443, %c1_444, %c0_445] : memref<11x11x64xbf16, #tpu.memory_space<vmem>>, vector<8x8x64xbf16>
    %c1_446 = arith.constant 1 : index
    %c2_447 = arith.constant 2 : index
    %c0_448 = arith.constant 0 : index
    %219 = vector.load %arg12[%c1_446, %c2_447, %c0_448] : memref<11x11x64xbf16, #tpu.memory_space<vmem>>, vector<8x8x64xbf16>
    %c1_449 = arith.constant 1 : index
    %c3_450 = arith.constant 3 : index
    %c0_451 = arith.constant 0 : index
    %220 = vector.load %arg12[%c1_449, %c3_450, %c0_451] : memref<11x11x64xbf16, #tpu.memory_space<vmem>>, vector<8x8x64xbf16>
    %c2_452 = arith.constant 2 : index
    %c0_453 = arith.constant 0 : index
    %c0_454 = arith.constant 0 : index
    %221 = vector.load %arg12[%c2_452, %c0_453, %c0_454] : memref<11x11x64xbf16, #tpu.memory_space<vmem>>, vector<8x8x64xbf16>
    %c2_455 = arith.constant 2 : index
    %c1_456 = arith.constant 1 : index
    %c0_457 = arith.constant 0 : index
    %222 = vector.load %arg12[%c2_455, %c1_456, %c0_457] : memref<11x11x64xbf16, #tpu.memory_space<vmem>>, vector<8x8x64xbf16>
    %c2_458 = arith.constant 2 : index
    %c2_459 = arith.constant 2 : index
    %c0_460 = arith.constant 0 : index
    %223 = vector.load %arg12[%c2_458, %c2_459, %c0_460] : memref<11x11x64xbf16, #tpu.memory_space<vmem>>, vector<8x8x64xbf16>
    %c2_461 = arith.constant 2 : index
    %c3_462 = arith.constant 3 : index
    %c0_463 = arith.constant 0 : index
    %224 = vector.load %arg12[%c2_461, %c3_462, %c0_463] : memref<11x11x64xbf16, #tpu.memory_space<vmem>>, vector<8x8x64xbf16>
    %c3_464 = arith.constant 3 : index
    %c0_465 = arith.constant 0 : index
    %c0_466 = arith.constant 0 : index
    %225 = vector.load %arg12[%c3_464, %c0_465, %c0_466] : memref<11x11x64xbf16, #tpu.memory_space<vmem>>, vector<8x8x64xbf16>
    %c3_467 = arith.constant 3 : index
    %c1_468 = arith.constant 1 : index
    %c0_469 = arith.constant 0 : index
    %226 = vector.load %arg12[%c3_467, %c1_468, %c0_469] : memref<11x11x64xbf16, #tpu.memory_space<vmem>>, vector<8x8x64xbf16>
    %c3_470 = arith.constant 3 : index
    %c2_471 = arith.constant 2 : index
    %c0_472 = arith.constant 0 : index
    %227 = vector.load %arg12[%c3_470, %c2_471, %c0_472] : memref<11x11x64xbf16, #tpu.memory_space<vmem>>, vector<8x8x64xbf16>
    %c3_473 = arith.constant 3 : index
    %c3_474 = arith.constant 3 : index
    %c0_475 = arith.constant 0 : index
    %228 = vector.load %arg12[%c3_473, %c3_474, %c0_475] : memref<11x11x64xbf16, #tpu.memory_space<vmem>>, vector<8x8x64xbf16>
    %229 = tpu.concatenate %213, %214, %215, %216, %217, %218, %219, %220, %221, %222, %223, %224, %225, %226, %227, %228 in 2 : vector<8x8x64xbf16>, vector<8x8x64xbf16>, vector<8x8x64xbf16>, vector<8x8x64xbf16>, vector<8x8x64xbf16>, vector<8x8x64xbf16>, vector<8x8x64xbf16>, vector<8x8x64xbf16>, vector<8x8x64xbf16>, vector<8x8x64xbf16>, vector<8x8x64xbf16>, vector<8x8x64xbf16>, vector<8x8x64xbf16>, vector<8x8x64xbf16>, vector<8x8x64xbf16>, vector<8x8x64xbf16> -> vector<8x8x1024xbf16>
    %230 = vector.shape_cast %229 : vector<8x8x1024xbf16> to vector<64x1024xbf16>
    %c0_476 = arith.constant 0 : index
    %c0_477 = arith.constant 0 : index
    %231 = vector.load %arg6[%c0_476, %c0_477] : memref<1024x64xbf16, #tpu.memory_space<vmem>>, vector<1024x64xbf16>
    %cst_478 = arith.constant dense<0.000000e+00> : vector<64x64xf32>
    %232 = tpu.matmul %230, %231, %cst_478 {dimension_numbers = #tpu.dot_dimension_numbers<[1], [0], [0], [1], [0, 0, 1, 1], [], []>} : vector<64x1024xbf16>, vector<1024x64xbf16>, vector<64x64xf32> -> vector<64x64xf32>
    %c0_479 = arith.constant 0 : index
    %c0_480 = arith.constant 0 : index
    %233 = vector.load %arg7[%c0_479, %c0_480] : memref<1x64xf32, #tpu.memory_space<vmem>>, vector<1x64xf32>
    %234 = vector.broadcast %233 : vector<1x64xf32> to vector<64x64xf32>
    %235 = arith.addf %232, %234 : vector<64x64xf32>
    %cst_481 = arith.constant 0.000000e+00 : f32
    %236 = vector.broadcast %cst_481 : f32 to vector<64x64xf32>
    %237 = arith.maximumf %235, %236 : vector<64x64xf32>
    %238 = arith.truncf %237 : vector<64x64xf32> to vector<64x64xbf16>
    %239 = vector.extract_strided_slice %238 {offsets = [0, 0], sizes = [1, 64], strides = [1, 1]} : vector<64x64xbf16> to vector<1x64xbf16>
    %240 = vector.extract_strided_slice %238 {offsets = [1, 0], sizes = [1, 64], strides = [1, 1]} : vector<64x64xbf16> to vector<1x64xbf16>
    %241 = vector.extract_strided_slice %238 {offsets = [2, 0], sizes = [1, 64], strides = [1, 1]} : vector<64x64xbf16> to vector<1x64xbf16>
    %242 = vector.extract_strided_slice %238 {offsets = [3, 0], sizes = [1, 64], strides = [1, 1]} : vector<64x64xbf16> to vector<1x64xbf16>
    %243 = vector.extract_strided_slice %238 {offsets = [4, 0], sizes = [1, 64], strides = [1, 1]} : vector<64x64xbf16> to vector<1x64xbf16>
    %244 = vector.extract_strided_slice %238 {offsets = [5, 0], sizes = [1, 64], strides = [1, 1]} : vector<64x64xbf16> to vector<1x64xbf16>
    %245 = vector.extract_strided_slice %238 {offsets = [6, 0], sizes = [1, 64], strides = [1, 1]} : vector<64x64xbf16> to vector<1x64xbf16>
    %246 = vector.extract_strided_slice %238 {offsets = [7, 0], sizes = [1, 64], strides = [1, 1]} : vector<64x64xbf16> to vector<1x64xbf16>
    %247 = vector.extract_strided_slice %238 {offsets = [8, 0], sizes = [1, 64], strides = [1, 1]} : vector<64x64xbf16> to vector<1x64xbf16>
    %248 = vector.extract_strided_slice %238 {offsets = [9, 0], sizes = [1, 64], strides = [1, 1]} : vector<64x64xbf16> to vector<1x64xbf16>
    %249 = vector.extract_strided_slice %238 {offsets = [10, 0], sizes = [1, 64], strides = [1, 1]} : vector<64x64xbf16> to vector<1x64xbf16>
    %250 = vector.extract_strided_slice %238 {offsets = [11, 0], sizes = [1, 64], strides = [1, 1]} : vector<64x64xbf16> to vector<1x64xbf16>
    %251 = vector.extract_strided_slice %238 {offsets = [12, 0], sizes = [1, 64], strides = [1, 1]} : vector<64x64xbf16> to vector<1x64xbf16>
    %252 = vector.extract_strided_slice %238 {offsets = [13, 0], sizes = [1, 64], strides = [1, 1]} : vector<64x64xbf16> to vector<1x64xbf16>
    %253 = vector.extract_strided_slice %238 {offsets = [14, 0], sizes = [1, 64], strides = [1, 1]} : vector<64x64xbf16> to vector<1x64xbf16>
    %254 = vector.extract_strided_slice %238 {offsets = [15, 0], sizes = [1, 64], strides = [1, 1]} : vector<64x64xbf16> to vector<1x64xbf16>
    %255 = vector.extract_strided_slice %238 {offsets = [16, 0], sizes = [1, 64], strides = [1, 1]} : vector<64x64xbf16> to vector<1x64xbf16>
    %256 = vector.extract_strided_slice %238 {offsets = [17, 0], sizes = [1, 64], strides = [1, 1]} : vector<64x64xbf16> to vector<1x64xbf16>
    %257 = vector.extract_strided_slice %238 {offsets = [18, 0], sizes = [1, 64], strides = [1, 1]} : vector<64x64xbf16> to vector<1x64xbf16>
    %258 = vector.extract_strided_slice %238 {offsets = [19, 0], sizes = [1, 64], strides = [1, 1]} : vector<64x64xbf16> to vector<1x64xbf16>
    %259 = vector.extract_strided_slice %238 {offsets = [20, 0], sizes = [1, 64], strides = [1, 1]} : vector<64x64xbf16> to vector<1x64xbf16>
    %260 = vector.extract_strided_slice %238 {offsets = [21, 0], sizes = [1, 64], strides = [1, 1]} : vector<64x64xbf16> to vector<1x64xbf16>
    %261 = vector.extract_strided_slice %238 {offsets = [22, 0], sizes = [1, 64], strides = [1, 1]} : vector<64x64xbf16> to vector<1x64xbf16>
    %262 = vector.extract_strided_slice %238 {offsets = [23, 0], sizes = [1, 64], strides = [1, 1]} : vector<64x64xbf16> to vector<1x64xbf16>
    %263 = vector.extract_strided_slice %238 {offsets = [24, 0], sizes = [1, 64], strides = [1, 1]} : vector<64x64xbf16> to vector<1x64xbf16>
    %264 = vector.extract_strided_slice %238 {offsets = [25, 0], sizes = [1, 64], strides = [1, 1]} : vector<64x64xbf16> to vector<1x64xbf16>
    %265 = vector.extract_strided_slice %238 {offsets = [26, 0], sizes = [1, 64], strides = [1, 1]} : vector<64x64xbf16> to vector<1x64xbf16>
    %266 = vector.extract_strided_slice %238 {offsets = [27, 0], sizes = [1, 64], strides = [1, 1]} : vector<64x64xbf16> to vector<1x64xbf16>
    %267 = vector.extract_strided_slice %238 {offsets = [28, 0], sizes = [1, 64], strides = [1, 1]} : vector<64x64xbf16> to vector<1x64xbf16>
    %268 = vector.extract_strided_slice %238 {offsets = [29, 0], sizes = [1, 64], strides = [1, 1]} : vector<64x64xbf16> to vector<1x64xbf16>
    %269 = vector.extract_strided_slice %238 {offsets = [30, 0], sizes = [1, 64], strides = [1, 1]} : vector<64x64xbf16> to vector<1x64xbf16>
    %270 = vector.extract_strided_slice %238 {offsets = [31, 0], sizes = [1, 64], strides = [1, 1]} : vector<64x64xbf16> to vector<1x64xbf16>
    %271 = vector.extract_strided_slice %238 {offsets = [32, 0], sizes = [1, 64], strides = [1, 1]} : vector<64x64xbf16> to vector<1x64xbf16>
    %272 = vector.extract_strided_slice %238 {offsets = [33, 0], sizes = [1, 64], strides = [1, 1]} : vector<64x64xbf16> to vector<1x64xbf16>
    %273 = vector.extract_strided_slice %238 {offsets = [34, 0], sizes = [1, 64], strides = [1, 1]} : vector<64x64xbf16> to vector<1x64xbf16>
    %274 = vector.extract_strided_slice %238 {offsets = [35, 0], sizes = [1, 64], strides = [1, 1]} : vector<64x64xbf16> to vector<1x64xbf16>
    %275 = vector.extract_strided_slice %238 {offsets = [36, 0], sizes = [1, 64], strides = [1, 1]} : vector<64x64xbf16> to vector<1x64xbf16>
    %276 = vector.extract_strided_slice %238 {offsets = [37, 0], sizes = [1, 64], strides = [1, 1]} : vector<64x64xbf16> to vector<1x64xbf16>
    %277 = vector.extract_strided_slice %238 {offsets = [38, 0], sizes = [1, 64], strides = [1, 1]} : vector<64x64xbf16> to vector<1x64xbf16>
    %278 = vector.extract_strided_slice %238 {offsets = [39, 0], sizes = [1, 64], strides = [1, 1]} : vector<64x64xbf16> to vector<1x64xbf16>
    %279 = vector.extract_strided_slice %238 {offsets = [40, 0], sizes = [1, 64], strides = [1, 1]} : vector<64x64xbf16> to vector<1x64xbf16>
    %280 = vector.extract_strided_slice %238 {offsets = [41, 0], sizes = [1, 64], strides = [1, 1]} : vector<64x64xbf16> to vector<1x64xbf16>
    %281 = vector.extract_strided_slice %238 {offsets = [42, 0], sizes = [1, 64], strides = [1, 1]} : vector<64x64xbf16> to vector<1x64xbf16>
    %282 = vector.extract_strided_slice %238 {offsets = [43, 0], sizes = [1, 64], strides = [1, 1]} : vector<64x64xbf16> to vector<1x64xbf16>
    %283 = vector.extract_strided_slice %238 {offsets = [44, 0], sizes = [1, 64], strides = [1, 1]} : vector<64x64xbf16> to vector<1x64xbf16>
    %284 = vector.extract_strided_slice %238 {offsets = [45, 0], sizes = [1, 64], strides = [1, 1]} : vector<64x64xbf16> to vector<1x64xbf16>
    %285 = vector.extract_strided_slice %238 {offsets = [46, 0], sizes = [1, 64], strides = [1, 1]} : vector<64x64xbf16> to vector<1x64xbf16>
    %286 = vector.extract_strided_slice %238 {offsets = [47, 0], sizes = [1, 64], strides = [1, 1]} : vector<64x64xbf16> to vector<1x64xbf16>
    %287 = vector.extract_strided_slice %238 {offsets = [48, 0], sizes = [1, 64], strides = [1, 1]} : vector<64x64xbf16> to vector<1x64xbf16>
    %288 = vector.extract_strided_slice %238 {offsets = [49, 0], sizes = [1, 64], strides = [1, 1]} : vector<64x64xbf16> to vector<1x64xbf16>
    %289 = vector.extract_strided_slice %238 {offsets = [50, 0], sizes = [1, 64], strides = [1, 1]} : vector<64x64xbf16> to vector<1x64xbf16>
    %290 = vector.extract_strided_slice %238 {offsets = [51, 0], sizes = [1, 64], strides = [1, 1]} : vector<64x64xbf16> to vector<1x64xbf16>
    %291 = vector.extract_strided_slice %238 {offsets = [52, 0], sizes = [1, 64], strides = [1, 1]} : vector<64x64xbf16> to vector<1x64xbf16>
    %292 = vector.extract_strided_slice %238 {offsets = [53, 0], sizes = [1, 64], strides = [1, 1]} : vector<64x64xbf16> to vector<1x64xbf16>
    %293 = vector.extract_strided_slice %238 {offsets = [54, 0], sizes = [1, 64], strides = [1, 1]} : vector<64x64xbf16> to vector<1x64xbf16>
    %294 = vector.extract_strided_slice %238 {offsets = [55, 0], sizes = [1, 64], strides = [1, 1]} : vector<64x64xbf16> to vector<1x64xbf16>
    %295 = vector.extract_strided_slice %238 {offsets = [56, 0], sizes = [1, 64], strides = [1, 1]} : vector<64x64xbf16> to vector<1x64xbf16>
    %296 = vector.extract_strided_slice %238 {offsets = [57, 0], sizes = [1, 64], strides = [1, 1]} : vector<64x64xbf16> to vector<1x64xbf16>
    %297 = vector.extract_strided_slice %238 {offsets = [58, 0], sizes = [1, 64], strides = [1, 1]} : vector<64x64xbf16> to vector<1x64xbf16>
    %298 = vector.extract_strided_slice %238 {offsets = [59, 0], sizes = [1, 64], strides = [1, 1]} : vector<64x64xbf16> to vector<1x64xbf16>
    %299 = vector.extract_strided_slice %238 {offsets = [60, 0], sizes = [1, 64], strides = [1, 1]} : vector<64x64xbf16> to vector<1x64xbf16>
    %300 = vector.extract_strided_slice %238 {offsets = [61, 0], sizes = [1, 64], strides = [1, 1]} : vector<64x64xbf16> to vector<1x64xbf16>
    %301 = vector.extract_strided_slice %238 {offsets = [62, 0], sizes = [1, 64], strides = [1, 1]} : vector<64x64xbf16> to vector<1x64xbf16>
    %302 = vector.extract_strided_slice %238 {offsets = [63, 0], sizes = [1, 64], strides = [1, 1]} : vector<64x64xbf16> to vector<1x64xbf16>
    %303 = tpu.concatenate %239, %240, %241, %242, %243, %244, %245, %246, %247, %248, %249, %250, %251, %252, %253, %254 in 1 : vector<1x64xbf16>, vector<1x64xbf16>, vector<1x64xbf16>, vector<1x64xbf16>, vector<1x64xbf16>, vector<1x64xbf16>, vector<1x64xbf16>, vector<1x64xbf16>, vector<1x64xbf16>, vector<1x64xbf16>, vector<1x64xbf16>, vector<1x64xbf16>, vector<1x64xbf16>, vector<1x64xbf16>, vector<1x64xbf16>, vector<1x64xbf16> -> vector<1x1024xbf16>
    %304 = tpu.concatenate %255, %256, %257, %258, %259, %260, %261, %262, %263, %264, %265, %266, %267, %268, %269, %270 in 1 : vector<1x64xbf16>, vector<1x64xbf16>, vector<1x64xbf16>, vector<1x64xbf16>, vector<1x64xbf16>, vector<1x64xbf16>, vector<1x64xbf16>, vector<1x64xbf16>, vector<1x64xbf16>, vector<1x64xbf16>, vector<1x64xbf16>, vector<1x64xbf16>, vector<1x64xbf16>, vector<1x64xbf16>, vector<1x64xbf16>, vector<1x64xbf16> -> vector<1x1024xbf16>
    %305 = tpu.concatenate %271, %272, %273, %274, %275, %276, %277, %278, %279, %280, %281, %282, %283, %284, %285, %286 in 1 : vector<1x64xbf16>, vector<1x64xbf16>, vector<1x64xbf16>, vector<1x64xbf16>, vector<1x64xbf16>, vector<1x64xbf16>, vector<1x64xbf16>, vector<1x64xbf16>, vector<1x64xbf16>, vector<1x64xbf16>, vector<1x64xbf16>, vector<1x64xbf16>, vector<1x64xbf16>, vector<1x64xbf16>, vector<1x64xbf16>, vector<1x64xbf16> -> vector<1x1024xbf16>
    %306 = tpu.concatenate %287, %288, %289, %290, %291, %292, %293, %294, %295, %296, %297, %298, %299, %300, %301, %302 in 1 : vector<1x64xbf16>, vector<1x64xbf16>, vector<1x64xbf16>, vector<1x64xbf16>, vector<1x64xbf16>, vector<1x64xbf16>, vector<1x64xbf16>, vector<1x64xbf16>, vector<1x64xbf16>, vector<1x64xbf16>, vector<1x64xbf16>, vector<1x64xbf16>, vector<1x64xbf16>, vector<1x64xbf16>, vector<1x64xbf16>, vector<1x64xbf16> -> vector<1x1024xbf16>
    %307 = tpu.concatenate %303, %304, %305, %306 in 1 : vector<1x1024xbf16>, vector<1x1024xbf16>, vector<1x1024xbf16>, vector<1x1024xbf16> -> vector<1x4096xbf16>
    %c0_482 = arith.constant 0 : index
    %c0_483 = arith.constant 0 : index
    %308 = vector.load %arg8[%c0_482, %c0_483] : memref<4096x32xbf16, #tpu.memory_space<vmem>>, vector<4096x32xbf16>
    %cst_484 = arith.constant dense<0.000000e+00> : vector<1x32xf32>
    %309 = tpu.matmul %307, %308, %cst_484 {dimension_numbers = #tpu.dot_dimension_numbers<[1], [0], [0], [1], [0, 0, 1, 1], [], []>} : vector<1x4096xbf16>, vector<4096x32xbf16>, vector<1x32xf32> -> vector<1x32xf32>
    %c0_485 = arith.constant 0 : index
    %c0_486 = arith.constant 0 : index
    %310 = vector.load %arg9[%c0_485, %c0_486] : memref<1x32xf32, #tpu.memory_space<vmem>>, vector<1x32xf32>
    %311 = arith.addf %309, %310 : vector<1x32xf32>
    %c0_487 = arith.constant 0 : index
    %c0_488 = arith.constant 0 : index
    %c0_489 = arith.constant 0 : index
    %312 = vector.load %arg10[%c0_487, %c0_488, %c0_489] : memref<1x1x32xf32, #tpu.memory_space<vmem>>, vector<1x1x32xf32>
    %313 = vector.shape_cast %312 : vector<1x1x32xf32> to vector<1x32xf32>
    %314 = vector.shape_cast %311 : vector<1x32xf32> to vector<1x1x32xf32>
    tpu.vector_store %arg10[%c0_487, %c0_488, %c0_489], %314 {strides = array<i32>} : memref<1x1x32xf32, #tpu.memory_space<vmem>>, vector<1x1x32xf32>,
    return
  }
  func.func @transform_0(%arg0: i32) -> (i32, i32, i32, i32, i32) {
    %c0_i32 = arith.constant 0 : i32
    %c0_i32_0 = arith.constant 0 : i32
    %c0_i32_1 = arith.constant 0 : i32
    %c0_i32_2 = arith.constant 0 : i32
    %c0_i32_3 = arith.constant 0 : i32
    return %arg0, %c0_i32, %c0_i32_0, %c0_i32_1, %c0_i32_2 : i32, i32, i32, i32, i32
  }
  func.func @transform_1(%arg0: i32) -> (i32, i32) {
    %c0_i32 = arith.constant 0 : i32
    %c0_i32_0 = arith.constant 0 : i32
    %c0_i32_1 = arith.constant 0 : i32
    return %c0_i32, %c0_i32_0 : i32, i32
  }
  func.func @transform_2(%arg0: i32) -> (i32, i32) {
    %c0_i32 = arith.constant 0 : i32
    %c0_i32_0 = arith.constant 0 : i32
    %c0_i32_1 = arith.constant 0 : i32
    return %c0_i32, %c0_i32_0 : i32, i32
  }
  func.func @transform_3(%arg0: i32) -> (i32, i32) {
    %c0_i32 = arith.constant 0 : i32
    %c0_i32_0 = arith.constant 0 : i32
    %c0_i32_1 = arith.constant 0 : i32
    return %c0_i32, %c0_i32_0 : i32, i32
  }
  func.func @transform_4(%arg0: i32) -> (i32, i32) {
    %c0_i32 = arith.constant 0 : i32
    %c0_i32_0 = arith.constant 0 : i32
    %c0_i32_1 = arith.constant 0 : i32
    return %c0_i32, %c0_i32_0 : i32, i32
  }
  func.func @transform_5(%arg0: i32) -> (i32, i32) {
    %c0_i32 = arith.constant 0 : i32
    %c0_i32_0 = arith.constant 0 : i32
    %c0_i32_1 = arith.constant 0 : i32
    return %c0_i32, %c0_i32_0 : i32, i32
  }
  func.func @transform_6(%arg0: i32) -> (i32, i32) {
    %c0_i32 = arith.constant 0 : i32
    %c0_i32_0 = arith.constant 0 : i32
    %c0_i32_1 = arith.constant 0 : i32
    return %c0_i32, %c0_i32_0 : i32, i32
  }
  func.func @transform_7(%arg0: i32) -> (i32, i32) {
    %c0_i32 = arith.constant 0 : i32
    %c0_i32_0 = arith.constant 0 : i32
    %c0_i32_1 = arith.constant 0 : i32
    return %c0_i32, %c0_i32_0 : i32, i32
  }
  func.func @transform_8(%arg0: i32) -> (i32, i32) {
    %c0_i32 = arith.constant 0 : i32
    %c0_i32_0 = arith.constant 0 : i32
    %c0_i32_1 = arith.constant 0 : i32
    return %c0_i32, %c0_i32_0 : i32, i32
  }
  func.func @transform_9(%arg0: i32) -> (i32, i32, i32) {
    %c0_i32 = arith.constant 0 : i32
    %c0_i32_0 = arith.constant 0 : i32
    %c0_i32_1 = arith.constant 0 : i32
    return %arg0, %c0_i32, %c0_i32_0 : i32, i32, i32
  }
}

</mosaic_0001>

<llo_original>
// kernel: encoder_forward.1
$region0: #{encoder_forward.1}
  #allocation0 [shape = 'u32[]', space=smem, size = 0x4, offset = 0x4, fixed_abs, tag = 'smem constant byte address 0x4 - core index']
  #allocation1 [shape = 'u32[144,128]{1,0:T(1,128)}', space=vmem, size = 0x12000, scoped, tag = 'internal scratch']
  #allocation2 [shape = 'bf16[2,2,9,9,64]{4,3,2,1,0:T(8,128)(2,1)}', space=vmem, size = 0x24000, scoped, tag = 'scratch operand']
  #allocation3 [shape = 'bf16[11,11,64]{2,1,0:T(8,128)(2,1)}', space=vmem, size = 0xb000, scoped, tag = 'scratch operand']
  %s0 = inlined_call_operand.vmem [shape: bf16[2,16,9,9,4], index: 0, kind: input, shape index: {}]
  %s1 = inlined_call_operand.vmem [shape: bf16[64,64], index: 1, kind: input, shape index: {}]
  %s2 = inlined_call_operand.vmem [shape: f32[1,64], index: 2, kind: input, shape index: {}]
  %s3 = inlined_call_operand.vmem [shape: bf16[1024,64], index: 3, kind: input, shape index: {}]
  %s4 = inlined_call_operand.vmem [shape: f32[1,64], index: 4, kind: input, shape index: {}]
  %s5 = inlined_call_operand.vmem [shape: bf16[1024,64], index: 5, kind: input, shape index: {}]
  %s6 = inlined_call_operand.vmem [shape: f32[1,64], index: 6, kind: input, shape index: {}]
  %s7 = inlined_call_operand.vmem [shape: bf16[4096,32], index: 7, kind: input, shape index: {}]
  %s8 = inlined_call_operand.vmem [shape: f32[1,32], index: 8, kind: input, shape index: {}]
  %s9 = inlined_call_operand.hbm [shape: f32[2,1,32], index: 9, kind: output, shape index: {}]
  %s10 = sld [smem:[#allocation0]]
  $region69: #{encoder_forward.1} parent=0
    _
  %s12 = ssub.s32 1, %s10
  %s13 = scalar_select 0, %s12, %s10
  $region1: #{encoder_forward.1} parent=0
    #allocation4 [shape = 'u8[1024]{0}', space=vmem, size = 0x400, scoped, tag = 'output window, operand 0']
    #allocation5 [shape = 's32[2]{0}', space=sflag, size = 0x8, scoped, tag = 'scoped memory for encoder_forward.1']
    %14 = vsyncpa [#allocation5], 0
    %s15 = scalar_lea.sflag [#allocation5], 1
    %16 = vsyncpa %s15, 0
    loop: start=0, step=1, limit=4
    $region2: #{encoder_forward.1} parent=1 // loop_pre_header
      _
    $region3: #{encoder_forward.1} parent=1 // loop_header
      %s18 = sphi 0, %s22
      %p19 = scmp.ge.s32.totalorder %s18, 4
      %s28 = sphi 0, %s30
      %s31 = sphi 0, %s28
      %s32 = sphi 0, %s31
      %s48 = sphi 0, %s32
      %s52 = sphi 0, %s52
      %s54 = sphi 0, %s52
      %s55 = sphi 0, %s54
      %s69 = sphi 0, %s55
      %s73 = sphi 0, %s73
      %s75 = sphi 0, %s73
      %s76 = sphi 0, %s75
      %s90 = sphi 0, %s76
      %s94 = sphi 0, %s94
      %s96 = sphi 0, %s94
      %s97 = sphi 0, %s96
      %s111 = sphi 0, %s97
      %s115 = sphi 0, %s115
      %s117 = sphi 0, %s115
      %s118 = sphi 0, %s117
      %s132 = sphi 0, %s118
      %s136 = sphi 0, %s136
      %s138 = sphi 0, %s136
      %s139 = sphi 0, %s138
      %s153 = sphi 0, %s139
      %s157 = sphi 0, %s157
      %s159 = sphi 0, %s157
      %s160 = sphi 0, %s159
      %s174 = sphi 0, %s160
      %s178 = sphi 0, %s178
      %s180 = sphi 0, %s178
      %s181 = sphi 0, %s180
      %s195 = sphi 0, %s181
      %s199 = sphi 0, %s199
      %s201 = sphi 0, %s199
      %s202 = sphi 0, %s201
      %s216 = sphi 0, %s202
      %s222 = sphi 0, %s224
      %s225 = sphi 0, %s222
      %s226 = sphi 0, %s225
      %s242 = sphi 0, %s226
    $region4: #{encoder_forward.1} parent=1 // loop_header_branch
      %21 = sbr.rel (%p19) target = $region8
    $region5: #{encoder_forward.1} parent=1 // loop_body
      %s23 = ssub.s32 %s18, 1
      %s24 = ssub.s32 %s18, 2
      %s25 = sadd.s32 %s18, 1
      %s26 = ssub.s32 %s18, %s25
      %p27 = scmp.eq.s32.totalorder %s26, 0
      %s29 = sadd.s32 %s28, 1
      %s30 = scalar_select %p27, %s28, %s29
      %p33 = pneg %p27
      %p34 = scmp.eq.s32.totalorder %s18, 1
      %p35 = por %p33, %p34
      %p36 = scmp.ne.s32.totalorder %s28, %s31
      %p37 = scmp.eq.s32.totalorder %s18, 0
      %p38 = por %p36, %p37
      %p39 = scmp.ne.s32.totalorder %s28, %s31
      %p40 = scmp.eq.s32.totalorder %s23, 1
      %p41 = por %p39, %p40
      %p42 = scmp.ne.s32.totalorder %s31, %s32
      %p43 = scmp.eq.s32.totalorder %s23, 0
      %p44 = por %p42, %p43
      %p45 = scmp.ne.s32.totalorder %s31, %s32
      %p46 = scmp.eq.s32.totalorder %s24, 1
      %p47 = por %p45, %p46
      %p49 = scmp.ne.s32.totalorder %s32, %s48
      %p50 = scmp.eq.s32.totalorder %s24, 0
      %p51 = por %p49, %p50
      %s53 = sadd.s32 %s52, 1
      %p56 = scmp.eq.s32.totalorder %s18, 1
      %p57 = scmp.ne.s32.totalorder %s52, %s54
      %p58 = scmp.eq.s32.totalorder %s18, 0
      %p59 = por %p57, %p58
      %p60 = scmp.ne.s32.totalorder %s52, %s54
      %p61 = scmp.eq.s32.totalorder %s23, 1
      %p62 = por %p60, %p61
      %p63 = scmp.ne.s32.totalorder %s54, %s55
      %p64 = scmp.eq.s32.totalorder %s23, 0
      %p65 = por %p63, %p64
      %p66 = scmp.ne.s32.totalorder %s54, %s55
      %p67 = scmp.eq.s32.totalorder %s24, 1
      %p68 = por %p66, %p67
      %p70 = scmp.ne.s32.totalorder %s55, %s69
      %p71 = scmp.eq.s32.totalorder %s24, 0
      %p72 = por %p70, %p71
      %s74 = sadd.s32 %s73, 1
      %p77 = scmp.eq.s32.totalorder %s18, 1
      %p78 = scmp.ne.s32.totalorder %s73, %s75
      %p79 = scmp.eq.s32.totalorder %s18, 0
      %p80 = por %p78, %p79
      %p81 = scmp.ne.s32.totalorder %s73, %s75
      %p82 = scmp.eq.s32.totalorder %s23, 1
      %p83 = por %p81, %p82
      %p84 = scmp.ne.s32.totalorder %s75, %s76
      %p85 = scmp.eq.s32.totalorder %s23, 0
      %p86 = por %p84, %p85
      %p87 = scmp.ne.s32.totalorder %s75, %s76
      %p88 = scmp.eq.s32.totalorder %s24, 1
      %p89 = por %p87, %p88
      %p91 = scmp.ne.s32.totalorder %s76, %s90
      %p92 = scmp.eq.s32.totalorder %s24, 0
      %p93 = por %p91, %p92
      %s95 = sadd.s32 %s94, 1
      %p98 = scmp.eq.s32.totalorder %s18, 1
      %p99 = scmp.ne.s32.totalorder %s94, %s96
      %p100 = scmp.eq.s32.totalorder %s18, 0
      %p101 = por %p99, %p100
      %p102 = scmp.ne.s32.totalorder %s94, %s96
      %p103 = scmp.eq.s32.totalorder %s23, 1
      %p104 = por %p102, %p103
      %p105 = scmp.ne.s32.totalorder %s96, %s97
      %p106 = scmp.eq.s32.totalorder %s23, 0
      %p107 = por %p105, %p106
      %p108 = scmp.ne.s32.totalorder %s96, %s97
      %p109 = scmp.eq.s32.totalorder %s24, 1
      %p110 = por %p108, %p109
      %p112 = scmp.ne.s32.totalorder %s97, %s111
      %p113 = scmp.eq.s32.totalorder %s24, 0
      %p114 = por %p112, %p113
      %s116 = sadd.s32 %s115, 1
      %p119 = scmp.eq.s32.totalorder %s18, 1
      %p120 = scmp.ne.s32.totalorder %s115, %s117
      %p121 = scmp.eq.s32.totalorder %s18, 0
      %p122 = por %p120, %p121
      %p123 = scmp.ne.s32.totalorder %s115, %s117
      %p124 = scmp.eq.s32.totalorder %s23, 1
      %p125 = por %p123, %p124
      %p126 = scmp.ne.s32.totalorder %s117, %s118
      %p127 = scmp.eq.s32.totalorder %s23, 0
      %p128 = por %p126, %p127
      %p129 = scmp.ne.s32.totalorder %s117, %s118
      %p130 = scmp.eq.s32.totalorder %s24, 1
      %p131 = por %p129, %p130
      %p133 = scmp.ne.s32.totalorder %s118, %s132
      %p134 = scmp.eq.s32.totalorder %s24, 0
      %p135 = por %p133, %p134
      %s137 = sadd.s32 %s136, 1
      %p140 = scmp.eq.s32.totalorder %s18, 1
      %p141 = scmp.ne.s32.totalorder %s136, %s138
      %p142 = scmp.eq.s32.totalorder %s18, 0
      %p143 = por %p141, %p142
      %p144 = scmp.ne.s32.totalorder %s136, %s138
      %p145 = scmp.eq.s32.totalorder %s23, 1
      %p146 = por %p144, %p145
      %p147 = scmp.ne.s32.totalorder %s138, %s139
      %p148 = scmp.eq.s32.totalorder %s23, 0
      %p149 = por %p147, %p148
      %p150 = scmp.ne.s32.totalorder %s138, %s139
      %p151 = scmp.eq.s32.totalorder %s24, 1
      %p152 = por %p150, %p151
      %p154 = scmp.ne.s32.totalorder %s139, %s153
      %p155 = scmp.eq.s32.totalorder %s24, 0
      %p156 = por %p154, %p155
      %s158 = sadd.s32 %s157, 1
      %p161 = scmp.eq.s32.totalorder %s18, 1
      %p162 = scmp.ne.s32.totalorder %s157, %s159
      %p163 = scmp.eq.s32.totalorder %s18, 0
      %p164 = por %p162, %p163
      %p165 = scmp.ne.s32.totalorder %s157, %s159
      %p166 = scmp.eq.s32.totalorder %s23, 1
      %p167 = por %p165, %p166
      %p168 = scmp.ne.s32.totalorder %s159, %s160
      %p169 = scmp.eq.s32.totalorder %s23, 0
      %p170 = por %p168, %p169
      %p171 = scmp.ne.s32.totalorder %s159, %s160
      %p172 = scmp.eq.s32.totalorder %s24, 1
      %p173 = por %p171, %p172
      %p175 = scmp.ne.s32.totalorder %s160, %s174
      %p176 = scmp.eq.s32.totalorder %s24, 0
      %p177 = por %p175, %p176
      %s179 = sadd.s32 %s178, 1
      %p182 = scmp.eq.s32.totalorder %s18, 1
      %p183 = scmp.ne.s32.totalorder %s178, %s180
      %p184 = scmp.eq.s32.totalorder %s18, 0
      %p185 = por %p183, %p184
      %p186 = scmp.ne.s32.totalorder %s178, %s180
      %p187 = scmp.eq.s32.totalorder %s23, 1
      %p188 = por %p186, %p187
      %p189 = scmp.ne.s32.totalorder %s180, %s181
      %p190 = scmp.eq.s32.totalorder %s23, 0
      %p191 = por %p189, %p190
      %p192 = scmp.ne.s32.totalorder %s180, %s181
      %p193 = scmp.eq.s32.totalorder %s24, 1
      %p194 = por %p192, %p193
      %p196 = scmp.ne.s32.totalorder %s181, %s195
      %p197 = scmp.eq.s32.totalorder %s24, 0
      %p198 = por %p196, %p197
      %s200 = sadd.s32 %s199, 1
      %p203 = scmp.eq.s32.totalorder %s18, 1
      %p204 = scmp.ne.s32.totalorder %s199, %s201
      %p205 = scmp.eq.s32.totalorder %s18, 0
      %p206 = por %p204, %p205
      %p207 = scmp.ne.s32.totalorder %s199, %s201
      %p208 = scmp.eq.s32.totalorder %s23, 1
      %p209 = por %p207, %p208
      %p210 = scmp.ne.s32.totalorder %s201, %s202
      %p211 = scmp.eq.s32.totalorder %s23, 0
      %p212 = por %p210, %p211
      %p213 = scmp.ne.s32.totalorder %s201, %s202
      %p214 = scmp.eq.s32.totalorder %s24, 1
      %p215 = por %p213, %p214
      %p217 = scmp.ne.s32.totalorder %s202, %s216
      %p218 = scmp.eq.s32.totalorder %s24, 0
      %p219 = por %p217, %p218
      %s220 = ssub.s32 %s18, %s25
      %p221 = scmp.eq.s32.totalorder %s220, 0
      %s223 = sadd.s32 %s222, 1
      %s224 = scalar_select %p221, %s222, %s223
      %p227 = pneg %p221
      %p228 = scmp.eq.s32.totalorder %s18, 1
      %p229 = por %p227, %p228
      %p230 = scmp.ne.s32.totalorder %s222, %s225
      %p231 = scmp.eq.s32.totalorder %s18, 0
      %p232 = por %p230, %p231
      %p233 = scmp.ne.s32.totalorder %s222, %s225
      %p234 = scmp.eq.s32.totalorder %s23, 1
      %p235 = por %p233, %p234
      %p236 = scmp.ne.s32.totalorder %s225, %s226
      %p237 = scmp.eq.s32.totalorder %s23, 0
      %p238 = por %p236, %p237
      %p239 = scmp.ne.s32.totalorder %s225, %s226
      %p240 = scmp.eq.s32.totalorder %s24, 1
      %p241 = por %p239, %p240
      %p243 = scmp.ne.s32.totalorder %s226, %s242
      %p244 = scmp.eq.s32.totalorder %s24, 0
      %p245 = por %p243, %p244
      %p246 = scmp.le.s32.totalorder 1, %s18
      %p247 = scmp.lt.s32.totalorder %s18, 3
      %p248 = pnand %p246, %p247
      %p249 = pneg %p248
      // Predicated region
      $region9: #{encoder_forward.1} parent=5 // pred_check
        _
      $region10: #{encoder_forward.1} parent=5 // pred_check_branch
        %251 = sbr.rel (%p248) target = $region12
      $region11: #{encoder_forward.1} parent=5 // pred_region
        %s252 = ssub.s32 %s18, 1
        // Predicated region
        $region13: #{encoder_forward.1} parent=11 // pred_check
          %p253 = pneg %p65
        $region14: #{encoder_forward.1} parent=11 // pred_check_branch
          %255 = sbr.rel (%p253) target = $region16
        $region15: #{encoder_forward.1} parent=11 // pred_region
          _
        $region16: #{encoder_forward.1} parent=11 // pred_fallthru
          _
        // Predicated region
        $region17: #{encoder_forward.1} parent=11 // pred_check
          %p256 = pneg %p86
        $region18: #{encoder_forward.1} parent=11 // pred_check_branch
          %258 = sbr.rel (%p256) target = $region20
        $region19: #{encoder_forward.1} parent=11 // pred_region
          _
        $region20: #{encoder_forward.1} parent=11 // pred_fallthru
          _
        // Predicated region
        $region21: #{encoder_forward.1} parent=11 // pred_check
          %p259 = pneg %p107
        $region22: #{encoder_forward.1} parent=11 // pred_check_branch
          %261 = sbr.rel (%p259) target = $region24
        $region23: #{encoder_forward.1} parent=11 // pred_region
          _
        $region24: #{encoder_forward.1} parent=11 // pred_fallthru
          _
        // Predicated region
        $region25: #{encoder_forward.1} parent=11 // pred_check
          %p262 = pneg %p128
        $region26: #{encoder_forward.1} parent=11 // pred_check_branch
          %264 = sbr.rel (%p262) target = $region28
        $region27: #{encoder_forward.1} parent=11 // pred_region
          _
        $region28: #{encoder_forward.1} parent=11 // pred_fallthru
          _
        // Predicated region
        $region29: #{encoder_forward.1} parent=11 // pred_check
          %p265 = pneg %p149
        $region30: #{encoder_forward.1} parent=11 // pred_check_branch
          %267 = sbr.rel (%p265) target = $region32
        $region31: #{encoder_forward.1} parent=11 // pred_region
          _
        $region32: #{encoder_forward.1} parent=11 // pred_fallthru
          _
        // Predicated region
        $region33: #{encoder_forward.1} parent=11 // pred_check
          %p268 = pneg %p170
        $region34: #{encoder_forward.1} parent=11 // pred_check_branch
          %270 = sbr.rel (%p268) target = $region36
        $region35: #{encoder_forward.1} parent=11 // pred_region
          _
        $region36: #{encoder_forward.1} parent=11 // pred_fallthru
          _
        // Predicated region
        $region37: #{encoder_forward.1} parent=11 // pred_check
          %p271 = pneg %p191
        $region38: #{encoder_forward.1} parent=11 // pred_check_branch
          %273 = sbr.rel (%p271) target = $region40
        $region39: #{encoder_forward.1} parent=11 // pred_region
          _
        $region40: #{encoder_forward.1} parent=11 // pred_fallthru
          _
        // Predicated region
        $region41: #{encoder_forward.1} parent=11 // pred_check
          %p274 = pneg %p212
        $region42: #{encoder_forward.1} parent=11 // pred_check_branch
          %276 = sbr.rel (%p274) target = $region44
        $region43: #{encoder_forward.1} parent=11 // pred_region
          _
        $region44: #{encoder_forward.1} parent=11 // pred_fallthru
          _
      $region12: #{encoder_forward.1} parent=5 // pred_fallthru
        _
      %p277 = scmp.lt.s32.totalorder %s18, 2
      // Predicated region
      $region45: #{encoder_forward.1} parent=5 // pred_check
        %p278 = pneg %p277
      $region46: #{encoder_forward.1} parent=5 // pred_check_branch
        %280 = sbr.rel (%p278) target = $region48
      $region47: #{encoder_forward.1} parent=5 // pred_region
        // Predicated region
        $region49: #{encoder_forward.1} parent=47 // pred_check
          %p281 = pneg %p38
        $region50: #{encoder_forward.1} parent=47 // pred_check_branch
          %283 = sbr.rel (%p281) target = $region52
        $region51: #{encoder_forward.1} parent=47 // pred_region
          %p284 = scmp.lt.s32.totalorder %s18, 1
          %s285 = scalar_select %p284, %s18, 1
          %s286 = smul.addr %s285, 288
          %s287 = smul.addr %s286, 4
          %s288 = scalar_lea.vmem %s0, %s287
        $region52: #{encoder_forward.1} parent=47 // pred_fallthru
          _
      $region48: #{encoder_forward.1} parent=5 // pred_fallthru
        _
      %p289 = scmp.le.s32.totalorder 1, %s18
      %p290 = scmp.lt.s32.totalorder %s18, 3
      %p291 = pnand %p289, %p290
      %p292 = pneg %p291
      // Predicated region
      $region53: #{encoder_forward.1} parent=5 // pred_check
        _
      $region54: #{encoder_forward.1} parent=5 // pred_check_branch
        %294 = sbr.rel (%p291) target = $region56
      $region55: #{encoder_forward.1} parent=5 // pred_region
        %s295 = ssub.s32 %s18, 1
        %p296 = scmp.lt.s32.totalorder %s23, 1
        %s297 = scalar_select %p296, %s23, 1
        %s298 = smul.addr %s297, 288
        %s299 = smul.addr %s298, 4
        %s300 = scalar_lea.vmem %s0, %s299
        %p301 = pneg %p44
        %p302 = pneg %p41
        %p303 = pneg %p65
        %p304 = pneg %p62
        %p305 = pneg %p86
        %p306 = pneg %p83
        %p307 = pneg %p107
        %p308 = pneg %p104
        %p309 = pneg %p128
        %p310 = pneg %p125
        %p311 = pneg %p149
        %p312 = pneg %p146
        %p313 = pneg %p170
        %p314 = pneg %p167
        %p315 = pneg %p191
        %p316 = pneg %p188
        %p317 = pneg %p212
        %p318 = pneg %p209
        %p319 = pneg %p238
        %p320 = pneg %p235
        %s321 = sand.u32 %s225, 1
        %s322 = scalar_lea.sflag [#allocation5], %s321
        %s323 = sand.u32 %s225, 1
        %s324 = scalar_lea.vmem [#allocation4], %s323
        %p325 = scmp.lt.s32.totalorder %s23, 1
        %s326 = scalar_select %p325, %s23, 1
        %s327 = smul.addr %s326, 288
        %s328 = smul.addr %s327, 4
        %s329 = scalar_lea.vmem %s0, %s328
        %v331 = vld [vmem:[%s329] sm:$0xf]
        %v332 = vld [vmem:[%s329 + $0x8] sm:$0xf]
        %v333 = vld [vmem:[%s329 + $0x10] sm:$0xf]
        %v334 = vld [vmem:[%s329 + $0x18] sm:$0xf]
        %v335 = vld [vmem:[%s329 + $0x20] sm:$0xf]
        %v336 = vld [vmem:[%s329 + $0x28] sm:$0xf]
        %v337 = vld [vmem:[%s329 + $0x30] sm:$0xf]
        %v338 = vld [vmem:[%s329 + $0x38] sm:$0xf]
        %s339 = scalar_lea.vmem %s329, 72
        %v340 = vld [vmem:[%s339] sm:$0xf]
        %v341 = vld [vmem:[%s339 + $0x8] sm:$0xf]
        %v342 = vld [vmem:[%s339 + $0x10] sm:$0xf]
        %v343 = vld [vmem:[%s339 + $0x18] sm:$0xf]
        %v344 = vld [vmem:[%s339 + $0x20] sm:$0xf]
        %v345 = vld [vmem:[%s339 + $0x28] sm:$0xf]
        %v346 = vld [vmem:[%s339 + $0x30] sm:$0xf]
        %v347 = vld [vmem:[%s339 + $0x38] sm:$0xf]
        %s348 = scalar_lea.vmem %s329, 144
        %v349 = vld [vmem:[%s348] sm:$0xf]
        %v350 = vld [vmem:[%s348 + $0x8] sm:$0xf]
        %v351 = vld [vmem:[%s348 + $0x10] sm:$0xf]
        %v352 = vld [vmem:[%s348 + $0x18] sm:$0xf]
        %v353 = vld [vmem:[%s348 + $0x20] sm:$0xf]
        %v354 = vld [vmem:[%s348 + $0x28] sm:$0xf]
        %v355 = vld [vmem:[%s348 + $0x30] sm:$0xf]
        %v356 = vld [vmem:[%s348 + $0x38] sm:$0xf]
        %s357 = scalar_lea.vmem %s329, 216
        %v358 = vld [vmem:[%s357] sm:$0xf]
        %v359 = vld [vmem:[%s357 + $0x8] sm:$0xf]
        %v360 = vld [vmem:[%s357 + $0x10] sm:$0xf]
        %v361 = vld [vmem:[%s357 + $0x18] sm:$0xf]
        %v362 = vld [vmem:[%s357 + $0x20] sm:$0xf]
        %v363 = vld [vmem:[%s357 + $0x28] sm:$0xf]
        %v364 = vld [vmem:[%s357 + $0x30] sm:$0xf]
        %v365 = vld [vmem:[%s357 + $0x38] sm:$0xf]
        %s366 = scalar_lea.vmem %s329, 288
        %v367 = vld [vmem:[%s366] sm:$0xf]
        %v368 = vld [vmem:[%s366 + $0x8] sm:$0xf]
        %v369 = vld [vmem:[%s366 + $0x10] sm:$0xf]
        %v370 = vld [vmem:[%s366 + $0x18] sm:$0xf]
        %v371 = vld [vmem:[%s366 + $0x20] sm:$0xf]
        %v372 = vld [vmem:[%s366 + $0x28] sm:$0xf]
        %v373 = vld [vmem:[%s366 + $0x30] sm:$0xf]
        %v374 = vld [vmem:[%s366 + $0x38] sm:$0xf]
        %s375 = scalar_lea.vmem %s329, 360
        %v376 = vld [vmem:[%s375] sm:$0xf]
        %v377 = vld [vmem:[%s375 + $0x8] sm:$0xf]
        %v378 = vld [vmem:[%s375 + $0x10] sm:$0xf]
        %v379 = vld [vmem:[%s375 + $0x18] sm:$0xf]
        %v380 = vld [vmem:[%s375 + $0x20] sm:$0xf]
        %v381 = vld [vmem:[%s375 + $0x28] sm:$0xf]
        %v382 = vld [vmem:[%s375 + $0x30] sm:$0xf]
        %v383 = vld [vmem:[%s375 + $0x38] sm:$0xf]
        %s384 = scalar_lea.vmem %s329, 432
        %v385 = vld [vmem:[%s384] sm:$0xf]
        %v386 = vld [vmem:[%s384 + $0x8] sm:$0xf]
        %v387 = vld [vmem:[%s384 + $0x10] sm:$0xf]
        %v388 = vld [vmem:[%s384 + $0x18] sm:$0xf]
        %v389 = vld [vmem:[%s384 + $0x20] sm:$0xf]
        %v390 = vld [vmem:[%s384 + $0x28] sm:$0xf]
        %v391 = vld [vmem:[%s384 + $0x30] sm:$0xf]
        %v392 = vld [vmem:[%s384 + $0x38] sm:$0xf]
        %s393 = scalar_lea.vmem %s329, 504
        %v394 = vld [vmem:[%s393] sm:$0xf]
        %v395 = vld [vmem:[%s393 + $0x8] sm:$0xf]
        %v396 = vld [vmem:[%s393 + $0x10] sm:$0xf]
        %v397 = vld [vmem:[%s393 + $0x18] sm:$0xf]
        %v398 = vld [vmem:[%s393 + $0x20] sm:$0xf]
        %v399 = vld [vmem:[%s393 + $0x28] sm:$0xf]
        %v400 = vld [vmem:[%s393 + $0x30] sm:$0xf]
        %v401 = vld [vmem:[%s393 + $0x38] sm:$0xf]
        %s402 = scalar_lea.vmem %s329, 576
        %v403 = vld [vmem:[%s402] sm:$0xf]
        %v404 = vld [vmem:[%s402 + $0x8] sm:$0xf]
        %v405 = vld [vmem:[%s402 + $0x10] sm:$0xf]
        %v406 = vld [vmem:[%s402 + $0x18] sm:$0xf]
        %v407 = vld [vmem:[%s402 + $0x20] sm:$0xf]
        %v408 = vld [vmem:[%s402 + $0x28] sm:$0xf]
        %v409 = vld [vmem:[%s402 + $0x30] sm:$0xf]
        %v410 = vld [vmem:[%s402 + $0x38] sm:$0xf]
        %s411 = scalar_lea.vmem %s329, 648
        %v412 = vld [vmem:[%s411] sm:$0xf]
        %v413 = vld [vmem:[%s411 + $0x8] sm:$0xf]
        %v414 = vld [vmem:[%s411 + $0x10] sm:$0xf]
        %v415 = vld [vmem:[%s411 + $0x18] sm:$0xf]
        %v416 = vld [vmem:[%s411 + $0x20] sm:$0xf]
        %v417 = vld [vmem:[%s411 + $0x28] sm:$0xf]
        %v418 = vld [vmem:[%s411 + $0x30] sm:$0xf]
        %v419 = vld [vmem:[%s411 + $0x38] sm:$0xf]
        %s420 = scalar_lea.vmem %s329, 720
        %v421 = vld [vmem:[%s420] sm:$0xf]
        %v422 = vld [vmem:[%s420 + $0x8] sm:$0xf]
        %v423 = vld [vmem:[%s420 + $0x10] sm:$0xf]
        %v424 = vld [vmem:[%s420 + $0x18] sm:$0xf]
        %v425 = vld [vmem:[%s420 + $0x20] sm:$0xf]
        %v426 = vld [vmem:[%s420 + $0x28] sm:$0xf]
        %v427 = vld [vmem:[%s420 + $0x30] sm:$0xf]
        %v428 = vld [vmem:[%s420 + $0x38] sm:$0xf]
        %s429 = scalar_lea.vmem %s329, 792
        %v430 = vld [vmem:[%s429] sm:$0xf]
        %v431 = vld [vmem:[%s429 + $0x8] sm:$0xf]
        %v432 = vld [vmem:[%s429 + $0x10] sm:$0xf]
        %v433 = vld [vmem:[%s429 + $0x18] sm:$0xf]
        %v434 = vld [vmem:[%s429 + $0x20] sm:$0xf]
        %v435 = vld [vmem:[%s429 + $0x28] sm:$0xf]
        %v436 = vld [vmem:[%s429 + $0x30] sm:$0xf]
        %v437 = vld [vmem:[%s429 + $0x38] sm:$0xf]
        %s438 = scalar_lea.vmem %s329, 864
        %v439 = vld [vmem:[%s438] sm:$0xf]
        %v440 = vld [vmem:[%s438 + $0x8] sm:$0xf]
        %v441 = vld [vmem:[%s438 + $0x10] sm:$0xf]
        %v442 = vld [vmem:[%s438 + $0x18] sm:$0xf]
        %v443 = vld [vmem:[%s438 + $0x20] sm:$0xf]
        %v444 = vld [vmem:[%s438 + $0x28] sm:$0xf]
        %v445 = vld [vmem:[%s438 + $0x30] sm:$0xf]
        %v446 = vld [vmem:[%s438 + $0x38] sm:$0xf]
        %s447 = scalar_lea.vmem %s329, 936
        %v448 = vld [vmem:[%s447] sm:$0xf]
        %v449 = vld [vmem:[%s447 + $0x8] sm:$0xf]
        %v450 = vld [vmem:[%s447 + $0x10] sm:$0xf]
        %v451 = vld [vmem:[%s447 + $0x18] sm:$0xf]
        %v452 = vld [vmem:[%s447 + $0x20] sm:$0xf]
        %v453 = vld [vmem:[%s447 + $0x28] sm:$0xf]
        %v454 = vld [vmem:[%s447 + $0x30] sm:$0xf]
        %v455 = vld [vmem:[%s447 + $0x38] sm:$0xf]
        %s456 = scalar_lea.vmem %s329, 1008
        %v457 = vld [vmem:[%s456] sm:$0xf]
        %v458 = vld [vmem:[%s456 + $0x8] sm:$0xf]
        %v459 = vld [vmem:[%s456 + $0x10] sm:$0xf]
        %v460 = vld [vmem:[%s456 + $0x18] sm:$0xf]
        %v461 = vld [vmem:[%s456 + $0x20] sm:$0xf]
        %v462 = vld [vmem:[%s456 + $0x28] sm:$0xf]
        %v463 = vld [vmem:[%s456 + $0x30] sm:$0xf]
        %v464 = vld [vmem:[%s456 + $0x38] sm:$0xf]
        %s465 = scalar_lea.vmem %s329, 1080
        %v466 = vld [vmem:[%s465] sm:$0xf]
        %v467 = vld [vmem:[%s465 + $0x8] sm:$0xf]
        %v468 = vld [vmem:[%s465 + $0x10] sm:$0xf]
        %v469 = vld [vmem:[%s465 + $0x18] sm:$0xf]
        %v470 = vld [vmem:[%s465 + $0x20] sm:$0xf]
        %v471 = vld [vmem:[%s465 + $0x28] sm:$0xf]
        %v472 = vld [vmem:[%s465 + $0x30] sm:$0xf]
        %v473 = vld [vmem:[%s465 + $0x38] sm:$0xf]
        %v482 = vunpack.c.l.b16 %v340
        %v483 = vunpack.c.l.b16 %v341
        %v484 = vunpack.c.l.b16 %v342
        %v485 = vunpack.c.l.b16 %v343
        %v486 = vunpack.c.l.b16 %v344
        %v487 = vunpack.c.l.b16 %v345
        %v488 = vunpack.c.l.b16 %v346
        %v489 = vunpack.c.l.b16 %v347
        %v490 = vpack.c.b16 %v482, %v482
        %v491 = vpack.c.b16 %v483, %v483
        %v492 = vpack.c.b16 %v484, %v484
        %v493 = vpack.c.b16 %v485, %v485
        %v494 = vpack.c.b16 %v486, %v486
        %v495 = vpack.c.b16 %v487, %v487
        %v496 = vpack.c.b16 %v488, %v488
        %v497 = vpack.c.b16 %v489, %v489
        %498 = vrot.lane.b32.xlu0 %v490, 4
        %v499 = vpop.permute.xlu0 %498
        %500 = vrot.lane.b32.xlu0 %v491, 4
        %v501 = vpop.permute.xlu0 %500
        %502 = vrot.lane.b32.xlu0 %v492, 4
        %v503 = vpop.permute.xlu0 %502
        %504 = vrot.lane.b32.xlu0 %v493, 4
        %v505 = vpop.permute.xlu0 %504
        %506 = vrot.lane.b32.xlu0 %v494, 4
        %v507 = vpop.permute.xlu0 %506
        %508 = vrot.lane.b32.xlu0 %v495, 4
        %v509 = vpop.permute.xlu0 %508
        %510 = vrot.lane.b32.xlu0 %v496, 4
        %v511 = vpop.permute.xlu0 %510
        %512 = vrot.lane.b32.xlu0 %v497, 4
        %v513 = vpop.permute.xlu0 %512
        %v522 = vunpack.c.l.b16 %v349
        %v523 = vunpack.c.l.b16 %v350
        %v524 = vunpack.c.l.b16 %v351
        %v525 = vunpack.c.l.b16 %v352
        %v526 = vunpack.c.l.b16 %v353
        %v527 = vunpack.c.l.b16 %v354
        %v528 = vunpack.c.l.b16 %v355
        %v529 = vunpack.c.l.b16 %v356
        %v530 = vpack.c.b16 %v522, %v522
        %v531 = vpack.c.b16 %v523, %v523
        %v532 = vpack.c.b16 %v524, %v524
        %v533 = vpack.c.b16 %v525, %v525
        %v534 = vpack.c.b16 %v526, %v526
        %v535 = vpack.c.b16 %v527, %v527
        %v536 = vpack.c.b16 %v528, %v528
        %v537 = vpack.c.b16 %v529, %v529
        %538 = vrot.lane.b32.xlu0 %v530, 8
        %v539 = vpop.permute.xlu0 %538
        %540 = vrot.lane.b32.xlu0 %v531, 8
        %v541 = vpop.permute.xlu0 %540
        %542 = vrot.lane.b32.xlu0 %v532, 8
        %v543 = vpop.permute.xlu0 %542
        %544 = vrot.lane.b32.xlu0 %v533, 8
        %v545 = vpop.permute.xlu0 %544
        %546 = vrot.lane.b32.xlu0 %v534, 8
        %v547 = vpop.permute.xlu0 %546
        %548 = vrot.lane.b32.xlu0 %v535, 8
        %v549 = vpop.permute.xlu0 %548
        %550 = vrot.lane.b32.xlu0 %v536, 8
        %v551 = vpop.permute.xlu0 %550
        %552 = vrot.lane.b32.xlu0 %v537, 8
        %v553 = vpop.permute.xlu0 %552
        %v562 = vunpack.c.l.b16 %v358
        %v563 = vunpack.c.l.b16 %v359
        %v564 = vunpack.c.l.b16 %v360
        %v565 = vunpack.c.l.b16 %v361
        %v566 = vunpack.c.l.b16 %v362
        %v567 = vunpack.c.l.b16 %v363
        %v568 = vunpack.c.l.b16 %v364
        %v569 = vunpack.c.l.b16 %v365
        %v570 = vpack.c.b16 %v562, %v562
        %v571 = vpack.c.b16 %v563, %v563
        %v572 = vpack.c.b16 %v564, %v564
        %v573 = vpack.c.b16 %v565, %v565
        %v574 = vpack.c.b16 %v566, %v566
        %v575 = vpack.c.b16 %v567, %v567
        %v576 = vpack.c.b16 %v568, %v568
        %v577 = vpack.c.b16 %v569, %v569
        %578 = vrot.lane.b32.xlu0 %v570, 12
        %v579 = vpop.permute.xlu0 %578
        %580 = vrot.lane.b32.xlu0 %v571, 12
        %v581 = vpop.permute.xlu0 %580
        %582 = vrot.lane.b32.xlu0 %v572, 12
        %v583 = vpop.permute.xlu0 %582
        %584 = vrot.lane.b32.xlu0 %v573, 12
        %v585 = vpop.permute.xlu0 %584
        %586 = vrot.lane.b32.xlu0 %v574, 12
        %v587 = vpop.permute.xlu0 %586
        %588 = vrot.lane.b32.xlu0 %v575, 12
        %v589 = vpop.permute.xlu0 %588
        %590 = vrot.lane.b32.xlu0 %v576, 12
        %v591 = vpop.permute.xlu0 %590
        %592 = vrot.lane.b32.xlu0 %v577, 12
        %v593 = vpop.permute.xlu0 %592
        %v602 = vunpack.c.l.b16 %v367
        %v603 = vunpack.c.l.b16 %v368
        %v604 = vunpack.c.l.b16 %v369
        %v605 = vunpack.c.l.b16 %v370
        %v606 = vunpack.c.l.b16 %v371
        %v607 = vunpack.c.l.b16 %v372
        %v608 = vunpack.c.l.b16 %v373
        %v609 = vunpack.c.l.b16 %v374
        %v610 = vpack.c.b16 %v602, %v602
        %v611 = vpack.c.b16 %v603, %v603
        %v612 = vpack.c.b16 %v604, %v604
        %v613 = vpack.c.b16 %v605, %v605
        %v614 = vpack.c.b16 %v606, %v606
        %v615 = vpack.c.b16 %v607, %v607
        %v616 = vpack.c.b16 %v608, %v608
        %v617 = vpack.c.b16 %v609, %v609
        %618 = vrot.lane.b32.xlu0 %v610, 16
        %v619 = vpop.permute.xlu0 %618
        %620 = vrot.lane.b32.xlu0 %v611, 16
        %v621 = vpop.permute.xlu0 %620
        %622 = vrot.lane.b32.xlu0 %v612, 16
        %v623 = vpop.permute.xlu0 %622
        %624 = vrot.lane.b32.xlu0 %v613, 16
        %v625 = vpop.permute.xlu0 %624
        %626 = vrot.lane.b32.xlu0 %v614, 16
        %v627 = vpop.permute.xlu0 %626
        %628 = vrot.lane.b32.xlu0 %v615, 16
        %v629 = vpop.permute.xlu0 %628
        %630 = vrot.lane.b32.xlu0 %v616, 16
        %v631 = vpop.permute.xlu0 %630
        %632 = vrot.lane.b32.xlu0 %v617, 16
        %v633 = vpop.permute.xlu0 %632
        %v642 = vunpack.c.l.b16 %v376
        %v643 = vunpack.c.l.b16 %v377
        %v644 = vunpack.c.l.b16 %v378
        %v645 = vunpack.c.l.b16 %v379
        %v646 = vunpack.c.l.b16 %v380
        %v647 = vunpack.c.l.b16 %v381
        %v648 = vunpack.c.l.b16 %v382
        %v649 = vunpack.c.l.b16 %v383
        %v650 = vpack.c.b16 %v642, %v642
        %v651 = vpack.c.b16 %v643, %v643
        %v652 = vpack.c.b16 %v644, %v644
        %v653 = vpack.c.b16 %v645, %v645
        %v654 = vpack.c.b16 %v646, %v646
        %v655 = vpack.c.b16 %v647, %v647
        %v656 = vpack.c.b16 %v648, %v648
        %v657 = vpack.c.b16 %v649, %v649
        %658 = vrot.lane.b32.xlu0 %v650, 20
        %v659 = vpop.permute.xlu0 %658
        %660 = vrot.lane.b32.xlu0 %v651, 20
        %v661 = vpop.permute.xlu0 %660
        %662 = vrot.lane.b32.xlu0 %v652, 20
        %v663 = vpop.permute.xlu0 %662
        %664 = vrot.lane.b32.xlu0 %v653, 20
        %v665 = vpop.permute.xlu0 %664
        %666 = vrot.lane.b32.xlu0 %v654, 20
        %v667 = vpop.permute.xlu0 %666
        %668 = vrot.lane.b32.xlu0 %v655, 20
        %v669 = vpop.permute.xlu0 %668
        %670 = vrot.lane.b32.xlu0 %v656, 20
        %v671 = vpop.permute.xlu0 %670
        %672 = vrot.lane.b32.xlu0 %v657, 20
        %v673 = vpop.permute.xlu0 %672
        %v682 = vunpack.c.l.b16 %v385
        %v683 = vunpack.c.l.b16 %v386
        %v684 = vunpack.c.l.b16 %v387
        %v685 = vunpack.c.l.b16 %v388
        %v686 = vunpack.c.l.b16 %v389
        %v687 = vunpack.c.l.b16 %v390
        %v688 = vunpack.c.l.b16 %v391
        %v689 = vunpack.c.l.b16 %v392
        %v690 = vpack.c.b16 %v682, %v682
        %v691 = vpack.c.b16 %v683, %v683
        %v692 = vpack.c.b16 %v684, %v684
        %v693 = vpack.c.b16 %v685, %v685
        %v694 = vpack.c.b16 %v686, %v686
        %v695 = vpack.c.b16 %v687, %v687
        %v696 = vpack.c.b16 %v688, %v688
        %v697 = vpack.c.b16 %v689, %v689
        %698 = vrot.lane.b32.xlu0 %v690, 24
        %v699 = vpop.permute.xlu0 %698
        %700 = vrot.lane.b32.xlu0 %v691, 24
        %v701 = vpop.permute.xlu0 %700
        %702 = vrot.lane.b32.xlu0 %v692, 24
        %v703 = vpop.permute.xlu0 %702
        %704 = vrot.lane.b32.xlu0 %v693, 24
        %v705 = vpop.permute.xlu0 %704
        %706 = vrot.lane.b32.xlu0 %v694, 24
        %v707 = vpop.permute.xlu0 %706
        %708 = vrot.lane.b32.xlu0 %v695, 24
        %v709 = vpop.permute.xlu0 %708
        %710 = vrot.lane.b32.xlu0 %v696, 24
        %v711 = vpop.permute.xlu0 %710
        %712 = vrot.lane.b32.xlu0 %v697, 24
        %v713 = vpop.permute.xlu0 %712
        %v722 = vunpack.c.l.b16 %v394
        %v723 = vunpack.c.l.b16 %v395
        %v724 = vunpack.c.l.b16 %v396
        %v725 = vunpack.c.l.b16 %v397
        %v726 = vunpack.c.l.b16 %v398
        %v727 = vunpack.c.l.b16 %v399
        %v728 = vunpack.c.l.b16 %v400
        %v729 = vunpack.c.l.b16 %v401
        %v730 = vpack.c.b16 %v722, %v722
        %v731 = vpack.c.b16 %v723, %v723
        %v732 = vpack.c.b16 %v724, %v724
        %v733 = vpack.c.b16 %v725, %v725
        %v734 = vpack.c.b16 %v726, %v726
        %v735 = vpack.c.b16 %v727, %v727
        %v736 = vpack.c.b16 %v728, %v728
        %v737 = vpack.c.b16 %v729, %v729
        %738 = vrot.lane.b32.xlu0 %v730, 28
        %v739 = vpop.permute.xlu0 %738
        %740 = vrot.lane.b32.xlu0 %v731, 28
        %v741 = vpop.permute.xlu0 %740
        %742 = vrot.lane.b32.xlu0 %v732, 28
        %v743 = vpop.permute.xlu0 %742
        %744 = vrot.lane.b32.xlu0 %v733, 28
        %v745 = vpop.permute.xlu0 %744
        %746 = vrot.lane.b32.xlu0 %v734, 28
        %v747 = vpop.permute.xlu0 %746
        %748 = vrot.lane.b32.xlu0 %v735, 28
        %v749 = vpop.permute.xlu0 %748
        %750 = vrot.lane.b32.xlu0 %v736, 28
        %v751 = vpop.permute.xlu0 %750
        %752 = vrot.lane.b32.xlu0 %v737, 28
        %v753 = vpop.permute.xlu0 %752
        %v762 = vunpack.c.l.b16 %v403
        %v763 = vunpack.c.l.b16 %v404
        %v764 = vunpack.c.l.b16 %v405
        %v765 = vunpack.c.l.b16 %v406
        %v766 = vunpack.c.l.b16 %v407
        %v767 = vunpack.c.l.b16 %v408
        %v768 = vunpack.c.l.b16 %v409
        %v769 = vunpack.c.l.b16 %v410
        %v770 = vpack.c.b16 %v762, %v762
        %v771 = vpack.c.b16 %v763, %v763
        %v772 = vpack.c.b16 %v764, %v764
        %v773 = vpack.c.b16 %v765, %v765
        %v774 = vpack.c.b16 %v766, %v766
        %v775 = vpack.c.b16 %v767, %v767
        %v776 = vpack.c.b16 %v768, %v768
        %v777 = vpack.c.b16 %v769, %v769
        %778 = vrot.lane.b32.xlu0 %v770, 32
        %v779 = vpop.permute.xlu0 %778
        %780 = vrot.lane.b32.xlu0 %v771, 32
        %v781 = vpop.permute.xlu0 %780
        %782 = vrot.lane.b32.xlu0 %v772, 32
        %v783 = vpop.permute.xlu0 %782
        %784 = vrot.lane.b32.xlu0 %v773, 32
        %v785 = vpop.permute.xlu0 %784
        %786 = vrot.lane.b32.xlu0 %v774, 32
        %v787 = vpop.permute.xlu0 %786
        %788 = vrot.lane.b32.xlu0 %v775, 32
        %v789 = vpop.permute.xlu0 %788
        %790 = vrot.lane.b32.xlu0 %v776, 32
        %v791 = vpop.permute.xlu0 %790
        %792 = vrot.lane.b32.xlu0 %v777, 32
        %v793 = vpop.permute.xlu0 %792
        %v802 = vunpack.c.l.b16 %v412
        %v803 = vunpack.c.l.b16 %v413
        %v804 = vunpack.c.l.b16 %v414
        %v805 = vunpack.c.l.b16 %v415
        %v806 = vunpack.c.l.b16 %v416
        %v807 = vunpack.c.l.b16 %v417
        %v808 = vunpack.c.l.b16 %v418
        %v809 = vunpack.c.l.b16 %v419
        %v810 = vpack.c.b16 %v802, %v802
        %v811 = vpack.c.b16 %v803, %v803
        %v812 = vpack.c.b16 %v804, %v804
        %v813 = vpack.c.b16 %v805, %v805
        %v814 = vpack.c.b16 %v806, %v806
        %v815 = vpack.c.b16 %v807, %v807
        %v816 = vpack.c.b16 %v808, %v808
        %v817 = vpack.c.b16 %v809, %v809
        %818 = vrot.lane.b32.xlu0 %v810, 36
        %v819 = vpop.permute.xlu0 %818
        %820 = vrot.lane.b32.xlu0 %v811, 36
        %v821 = vpop.permute.xlu0 %820
        %822 = vrot.lane.b32.xlu0 %v812, 36
        %v823 = vpop.permute.xlu0 %822
        %824 = vrot.lane.b32.xlu0 %v813, 36
        %v825 = vpop.permute.xlu0 %824
        %826 = vrot.lane.b32.xlu0 %v814, 36
        %v827 = vpop.permute.xlu0 %826
        %828 = vrot.lane.b32.xlu0 %v815, 36
        %v829 = vpop.permute.xlu0 %828
        %830 = vrot.lane.b32.xlu0 %v816, 36
        %v831 = vpop.permute.xlu0 %830
        %832 = vrot.lane.b32.xlu0 %v817, 36
        %v833 = vpop.permute.xlu0 %832
        %v842 = vunpack.c.l.b16 %v421
        %v843 = vunpack.c.l.b16 %v422
        %v844 = vunpack.c.l.b16 %v423
        %v845 = vunpack.c.l.b16 %v424
        %v846 = vunpack.c.l.b16 %v425
        %v847 = vunpack.c.l.b16 %v426
        %v848 = vunpack.c.l.b16 %v427
        %v849 = vunpack.c.l.b16 %v428
        %v850 = vpack.c.b16 %v842, %v842
        %v851 = vpack.c.b16 %v843, %v843
        %v852 = vpack.c.b16 %v844, %v844
        %v853 = vpack.c.b16 %v845, %v845
        %v854 = vpack.c.b16 %v846, %v846
        %v855 = vpack.c.b16 %v847, %v847
        %v856 = vpack.c.b16 %v848, %v848
        %v857 = vpack.c.b16 %v849, %v849
        %858 = vrot.lane.b32.xlu0 %v850, 40
        %v859 = vpop.permute.xlu0 %858
        %860 = vrot.lane.b32.xlu0 %v851, 40
        %v861 = vpop.permute.xlu0 %860
        %862 = vrot.lane.b32.xlu0 %v852, 40
        %v863 = vpop.permute.xlu0 %862
        %864 = vrot.lane.b32.xlu0 %v853, 40
        %v865 = vpop.permute.xlu0 %864
        %866 = vrot.lane.b32.xlu0 %v854, 40
        %v867 = vpop.permute.xlu0 %866
        %868 = vrot.lane.b32.xlu0 %v855, 40
        %v869 = vpop.permute.xlu0 %868
        %870 = vrot.lane.b32.xlu0 %v856, 40
        %v871 = vpop.permute.xlu0 %870
        %872 = vrot.lane.b32.xlu0 %v857, 40
        %v873 = vpop.permute.xlu0 %872
        %v882 = vunpack.c.l.b16 %v430
        %v883 = vunpack.c.l.b16 %v431
        %v884 = vunpack.c.l.b16 %v432
        %v885 = vunpack.c.l.b16 %v433
        %v886 = vunpack.c.l.b16 %v434
        %v887 = vunpack.c.l.b16 %v435
        %v888 = vunpack.c.l.b16 %v436
        %v889 = vunpack.c.l.b16 %v437
        %v890 = vpack.c.b16 %v882, %v882
        %v891 = vpack.c.b16 %v883, %v883
        %v892 = vpack.c.b16 %v884, %v884
        %v893 = vpack.c.b16 %v885, %v885
        %v894 = vpack.c.b16 %v886, %v886
        %v895 = vpack.c.b16 %v887, %v887
        %v896 = vpack.c.b16 %v888, %v888
        %v897 = vpack.c.b16 %v889, %v889
        %898 = vrot.lane.b32.xlu0 %v890, 44
        %v899 = vpop.permute.xlu0 %898
        %900 = vrot.lane.b32.xlu0 %v891, 44
        %v901 = vpop.permute.xlu0 %900
        %902 = vrot.lane.b32.xlu0 %v892, 44
        %v903 = vpop.permute.xlu0 %902
        %904 = vrot.lane.b32.xlu0 %v893, 44
        %v905 = vpop.permute.xlu0 %904
        %906 = vrot.lane.b32.xlu0 %v894, 44
        %v907 = vpop.permute.xlu0 %906
        %908 = vrot.lane.b32.xlu0 %v895, 44
        %v909 = vpop.permute.xlu0 %908
        %910 = vrot.lane.b32.xlu0 %v896, 44
        %v911 = vpop.permute.xlu0 %910
        %912 = vrot.lane.b32.xlu0 %v897, 44
        %v913 = vpop.permute.xlu0 %912
        %v922 = vunpack.c.l.b16 %v439
        %v923 = vunpack.c.l.b16 %v440
        %v924 = vunpack.c.l.b16 %v441
        %v925 = vunpack.c.l.b16 %v442
        %v926 = vunpack.c.l.b16 %v443
        %v927 = vunpack.c.l.b16 %v444
        %v928 = vunpack.c.l.b16 %v445
        %v929 = vunpack.c.l.b16 %v446
        %v930 = vpack.c.b16 %v922, %v922
        %v931 = vpack.c.b16 %v923, %v923
        %v932 = vpack.c.b16 %v924, %v924
        %v933 = vpack.c.b16 %v925, %v925
        %v934 = vpack.c.b16 %v926, %v926
        %v935 = vpack.c.b16 %v927, %v927
        %v936 = vpack.c.b16 %v928, %v928
        %v937 = vpack.c.b16 %v929, %v929
        %938 = vrot.lane.b32.xlu0 %v930, 48
        %v939 = vpop.permute.xlu0 %938
        %940 = vrot.lane.b32.xlu0 %v931, 48
        %v941 = vpop.permute.xlu0 %940
        %942 = vrot.lane.b32.xlu0 %v932, 48
        %v943 = vpop.permute.xlu0 %942
        %944 = vrot.lane.b32.xlu0 %v933, 48
        %v945 = vpop.permute.xlu0 %944
        %946 = vrot.lane.b32.xlu0 %v934, 48
        %v947 = vpop.permute.xlu0 %946
        %948 = vrot.lane.b32.xlu0 %v935, 48
        %v949 = vpop.permute.xlu0 %948
        %950 = vrot.lane.b32.xlu0 %v936, 48
        %v951 = vpop.permute.xlu0 %950
        %952 = vrot.lane.b32.xlu0 %v937, 48
        %v953 = vpop.permute.xlu0 %952
        %v962 = vunpack.c.l.b16 %v448
        %v963 = vunpack.c.l.b16 %v449
        %v964 = vunpack.c.l.b16 %v450
        %v965 = vunpack.c.l.b16 %v451
        %v966 = vunpack.c.l.b16 %v452
        %v967 = vunpack.c.l.b16 %v453
        %v968 = vunpack.c.l.b16 %v454
        %v969 = vunpack.c.l.b16 %v455
        %v970 = vpack.c.b16 %v962, %v962
        %v971 = vpack.c.b16 %v963, %v963
        %v972 = vpack.c.b16 %v964, %v964
        %v973 = vpack.c.b16 %v965, %v965
        %v974 = vpack.c.b16 %v966, %v966
        %v975 = vpack.c.b16 %v967, %v967
        %v976 = vpack.c.b16 %v968, %v968
        %v977 = vpack.c.b16 %v969, %v969
        %978 = vrot.lane.b32.xlu0 %v970, 52
        %v979 = vpop.permute.xlu0 %978
        %980 = vrot.lane.b32.xlu0 %v971, 52
        %v981 = vpop.permute.xlu0 %980
        %982 = vrot.lane.b32.xlu0 %v972, 52
        %v983 = vpop.permute.xlu0 %982
        %984 = vrot.lane.b32.xlu0 %v973, 52
        %v985 = vpop.permute.xlu0 %984
        %986 = vrot.lane.b32.xlu0 %v974, 52
        %v987 = vpop.permute.xlu0 %986
        %988 = vrot.lane.b32.xlu0 %v975, 52
        %v989 = vpop.permute.xlu0 %988
        %990 = vrot.lane.b32.xlu0 %v976, 52
        %v991 = vpop.permute.xlu0 %990
        %992 = vrot.lane.b32.xlu0 %v977, 52
        %v993 = vpop.permute.xlu0 %992
        %v1002 = vunpack.c.l.b16 %v457
        %v1003 = vunpack.c.l.b16 %v458
        %v1004 = vunpack.c.l.b16 %v459
        %v1005 = vunpack.c.l.b16 %v460
        %v1006 = vunpack.c.l.b16 %v461
        %v1007 = vunpack.c.l.b16 %v462
        %v1008 = vunpack.c.l.b16 %v463
        %v1009 = vunpack.c.l.b16 %v464
        %v1010 = vpack.c.b16 %v1002, %v1002
        %v1011 = vpack.c.b16 %v1003, %v1003
        %v1012 = vpack.c.b16 %v1004, %v1004
        %v1013 = vpack.c.b16 %v1005, %v1005
        %v1014 = vpack.c.b16 %v1006, %v1006
        %v1015 = vpack.c.b16 %v1007, %v1007
        %v1016 = vpack.c.b16 %v1008, %v1008
        %v1017 = vpack.c.b16 %v1009, %v1009
        %1018 = vrot.lane.b32.xlu0 %v1010, 56
        %v1019 = vpop.permute.xlu0 %1018
        %1020 = vrot.lane.b32.xlu0 %v1011, 56
        %v1021 = vpop.permute.xlu0 %1020
        %1022 = vrot.lane.b32.xlu0 %v1012, 56
        %v1023 = vpop.permute.xlu0 %1022
        %1024 = vrot.lane.b32.xlu0 %v1013, 56
        %v1025 = vpop.permute.xlu0 %1024
        %1026 = vrot.lane.b32.xlu0 %v1014, 56
        %v1027 = vpop.permute.xlu0 %1026
        %1028 = vrot.lane.b32.xlu0 %v1015, 56
        %v1029 = vpop.permute.xlu0 %1028
        %1030 = vrot.lane.b32.xlu0 %v1016, 56
        %v1031 = vpop.permute.xlu0 %1030
        %1032 = vrot.lane.b32.xlu0 %v1017, 56
        %v1033 = vpop.permute.xlu0 %1032
        %v1042 = vunpack.c.l.b16 %v466
        %v1043 = vunpack.c.l.b16 %v467
        %v1044 = vunpack.c.l.b16 %v468
        %v1045 = vunpack.c.l.b16 %v469
        %v1046 = vunpack.c.l.b16 %v470
        %v1047 = vunpack.c.l.b16 %v471
        %v1048 = vunpack.c.l.b16 %v472
        %v1049 = vunpack.c.l.b16 %v473
        %v1050 = vpack.c.b16 %v1042, %v1042
        %v1051 = vpack.c.b16 %v1043, %v1043
        %v1052 = vpack.c.b16 %v1044, %v1044
        %v1053 = vpack.c.b16 %v1045, %v1045
        %v1054 = vpack.c.b16 %v1046, %v1046
        %v1055 = vpack.c.b16 %v1047, %v1047
        %v1056 = vpack.c.b16 %v1048, %v1048
        %v1057 = vpack.c.b16 %v1049, %v1049
        %1058 = vrot.lane.b32.xlu0 %v1050, 60
        %v1059 = vpop.permute.xlu0 %1058
        %1060 = vrot.lane.b32.xlu0 %v1051, 60
        %v1061 = vpop.permute.xlu0 %1060
        %1062 = vrot.lane.b32.xlu0 %v1052, 60
        %v1063 = vpop.permute.xlu0 %1062
        %1064 = vrot.lane.b32.xlu0 %v1053, 60
        %v1065 = vpop.permute.xlu0 %1064
        %1066 = vrot.lane.b32.xlu0 %v1054, 60
        %v1067 = vpop.permute.xlu0 %1066
        %1068 = vrot.lane.b32.xlu0 %v1055, 60
        %v1069 = vpop.permute.xlu0 %1068
        %1070 = vrot.lane.b32.xlu0 %v1056, 60
        %v1071 = vpop.permute.xlu0 %1070
        %1072 = vrot.lane.b32.xlu0 %v1057, 60
        %v1073 = vpop.permute.xlu0 %1072
        %vm1074 = vcmask 31744
        %v1077 = vsel %vm1074, %v331, %v499
        %v1080 = vsel %vm1074, %v332, %v501
        %v1083 = vsel %vm1074, %v333, %v503
        %v1086 = vsel %vm1074, %v334, %v505
        %v1089 = vsel %vm1074, %v335, %v507
        %v1092 = vsel %vm1074, %v336, %v509
        %v1095 = vsel %vm1074, %v337, %v511
        %v1098 = vsel %vm1074, %v338, %v513
        %vm1099 = vcmask 64512
        %v1101 = vsel %vm1099, %v1077, %v539
        %v1103 = vsel %vm1099, %v1080, %v541
        %v1105 = vsel %vm1099, %v1083, %v543
        %v1107 = vsel %vm1099, %v1086, %v545
        %v1109 = vsel %vm1099, %v1089, %v547
        %v1111 = vsel %vm1099, %v1092, %v549
        %v1113 = vsel %vm1099, %v1095, %v551
        %v1115 = vsel %vm1099, %v1098, %v553
        %vm1116 = vcmask 97280
        %v1118 = vsel %vm1116, %v1101, %v579
        %v1120 = vsel %vm1116, %v1103, %v581
        %v1122 = vsel %vm1116, %v1105, %v583
        %v1124 = vsel %vm1116, %v1107, %v585
        %v1126 = vsel %vm1116, %v1109, %v587
        %v1128 = vsel %vm1116, %v1111, %v589
        %v1130 = vsel %vm1116, %v1113, %v591
        %v1132 = vsel %vm1116, %v1115, %v593
        %vm1133 = vcmask 130048
        %v1135 = vsel %vm1133, %v1118, %v619
        %v1137 = vsel %vm1133, %v1120, %v621
        %v1139 = vsel %vm1133, %v1122, %v623
        %v1141 = vsel %vm1133, %v1124, %v625
        %v1143 = vsel %vm1133, %v1126, %v627
        %v1145 = vsel %vm1133, %v1128, %v629
        %v1147 = vsel %vm1133, %v1130, %v631
        %v1149 = vsel %vm1133, %v1132, %v633
        %vm1150 = vcmask 162816
        %v1152 = vsel %vm1150, %v1135, %v659
        %v1154 = vsel %vm1150, %v1137, %v661
        %v1156 = vsel %vm1150, %v1139, %v663
        %v1158 = vsel %vm1150, %v1141, %v665
        %v1160 = vsel %vm1150, %v1143, %v667
        %v1162 = vsel %vm1150, %v1145, %v669
        %v1164 = vsel %vm1150, %v1147, %v671
        %v1166 = vsel %vm1150, %v1149, %v673
        %vm1167 = vcmask 195584
        %v1169 = vsel %vm1167, %v1152, %v699
        %v1171 = vsel %vm1167, %v1154, %v701
        %v1173 = vsel %vm1167, %v1156, %v703
        %v1175 = vsel %vm1167, %v1158, %v705
        %v1177 = vsel %vm1167, %v1160, %v707
        %v1179 = vsel %vm1167, %v1162, %v709
        %v1181 = vsel %vm1167, %v1164, %v711
        %v1183 = vsel %vm1167, %v1166, %v713
        %vm1184 = vcmask 228352
        %v1186 = vsel %vm1184, %v1169, %v739
        %v1188 = vsel %vm1184, %v1171, %v741
        %v1190 = vsel %vm1184, %v1173, %v743
        %v1192 = vsel %vm1184, %v1175, %v745
        %v1194 = vsel %vm1184, %v1177, %v747
        %v1196 = vsel %vm1184, %v1179, %v749
        %v1198 = vsel %vm1184, %v1181, %v751
        %v1200 = vsel %vm1184, %v1183, %v753
        %vm1201 = vcmask 261120
        %v1203 = vsel %vm1201, %v1186, %v779
        %v1205 = vsel %vm1201, %v1188, %v781
        %v1207 = vsel %vm1201, %v1190, %v783
        %v1209 = vsel %vm1201, %v1192, %v785
        %v1211 = vsel %vm1201, %v1194, %v787
        %v1213 = vsel %vm1201, %v1196, %v789
        %v1215 = vsel %vm1201, %v1198, %v791
        %v1217 = vsel %vm1201, %v1200, %v793
        %vm1218 = vcmask 293888
        %v1220 = vsel %vm1218, %v1203, %v819
        %v1222 = vsel %vm1218, %v1205, %v821
        %v1224 = vsel %vm1218, %v1207, %v823
        %v1226 = vsel %vm1218, %v1209, %v825
        %v1228 = vsel %vm1218, %v1211, %v827
        %v1230 = vsel %vm1218, %v1213, %v829
        %v1232 = vsel %vm1218, %v1215, %v831
        %v1234 = vsel %vm1218, %v1217, %v833
        %vm1235 = vcmask 326656
        %v1237 = vsel %vm1235, %v1220, %v859
        %v1239 = vsel %vm1235, %v1222, %v861
        %v1241 = vsel %vm1235, %v1224, %v863
        %v1243 = vsel %vm1235, %v1226, %v865
        %v1245 = vsel %vm1235, %v1228, %v867
        %v1247 = vsel %vm1235, %v1230, %v869
        %v1249 = vsel %vm1235, %v1232, %v871
        %v1251 = vsel %vm1235, %v1234, %v873
        %vm1252 = vcmask 359424
        %v1254 = vsel %vm1252, %v1237, %v899
        %v1256 = vsel %vm1252, %v1239, %v901
        %v1258 = vsel %vm1252, %v1241, %v903
        %v1260 = vsel %vm1252, %v1243, %v905
        %v1262 = vsel %vm1252, %v1245, %v907
        %v1264 = vsel %vm1252, %v1247, %v909
        %v1266 = vsel %vm1252, %v1249, %v911
        %v1268 = vsel %vm1252, %v1251, %v913
        %vm1269 = vcmask 392192
        %v1271 = vsel %vm1269, %v1254, %v939
        %v1273 = vsel %vm1269, %v1256, %v941
        %v1275 = vsel %vm1269, %v1258, %v943
        %v1277 = vsel %vm1269, %v1260, %v945
        %v1279 = vsel %vm1269, %v1262, %v947
        %v1281 = vsel %vm1269, %v1264, %v949
        %v1283 = vsel %vm1269, %v1266, %v951
        %v1285 = vsel %vm1269, %v1268, %v953
        %vm1286 = vcmask 424960
        %v1288 = vsel %vm1286, %v1271, %v979
        %v1290 = vsel %vm1286, %v1273, %v981
        %v1292 = vsel %vm1286, %v1275, %v983
        %v1294 = vsel %vm1286, %v1277, %v985
        %v1296 = vsel %vm1286, %v1279, %v987
        %v1298 = vsel %vm1286, %v1281, %v989
        %v1300 = vsel %vm1286, %v1283, %v991
        %v1302 = vsel %vm1286, %v1285, %v993
        %vm1303 = vcmask 457728
        %v1305 = vsel %vm1303, %v1288, %v1019
        %v1307 = vsel %vm1303, %v1290, %v1021
        %v1309 = vsel %vm1303, %v1292, %v1023
        %v1311 = vsel %vm1303, %v1294, %v1025
        %v1313 = vsel %vm1303, %v1296, %v1027
        %v1315 = vsel %vm1303, %v1298, %v1029
        %v1317 = vsel %vm1303, %v1300, %v1031
        %v1319 = vsel %vm1303, %v1302, %v1033
        %vm1320 = vcmask 490496
        %v1322 = vsel %vm1320, %v1305, %v1059
        %v1324 = vsel %vm1320, %v1307, %v1061
        %v1326 = vsel %vm1320, %v1309, %v1063
        %v1328 = vsel %vm1320, %v1311, %v1065
        %v1330 = vsel %vm1320, %v1313, %v1067
        %v1332 = vsel %vm1320, %v1315, %v1069
        %v1334 = vsel %vm1320, %v1317, %v1071
        %v1336 = vsel %vm1320, %v1319, %v1073
        %v1337 = vld [vmem:[%s329 + $0x4] sm:$0x1]
        %v1338 = vld [vmem:[%s329 + $0xc] sm:$0x1]
        %v1339 = vld [vmem:[%s329 + $0x14] sm:$0x1]
        %v1340 = vld [vmem:[%s329 + $0x1c] sm:$0x1]
        %v1341 = vld [vmem:[%s329 + $0x24] sm:$0x1]
        %v1342 = vld [vmem:[%s329 + $0x2c] sm:$0x1]
        %v1343 = vld [vmem:[%s329 + $0x34] sm:$0x1]
        %v1344 = vld [vmem:[%s329 + $0x3c] sm:$0x1]
        %v1345 = vld [vmem:[%s339 + $0x4] sm:$0x1]
        %v1346 = vld [vmem:[%s339 + $0xc] sm:$0x1]
        %v1347 = vld [vmem:[%s339 + $0x14] sm:$0x1]
        %v1348 = vld [vmem:[%s339 + $0x1c] sm:$0x1]
        %v1349 = vld [vmem:[%s339 + $0x24] sm:$0x1]
        %v1350 = vld [vmem:[%s339 + $0x2c] sm:$0x1]
        %v1351 = vld [vmem:[%s339 + $0x34] sm:$0x1]
        %v1352 = vld [vmem:[%s339 + $0x3c] sm:$0x1]
        %v1353 = vld [vmem:[%s366 + $0x4] sm:$0x1]
        %v1354 = vld [vmem:[%s366 + $0xc] sm:$0x1]
        %v1355 = vld [vmem:[%s366 + $0x14] sm:$0x1]
        %v1356 = vld [vmem:[%s366 + $0x1c] sm:$0x1]
        %v1357 = vld [vmem:[%s366 + $0x24] sm:$0x1]
        %v1358 = vld [vmem:[%s366 + $0x2c] sm:$0x1]
        %v1359 = vld [vmem:[%s366 + $0x34] sm:$0x1]
        %v1360 = vld [vmem:[%s366 + $0x3c] sm:$0x1]
        %v1361 = vld [vmem:[%s375 + $0x4] sm:$0x1]
        %v1362 = vld [vmem:[%s375 + $0xc] sm:$0x1]
        %v1363 = vld [vmem:[%s375 + $0x14] sm:$0x1]
        %v1364 = vld [vmem:[%s375 + $0x1c] sm:$0x1]
        %v1365 = vld [vmem:[%s375 + $0x24] sm:$0x1]
        %v1366 = vld [vmem:[%s375 + $0x2c] sm:$0x1]
        %v1367 = vld [vmem:[%s375 + $0x34] sm:$0x1]
        %v1368 = vld [vmem:[%s375 + $0x3c] sm:$0x1]
        %v1369 = vld [vmem:[%s402 + $0x4] sm:$0x1]
        %v1370 = vld [vmem:[%s402 + $0xc] sm:$0x1]
        %v1371 = vld [vmem:[%s402 + $0x14] sm:$0x1]
        %v1372 = vld [vmem:[%s402 + $0x1c] sm:$0x1]
        %v1373 = vld [vmem:[%s402 + $0x24] sm:$0x1]
        %v1374 = vld [vmem:[%s402 + $0x2c] sm:$0x1]
        %v1375 = vld [vmem:[%s402 + $0x34] sm:$0x1]
        %v1376 = vld [vmem:[%s402 + $0x3c] sm:$0x1]
        %v1377 = vld [vmem:[%s411 + $0x4] sm:$0x1]
        %v1378 = vld [vmem:[%s411 + $0xc] sm:$0x1]
        %v1379 = vld [vmem:[%s411 + $0x14] sm:$0x1]
        %v1380 = vld [vmem:[%s411 + $0x1c] sm:$0x1]
        %v1381 = vld [vmem:[%s411 + $0x24] sm:$0x1]
        %v1382 = vld [vmem:[%s411 + $0x2c] sm:$0x1]
        %v1383 = vld [vmem:[%s411 + $0x34] sm:$0x1]
        %v1384 = vld [vmem:[%s411 + $0x3c] sm:$0x1]
        %v1385 = vld [vmem:[%s438 + $0x4] sm:$0x1]
        %v1386 = vld [vmem:[%s438 + $0xc] sm:$0x1]
        %v1387 = vld [vmem:[%s438 + $0x14] sm:$0x1]
        %v1388 = vld [vmem:[%s438 + $0x1c] sm:$0x1]
        %v1389 = vld [vmem:[%s438 + $0x24] sm:$0x1]
        %v1390 = vld [vmem:[%s438 + $0x2c] sm:$0x1]
        %v1391 = vld [vmem:[%s438 + $0x34] sm:$0x1]
        %v1392 = vld [vmem:[%s438 + $0x3c] sm:$0x1]
        %v1393 = vld [vmem:[%s447 + $0x4] sm:$0x1]
        %v1394 = vld [vmem:[%s447 + $0xc] sm:$0x1]
        %v1395 = vld [vmem:[%s447 + $0x14] sm:$0x1]
        %v1396 = vld [vmem:[%s447 + $0x1c] sm:$0x1]
        %v1397 = vld [vmem:[%s447 + $0x24] sm:$0x1]
        %v1398 = vld [vmem:[%s447 + $0x2c] sm:$0x1]
        %v1399 = vld [vmem:[%s447 + $0x34] sm:$0x1]
        %v1400 = vld [vmem:[%s447 + $0x3c] sm:$0x1]
        %1401 = vrot.lane.b32.xlu0 %v570, 4
        %v1402 = vpop.permute.xlu0 %1401
        %1403 = vrot.lane.b32.xlu0 %v571, 4
        %v1404 = vpop.permute.xlu0 %1403
        %1405 = vrot.lane.b32.xlu0 %v572, 4
        %v1406 = vpop.permute.xlu0 %1405
        %1407 = vrot.lane.b32.xlu0 %v573, 4
        %v1408 = vpop.permute.xlu0 %1407
        %1409 = vrot.lane.b32.xlu0 %v574, 4
        %v1410 = vpop.permute.xlu0 %1409
        %1411 = vrot.lane.b32.xlu0 %v575, 4
        %v1412 = vpop.permute.xlu0 %1411
        %1413 = vrot.lane.b32.xlu0 %v576, 4
        %v1414 = vpop.permute.xlu0 %1413
        %1415 = vrot.lane.b32.xlu0 %v577, 4
        %v1416 = vpop.permute.xlu0 %1415
        %v1433 = vunpack.c.l.b16 %v331
        %v1434 = vunpack.c.l.b16 %v1337
        %v1435 = vunpack.c.l.b16 %v332
        %v1436 = vunpack.c.l.b16 %v1338
        %v1437 = vunpack.c.l.b16 %v333
        %v1438 = vunpack.c.l.b16 %v1339
        %v1439 = vunpack.c.l.b16 %v334
        %v1440 = vunpack.c.l.b16 %v1340
        %v1441 = vunpack.c.l.b16 %v335
        %v1442 = vunpack.c.l.b16 %v1341
        %v1443 = vunpack.c.l.b16 %v336
        %v1444 = vunpack.c.l.b16 %v1342
        %v1445 = vunpack.c.l.b16 %v337
        %v1446 = vunpack.c.l.b16 %v1343
        %v1447 = vunpack.c.l.b16 %v338
        %v1448 = vunpack.c.l.b16 %v1344
        %v1449 = vpack.c.b16 %v1434, %v1433
        %v1450 = vpack.c.b16 %v1436, %v1435
        %v1451 = vpack.c.b16 %v1438, %v1437
        %v1452 = vpack.c.b16 %v1440, %v1439
        %v1453 = vpack.c.b16 %v1442, %v1441
        %v1454 = vpack.c.b16 %v1444, %v1443
        %v1455 = vpack.c.b16 %v1446, %v1445
        %v1456 = vpack.c.b16 %v1448, %v1447
        %v1458 = vshrl.u32 %v1449, 16
        %v1460 = vshll.u32 %v1449, 16
        %v1462 = vrot.slane %v1460, 1
        %v1463 = vor.u32 %v1458, %v1462
        %v1465 = vshrl.u32 %v1450, 16
        %v1467 = vshll.u32 %v1450, 16
        %v1469 = vrot.slane %v1467, 1
        %v1470 = vor.u32 %v1465, %v1469
        %v1472 = vshrl.u32 %v1451, 16
        %v1474 = vshll.u32 %v1451, 16
        %v1476 = vrot.slane %v1474, 1
        %v1477 = vor.u32 %v1472, %v1476
        %v1479 = vshrl.u32 %v1452, 16
        %v1481 = vshll.u32 %v1452, 16
        %v1483 = vrot.slane %v1481, 1
        %v1484 = vor.u32 %v1479, %v1483
        %v1486 = vshrl.u32 %v1453, 16
        %v1488 = vshll.u32 %v1453, 16
        %v1490 = vrot.slane %v1488, 1
        %v1491 = vor.u32 %v1486, %v1490
        %v1493 = vshrl.u32 %v1454, 16
        %v1495 = vshll.u32 %v1454, 16
        %v1497 = vrot.slane %v1495, 1
        %v1498 = vor.u32 %v1493, %v1497
        %v1500 = vshrl.u32 %v1455, 16
        %v1502 = vshll.u32 %v1455, 16
        %v1504 = vrot.slane %v1502, 1
        %v1505 = vor.u32 %v1500, %v1504
        %v1507 = vshrl.u32 %v1456, 16
        %v1509 = vshll.u32 %v1456, 16
        %v1511 = vrot.slane %v1509, 1
        %v1512 = vor.u32 %v1507, %v1511
        %1513 = vrot.lane.b32.xlu0 %v1463, 8
        %v1514 = vpop.permute.xlu0 %1513
        %1515 = vrot.lane.b32.xlu0 %v1470, 8
        %v1516 = vpop.permute.xlu0 %1515
        %1517 = vrot.lane.b32.xlu0 %v1477, 8
        %v1518 = vpop.permute.xlu0 %1517
        %1519 = vrot.lane.b32.xlu0 %v1484, 8
        %v1520 = vpop.permute.xlu0 %1519
        %1521 = vrot.lane.b32.xlu0 %v1491, 8
        %v1522 = vpop.permute.xlu0 %1521
        %1523 = vrot.lane.b32.xlu0 %v1498, 8
        %v1524 = vpop.permute.xlu0 %1523
        %1525 = vrot.lane.b32.xlu0 %v1505, 8
        %v1526 = vpop.permute.xlu0 %1525
        %1527 = vrot.lane.b32.xlu0 %v1512, 8
        %v1528 = vpop.permute.xlu0 %1527
        %v1537 = vunpack.c.l.b16 %v1345
        %v1538 = vunpack.c.l.b16 %v1346
        %v1539 = vunpack.c.l.b16 %v1347
        %v1540 = vunpack.c.l.b16 %v1348
        %v1541 = vunpack.c.l.b16 %v1349
        %v1542 = vunpack.c.l.b16 %v1350
        %v1543 = vunpack.c.l.b16 %v1351
        %v1544 = vunpack.c.l.b16 %v1352
        %v1545 = vpack.c.b16 %v1537, %v482
        %v1546 = vpack.c.b16 %v1538, %v483
        %v1547 = vpack.c.b16 %v1539, %v484
        %v1548 = vpack.c.b16 %v1540, %v485
        %v1549 = vpack.c.b16 %v1541, %v486
        %v1550 = vpack.c.b16 %v1542, %v487
        %v1551 = vpack.c.b16 %v1543, %v488
        %v1552 = vpack.c.b16 %v1544, %v489
        %v1554 = vshrl.u32 %v1545, 16
        %v1556 = vshll.u32 %v1545, 16
        %v1558 = vrot.slane %v1556, 1
        %v1559 = vor.u32 %v1554, %v1558
        %v1561 = vshrl.u32 %v1546, 16
        %v1563 = vshll.u32 %v1546, 16
        %v1565 = vrot.slane %v1563, 1
        %v1566 = vor.u32 %v1561, %v1565
        %v1568 = vshrl.u32 %v1547, 16
        %v1570 = vshll.u32 %v1547, 16
        %v1572 = vrot.slane %v1570, 1
        %v1573 = vor.u32 %v1568, %v1572
        %v1575 = vshrl.u32 %v1548, 16
        %v1577 = vshll.u32 %v1548, 16
        %v1579 = vrot.slane %v1577, 1
        %v1580 = vor.u32 %v1575, %v1579
        %v1582 = vshrl.u32 %v1549, 16
        %v1584 = vshll.u32 %v1549, 16
        %v1586 = vrot.slane %v1584, 1
        %v1587 = vor.u32 %v1582, %v1586
        %v1589 = vshrl.u32 %v1550, 16
        %v1591 = vshll.u32 %v1550, 16
        %v1593 = vrot.slane %v1591, 1
        %v1594 = vor.u32 %v1589, %v1593
        %v1596 = vshrl.u32 %v1551, 16
        %v1598 = vshll.u32 %v1551, 16
        %v1600 = vrot.slane %v1598, 1
        %v1601 = vor.u32 %v1596, %v1600
        %v1603 = vshrl.u32 %v1552, 16
        %v1605 = vshll.u32 %v1552, 16
        %v1607 = vrot.slane %v1605, 1
        %v1608 = vor.u32 %v1603, %v1607
        %1609 = vrot.lane.b32.xlu0 %v1559, 12
        %v1610 = vpop.permute.xlu0 %1609
        %1611 = vrot.lane.b32.xlu0 %v1566, 12
        %v1612 = vpop.permute.xlu0 %1611
        %1613 = vrot.lane.b32.xlu0 %v1573, 12
        %v1614 = vpop.permute.xlu0 %1613
        %1615 = vrot.lane.b32.xlu0 %v1580, 12
        %v1616 = vpop.permute.xlu0 %1615
        %1617 = vrot.lane.b32.xlu0 %v1587, 12
        %v1618 = vpop.permute.xlu0 %1617
        %1619 = vrot.lane.b32.xlu0 %v1594, 12
        %v1620 = vpop.permute.xlu0 %1619
        %1621 = vrot.lane.b32.xlu0 %v1601, 12
        %v1622 = vpop.permute.xlu0 %1621
        %1623 = vrot.lane.b32.xlu0 %v1608, 12
        %v1624 = vpop.permute.xlu0 %1623
        %1625 = vrot.lane.b32.xlu0 %v690, 16
        %v1626 = vpop.permute.xlu0 %1625
        %1627 = vrot.lane.b32.xlu0 %v691, 16
        %v1628 = vpop.permute.xlu0 %1627
        %1629 = vrot.lane.b32.xlu0 %v692, 16
        %v1630 = vpop.permute.xlu0 %1629
        %1631 = vrot.lane.b32.xlu0 %v693, 16
        %v1632 = vpop.permute.xlu0 %1631
        %1633 = vrot.lane.b32.xlu0 %v694, 16
        %v1634 = vpop.permute.xlu0 %1633
        %1635 = vrot.lane.b32.xlu0 %v695, 16
        %v1636 = vpop.permute.xlu0 %1635
        %1637 = vrot.lane.b32.xlu0 %v696, 16
        %v1638 = vpop.permute.xlu0 %1637
        %1639 = vrot.lane.b32.xlu0 %v697, 16
        %v1640 = vpop.permute.xlu0 %1639
        %1641 = vrot.lane.b32.xlu0 %v730, 20
        %v1642 = vpop.permute.xlu0 %1641
        %1643 = vrot.lane.b32.xlu0 %v731, 20
        %v1644 = vpop.permute.xlu0 %1643
        %1645 = vrot.lane.b32.xlu0 %v732, 20
        %v1646 = vpop.permute.xlu0 %1645
        %1647 = vrot.lane.b32.xlu0 %v733, 20
        %v1648 = vpop.permute.xlu0 %1647
        %1649 = vrot.lane.b32.xlu0 %v734, 20
        %v1650 = vpop.permute.xlu0 %1649
        %1651 = vrot.lane.b32.xlu0 %v735, 20
        %v1652 = vpop.permute.xlu0 %1651
        %1653 = vrot.lane.b32.xlu0 %v736, 20
        %v1654 = vpop.permute.xlu0 %1653
        %1655 = vrot.lane.b32.xlu0 %v737, 20
        %v1656 = vpop.permute.xlu0 %1655
        %v1665 = vunpack.c.l.b16 %v1353
        %v1666 = vunpack.c.l.b16 %v1354
        %v1667 = vunpack.c.l.b16 %v1355
        %v1668 = vunpack.c.l.b16 %v1356
        %v1669 = vunpack.c.l.b16 %v1357
        %v1670 = vunpack.c.l.b16 %v1358
        %v1671 = vunpack.c.l.b16 %v1359
        %v1672 = vunpack.c.l.b16 %v1360
        %v1673 = vpack.c.b16 %v1665, %v602
        %v1674 = vpack.c.b16 %v1666, %v603
        %v1675 = vpack.c.b16 %v1667, %v604
        %v1676 = vpack.c.b16 %v1668, %v605
        %v1677 = vpack.c.b16 %v1669, %v606
        %v1678 = vpack.c.b16 %v1670, %v607
        %v1679 = vpack.c.b16 %v1671, %v608
        %v1680 = vpack.c.b16 %v1672, %v609
        %v1682 = vshrl.u32 %v1673, 16
        %v1684 = vshll.u32 %v1673, 16
        %v1686 = vrot.slane %v1684, 1
        %v1687 = vor.u32 %v1682, %v1686
        %v1689 = vshrl.u32 %v1674, 16
        %v1691 = vshll.u32 %v1674, 16
        %v1693 = vrot.slane %v1691, 1
        %v1694 = vor.u32 %v1689, %v1693
        %v1696 = vshrl.u32 %v1675, 16
        %v1698 = vshll.u32 %v1675, 16
        %v1700 = vrot.slane %v1698, 1
        %v1701 = vor.u32 %v1696, %v1700
        %v1703 = vshrl.u32 %v1676, 16
        %v1705 = vshll.u32 %v1676, 16
        %v1707 = vrot.slane %v1705, 1
        %v1708 = vor.u32 %v1703, %v1707
        %v1710 = vshrl.u32 %v1677, 16
        %v1712 = vshll.u32 %v1677, 16
        %v1714 = vrot.slane %v1712, 1
        %v1715 = vor.u32 %v1710, %v1714
        %v1717 = vshrl.u32 %v1678, 16
        %v1719 = vshll.u32 %v1678, 16
        %v1721 = vrot.slane %v1719, 1
        %v1722 = vor.u32 %v1717, %v1721
        %v1724 = vshrl.u32 %v1679, 16
        %v1726 = vshll.u32 %v1679, 16
        %v1728 = vrot.slane %v1726, 1
        %v1729 = vor.u32 %v1724, %v1728
        %v1731 = vshrl.u32 %v1680, 16
        %v1733 = vshll.u32 %v1680, 16
        %v1735 = vrot.slane %v1733, 1
        %v1736 = vor.u32 %v1731, %v1735
        %1737 = vrot.lane.b32.xlu0 %v1687, 24
        %v1738 = vpop.permute.xlu0 %1737
        %1739 = vrot.lane.b32.xlu0 %v1694, 24
        %v1740 = vpop.permute.xlu0 %1739
        %1741 = vrot.lane.b32.xlu0 %v1701, 24
        %v1742 = vpop.permute.xlu0 %1741
        %1743 = vrot.lane.b32.xlu0 %v1708, 24
        %v1744 = vpop.permute.xlu0 %1743
        %1745 = vrot.lane.b32.xlu0 %v1715, 24
        %v1746 = vpop.permute.xlu0 %1745
        %1747 = vrot.lane.b32.xlu0 %v1722, 24
        %v1748 = vpop.permute.xlu0 %1747
        %1749 = vrot.lane.b32.xlu0 %v1729, 24
        %v1750 = vpop.permute.xlu0 %1749
        %1751 = vrot.lane.b32.xlu0 %v1736, 24
        %v1752 = vpop.permute.xlu0 %1751
        %v1761 = vunpack.c.l.b16 %v1361
        %v1762 = vunpack.c.l.b16 %v1362
        %v1763 = vunpack.c.l.b16 %v1363
        %v1764 = vunpack.c.l.b16 %v1364
        %v1765 = vunpack.c.l.b16 %v1365
        %v1766 = vunpack.c.l.b16 %v1366
        %v1767 = vunpack.c.l.b16 %v1367
        %v1768 = vunpack.c.l.b16 %v1368
        %v1769 = vpack.c.b16 %v1761, %v642
        %v1770 = vpack.c.b16 %v1762, %v643
        %v1771 = vpack.c.b16 %v1763, %v644
        %v1772 = vpack.c.b16 %v1764, %v645
        %v1773 = vpack.c.b16 %v1765, %v646
        %v1774 = vpack.c.b16 %v1766, %v647
        %v1775 = vpack.c.b16 %v1767, %v648
        %v1776 = vpack.c.b16 %v1768, %v649
        %v1778 = vshrl.u32 %v1769, 16
        %v1780 = vshll.u32 %v1769, 16
        %v1782 = vrot.slane %v1780, 1
        %v1783 = vor.u32 %v1778, %v1782
        %v1785 = vshrl.u32 %v1770, 16
        %v1787 = vshll.u32 %v1770, 16
        %v1789 = vrot.slane %v1787, 1
        %v1790 = vor.u32 %v1785, %v1789
        %v1792 = vshrl.u32 %v1771, 16
        %v1794 = vshll.u32 %v1771, 16
        %v1796 = vrot.slane %v1794, 1
        %v1797 = vor.u32 %v1792, %v1796
        %v1799 = vshrl.u32 %v1772, 16
        %v1801 = vshll.u32 %v1772, 16
        %v1803 = vrot.slane %v1801, 1
        %v1804 = vor.u32 %v1799, %v1803
        %v1806 = vshrl.u32 %v1773, 16
        %v1808 = vshll.u32 %v1773, 16
        %v1810 = vrot.slane %v1808, 1
        %v1811 = vor.u32 %v1806, %v1810
        %v1813 = vshrl.u32 %v1774, 16
        %v1815 = vshll.u32 %v1774, 16
        %v1817 = vrot.slane %v1815, 1
        %v1818 = vor.u32 %v1813, %v1817
        %v1820 = vshrl.u32 %v1775, 16
        %v1822 = vshll.u32 %v1775, 16
        %v1824 = vrot.slane %v1822, 1
        %v1825 = vor.u32 %v1820, %v1824
        %v1827 = vshrl.u32 %v1776, 16
        %v1829 = vshll.u32 %v1776, 16
        %v1831 = vrot.slane %v1829, 1
        %v1832 = vor.u32 %v1827, %v1831
        %1833 = vrot.lane.b32.xlu0 %v1783, 28
        %v1834 = vpop.permute.xlu0 %1833
        %1835 = vrot.lane.b32.xlu0 %v1790, 28
        %v1836 = vpop.permute.xlu0 %1835
        %1837 = vrot.lane.b32.xlu0 %v1797, 28
        %v1838 = vpop.permute.xlu0 %1837
        %1839 = vrot.lane.b32.xlu0 %v1804, 28
        %v1840 = vpop.permute.xlu0 %1839
        %1841 = vrot.lane.b32.xlu0 %v1811, 28
        %v1842 = vpop.permute.xlu0 %1841
        %1843 = vrot.lane.b32.xlu0 %v1818, 28
        %v1844 = vpop.permute.xlu0 %1843
        %1845 = vrot.lane.b32.xlu0 %v1825, 28
        %v1846 = vpop.permute.xlu0 %1845
        %1847 = vrot.lane.b32.xlu0 %v1832, 28
        %v1848 = vpop.permute.xlu0 %1847
        %1849 = vrot.lane.b32.xlu0 %v850, 32
        %v1850 = vpop.permute.xlu0 %1849
        %1851 = vrot.lane.b32.xlu0 %v851, 32
        %v1852 = vpop.permute.xlu0 %1851
        %1853 = vrot.lane.b32.xlu0 %v852, 32
        %v1854 = vpop.permute.xlu0 %1853
        %1855 = vrot.lane.b32.xlu0 %v853, 32
        %v1856 = vpop.permute.xlu0 %1855
        %1857 = vrot.lane.b32.xlu0 %v854, 32
        %v1858 = vpop.permute.xlu0 %1857
        %1859 = vrot.lane.b32.xlu0 %v855, 32
        %v1860 = vpop.permute.xlu0 %1859
        %1861 = vrot.lane.b32.xlu0 %v856, 32
        %v1862 = vpop.permute.xlu0 %1861
        %1863 = vrot.lane.b32.xlu0 %v857, 32
        %v1864 = vpop.permute.xlu0 %1863
        %1865 = vrot.lane.b32.xlu0 %v890, 36
        %v1866 = vpop.permute.xlu0 %1865
        %1867 = vrot.lane.b32.xlu0 %v891, 36
        %v1868 = vpop.permute.xlu0 %1867
        %1869 = vrot.lane.b32.xlu0 %v892, 36
        %v1870 = vpop.permute.xlu0 %1869
        %1871 = vrot.lane.b32.xlu0 %v893, 36
        %v1872 = vpop.permute.xlu0 %1871
        %1873 = vrot.lane.b32.xlu0 %v894, 36
        %v1874 = vpop.permute.xlu0 %1873
        %1875 = vrot.lane.b32.xlu0 %v895, 36
        %v1876 = vpop.permute.xlu0 %1875
        %1877 = vrot.lane.b32.xlu0 %v896, 36
        %v1878 = vpop.permute.xlu0 %1877
        %1879 = vrot.lane.b32.xlu0 %v897, 36
        %v1880 = vpop.permute.xlu0 %1879
        %v1889 = vunpack.c.l.b16 %v1369
        %v1890 = vunpack.c.l.b16 %v1370
        %v1891 = vunpack.c.l.b16 %v1371
        %v1892 = vunpack.c.l.b16 %v1372
        %v1893 = vunpack.c.l.b16 %v1373
        %v1894 = vunpack.c.l.b16 %v1374
        %v1895 = vunpack.c.l.b16 %v1375
        %v1896 = vunpack.c.l.b16 %v1376
        %v1897 = vpack.c.b16 %v1889, %v762
        %v1898 = vpack.c.b16 %v1890, %v763
        %v1899 = vpack.c.b16 %v1891, %v764
        %v1900 = vpack.c.b16 %v1892, %v765
        %v1901 = vpack.c.b16 %v1893, %v766
        %v1902 = vpack.c.b16 %v1894, %v767
        %v1903 = vpack.c.b16 %v1895, %v768
        %v1904 = vpack.c.b16 %v1896, %v769
        %v1906 = vshrl.u32 %v1897, 16
        %v1908 = vshll.u32 %v1897, 16
        %v1910 = vrot.slane %v1908, 1
        %v1911 = vor.u32 %v1906, %v1910
        %v1913 = vshrl.u32 %v1898, 16
        %v1915 = vshll.u32 %v1898, 16
        %v1917 = vrot.slane %v1915, 1
        %v1918 = vor.u32 %v1913, %v1917
        %v1920 = vshrl.u32 %v1899, 16
        %v1922 = vshll.u32 %v1899, 16
        %v1924 = vrot.slane %v1922, 1
        %v1925 = vor.u32 %v1920, %v1924
        %v1927 = vshrl.u32 %v1900, 16
        %v1929 = vshll.u32 %v1900, 16
        %v1931 = vrot.slane %v1929, 1
        %v1932 = vor.u32 %v1927, %v1931
        %v1934 = vshrl.u32 %v1901, 16
        %v1936 = vshll.u32 %v1901, 16
        %v1938 = vrot.slane %v1936, 1
        %v1939 = vor.u32 %v1934, %v1938
        %v1941 = vshrl.u32 %v1902, 16
        %v1943 = vshll.u32 %v1902, 16
        %v1945 = vrot.slane %v1943, 1
        %v1946 = vor.u32 %v1941, %v1945
        %v1948 = vshrl.u32 %v1903, 16
        %v1950 = vshll.u32 %v1903, 16
        %v1952 = vrot.slane %v1950, 1
        %v1953 = vor.u32 %v1948, %v1952
        %v1955 = vshrl.u32 %v1904, 16
        %v1957 = vshll.u32 %v1904, 16
        %v1959 = vrot.slane %v1957, 1
        %v1960 = vor.u32 %v1955, %v1959
        %1961 = vrot.lane.b32.xlu0 %v1911, 40
        %v1962 = vpop.permute.xlu0 %1961
        %1963 = vrot.lane.b32.xlu0 %v1918, 40
        %v1964 = vpop.permute.xlu0 %1963
        %1965 = vrot.lane.b32.xlu0 %v1925, 40
        %v1966 = vpop.permute.xlu0 %1965
        %1967 = vrot.lane.b32.xlu0 %v1932, 40
        %v1968 = vpop.permute.xlu0 %1967
        %1969 = vrot.lane.b32.xlu0 %v1939, 40
        %v1970 = vpop.permute.xlu0 %1969
        %1971 = vrot.lane.b32.xlu0 %v1946, 40
        %v1972 = vpop.permute.xlu0 %1971
        %1973 = vrot.lane.b32.xlu0 %v1953, 40
        %v1974 = vpop.permute.xlu0 %1973
        %1975 = vrot.lane.b32.xlu0 %v1960, 40
        %v1976 = vpop.permute.xlu0 %1975
        %v1985 = vunpack.c.l.b16 %v1377
        %v1986 = vunpack.c.l.b16 %v1378
        %v1987 = vunpack.c.l.b16 %v1379
        %v1988 = vunpack.c.l.b16 %v1380
        %v1989 = vunpack.c.l.b16 %v1381
        %v1990 = vunpack.c.l.b16 %v1382
        %v1991 = vunpack.c.l.b16 %v1383
        %v1992 = vunpack.c.l.b16 %v1384
        %v1993 = vpack.c.b16 %v1985, %v802
        %v1994 = vpack.c.b16 %v1986, %v803
        %v1995 = vpack.c.b16 %v1987, %v804
        %v1996 = vpack.c.b16 %v1988, %v805
        %v1997 = vpack.c.b16 %v1989, %v806
        %v1998 = vpack.c.b16 %v1990, %v807
        %v1999 = vpack.c.b16 %v1991, %v808
        %v2000 = vpack.c.b16 %v1992, %v809
        %v2002 = vshrl.u32 %v1993, 16
        %v2004 = vshll.u32 %v1993, 16
        %v2006 = vrot.slane %v2004, 1
        %v2007 = vor.u32 %v2002, %v2006
        %v2009 = vshrl.u32 %v1994, 16
        %v2011 = vshll.u32 %v1994, 16
        %v2013 = vrot.slane %v2011, 1
        %v2014 = vor.u32 %v2009, %v2013
        %v2016 = vshrl.u32 %v1995, 16
        %v2018 = vshll.u32 %v1995, 16
        %v2020 = vrot.slane %v2018, 1
        %v2021 = vor.u32 %v2016, %v2020
        %v2023 = vshrl.u32 %v1996, 16
        %v2025 = vshll.u32 %v1996, 16
        %v2027 = vrot.slane %v2025, 1
        %v2028 = vor.u32 %v2023, %v2027
        %v2030 = vshrl.u32 %v1997, 16
        %v2032 = vshll.u32 %v1997, 16
        %v2034 = vrot.slane %v2032, 1
        %v2035 = vor.u32 %v2030, %v2034
        %v2037 = vshrl.u32 %v1998, 16
        %v2039 = vshll.u32 %v1998, 16
        %v2041 = vrot.slane %v2039, 1
        %v2042 = vor.u32 %v2037, %v2041
        %v2044 = vshrl.u32 %v1999, 16
        %v2046 = vshll.u32 %v1999, 16
        %v2048 = vrot.slane %v2046, 1
        %v2049 = vor.u32 %v2044, %v2048
        %v2051 = vshrl.u32 %v2000, 16
        %v2053 = vshll.u32 %v2000, 16
        %v2055 = vrot.slane %v2053, 1
        %v2056 = vor.u32 %v2051, %v2055
        %2057 = vrot.lane.b32.xlu0 %v2007, 44
        %v2058 = vpop.permute.xlu0 %2057
        %2059 = vrot.lane.b32.xlu0 %v2014, 44
        %v2060 = vpop.permute.xlu0 %2059
        %2061 = vrot.lane.b32.xlu0 %v2021, 44
        %v2062 = vpop.permute.xlu0 %2061
        %2063 = vrot.lane.b32.xlu0 %v2028, 44
        %v2064 = vpop.permute.xlu0 %2063
        %2065 = vrot.lane.b32.xlu0 %v2035, 44
        %v2066 = vpop.permute.xlu0 %2065
        %2067 = vrot.lane.b32.xlu0 %v2042, 44
        %v2068 = vpop.permute.xlu0 %2067
        %2069 = vrot.lane.b32.xlu0 %v2049, 44
        %v2070 = vpop.permute.xlu0 %2069
        %2071 = vrot.lane.b32.xlu0 %v2056, 44
        %v2072 = vpop.permute.xlu0 %2071
        %2073 = vrot.lane.b32.xlu0 %v1010, 48
        %v2074 = vpop.permute.xlu0 %2073
        %2075 = vrot.lane.b32.xlu0 %v1011, 48
        %v2076 = vpop.permute.xlu0 %2075
        %2077 = vrot.lane.b32.xlu0 %v1012, 48
        %v2078 = vpop.permute.xlu0 %2077
        %2079 = vrot.lane.b32.xlu0 %v1013, 48
        %v2080 = vpop.permute.xlu0 %2079
        %2081 = vrot.lane.b32.xlu0 %v1014, 48
        %v2082 = vpop.permute.xlu0 %2081
        %2083 = vrot.lane.b32.xlu0 %v1015, 48
        %v2084 = vpop.permute.xlu0 %2083
        %2085 = vrot.lane.b32.xlu0 %v1016, 48
        %v2086 = vpop.permute.xlu0 %2085
        %2087 = vrot.lane.b32.xlu0 %v1017, 48
        %v2088 = vpop.permute.xlu0 %2087
        %2089 = vrot.lane.b32.xlu0 %v1050, 52
        %v2090 = vpop.permute.xlu0 %2089
        %2091 = vrot.lane.b32.xlu0 %v1051, 52
        %v2092 = vpop.permute.xlu0 %2091
        %2093 = vrot.lane.b32.xlu0 %v1052, 52
        %v2094 = vpop.permute.xlu0 %2093
        %2095 = vrot.lane.b32.xlu0 %v1053, 52
        %v2096 = vpop.permute.xlu0 %2095
        %2097 = vrot.lane.b32.xlu0 %v1054, 52
        %v2098 = vpop.permute.xlu0 %2097
        %2099 = vrot.lane.b32.xlu0 %v1055, 52
        %v2100 = vpop.permute.xlu0 %2099
        %2101 = vrot.lane.b32.xlu0 %v1056, 52
        %v2102 = vpop.permute.xlu0 %2101
        %2103 = vrot.lane.b32.xlu0 %v1057, 52
        %v2104 = vpop.permute.xlu0 %2103
        %v2113 = vunpack.c.l.b16 %v1385
        %v2114 = vunpack.c.l.b16 %v1386
        %v2115 = vunpack.c.l.b16 %v1387
        %v2116 = vunpack.c.l.b16 %v1388
        %v2117 = vunpack.c.l.b16 %v1389
        %v2118 = vunpack.c.l.b16 %v1390
        %v2119 = vunpack.c.l.b16 %v1391
        %v2120 = vunpack.c.l.b16 %v1392
        %v2121 = vpack.c.b16 %v2113, %v922
        %v2122 = vpack.c.b16 %v2114, %v923
        %v2123 = vpack.c.b16 %v2115, %v924
        %v2124 = vpack.c.b16 %v2116, %v925
        %v2125 = vpack.c.b16 %v2117, %v926
        %v2126 = vpack.c.b16 %v2118, %v927
        %v2127 = vpack.c.b16 %v2119, %v928
        %v2128 = vpack.c.b16 %v2120, %v929
        %v2130 = vshrl.u32 %v2121, 16
        %v2132 = vshll.u32 %v2121, 16
        %v2134 = vrot.slane %v2132, 1
        %v2135 = vor.u32 %v2130, %v2134
        %v2137 = vshrl.u32 %v2122, 16
        %v2139 = vshll.u32 %v2122, 16
        %v2141 = vrot.slane %v2139, 1
        %v2142 = vor.u32 %v2137, %v2141
        %v2144 = vshrl.u32 %v2123, 16
        %v2146 = vshll.u32 %v2123, 16
        %v2148 = vrot.slane %v2146, 1
        %v2149 = vor.u32 %v2144, %v2148
        %v2151 = vshrl.u32 %v2124, 16
        %v2153 = vshll.u32 %v2124, 16
        %v2155 = vrot.slane %v2153, 1
        %v2156 = vor.u32 %v2151, %v2155
        %v2158 = vshrl.u32 %v2125, 16
        %v2160 = vshll.u32 %v2125, 16
        %v2162 = vrot.slane %v2160, 1
        %v2163 = vor.u32 %v2158, %v2162
        %v2165 = vshrl.u32 %v2126, 16
        %v2167 = vshll.u32 %v2126, 16
        %v2169 = vrot.slane %v2167, 1
        %v2170 = vor.u32 %v2165, %v2169
        %v2172 = vshrl.u32 %v2127, 16
        %v2174 = vshll.u32 %v2127, 16
        %v2176 = vrot.slane %v2174, 1
        %v2177 = vor.u32 %v2172, %v2176
        %v2179 = vshrl.u32 %v2128, 16
        %v2181 = vshll.u32 %v2128, 16
        %v2183 = vrot.slane %v2181, 1
        %v2184 = vor.u32 %v2179, %v2183
        %2185 = vrot.lane.b32.xlu0 %v2135, 56
        %v2186 = vpop.permute.xlu0 %2185
        %2187 = vrot.lane.b32.xlu0 %v2142, 56
        %v2188 = vpop.permute.xlu0 %2187
        %2189 = vrot.lane.b32.xlu0 %v2149, 56
        %v2190 = vpop.permute.xlu0 %2189
        %2191 = vrot.lane.b32.xlu0 %v2156, 56
        %v2192 = vpop.permute.xlu0 %2191
        %2193 = vrot.lane.b32.xlu0 %v2163, 56
        %v2194 = vpop.permute.xlu0 %2193
        %2195 = vrot.lane.b32.xlu0 %v2170, 56
        %v2196 = vpop.permute.xlu0 %2195
        %2197 = vrot.lane.b32.xlu0 %v2177, 56
        %v2198 = vpop.permute.xlu0 %2197
        %2199 = vrot.lane.b32.xlu0 %v2184, 56
        %v2200 = vpop.permute.xlu0 %2199
        %v2209 = vunpack.c.l.b16 %v1393
        %v2210 = vunpack.c.l.b16 %v1394
        %v2211 = vunpack.c.l.b16 %v1395
        %v2212 = vunpack.c.l.b16 %v1396
        %v2213 = vunpack.c.l.b16 %v1397
        %v2214 = vunpack.c.l.b16 %v1398
        %v2215 = vunpack.c.l.b16 %v1399
        %v2216 = vunpack.c.l.b16 %v1400
        %v2217 = vpack.c.b16 %v2209, %v962
        %v2218 = vpack.c.b16 %v2210, %v963
        %v2219 = vpack.c.b16 %v2211, %v964
        %v2220 = vpack.c.b16 %v2212, %v965
        %v2221 = vpack.c.b16 %v2213, %v966
        %v2222 = vpack.c.b16 %v2214, %v967
        %v2223 = vpack.c.b16 %v2215, %v968
        %v2224 = vpack.c.b16 %v2216, %v969
        %v2226 = vshrl.u32 %v2217, 16
        %v2228 = vshll.u32 %v2217, 16
        %v2230 = vrot.slane %v2228, 1
        %v2231 = vor.u32 %v2226, %v2230
        %v2233 = vshrl.u32 %v2218, 16
        %v2235 = vshll.u32 %v2218, 16
        %v2237 = vrot.slane %v2235, 1
        %v2238 = vor.u32 %v2233, %v2237
        %v2240 = vshrl.u32 %v2219, 16
        %v2242 = vshll.u32 %v2219, 16
        %v2244 = vrot.slane %v2242, 1
        %v2245 = vor.u32 %v2240, %v2244
        %v2247 = vshrl.u32 %v2220, 16
        %v2249 = vshll.u32 %v2220, 16
        %v2251 = vrot.slane %v2249, 1
        %v2252 = vor.u32 %v2247, %v2251
        %v2254 = vshrl.u32 %v2221, 16
        %v2256 = vshll.u32 %v2221, 16
        %v2258 = vrot.slane %v2256, 1
        %v2259 = vor.u32 %v2254, %v2258
        %v2261 = vshrl.u32 %v2222, 16
        %v2263 = vshll.u32 %v2222, 16
        %v2265 = vrot.slane %v2263, 1
        %v2266 = vor.u32 %v2261, %v2265
        %v2268 = vshrl.u32 %v2223, 16
        %v2270 = vshll.u32 %v2223, 16
        %v2272 = vrot.slane %v2270, 1
        %v2273 = vor.u32 %v2268, %v2272
        %v2275 = vshrl.u32 %v2224, 16
        %v2277 = vshll.u32 %v2224, 16
        %v2279 = vrot.slane %v2277, 1
        %v2280 = vor.u32 %v2275, %v2279
        %2281 = vrot.lane.b32.xlu0 %v2231, 60
        %v2282 = vpop.permute.xlu0 %2281
        %2283 = vrot.lane.b32.xlu0 %v2238, 60
        %v2284 = vpop.permute.xlu0 %2283
        %2285 = vrot.lane.b32.xlu0 %v2245, 60
        %v2286 = vpop.permute.xlu0 %2285
        %2287 = vrot.lane.b32.xlu0 %v2252, 60
        %v2288 = vpop.permute.xlu0 %2287
        %2289 = vrot.lane.b32.xlu0 %v2259, 60
        %v2290 = vpop.permute.xlu0 %2289
        %2291 = vrot.lane.b32.xlu0 %v2266, 60
        %v2292 = vpop.permute.xlu0 %2291
        %2293 = vrot.lane.b32.xlu0 %v2273, 60
        %v2294 = vpop.permute.xlu0 %2293
        %2295 = vrot.lane.b32.xlu0 %v2280, 60
        %v2296 = vpop.permute.xlu0 %2295
        %v2299 = vsel %vm1074, %v349, %v1402
        %v2302 = vsel %vm1074, %v350, %v1404
        %v2305 = vsel %vm1074, %v351, %v1406
        %v2308 = vsel %vm1074, %v352, %v1408
        %v2311 = vsel %vm1074, %v353, %v1410
        %v2314 = vsel %vm1074, %v354, %v1412
        %v2317 = vsel %vm1074, %v355, %v1414
        %v2320 = vsel %vm1074, %v356, %v1416
        %v2322 = vsel %vm1099, %v2299, %v1514
        %v2324 = vsel %vm1099, %v2302, %v1516
        %v2326 = vsel %vm1099, %v2305, %v1518
        %v2328 = vsel %vm1099, %v2308, %v1520
        %v2330 = vsel %vm1099, %v2311, %v1522
        %v2332 = vsel %vm1099, %v2314, %v1524
        %v2334 = vsel %vm1099, %v2317, %v1526
        %v2336 = vsel %vm1099, %v2320, %v1528
        %v2338 = vsel %vm1116, %v2322, %v1610
        %v2340 = vsel %vm1116, %v2324, %v1612
        %v2342 = vsel %vm1116, %v2326, %v1614
        %v2344 = vsel %vm1116, %v2328, %v1616
        %v2346 = vsel %vm1116, %v2330, %v1618
        %v2348 = vsel %vm1116, %v2332, %v1620
        %v2350 = vsel %vm1116, %v2334, %v1622
        %v2352 = vsel %vm1116, %v2336, %v1624
        %v2354 = vsel %vm1133, %v2338, %v1626
        %v2356 = vsel %vm1133, %v2340, %v1628
        %v2358 = vsel %vm1133, %v2342, %v1630
        %v2360 = vsel %vm1133, %v2344, %v1632
        %v2362 = vsel %vm1133, %v2346, %v1634
        %v2364 = vsel %vm1133, %v2348, %v1636
        %v2366 = vsel %vm1133, %v2350, %v1638
        %v2368 = vsel %vm1133, %v2352, %v1640
        %v2370 = vsel %vm1150, %v2354, %v1642
        %v2372 = vsel %vm1150, %v2356, %v1644
        %v2374 = vsel %vm1150, %v2358, %v1646
        %v2376 = vsel %vm1150, %v2360, %v1648
        %v2378 = vsel %vm1150, %v2362, %v1650
        %v2380 = vsel %vm1150, %v2364, %v1652
        %v2382 = vsel %vm1150, %v2366, %v1654
        %v2384 = vsel %vm1150, %v2368, %v1656
        %v2386 = vsel %vm1167, %v2370, %v1738
        %v2388 = vsel %vm1167, %v2372, %v1740
        %v2390 = vsel %vm1167, %v2374, %v1742
        %v2392 = vsel %vm1167, %v2376, %v1744
        %v2394 = vsel %vm1167, %v2378, %v1746
        %v2396 = vsel %vm1167, %v2380, %v1748
        %v2398 = vsel %vm1167, %v2382, %v1750
        %v2400 = vsel %vm1167, %v2384, %v1752
        %v2402 = vsel %vm1184, %v2386, %v1834
        %v2404 = vsel %vm1184, %v2388, %v1836
        %v2406 = vsel %vm1184, %v2390, %v1838
        %v2408 = vsel %vm1184, %v2392, %v1840
        %v2410 = vsel %vm1184, %v2394, %v1842
        %v2412 = vsel %vm1184, %v2396, %v1844
        %v2414 = vsel %vm1184, %v2398, %v1846
        %v2416 = vsel %vm1184, %v2400, %v1848
        %v2418 = vsel %vm1201, %v2402, %v1850
        %v2420 = vsel %vm1201, %v2404, %v1852
        %v2422 = vsel %vm1201, %v2406, %v1854
        %v2424 = vsel %vm1201, %v2408, %v1856
        %v2426 = vsel %vm1201, %v2410, %v1858
        %v2428 = vsel %vm1201, %v2412, %v1860
        %v2430 = vsel %vm1201, %v2414, %v1862
        %v2432 = vsel %vm1201, %v2416, %v1864
        %v2434 = vsel %vm1218, %v2418, %v1866
        %v2436 = vsel %vm1218, %v2420, %v1868
        %v2438 = vsel %vm1218, %v2422, %v1870
        %v2440 = vsel %vm1218, %v2424, %v1872
        %v2442 = vsel %vm1218, %v2426, %v1874
        %v2444 = vsel %vm1218, %v2428, %v1876
        %v2446 = vsel %vm1218, %v2430, %v1878
        %v2448 = vsel %vm1218, %v2432, %v1880
        %v2450 = vsel %vm1235, %v2434, %v1962
        %v2452 = vsel %vm1235, %v2436, %v1964
        %v2454 = vsel %vm1235, %v2438, %v1966
        %v2456 = vsel %vm1235, %v2440, %v1968
        %v2458 = vsel %vm1235, %v2442, %v1970
        %v2460 = vsel %vm1235, %v2444, %v1972
        %v2462 = vsel %vm1235, %v2446, %v1974
        %v2464 = vsel %vm1235, %v2448, %v1976
        %v2466 = vsel %vm1252, %v2450, %v2058
        %v2468 = vsel %vm1252, %v2452, %v2060
        %v2470 = vsel %vm1252, %v2454, %v2062
        %v2472 = vsel %vm1252, %v2456, %v2064
        %v2474 = vsel %vm1252, %v2458, %v2066
        %v2476 = vsel %vm1252, %v2460, %v2068
        %v2478 = vsel %vm1252, %v2462, %v2070
        %v2480 = vsel %vm1252, %v2464, %v2072
        %v2482 = vsel %vm1269, %v2466, %v2074
        %v2484 = vsel %vm1269, %v2468, %v2076
        %v2486 = vsel %vm1269, %v2470, %v2078
        %v2488 = vsel %vm1269, %v2472, %v2080
        %v2490 = vsel %vm1269, %v2474, %v2082
        %v2492 = vsel %vm1269, %v2476, %v2084
        %v2494 = vsel %vm1269, %v2478, %v2086
        %v2496 = vsel %vm1269, %v2480, %v2088
        %v2498 = vsel %vm1286, %v2482, %v2090
        %v2500 = vsel %vm1286, %v2484, %v2092
        %v2502 = vsel %vm1286, %v2486, %v2094
        %v2504 = vsel %vm1286, %v2488, %v2096
        %v2506 = vsel %vm1286, %v2490, %v2098
        %v2508 = vsel %vm1286, %v2492, %v2100
        %v2510 = vsel %vm1286, %v2494, %v2102
        %v2512 = vsel %vm1286, %v2496, %v2104
        %v2514 = vsel %vm1303, %v2498, %v2186
        %v2516 = vsel %vm1303, %v2500, %v2188
        %v2518 = vsel %vm1303, %v2502, %v2190
        %v2520 = vsel %vm1303, %v2504, %v2192
        %v2522 = vsel %vm1303, %v2506, %v2194
        %v2524 = vsel %vm1303, %v2508, %v2196
        %v2526 = vsel %vm1303, %v2510, %v2198
        %v2528 = vsel %vm1303, %v2512, %v2200
        %v2530 = vsel %vm1320, %v2514, %v2282
        %v2532 = vsel %vm1320, %v2516, %v2284
        %v2534 = vsel %vm1320, %v2518, %v2286
        %v2536 = vsel %vm1320, %v2520, %v2288
        %v2538 = vsel %vm1320, %v2522, %v2290
        %v2540 = vsel %vm1320, %v2524, %v2292
        %v2542 = vsel %vm1320, %v2526, %v2294
        %v2544 = vsel %vm1320, %v2528, %v2296
        %s2545 = scalar_lea.vmem %s329, 8
        %v2546 = vld [vmem:[%s2545] sm:$0xf]
        %v2547 = vld [vmem:[%s2545 + $0x8] sm:$0xf]
        %v2548 = vld [vmem:[%s2545 + $0x10] sm:$0xf]
        %v2549 = vld [vmem:[%s2545 + $0x18] sm:$0xf]
        %v2550 = vld [vmem:[%s2545 + $0x20] sm:$0xf]
        %v2551 = vld [vmem:[%s2545 + $0x28] sm:$0xf]
        %v2552 = vld [vmem:[%s2545 + $0x30] sm:$0xf]
        %v2553 = vld [vmem:[%s2545 + $0x38] sm:$0xf]
        %s2554 = scalar_lea.vmem %s329, 80
        %v2555 = vld [vmem:[%s2554] sm:$0xf]
        %v2556 = vld [vmem:[%s2554 + $0x8] sm:$0xf]
        %v2557 = vld [vmem:[%s2554 + $0x10] sm:$0xf]
        %v2558 = vld [vmem:[%s2554 + $0x18] sm:$0xf]
        %v2559 = vld [vmem:[%s2554 + $0x20] sm:$0xf]
        %v2560 = vld [vmem:[%s2554 + $0x28] sm:$0xf]
        %v2561 = vld [vmem:[%s2554 + $0x30] sm:$0xf]
        %v2562 = vld [vmem:[%s2554 + $0x38] sm:$0xf]
        %s2563 = scalar_lea.vmem %s329, 152
        %v2564 = vld [vmem:[%s2563] sm:$0xf]
        %v2565 = vld [vmem:[%s2563 + $0x8] sm:$0xf]
        %v2566 = vld [vmem:[%s2563 + $0x10] sm:$0xf]
        %v2567 = vld [vmem:[%s2563 + $0x18] sm:$0xf]
        %v2568 = vld [vmem:[%s2563 + $0x20] sm:$0xf]
        %v2569 = vld [vmem:[%s2563 + $0x28] sm:$0xf]
        %v2570 = vld [vmem:[%s2563 + $0x30] sm:$0xf]
        %v2571 = vld [vmem:[%s2563 + $0x38] sm:$0xf]
        %s2572 = scalar_lea.vmem %s329, 224
        %v2573 = vld [vmem:[%s2572] sm:$0xf]
        %v2574 = vld [vmem:[%s2572 + $0x8] sm:$0xf]
        %v2575 = vld [vmem:[%s2572 + $0x10] sm:$0xf]
        %v2576 = vld [vmem:[%s2572 + $0x18] sm:$0xf]
        %v2577 = vld [vmem:[%s2572 + $0x20] sm:$0xf]
        %v2578 = vld [vmem:[%s2572 + $0x28] sm:$0xf]
        %v2579 = vld [vmem:[%s2572 + $0x30] sm:$0xf]
        %v2580 = vld [vmem:[%s2572 + $0x38] sm:$0xf]
        %s2581 = scalar_lea.vmem %s329, 296
        %v2582 = vld [vmem:[%s2581] sm:$0xf]
        %v2583 = vld [vmem:[%s2581 + $0x8] sm:$0xf]
        %v2584 = vld [vmem:[%s2581 + $0x10] sm:$0xf]
        %v2585 = vld [vmem:[%s2581 + $0x18] sm:$0xf]
        %v2586 = vld [vmem:[%s2581 + $0x20] sm:$0xf]
        %v2587 = vld [vmem:[%s2581 + $0x28] sm:$0xf]
        %v2588 = vld [vmem:[%s2581 + $0x30] sm:$0xf]
        %v2589 = vld [vmem:[%s2581 + $0x38] sm:$0xf]
        %s2590 = scalar_lea.vmem %s329, 368
        %v2591 = vld [vmem:[%s2590] sm:$0xf]
        %v2592 = vld [vmem:[%s2590 + $0x8] sm:$0xf]
        %v2593 = vld [vmem:[%s2590 + $0x10] sm:$0xf]
        %v2594 = vld [vmem:[%s2590 + $0x18] sm:$0xf]
        %v2595 = vld [vmem:[%s2590 + $0x20] sm:$0xf]
        %v2596 = vld [vmem:[%s2590 + $0x28] sm:$0xf]
        %v2597 = vld [vmem:[%s2590 + $0x30] sm:$0xf]
        %v2598 = vld [vmem:[%s2590 + $0x38] sm:$0xf]
        %s2599 = scalar_lea.vmem %s329, 440
        %v2600 = vld [vmem:[%s2599] sm:$0xf]
        %v2601 = vld [vmem:[%s2599 + $0x8] sm:$0xf]
        %v2602 = vld [vmem:[%s2599 + $0x10] sm:$0xf]
        %v2603 = vld [vmem:[%s2599 + $0x18] sm:$0xf]
        %v2604 = vld [vmem:[%s2599 + $0x20] sm:$0xf]
        %v2605 = vld [vmem:[%s2599 + $0x28] sm:$0xf]
        %v2606 = vld [vmem:[%s2599 + $0x30] sm:$0xf]
        %v2607 = vld [vmem:[%s2599 + $0x38] sm:$0xf]
        %s2608 = scalar_lea.vmem %s329, 512
        %v2609 = vld [vmem:[%s2608] sm:$0xf]
        %v2610 = vld [vmem:[%s2608 + $0x8] sm:$0xf]
        %v2611 = vld [vmem:[%s2608 + $0x10] sm:$0xf]
        %v2612 = vld [vmem:[%s2608 + $0x18] sm:$0xf]
        %v2613 = vld [vmem:[%s2608 + $0x20] sm:$0xf]
        %v2614 = vld [vmem:[%s2608 + $0x28] sm:$0xf]
        %v2615 = vld [vmem:[%s2608 + $0x30] sm:$0xf]
        %v2616 = vld [vmem:[%s2608 + $0x38] sm:$0xf]
        %2617 = vrot.lane.b32.xlu0 %v810, 4
        %v2618 = vpop.permute.xlu0 %2617
        %2619 = vrot.lane.b32.xlu0 %v811, 4
        %v2620 = vpop.permute.xlu0 %2619
        %2621 = vrot.lane.b32.xlu0 %v812, 4
        %v2622 = vpop.permute.xlu0 %2621
        %2623 = vrot.lane.b32.xlu0 %v813, 4
        %v2624 = vpop.permute.xlu0 %2623
        %2625 = vrot.lane.b32.xlu0 %v814, 4
        %v2626 = vpop.permute.xlu0 %2625
        %2627 = vrot.lane.b32.xlu0 %v815, 4
        %v2628 = vpop.permute.xlu0 %2627
        %2629 = vrot.lane.b32.xlu0 %v816, 4
        %v2630 = vpop.permute.xlu0 %2629
        %2631 = vrot.lane.b32.xlu0 %v817, 4
        %v2632 = vpop.permute.xlu0 %2631
        %2633 = vrot.lane.b32.xlu0 %v850, 8
        %v2634 = vpop.permute.xlu0 %2633
        %2635 = vrot.lane.b32.xlu0 %v851, 8
        %v2636 = vpop.permute.xlu0 %2635
        %2637 = vrot.lane.b32.xlu0 %v852, 8
        %v2638 = vpop.permute.xlu0 %2637
        %2639 = vrot.lane.b32.xlu0 %v853, 8
        %v2640 = vpop.permute.xlu0 %2639
        %2641 = vrot.lane.b32.xlu0 %v854, 8
        %v2642 = vpop.permute.xlu0 %2641
        %2643 = vrot.lane.b32.xlu0 %v855, 8
        %v2644 = vpop.permute.xlu0 %2643
        %2645 = vrot.lane.b32.xlu0 %v856, 8
        %v2646 = vpop.permute.xlu0 %2645
        %2647 = vrot.lane.b32.xlu0 %v857, 8
        %v2648 = vpop.permute.xlu0 %2647
        %2649 = vrot.lane.b32.xlu0 %v890, 12
        %v2650 = vpop.permute.xlu0 %2649
        %2651 = vrot.lane.b32.xlu0 %v891, 12
        %v2652 = vpop.permute.xlu0 %2651
        %2653 = vrot.lane.b32.xlu0 %v892, 12
        %v2654 = vpop.permute.xlu0 %2653
        %2655 = vrot.lane.b32.xlu0 %v893, 12
        %v2656 = vpop.permute.xlu0 %2655
        %2657 = vrot.lane.b32.xlu0 %v894, 12
        %v2658 = vpop.permute.xlu0 %2657
        %2659 = vrot.lane.b32.xlu0 %v895, 12
        %v2660 = vpop.permute.xlu0 %2659
        %2661 = vrot.lane.b32.xlu0 %v896, 12
        %v2662 = vpop.permute.xlu0 %2661
        %2663 = vrot.lane.b32.xlu0 %v897, 12
        %v2664 = vpop.permute.xlu0 %2663
        %2665 = vrot.lane.b32.xlu0 %v930, 16
        %v2666 = vpop.permute.xlu0 %2665
        %2667 = vrot.lane.b32.xlu0 %v931, 16
        %v2668 = vpop.permute.xlu0 %2667
        %2669 = vrot.lane.b32.xlu0 %v932, 16
        %v2670 = vpop.permute.xlu0 %2669
        %2671 = vrot.lane.b32.xlu0 %v933, 16
        %v2672 = vpop.permute.xlu0 %2671
        %2673 = vrot.lane.b32.xlu0 %v934, 16
        %v2674 = vpop.permute.xlu0 %2673
        %2675 = vrot.lane.b32.xlu0 %v935, 16
        %v2676 = vpop.permute.xlu0 %2675
        %2677 = vrot.lane.b32.xlu0 %v936, 16
        %v2678 = vpop.permute.xlu0 %2677
        %2679 = vrot.lane.b32.xlu0 %v937, 16
        %v2680 = vpop.permute.xlu0 %2679
        %2681 = vrot.lane.b32.xlu0 %v970, 20
        %v2682 = vpop.permute.xlu0 %2681
        %2683 = vrot.lane.b32.xlu0 %v971, 20
        %v2684 = vpop.permute.xlu0 %2683
        %2685 = vrot.lane.b32.xlu0 %v972, 20
        %v2686 = vpop.permute.xlu0 %2685
        %2687 = vrot.lane.b32.xlu0 %v973, 20
        %v2688 = vpop.permute.xlu0 %2687
        %2689 = vrot.lane.b32.xlu0 %v974, 20
        %v2690 = vpop.permute.xlu0 %2689
        %2691 = vrot.lane.b32.xlu0 %v975, 20
        %v2692 = vpop.permute.xlu0 %2691
        %2693 = vrot.lane.b32.xlu0 %v976, 20
        %v2694 = vpop.permute.xlu0 %2693
        %2695 = vrot.lane.b32.xlu0 %v977, 20
        %v2696 = vpop.permute.xlu0 %2695
        %2697 = vrot.lane.b32.xlu0 %v1010, 24
        %v2698 = vpop.permute.xlu0 %2697
        %2699 = vrot.lane.b32.xlu0 %v1011, 24
        %v2700 = vpop.permute.xlu0 %2699
        %2701 = vrot.lane.b32.xlu0 %v1012, 24
        %v2702 = vpop.permute.xlu0 %2701
        %2703 = vrot.lane.b32.xlu0 %v1013, 24
        %v2704 = vpop.permute.xlu0 %2703
        %2705 = vrot.lane.b32.xlu0 %v1014, 24
        %v2706 = vpop.permute.xlu0 %2705
        %2707 = vrot.lane.b32.xlu0 %v1015, 24
        %v2708 = vpop.permute.xlu0 %2707
        %2709 = vrot.lane.b32.xlu0 %v1016, 24
        %v2710 = vpop.permute.xlu0 %2709
        %2711 = vrot.lane.b32.xlu0 %v1017, 24
        %v2712 = vpop.permute.xlu0 %2711
        %2713 = vrot.lane.b32.xlu0 %v1050, 28
        %v2714 = vpop.permute.xlu0 %2713
        %2715 = vrot.lane.b32.xlu0 %v1051, 28
        %v2716 = vpop.permute.xlu0 %2715
        %2717 = vrot.lane.b32.xlu0 %v1052, 28
        %v2718 = vpop.permute.xlu0 %2717
        %2719 = vrot.lane.b32.xlu0 %v1053, 28
        %v2720 = vpop.permute.xlu0 %2719
        %2721 = vrot.lane.b32.xlu0 %v1054, 28
        %v2722 = vpop.permute.xlu0 %2721
        %2723 = vrot.lane.b32.xlu0 %v1055, 28
        %v2724 = vpop.permute.xlu0 %2723
        %2725 = vrot.lane.b32.xlu0 %v1056, 28
        %v2726 = vpop.permute.xlu0 %2725
        %2727 = vrot.lane.b32.xlu0 %v1057, 28
        %v2728 = vpop.permute.xlu0 %2727
        %v2737 = vunpack.c.l.b16 %v2546
        %v2738 = vunpack.c.l.b16 %v2547
        %v2739 = vunpack.c.l.b16 %v2548
        %v2740 = vunpack.c.l.b16 %v2549
        %v2741 = vunpack.c.l.b16 %v2550
        %v2742 = vunpack.c.l.b16 %v2551
        %v2743 = vunpack.c.l.b16 %v2552
        %v2744 = vunpack.c.l.b16 %v2553
        %v2745 = vpack.c.b16 %v2737, %v2737
        %v2746 = vpack.c.b16 %v2738, %v2738
        %v2747 = vpack.c.b16 %v2739, %v2739
        %v2748 = vpack.c.b16 %v2740, %v2740
        %v2749 = vpack.c.b16 %v2741, %v2741
        %v2750 = vpack.c.b16 %v2742, %v2742
        %v2751 = vpack.c.b16 %v2743, %v2743
        %v2752 = vpack.c.b16 %v2744, %v2744
        %2753 = vrot.lane.b32.xlu0 %v2745, 32
        %v2754 = vpop.permute.xlu0 %2753
        %2755 = vrot.lane.b32.xlu0 %v2746, 32
        %v2756 = vpop.permute.xlu0 %2755
        %2757 = vrot.lane.b32.xlu0 %v2747, 32
        %v2758 = vpop.permute.xlu0 %2757
        %2759 = vrot.lane.b32.xlu0 %v2748, 32
        %v2760 = vpop.permute.xlu0 %2759
        %2761 = vrot.lane.b32.xlu0 %v2749, 32
        %v2762 = vpop.permute.xlu0 %2761
        %2763 = vrot.lane.b32.xlu0 %v2750, 32
        %v2764 = vpop.permute.xlu0 %2763
        %2765 = vrot.lane.b32.xlu0 %v2751, 32
        %v2766 = vpop.permute.xlu0 %2765
        %2767 = vrot.lane.b32.xlu0 %v2752, 32
        %v2768 = vpop.permute.xlu0 %2767
        %v2777 = vunpack.c.l.b16 %v2555
        %v2778 = vunpack.c.l.b16 %v2556
        %v2779 = vunpack.c.l.b16 %v2557
        %v2780 = vunpack.c.l.b16 %v2558
        %v2781 = vunpack.c.l.b16 %v2559
        %v2782 = vunpack.c.l.b16 %v2560
        %v2783 = vunpack.c.l.b16 %v2561
        %v2784 = vunpack.c.l.b16 %v2562
        %v2785 = vpack.c.b16 %v2777, %v2777
        %v2786 = vpack.c.b16 %v2778, %v2778
        %v2787 = vpack.c.b16 %v2779, %v2779
        %v2788 = vpack.c.b16 %v2780, %v2780
        %v2789 = vpack.c.b16 %v2781, %v2781
        %v2790 = vpack.c.b16 %v2782, %v2782
        %v2791 = vpack.c.b16 %v2783, %v2783
        %v2792 = vpack.c.b16 %v2784, %v2784
        %2793 = vrot.lane.b32.xlu0 %v2785, 36
        %v2794 = vpop.permute.xlu0 %2793
        %2795 = vrot.lane.b32.xlu0 %v2786, 36
        %v2796 = vpop.permute.xlu0 %2795
        %2797 = vrot.lane.b32.xlu0 %v2787, 36
        %v2798 = vpop.permute.xlu0 %2797
        %2799 = vrot.lane.b32.xlu0 %v2788, 36
        %v2800 = vpop.permute.xlu0 %2799
        %2801 = vrot.lane.b32.xlu0 %v2789, 36
        %v2802 = vpop.permute.xlu0 %2801
        %2803 = vrot.lane.b32.xlu0 %v2790, 36
        %v2804 = vpop.permute.xlu0 %2803
        %2805 = vrot.lane.b32.xlu0 %v2791, 36
        %v2806 = vpop.permute.xlu0 %2805
        %2807 = vrot.lane.b32.xlu0 %v2792, 36
        %v2808 = vpop.permute.xlu0 %2807
        %v2817 = vunpack.c.l.b16 %v2564
        %v2818 = vunpack.c.l.b16 %v2565
        %v2819 = vunpack.c.l.b16 %v2566
        %v2820 = vunpack.c.l.b16 %v2567
        %v2821 = vunpack.c.l.b16 %v2568
        %v2822 = vunpack.c.l.b16 %v2569
        %v2823 = vunpack.c.l.b16 %v2570
        %v2824 = vunpack.c.l.b16 %v2571
        %v2825 = vpack.c.b16 %v2817, %v2817
        %v2826 = vpack.c.b16 %v2818, %v2818
        %v2827 = vpack.c.b16 %v2819, %v2819
        %v2828 = vpack.c.b16 %v2820, %v2820
        %v2829 = vpack.c.b16 %v2821, %v2821
        %v2830 = vpack.c.b16 %v2822, %v2822
        %v2831 = vpack.c.b16 %v2823, %v2823
        %v2832 = vpack.c.b16 %v2824, %v2824
        %2833 = vrot.lane.b32.xlu0 %v2825, 40
        %v2834 = vpop.permute.xlu0 %2833
        %2835 = vrot.lane.b32.xlu0 %v2826, 40
        %v2836 = vpop.permute.xlu0 %2835
        %2837 = vrot.lane.b32.xlu0 %v2827, 40
        %v2838 = vpop.permute.xlu0 %2837
        %2839 = vrot.lane.b32.xlu0 %v2828, 40
        %v2840 = vpop.permute.xlu0 %2839
        %2841 = vrot.lane.b32.xlu0 %v2829, 40
        %v2842 = vpop.permute.xlu0 %2841
        %2843 = vrot.lane.b32.xlu0 %v2830, 40
        %v2844 = vpop.permute.xlu0 %2843
        %2845 = vrot.lane.b32.xlu0 %v2831, 40
        %v2846 = vpop.permute.xlu0 %2845
        %2847 = vrot.lane.b32.xlu0 %v2832, 40
        %v2848 = vpop.permute.xlu0 %2847
        %v2857 = vunpack.c.l.b16 %v2573
        %v2858 = vunpack.c.l.b16 %v2574
        %v2859 = vunpack.c.l.b16 %v2575
        %v2860 = vunpack.c.l.b16 %v2576
        %v2861 = vunpack.c.l.b16 %v2577
        %v2862 = vunpack.c.l.b16 %v2578
        %v2863 = vunpack.c.l.b16 %v2579
        %v2864 = vunpack.c.l.b16 %v2580
        %v2865 = vpack.c.b16 %v2857, %v2857
        %v2866 = vpack.c.b16 %v2858, %v2858
        %v2867 = vpack.c.b16 %v2859, %v2859
        %v2868 = vpack.c.b16 %v2860, %v2860
        %v2869 = vpack.c.b16 %v2861, %v2861
        %v2870 = vpack.c.b16 %v2862, %v2862
        %v2871 = vpack.c.b16 %v2863, %v2863
        %v2872 = vpack.c.b16 %v2864, %v2864
        %2873 = vrot.lane.b32.xlu0 %v2865, 44
        %v2874 = vpop.permute.xlu0 %2873
        %2875 = vrot.lane.b32.xlu0 %v2866, 44
        %v2876 = vpop.permute.xlu0 %2875
        %2877 = vrot.lane.b32.xlu0 %v2867, 44
        %v2878 = vpop.permute.xlu0 %2877
        %2879 = vrot.lane.b32.xlu0 %v2868, 44
        %v2880 = vpop.permute.xlu0 %2879
        %2881 = vrot.lane.b32.xlu0 %v2869, 44
        %v2882 = vpop.permute.xlu0 %2881
        %2883 = vrot.lane.b32.xlu0 %v2870, 44
        %v2884 = vpop.permute.xlu0 %2883
        %2885 = vrot.lane.b32.xlu0 %v2871, 44
        %v2886 = vpop.permute.xlu0 %2885
        %2887 = vrot.lane.b32.xlu0 %v2872, 44
        %v2888 = vpop.permute.xlu0 %2887
        %v2897 = vunpack.c.l.b16 %v2582
        %v2898 = vunpack.c.l.b16 %v2583
        %v2899 = vunpack.c.l.b16 %v2584
        %v2900 = vunpack.c.l.b16 %v2585
        %v2901 = vunpack.c.l.b16 %v2586
        %v2902 = vunpack.c.l.b16 %v2587
        %v2903 = vunpack.c.l.b16 %v2588
        %v2904 = vunpack.c.l.b16 %v2589
        %v2905 = vpack.c.b16 %v2897, %v2897
        %v2906 = vpack.c.b16 %v2898, %v2898
        %v2907 = vpack.c.b16 %v2899, %v2899
        %v2908 = vpack.c.b16 %v2900, %v2900
        %v2909 = vpack.c.b16 %v2901, %v2901
        %v2910 = vpack.c.b16 %v2902, %v2902
        %v2911 = vpack.c.b16 %v2903, %v2903
        %v2912 = vpack.c.b16 %v2904, %v2904
        %2913 = vrot.lane.b32.xlu0 %v2905, 48
        %v2914 = vpop.permute.xlu0 %2913
        %2915 = vrot.lane.b32.xlu0 %v2906, 48
        %v2916 = vpop.permute.xlu0 %2915
        %2917 = vrot.lane.b32.xlu0 %v2907, 48
        %v2918 = vpop.permute.xlu0 %2917
        %2919 = vrot.lane.b32.xlu0 %v2908, 48
        %v2920 = vpop.permute.xlu0 %2919
        %2921 = vrot.lane.b32.xlu0 %v2909, 48
        %v2922 = vpop.permute.xlu0 %2921
        %2923 = vrot.lane.b32.xlu0 %v2910, 48
        %v2924 = vpop.permute.xlu0 %2923
        %2925 = vrot.lane.b32.xlu0 %v2911, 48
        %v2926 = vpop.permute.xlu0 %2925
        %2927 = vrot.lane.b32.xlu0 %v2912, 48
        %v2928 = vpop.permute.xlu0 %2927
        %v2937 = vunpack.c.l.b16 %v2591
        %v2938 = vunpack.c.l.b16 %v2592
        %v2939 = vunpack.c.l.b16 %v2593
        %v2940 = vunpack.c.l.b16 %v2594
        %v2941 = vunpack.c.l.b16 %v2595
        %v2942 = vunpack.c.l.b16 %v2596
        %v2943 = vunpack.c.l.b16 %v2597
        %v2944 = vunpack.c.l.b16 %v2598
        %v2945 = vpack.c.b16 %v2937, %v2937
        %v2946 = vpack.c.b16 %v2938, %v2938
        %v2947 = vpack.c.b16 %v2939, %v2939
        %v2948 = vpack.c.b16 %v2940, %v2940
        %v2949 = vpack.c.b16 %v2941, %v2941
        %v2950 = vpack.c.b16 %v2942, %v2942
        %v2951 = vpack.c.b16 %v2943, %v2943
        %v2952 = vpack.c.b16 %v2944, %v2944
        %2953 = vrot.lane.b32.xlu0 %v2945, 52
        %v2954 = vpop.permute.xlu0 %2953
        %2955 = vrot.lane.b32.xlu0 %v2946, 52
        %v2956 = vpop.permute.xlu0 %2955
        %2957 = vrot.lane.b32.xlu0 %v2947, 52
        %v2958 = vpop.permute.xlu0 %2957
        %2959 = vrot.lane.b32.xlu0 %v2948, 52
        %v2960 = vpop.permute.xlu0 %2959
        %2961 = vrot.lane.b32.xlu0 %v2949, 52
        %v2962 = vpop.permute.xlu0 %2961
        %2963 = vrot.lane.b32.xlu0 %v2950, 52
        %v2964 = vpop.permute.xlu0 %2963
        %2965 = vrot.lane.b32.xlu0 %v2951, 52
        %v2966 = vpop.permute.xlu0 %2965
        %2967 = vrot.lane.b32.xlu0 %v2952, 52
        %v2968 = vpop.permute.xlu0 %2967
        %v2977 = vunpack.c.l.b16 %v2600
        %v2978 = vunpack.c.l.b16 %v2601
        %v2979 = vunpack.c.l.b16 %v2602
        %v2980 = vunpack.c.l.b16 %v2603
        %v2981 = vunpack.c.l.b16 %v2604
        %v2982 = vunpack.c.l.b16 %v2605
        %v2983 = vunpack.c.l.b16 %v2606
        %v2984 = vunpack.c.l.b16 %v2607
        %v2985 = vpack.c.b16 %v2977, %v2977
        %v2986 = vpack.c.b16 %v2978, %v2978
        %v2987 = vpack.c.b16 %v2979, %v2979
        %v2988 = vpack.c.b16 %v2980, %v2980
        %v2989 = vpack.c.b16 %v2981, %v2981
        %v2990 = vpack.c.b16 %v2982, %v2982
        %v2991 = vpack.c.b16 %v2983, %v2983
        %v2992 = vpack.c.b16 %v2984, %v2984
        %2993 = vrot.lane.b32.xlu0 %v2985, 56
        %v2994 = vpop.permute.xlu0 %2993
        %2995 = vrot.lane.b32.xlu0 %v2986, 56
        %v2996 = vpop.permute.xlu0 %2995
        %2997 = vrot.lane.b32.xlu0 %v2987, 56
        %v2998 = vpop.permute.xlu0 %2997
        %2999 = vrot.lane.b32.xlu0 %v2988, 56
        %v3000 = vpop.permute.xlu0 %2999
        %3001 = vrot.lane.b32.xlu0 %v2989, 56
        %v3002 = vpop.permute.xlu0 %3001
        %3003 = vrot.lane.b32.xlu0 %v2990, 56
        %v3004 = vpop.permute.xlu0 %3003
        %3005 = vrot.lane.b32.xlu0 %v2991, 56
        %v3006 = vpop.permute.xlu0 %3005
        %3007 = vrot.lane.b32.xlu0 %v2992, 56
        %v3008 = vpop.permute.xlu0 %3007
        %v3017 = vunpack.c.l.b16 %v2609
        %v3018 = vunpack.c.l.b16 %v2610
        %v3019 = vunpack.c.l.b16 %v2611
        %v3020 = vunpack.c.l.b16 %v2612
        %v3021 = vunpack.c.l.b16 %v2613
        %v3022 = vunpack.c.l.b16 %v2614
        %v3023 = vunpack.c.l.b16 %v2615
        %v3024 = vunpack.c.l.b16 %v2616
        %v3025 = vpack.c.b16 %v3017, %v3017
        %v3026 = vpack.c.b16 %v3018, %v3018
        %v3027 = vpack.c.b16 %v3019, %v3019
        %v3028 = vpack.c.b16 %v3020, %v3020
        %v3029 = vpack.c.b16 %v3021, %v3021
        %v3030 = vpack.c.b16 %v3022, %v3022
        %v3031 = vpack.c.b16 %v3023, %v3023
        %v3032 = vpack.c.b16 %v3024, %v3024
        %3033 = vrot.lane.b32.xlu0 %v3025, 60
        %v3034 = vpop.permute.xlu0 %3033
        %3035 = vrot.lane.b32.xlu0 %v3026, 60
        %v3036 = vpop.permute.xlu0 %3035
        %3037 = vrot.lane.b32.xlu0 %v3027, 60
        %v3038 = vpop.permute.xlu0 %3037
        %3039 = vrot.lane.b32.xlu0 %v3028, 60
        %v3040 = vpop.permute.xlu0 %3039
        %3041 = vrot.lane.b32.xlu0 %v3029, 60
        %v3042 = vpop.permute.xlu0 %3041
        %3043 = vrot.lane.b32.xlu0 %v3030, 60
        %v3044 = vpop.permute.xlu0 %3043
        %3045 = vrot.lane.b32.xlu0 %v3031, 60
        %v3046 = vpop.permute.xlu0 %3045
        %3047 = vrot.lane.b32.xlu0 %v3032, 60
        %v3048 = vpop.permute.xlu0 %3047
        %v3051 = vsel %vm1074, %v403, %v2618
        %v3054 = vsel %vm1074, %v404, %v2620
        %v3057 = vsel %vm1074, %v405, %v2622
        %v3060 = vsel %vm1074, %v406, %v2624
        %v3063 = vsel %vm1074, %v407, %v2626
        %v3066 = vsel %vm1074, %v408, %v2628
        %v3069 = vsel %vm1074, %v409, %v2630
        %v3072 = vsel %vm1074, %v410, %v2632
        %v3074 = vsel %vm1099, %v3051, %v2634
        %v3076 = vsel %vm1099, %v3054, %v2636
        %v3078 = vsel %vm1099, %v3057, %v2638
        %v3080 = vsel %vm1099, %v3060, %v2640
        %v3082 = vsel %vm1099, %v3063, %v2642
        %v3084 = vsel %vm1099, %v3066, %v2644
        %v3086 = vsel %vm1099, %v3069, %v2646
        %v3088 = vsel %vm1099, %v3072, %v2648
        %v3090 = vsel %vm1116, %v3074, %v2650
        %v3092 = vsel %vm1116, %v3076, %v2652
        %v3094 = vsel %vm1116, %v3078, %v2654
        %v3096 = vsel %vm1116, %v3080, %v2656
        %v3098 = vsel %vm1116, %v3082, %v2658
        %v3100 = vsel %vm1116, %v3084, %v2660
        %v3102 = vsel %vm1116, %v3086, %v2662
        %v3104 = vsel %vm1116, %v3088, %v2664
        %v3106 = vsel %vm1133, %v3090, %v2666
        %v3108 = vsel %vm1133, %v3092, %v2668
        %v3110 = vsel %vm1133, %v3094, %v2670
        %v3112 = vsel %vm1133, %v3096, %v2672
        %v3114 = vsel %vm1133, %v3098, %v2674
        %v3116 = vsel %vm1133, %v3100, %v2676
        %v3118 = vsel %vm1133, %v3102, %v2678
        %v3120 = vsel %vm1133, %v3104, %v2680
        %v3122 = vsel %vm1150, %v3106, %v2682
        %v3124 = vsel %vm1150, %v3108, %v2684
        %v3126 = vsel %vm1150, %v3110, %v2686
        %v3128 = vsel %vm1150, %v3112, %v2688
        %v3130 = vsel %vm1150, %v3114, %v2690
        %v3132 = vsel %vm1150, %v3116, %v2692
        %v3134 = vsel %vm1150, %v3118, %v2694
        %v3136 = vsel %vm1150, %v3120, %v2696
        %v3138 = vsel %vm1167, %v3122, %v2698
        %v3140 = vsel %vm1167, %v3124, %v2700
        %v3142 = vsel %vm1167, %v3126, %v2702
        %v3144 = vsel %vm1167, %v3128, %v2704
        %v3146 = vsel %vm1167, %v3130, %v2706
        %v3148 = vsel %vm1167, %v3132, %v2708
        %v3150 = vsel %vm1167, %v3134, %v2710
        %v3152 = vsel %vm1167, %v3136, %v2712
        %v3154 = vsel %vm1184, %v3138, %v2714
        %v3156 = vsel %vm1184, %v3140, %v2716
        %v3158 = vsel %vm1184, %v3142, %v2718
        %v3160 = vsel %vm1184, %v3144, %v2720
        %v3162 = vsel %vm1184, %v3146, %v2722
        %v3164 = vsel %vm1184, %v3148, %v2724
        %v3166 = vsel %vm1184, %v3150, %v2726
        %v3168 = vsel %vm1184, %v3152, %v2728
        %v3170 = vsel %vm1201, %v3154, %v2754
        %v3172 = vsel %vm1201, %v3156, %v2756
        %v3174 = vsel %vm1201, %v3158, %v2758
        %v3176 = vsel %vm1201, %v3160, %v2760
        %v3178 = vsel %vm1201, %v3162, %v2762
        %v3180 = vsel %vm1201, %v3164, %v2764
        %v3182 = vsel %vm1201, %v3166, %v2766
        %v3184 = vsel %vm1201, %v3168, %v2768
        %v3186 = vsel %vm1218, %v3170, %v2794
        %v3188 = vsel %vm1218, %v3172, %v2796
        %v3190 = vsel %vm1218, %v3174, %v2798
        %v3192 = vsel %vm1218, %v3176, %v2800
        %v3194 = vsel %vm1218, %v3178, %v2802
        %v3196 = vsel %vm1218, %v3180, %v2804
        %v3198 = vsel %vm1218, %v3182, %v2806
        %v3200 = vsel %vm1218, %v3184, %v2808
        %v3202 = vsel %vm1235, %v3186, %v2834
        %v3204 = vsel %vm1235, %v3188, %v2836
        %v3206 = vsel %vm1235, %v3190, %v2838
        %v3208 = vsel %vm1235, %v3192, %v2840
        %v3210 = vsel %vm1235, %v3194, %v2842
        %v3212 = vsel %vm1235, %v3196, %v2844
        %v3214 = vsel %vm1235, %v3198, %v2846
        %v3216 = vsel %vm1235, %v3200, %v2848
        %v3218 = vsel %vm1252, %v3202, %v2874
        %v3220 = vsel %vm1252, %v3204, %v2876
        %v3222 = vsel %vm1252, %v3206, %v2878
        %v3224 = vsel %vm1252, %v3208, %v2880
        %v3226 = vsel %vm1252, %v3210, %v2882
        %v3228 = vsel %vm1252, %v3212, %v2884
        %v3230 = vsel %vm1252, %v3214, %v2886
        %v3232 = vsel %vm1252, %v3216, %v2888
        %v3234 = vsel %vm1269, %v3218, %v2914
        %v3236 = vsel %vm1269, %v3220, %v2916
        %v3238 = vsel %vm1269, %v3222, %v2918
        %v3240 = vsel %vm1269, %v3224, %v2920
        %v3242 = vsel %vm1269, %v3226, %v2922
        %v3244 = vsel %vm1269, %v3228, %v2924
        %v3246 = vsel %vm1269, %v3230, %v2926
        %v3248 = vsel %vm1269, %v3232, %v2928
        %v3250 = vsel %vm1286, %v3234, %v2954
        %v3252 = vsel %vm1286, %v3236, %v2956
        %v3254 = vsel %vm1286, %v3238, %v2958
        %v3256 = vsel %vm1286, %v3240, %v2960
        %v3258 = vsel %vm1286, %v3242, %v2962
        %v3260 = vsel %vm1286, %v3244, %v2964
        %v3262 = vsel %vm1286, %v3246, %v2966
        %v3264 = vsel %vm1286, %v3248, %v2968
        %v3266 = vsel %vm1303, %v3250, %v2994
        %v3268 = vsel %vm1303, %v3252, %v2996
        %v3270 = vsel %vm1303, %v3254, %v2998
        %v3272 = vsel %vm1303, %v3256, %v3000
        %v3274 = vsel %vm1303, %v3258, %v3002
        %v3276 = vsel %vm1303, %v3260, %v3004
        %v3278 = vsel %vm1303, %v3262, %v3006
        %v3280 = vsel %vm1303, %v3264, %v3008
        %v3282 = vsel %vm1320, %v3266, %v3034
        %v3284 = vsel %vm1320, %v3268, %v3036
        %v3286 = vsel %vm1320, %v3270, %v3038
        %v3288 = vsel %vm1320, %v3272, %v3040
        %v3290 = vsel %vm1320, %v3274, %v3042
        %v3292 = vsel %vm1320, %v3276, %v3044
        %v3294 = vsel %vm1320, %v3278, %v3046
        %v3296 = vsel %vm1320, %v3280, %v3048
        %v3297 = vld [vmem:[%s2545 + $0x4] sm:$0x1]
        %v3298 = vld [vmem:[%s2545 + $0xc] sm:$0x1]
        %v3299 = vld [vmem:[%s2545 + $0x14] sm:$0x1]
        %v3300 = vld [vmem:[%s2545 + $0x1c] sm:$0x1]
        %v3301 = vld [vmem:[%s2545 + $0x24] sm:$0x1]
        %v3302 = vld [vmem:[%s2545 + $0x2c] sm:$0x1]
        %v3303 = vld [vmem:[%s2545 + $0x34] sm:$0x1]
        %v3304 = vld [vmem:[%s2545 + $0x3c] sm:$0x1]
        %v3305 = vld [vmem:[%s2554 + $0x4] sm:$0x1]
        %v3306 = vld [vmem:[%s2554 + $0xc] sm:$0x1]
        %v3307 = vld [vmem:[%s2554 + $0x14] sm:$0x1]
        %v3308 = vld [vmem:[%s2554 + $0x1c] sm:$0x1]
        %v3309 = vld [vmem:[%s2554 + $0x24] sm:$0x1]
        %v3310 = vld [vmem:[%s2554 + $0x2c] sm:$0x1]
        %v3311 = vld [vmem:[%s2554 + $0x34] sm:$0x1]
        %v3312 = vld [vmem:[%s2554 + $0x3c] sm:$0x1]
        %v3313 = vld [vmem:[%s2581 + $0x4] sm:$0x1]
        %v3314 = vld [vmem:[%s2581 + $0xc] sm:$0x1]
        %v3315 = vld [vmem:[%s2581 + $0x14] sm:$0x1]
        %v3316 = vld [vmem:[%s2581 + $0x1c] sm:$0x1]
        %v3317 = vld [vmem:[%s2581 + $0x24] sm:$0x1]
        %v3318 = vld [vmem:[%s2581 + $0x2c] sm:$0x1]
        %v3319 = vld [vmem:[%s2581 + $0x34] sm:$0x1]
        %v3320 = vld [vmem:[%s2581 + $0x3c] sm:$0x1]
        %v3321 = vld [vmem:[%s2590 + $0x4] sm:$0x1]
        %v3322 = vld [vmem:[%s2590 + $0xc] sm:$0x1]
        %v3323 = vld [vmem:[%s2590 + $0x14] sm:$0x1]
        %v3324 = vld [vmem:[%s2590 + $0x1c] sm:$0x1]
        %v3325 = vld [vmem:[%s2590 + $0x24] sm:$0x1]
        %v3326 = vld [vmem:[%s2590 + $0x2c] sm:$0x1]
        %v3327 = vld [vmem:[%s2590 + $0x34] sm:$0x1]
        %v3328 = vld [vmem:[%s2590 + $0x3c] sm:$0x1]
        %3329 = vrot.lane.b32.xlu0 %v890, 4
        %v3330 = vpop.permute.xlu0 %3329
        %3331 = vrot.lane.b32.xlu0 %v891, 4
        %v3332 = vpop.permute.xlu0 %3331
        %3333 = vrot.lane.b32.xlu0 %v892, 4
        %v3334 = vpop.permute.xlu0 %3333
        %3335 = vrot.lane.b32.xlu0 %v893, 4
        %v3336 = vpop.permute.xlu0 %3335
        %3337 = vrot.lane.b32.xlu0 %v894, 4
        %v3338 = vpop.permute.xlu0 %3337
        %3339 = vrot.lane.b32.xlu0 %v895, 4
        %v3340 = vpop.permute.xlu0 %3339
        %3341 = vrot.lane.b32.xlu0 %v896, 4
        %v3342 = vpop.permute.xlu0 %3341
        %3343 = vrot.lane.b32.xlu0 %v897, 4
        %v3344 = vpop.permute.xlu0 %3343
        %3345 = vrot.lane.b32.xlu0 %v1911, 8
        %v3346 = vpop.permute.xlu0 %3345
        %3347 = vrot.lane.b32.xlu0 %v1918, 8
        %v3348 = vpop.permute.xlu0 %3347
        %3349 = vrot.lane.b32.xlu0 %v1925, 8
        %v3350 = vpop.permute.xlu0 %3349
        %3351 = vrot.lane.b32.xlu0 %v1932, 8
        %v3352 = vpop.permute.xlu0 %3351
        %3353 = vrot.lane.b32.xlu0 %v1939, 8
        %v3354 = vpop.permute.xlu0 %3353
        %3355 = vrot.lane.b32.xlu0 %v1946, 8
        %v3356 = vpop.permute.xlu0 %3355
        %3357 = vrot.lane.b32.xlu0 %v1953, 8
        %v3358 = vpop.permute.xlu0 %3357
        %3359 = vrot.lane.b32.xlu0 %v1960, 8
        %v3360 = vpop.permute.xlu0 %3359
        %3361 = vrot.lane.b32.xlu0 %v2007, 12
        %v3362 = vpop.permute.xlu0 %3361
        %3363 = vrot.lane.b32.xlu0 %v2014, 12
        %v3364 = vpop.permute.xlu0 %3363
        %3365 = vrot.lane.b32.xlu0 %v2021, 12
        %v3366 = vpop.permute.xlu0 %3365
        %3367 = vrot.lane.b32.xlu0 %v2028, 12
        %v3368 = vpop.permute.xlu0 %3367
        %3369 = vrot.lane.b32.xlu0 %v2035, 12
        %v3370 = vpop.permute.xlu0 %3369
        %3371 = vrot.lane.b32.xlu0 %v2042, 12
        %v3372 = vpop.permute.xlu0 %3371
        %3373 = vrot.lane.b32.xlu0 %v2049, 12
        %v3374 = vpop.permute.xlu0 %3373
        %3375 = vrot.lane.b32.xlu0 %v2056, 12
        %v3376 = vpop.permute.xlu0 %3375
        %3377 = vrot.lane.b32.xlu0 %v1010, 16
        %v3378 = vpop.permute.xlu0 %3377
        %3379 = vrot.lane.b32.xlu0 %v1011, 16
        %v3380 = vpop.permute.xlu0 %3379
        %3381 = vrot.lane.b32.xlu0 %v1012, 16
        %v3382 = vpop.permute.xlu0 %3381
        %3383 = vrot.lane.b32.xlu0 %v1013, 16
        %v3384 = vpop.permute.xlu0 %3383
        %3385 = vrot.lane.b32.xlu0 %v1014, 16
        %v3386 = vpop.permute.xlu0 %3385
        %3387 = vrot.lane.b32.xlu0 %v1015, 16
        %v3388 = vpop.permute.xlu0 %3387
        %3389 = vrot.lane.b32.xlu0 %v1016, 16
        %v3390 = vpop.permute.xlu0 %3389
        %3391 = vrot.lane.b32.xlu0 %v1017, 16
        %v3392 = vpop.permute.xlu0 %3391
        %3393 = vrot.lane.b32.xlu0 %v1050, 20
        %v3394 = vpop.permute.xlu0 %3393
        %3395 = vrot.lane.b32.xlu0 %v1051, 20
        %v3396 = vpop.permute.xlu0 %3395
        %3397 = vrot.lane.b32.xlu0 %v1052, 20
        %v3398 = vpop.permute.xlu0 %3397
        %3399 = vrot.lane.b32.xlu0 %v1053, 20
        %v3400 = vpop.permute.xlu0 %3399
        %3401 = vrot.lane.b32.xlu0 %v1054, 20
        %v3402 = vpop.permute.xlu0 %3401
        %3403 = vrot.lane.b32.xlu0 %v1055, 20
        %v3404 = vpop.permute.xlu0 %3403
        %3405 = vrot.lane.b32.xlu0 %v1056, 20
        %v3406 = vpop.permute.xlu0 %3405
        %3407 = vrot.lane.b32.xlu0 %v1057, 20
        %v3408 = vpop.permute.xlu0 %3407
        %3409 = vrot.lane.b32.xlu0 %v2135, 24
        %v3410 = vpop.permute.xlu0 %3409
        %3411 = vrot.lane.b32.xlu0 %v2142, 24
        %v3412 = vpop.permute.xlu0 %3411
        %3413 = vrot.lane.b32.xlu0 %v2149, 24
        %v3414 = vpop.permute.xlu0 %3413
        %3415 = vrot.lane.b32.xlu0 %v2156, 24
        %v3416 = vpop.permute.xlu0 %3415
        %3417 = vrot.lane.b32.xlu0 %v2163, 24
        %v3418 = vpop.permute.xlu0 %3417
        %3419 = vrot.lane.b32.xlu0 %v2170, 24
        %v3420 = vpop.permute.xlu0 %3419
        %3421 = vrot.lane.b32.xlu0 %v2177, 24
        %v3422 = vpop.permute.xlu0 %3421
        %3423 = vrot.lane.b32.xlu0 %v2184, 24
        %v3424 = vpop.permute.xlu0 %3423
        %3425 = vrot.lane.b32.xlu0 %v2231, 28
        %v3426 = vpop.permute.xlu0 %3425
        %3427 = vrot.lane.b32.xlu0 %v2238, 28
        %v3428 = vpop.permute.xlu0 %3427
        %3429 = vrot.lane.b32.xlu0 %v2245, 28
        %v3430 = vpop.permute.xlu0 %3429
        %3431 = vrot.lane.b32.xlu0 %v2252, 28
        %v3432 = vpop.permute.xlu0 %3431
        %3433 = vrot.lane.b32.xlu0 %v2259, 28
        %v3434 = vpop.permute.xlu0 %3433
        %3435 = vrot.lane.b32.xlu0 %v2266, 28
        %v3436 = vpop.permute.xlu0 %3435
        %3437 = vrot.lane.b32.xlu0 %v2273, 28
        %v3438 = vpop.permute.xlu0 %3437
        %3439 = vrot.lane.b32.xlu0 %v2280, 28
        %v3440 = vpop.permute.xlu0 %3439
        %3441 = vrot.lane.b32.xlu0 %v2825, 32
        %v3442 = vpop.permute.xlu0 %3441
        %3443 = vrot.lane.b32.xlu0 %v2826, 32
        %v3444 = vpop.permute.xlu0 %3443
        %3445 = vrot.lane.b32.xlu0 %v2827, 32
        %v3446 = vpop.permute.xlu0 %3445
        %3447 = vrot.lane.b32.xlu0 %v2828, 32
        %v3448 = vpop.permute.xlu0 %3447
        %3449 = vrot.lane.b32.xlu0 %v2829, 32
        %v3450 = vpop.permute.xlu0 %3449
        %3451 = vrot.lane.b32.xlu0 %v2830, 32
        %v3452 = vpop.permute.xlu0 %3451
        %3453 = vrot.lane.b32.xlu0 %v2831, 32
        %v3454 = vpop.permute.xlu0 %3453
        %3455 = vrot.lane.b32.xlu0 %v2832, 32
        %v3456 = vpop.permute.xlu0 %3455
        %3457 = vrot.lane.b32.xlu0 %v2865, 36
        %v3458 = vpop.permute.xlu0 %3457
        %3459 = vrot.lane.b32.xlu0 %v2866, 36
        %v3460 = vpop.permute.xlu0 %3459
        %3461 = vrot.lane.b32.xlu0 %v2867, 36
        %v3462 = vpop.permute.xlu0 %3461
        %3463 = vrot.lane.b32.xlu0 %v2868, 36
        %v3464 = vpop.permute.xlu0 %3463
        %3465 = vrot.lane.b32.xlu0 %v2869, 36
        %v3466 = vpop.permute.xlu0 %3465
        %3467 = vrot.lane.b32.xlu0 %v2870, 36
        %v3468 = vpop.permute.xlu0 %3467
        %3469 = vrot.lane.b32.xlu0 %v2871, 36
        %v3470 = vpop.permute.xlu0 %3469
        %3471 = vrot.lane.b32.xlu0 %v2872, 36
        %v3472 = vpop.permute.xlu0 %3471
        %v3481 = vunpack.c.l.b16 %v3297
        %v3482 = vunpack.c.l.b16 %v3298
        %v3483 = vunpack.c.l.b16 %v3299
        %v3484 = vunpack.c.l.b16 %v3300
        %v3485 = vunpack.c.l.b16 %v3301
        %v3486 = vunpack.c.l.b16 %v3302
        %v3487 = vunpack.c.l.b16 %v3303
        %v3488 = vunpack.c.l.b16 %v3304
        %v3489 = vpack.c.b16 %v3481, %v2737
        %v3490 = vpack.c.b16 %v3482, %v2738
        %v3491 = vpack.c.b16 %v3483, %v2739
        %v3492 = vpack.c.b16 %v3484, %v2740
        %v3493 = vpack.c.b16 %v3485, %v2741
        %v3494 = vpack.c.b16 %v3486, %v2742
        %v3495 = vpack.c.b16 %v3487, %v2743
        %v3496 = vpack.c.b16 %v3488, %v2744
        %v3498 = vshrl.u32 %v3489, 16
        %v3500 = vshll.u32 %v3489, 16
        %v3502 = vrot.slane %v3500, 1
        %v3503 = vor.u32 %v3498, %v3502
        %v3505 = vshrl.u32 %v3490, 16
        %v3507 = vshll.u32 %v3490, 16
        %v3509 = vrot.slane %v3507, 1
        %v3510 = vor.u32 %v3505, %v3509
        %v3512 = vshrl.u32 %v3491, 16
        %v3514 = vshll.u32 %v3491, 16
        %v3516 = vrot.slane %v3514, 1
        %v3517 = vor.u32 %v3512, %v3516
        %v3519 = vshrl.u32 %v3492, 16
        %v3521 = vshll.u32 %v3492, 16
        %v3523 = vrot.slane %v3521, 1
        %v3524 = vor.u32 %v3519, %v3523
        %v3526 = vshrl.u32 %v3493, 16
        %v3528 = vshll.u32 %v3493, 16
        %v3530 = vrot.slane %v3528, 1
        %v3531 = vor.u32 %v3526, %v3530
        %v3533 = vshrl.u32 %v3494, 16
        %v3535 = vshll.u32 %v3494, 16
        %v3537 = vrot.slane %v3535, 1
        %v3538 = vor.u32 %v3533, %v3537
        %v3540 = vshrl.u32 %v3495, 16
        %v3542 = vshll.u32 %v3495, 16
        %v3544 = vrot.slane %v3542, 1
        %v3545 = vor.u32 %v3540, %v3544
        %v3547 = vshrl.u32 %v3496, 16
        %v3549 = vshll.u32 %v3496, 16
        %v3551 = vrot.slane %v3549, 1
        %v3552 = vor.u32 %v3547, %v3551
        %3553 = vrot.lane.b32.xlu0 %v3503, 40
        %v3554 = vpop.permute.xlu0 %3553
        %3555 = vrot.lane.b32.xlu0 %v3510, 40
        %v3556 = vpop.permute.xlu0 %3555
        %3557 = vrot.lane.b32.xlu0 %v3517, 40
        %v3558 = vpop.permute.xlu0 %3557
        %3559 = vrot.lane.b32.xlu0 %v3524, 40
        %v3560 = vpop.permute.xlu0 %3559
        %3561 = vrot.lane.b32.xlu0 %v3531, 40
        %v3562 = vpop.permute.xlu0 %3561
        %3563 = vrot.lane.b32.xlu0 %v3538, 40
        %v3564 = vpop.permute.xlu0 %3563
        %3565 = vrot.lane.b32.xlu0 %v3545, 40
        %v3566 = vpop.permute.xlu0 %3565
        %3567 = vrot.lane.b32.xlu0 %v3552, 40
        %v3568 = vpop.permute.xlu0 %3567
        %v3577 = vunpack.c.l.b16 %v3305
        %v3578 = vunpack.c.l.b16 %v3306
        %v3579 = vunpack.c.l.b16 %v3307
        %v3580 = vunpack.c.l.b16 %v3308
        %v3581 = vunpack.c.l.b16 %v3309
        %v3582 = vunpack.c.l.b16 %v3310
        %v3583 = vunpack.c.l.b16 %v3311
        %v3584 = vunpack.c.l.b16 %v3312
        %v3585 = vpack.c.b16 %v3577, %v2777
        %v3586 = vpack.c.b16 %v3578, %v2778
        %v3587 = vpack.c.b16 %v3579, %v2779
        %v3588 = vpack.c.b16 %v3580, %v2780
        %v3589 = vpack.c.b16 %v3581, %v2781
        %v3590 = vpack.c.b16 %v3582, %v2782
        %v3591 = vpack.c.b16 %v3583, %v2783
        %v3592 = vpack.c.b16 %v3584, %v2784
        %v3594 = vshrl.u32 %v3585, 16
        %v3596 = vshll.u32 %v3585, 16
        %v3598 = vrot.slane %v3596, 1
        %v3599 = vor.u32 %v3594, %v3598
        %v3601 = vshrl.u32 %v3586, 16
        %v3603 = vshll.u32 %v3586, 16
        %v3605 = vrot.slane %v3603, 1
        %v3606 = vor.u32 %v3601, %v3605
        %v3608 = vshrl.u32 %v3587, 16
        %v3610 = vshll.u32 %v3587, 16
        %v3612 = vrot.slane %v3610, 1
        %v3613 = vor.u32 %v3608, %v3612
        %v3615 = vshrl.u32 %v3588, 16
        %v3617 = vshll.u32 %v3588, 16
        %v3619 = vrot.slane %v3617, 1
        %v3620 = vor.u32 %v3615, %v3619
        %v3622 = vshrl.u32 %v3589, 16
        %v3624 = vshll.u32 %v3589, 16
        %v3626 = vrot.slane %v3624, 1
        %v3627 = vor.u32 %v3622, %v3626
        %v3629 = vshrl.u32 %v3590, 16
        %v3631 = vshll.u32 %v3590, 16
        %v3633 = vrot.slane %v3631, 1
        %v3634 = vor.u32 %v3629, %v3633
        %v3636 = vshrl.u32 %v3591, 16
        %v3638 = vshll.u32 %v3591, 16
        %v3640 = vrot.slane %v3638, 1
        %v3641 = vor.u32 %v3636, %v3640
        %v3643 = vshrl.u32 %v3592, 16
        %v3645 = vshll.u32 %v3592, 16
        %v3647 = vrot.slane %v3645, 1
        %v3648 = vor.u32 %v3643, %v3647
        %3649 = vrot.lane.b32.xlu0 %v3599, 44
        %v3650 = vpop.permute.xlu0 %3649
        %3651 = vrot.lane.b32.xlu0 %v3606, 44
        %v3652 = vpop.permute.xlu0 %3651
        %3653 = vrot.lane.b32.xlu0 %v3613, 44
        %v3654 = vpop.permute.xlu0 %3653
        %3655 = vrot.lane.b32.xlu0 %v3620, 44
        %v3656 = vpop.permute.xlu0 %3655
        %3657 = vrot.lane.b32.xlu0 %v3627, 44
        %v3658 = vpop.permute.xlu0 %3657
        %3659 = vrot.lane.b32.xlu0 %v3634, 44
        %v3660 = vpop.permute.xlu0 %3659
        %3661 = vrot.lane.b32.xlu0 %v3641, 44
        %v3662 = vpop.permute.xlu0 %3661
        %3663 = vrot.lane.b32.xlu0 %v3648, 44
        %v3664 = vpop.permute.xlu0 %3663
        %3665 = vrot.lane.b32.xlu0 %v2985, 48
        %v3666 = vpop.permute.xlu0 %3665
        %3667 = vrot.lane.b32.xlu0 %v2986, 48
        %v3668 = vpop.permute.xlu0 %3667
        %3669 = vrot.lane.b32.xlu0 %v2987, 48
        %v3670 = vpop.permute.xlu0 %3669
        %3671 = vrot.lane.b32.xlu0 %v2988, 48
        %v3672 = vpop.permute.xlu0 %3671
        %3673 = vrot.lane.b32.xlu0 %v2989, 48
        %v3674 = vpop.permute.xlu0 %3673
        %3675 = vrot.lane.b32.xlu0 %v2990, 48
        %v3676 = vpop.permute.xlu0 %3675
        %3677 = vrot.lane.b32.xlu0 %v2991, 48
        %v3678 = vpop.permute.xlu0 %3677
        %3679 = vrot.lane.b32.xlu0 %v2992, 48
        %v3680 = vpop.permute.xlu0 %3679
        %3681 = vrot.lane.b32.xlu0 %v3025, 52
        %v3682 = vpop.permute.xlu0 %3681
        %3683 = vrot.lane.b32.xlu0 %v3026, 52
        %v3684 = vpop.permute.xlu0 %3683
        %3685 = vrot.lane.b32.xlu0 %v3027, 52
        %v3686 = vpop.permute.xlu0 %3685
        %3687 = vrot.lane.b32.xlu0 %v3028, 52
        %v3688 = vpop.permute.xlu0 %3687
        %3689 = vrot.lane.b32.xlu0 %v3029, 52
        %v3690 = vpop.permute.xlu0 %3689
        %3691 = vrot.lane.b32.xlu0 %v3030, 52
        %v3692 = vpop.permute.xlu0 %3691
        %3693 = vrot.lane.b32.xlu0 %v3031, 52
        %v3694 = vpop.permute.xlu0 %3693
        %3695 = vrot.lane.b32.xlu0 %v3032, 52
        %v3696 = vpop.permute.xlu0 %3695
        %v3705 = vunpack.c.l.b16 %v3313
        %v3706 = vunpack.c.l.b16 %v3314
        %v3707 = vunpack.c.l.b16 %v3315
        %v3708 = vunpack.c.l.b16 %v3316
        %v3709 = vunpack.c.l.b16 %v3317
        %v3710 = vunpack.c.l.b16 %v3318
        %v3711 = vunpack.c.l.b16 %v3319
        %v3712 = vunpack.c.l.b16 %v3320
        %v3713 = vpack.c.b16 %v3705, %v2897
        %v3714 = vpack.c.b16 %v3706, %v2898
        %v3715 = vpack.c.b16 %v3707, %v2899
        %v3716 = vpack.c.b16 %v3708, %v2900
        %v3717 = vpack.c.b16 %v3709, %v2901
        %v3718 = vpack.c.b16 %v3710, %v2902
        %v3719 = vpack.c.b16 %v3711, %v2903
        %v3720 = vpack.c.b16 %v3712, %v2904
        %v3722 = vshrl.u32 %v3713, 16
        %v3724 = vshll.u32 %v3713, 16
        %v3726 = vrot.slane %v3724, 1
        %v3727 = vor.u32 %v3722, %v3726
        %v3729 = vshrl.u32 %v3714, 16
        %v3731 = vshll.u32 %v3714, 16
        %v3733 = vrot.slane %v3731, 1
        %v3734 = vor.u32 %v3729, %v3733
        %v3736 = vshrl.u32 %v3715, 16
        %v3738 = vshll.u32 %v3715, 16
        %v3740 = vrot.slane %v3738, 1
        %v3741 = vor.u32 %v3736, %v3740
        %v3743 = vshrl.u32 %v3716, 16
        %v3745 = vshll.u32 %v3716, 16
        %v3747 = vrot.slane %v3745, 1
        %v3748 = vor.u32 %v3743, %v3747
        %v3750 = vshrl.u32 %v3717, 16
        %v3752 = vshll.u32 %v3717, 16
        %v3754 = vrot.slane %v3752, 1
        %v3755 = vor.u32 %v3750, %v3754
        %v3757 = vshrl.u32 %v3718, 16
        %v3759 = vshll.u32 %v3718, 16
        %v3761 = vrot.slane %v3759, 1
        %v3762 = vor.u32 %v3757, %v3761
        %v3764 = vshrl.u32 %v3719, 16
        %v3766 = vshll.u32 %v3719, 16
        %v3768 = vrot.slane %v3766, 1
        %v3769 = vor.u32 %v3764, %v3768
        %v3771 = vshrl.u32 %v3720, 16
        %v3773 = vshll.u32 %v3720, 16
        %v3775 = vrot.slane %v3773, 1
        %v3776 = vor.u32 %v3771, %v3775
        %3777 = vrot.lane.b32.xlu0 %v3727, 56
        %v3778 = vpop.permute.xlu0 %3777
        %3779 = vrot.lane.b32.xlu0 %v3734, 56
        %v3780 = vpop.permute.xlu0 %3779
        %3781 = vrot.lane.b32.xlu0 %v3741, 56
        %v3782 = vpop.permute.xlu0 %3781
        %3783 = vrot.lane.b32.xlu0 %v3748, 56
        %v3784 = vpop.permute.xlu0 %3783
        %3785 = vrot.lane.b32.xlu0 %v3755, 56
        %v3786 = vpop.permute.xlu0 %3785
        %3787 = vrot.lane.b32.xlu0 %v3762, 56
        %v3788 = vpop.permute.xlu0 %3787
        %3789 = vrot.lane.b32.xlu0 %v3769, 56
        %v3790 = vpop.permute.xlu0 %3789
        %3791 = vrot.lane.b32.xlu0 %v3776, 56
        %v3792 = vpop.permute.xlu0 %3791
        %v3801 = vunpack.c.l.b16 %v3321
        %v3802 = vunpack.c.l.b16 %v3322
        %v3803 = vunpack.c.l.b16 %v3323
        %v3804 = vunpack.c.l.b16 %v3324
        %v3805 = vunpack.c.l.b16 %v3325
        %v3806 = vunpack.c.l.b16 %v3326
        %v3807 = vunpack.c.l.b16 %v3327
        %v3808 = vunpack.c.l.b16 %v3328
        %v3809 = vpack.c.b16 %v3801, %v2937
        %v3810 = vpack.c.b16 %v3802, %v2938
        %v3811 = vpack.c.b16 %v3803, %v2939
        %v3812 = vpack.c.b16 %v3804, %v2940
        %v3813 = vpack.c.b16 %v3805, %v2941
        %v3814 = vpack.c.b16 %v3806, %v2942
        %v3815 = vpack.c.b16 %v3807, %v2943
        %v3816 = vpack.c.b16 %v3808, %v2944
        %v3818 = vshrl.u32 %v3809, 16
        %v3820 = vshll.u32 %v3809, 16
        %v3822 = vrot.slane %v3820, 1
        %v3823 = vor.u32 %v3818, %v3822
        %v3825 = vshrl.u32 %v3810, 16
        %v3827 = vshll.u32 %v3810, 16
        %v3829 = vrot.slane %v3827, 1
        %v3830 = vor.u32 %v3825, %v3829
        %v3832 = vshrl.u32 %v3811, 16
        %v3834 = vshll.u32 %v3811, 16
        %v3836 = vrot.slane %v3834, 1
        %v3837 = vor.u32 %v3832, %v3836
        %v3839 = vshrl.u32 %v3812, 16
        %v3841 = vshll.u32 %v3812, 16
        %v3843 = vrot.slane %v3841, 1
        %v3844 = vor.u32 %v3839, %v3843
        %v3846 = vshrl.u32 %v3813, 16
        %v3848 = vshll.u32 %v3813, 16
        %v3850 = vrot.slane %v3848, 1
        %v3851 = vor.u32 %v3846, %v3850
        %v3853 = vshrl.u32 %v3814, 16
        %v3855 = vshll.u32 %v3814, 16
        %v3857 = vrot.slane %v3855, 1
        %v3858 = vor.u32 %v3853, %v3857
        %v3860 = vshrl.u32 %v3815, 16
        %v3862 = vshll.u32 %v3815, 16
        %v3864 = vrot.slane %v3862, 1
        %v3865 = vor.u32 %v3860, %v3864
        %v3867 = vshrl.u32 %v3816, 16
        %v3869 = vshll.u32 %v3816, 16
        %v3871 = vrot.slane %v3869, 1
        %v3872 = vor.u32 %v3867, %v3871
        %3873 = vrot.lane.b32.xlu0 %v3823, 60
        %v3874 = vpop.permute.xlu0 %3873
        %3875 = vrot.lane.b32.xlu0 %v3830, 60
        %v3876 = vpop.permute.xlu0 %3875
        %3877 = vrot.lane.b32.xlu0 %v3837, 60
        %v3878 = vpop.permute.xlu0 %3877
        %3879 = vrot.lane.b32.xlu0 %v3844, 60
        %v3880 = vpop.permute.xlu0 %3879
        %3881 = vrot.lane.b32.xlu0 %v3851, 60
        %v3882 = vpop.permute.xlu0 %3881
        %3883 = vrot.lane.b32.xlu0 %v3858, 60
        %v3884 = vpop.permute.xlu0 %3883
        %3885 = vrot.lane.b32.xlu0 %v3865, 60
        %v3886 = vpop.permute.xlu0 %3885
        %3887 = vrot.lane.b32.xlu0 %v3872, 60
        %v3888 = vpop.permute.xlu0 %3887
        %v3891 = vsel %vm1074, %v421, %v3330
        %v3894 = vsel %vm1074, %v422, %v3332
        %v3897 = vsel %vm1074, %v423, %v3334
        %v3900 = vsel %vm1074, %v424, %v3336
        %v3903 = vsel %vm1074, %v425, %v3338
        %v3906 = vsel %vm1074, %v426, %v3340
        %v3909 = vsel %vm1074, %v427, %v3342
        %v3912 = vsel %vm1074, %v428, %v3344
        %v3914 = vsel %vm1099, %v3891, %v3346
        %v3916 = vsel %vm1099, %v3894, %v3348
        %v3918 = vsel %vm1099, %v3897, %v3350
        %v3920 = vsel %vm1099, %v3900, %v3352
        %v3922 = vsel %vm1099, %v3903, %v3354
        %v3924 = vsel %vm1099, %v3906, %v3356
        %v3926 = vsel %vm1099, %v3909, %v3358
        %v3928 = vsel %vm1099, %v3912, %v3360
        %v3930 = vsel %vm1116, %v3914, %v3362
        %v3932 = vsel %vm1116, %v3916, %v3364
        %v3934 = vsel %vm1116, %v3918, %v3366
        %v3936 = vsel %vm1116, %v3920, %v3368
        %v3938 = vsel %vm1116, %v3922, %v3370
        %v3940 = vsel %vm1116, %v3924, %v3372
        %v3942 = vsel %vm1116, %v3926, %v3374
        %v3944 = vsel %vm1116, %v3928, %v3376
        %v3946 = vsel %vm1133, %v3930, %v3378
        %v3948 = vsel %vm1133, %v3932, %v3380
        %v3950 = vsel %vm1133, %v3934, %v3382
        %v3952 = vsel %vm1133, %v3936, %v3384
        %v3954 = vsel %vm1133, %v3938, %v3386
        %v3956 = vsel %vm1133, %v3940, %v3388
        %v3958 = vsel %vm1133, %v3942, %v3390
        %v3960 = vsel %vm1133, %v3944, %v3392
        %v3962 = vsel %vm1150, %v3946, %v3394
        %v3964 = vsel %vm1150, %v3948, %v3396
        %v3966 = vsel %vm1150, %v3950, %v3398
        %v3968 = vsel %vm1150, %v3952, %v3400
        %v3970 = vsel %vm1150, %v3954, %v3402
        %v3972 = vsel %vm1150, %v3956, %v3404
        %v3974 = vsel %vm1150, %v3958, %v3406
        %v3976 = vsel %vm1150, %v3960, %v3408
        %v3978 = vsel %vm1167, %v3962, %v3410
        %v3980 = vsel %vm1167, %v3964, %v3412
        %v3982 = vsel %vm1167, %v3966, %v3414
        %v3984 = vsel %vm1167, %v3968, %v3416
        %v3986 = vsel %vm1167, %v3970, %v3418
        %v3988 = vsel %vm1167, %v3972, %v3420
        %v3990 = vsel %vm1167, %v3974, %v3422
        %v3992 = vsel %vm1167, %v3976, %v3424
        %v3994 = vsel %vm1184, %v3978, %v3426
        %v3996 = vsel %vm1184, %v3980, %v3428
        %v3998 = vsel %vm1184, %v3982, %v3430
        %v4000 = vsel %vm1184, %v3984, %v3432
        %v4002 = vsel %vm1184, %v3986, %v3434
        %v4004 = vsel %vm1184, %v3988, %v3436
        %v4006 = vsel %vm1184, %v3990, %v3438
        %v4008 = vsel %vm1184, %v3992, %v3440
        %v4010 = vsel %vm1201, %v3994, %v3442
        %v4012 = vsel %vm1201, %v3996, %v3444
        %v4014 = vsel %vm1201, %v3998, %v3446
        %v4016 = vsel %vm1201, %v4000, %v3448
        %v4018 = vsel %vm1201, %v4002, %v3450
        %v4020 = vsel %vm1201, %v4004, %v3452
        %v4022 = vsel %vm1201, %v4006, %v3454
        %v4024 = vsel %vm1201, %v4008, %v3456
        %v4026 = vsel %vm1218, %v4010, %v3458
        %v4028 = vsel %vm1218, %v4012, %v3460
        %v4030 = vsel %vm1218, %v4014, %v3462
        %v4032 = vsel %vm1218, %v4016, %v3464
        %v4034 = vsel %vm1218, %v4018, %v3466
        %v4036 = vsel %vm1218, %v4020, %v3468
        %v4038 = vsel %vm1218, %v4022, %v3470
        %v4040 = vsel %vm1218, %v4024, %v3472
        %v4042 = vsel %vm1235, %v4026, %v3554
        %v4044 = vsel %vm1235, %v4028, %v3556
        %v4046 = vsel %vm1235, %v4030, %v3558
        %v4048 = vsel %vm1235, %v4032, %v3560
        %v4050 = vsel %vm1235, %v4034, %v3562
        %v4052 = vsel %vm1235, %v4036, %v3564
        %v4054 = vsel %vm1235, %v4038, %v3566
        %v4056 = vsel %vm1235, %v4040, %v3568
        %v4058 = vsel %vm1252, %v4042, %v3650
        %v4060 = vsel %vm1252, %v4044, %v3652
        %v4062 = vsel %vm1252, %v4046, %v3654
        %v4064 = vsel %vm1252, %v4048, %v3656
        %v4066 = vsel %vm1252, %v4050, %v3658
        %v4068 = vsel %vm1252, %v4052, %v3660
        %v4070 = vsel %vm1252, %v4054, %v3662
        %v4072 = vsel %vm1252, %v4056, %v3664
        %v4074 = vsel %vm1269, %v4058, %v3666
        %v4076 = vsel %vm1269, %v4060, %v3668
        %v4078 = vsel %vm1269, %v4062, %v3670
        %v4080 = vsel %vm1269, %v4064, %v3672
        %v4082 = vsel %vm1269, %v4066, %v3674
        %v4084 = vsel %vm1269, %v4068, %v3676
        %v4086 = vsel %vm1269, %v4070, %v3678
        %v4088 = vsel %vm1269, %v4072, %v3680
        %v4090 = vsel %vm1286, %v4074, %v3682
        %v4092 = vsel %vm1286, %v4076, %v3684
        %v4094 = vsel %vm1286, %v4078, %v3686
        %v4096 = vsel %vm1286, %v4080, %v3688
        %v4098 = vsel %vm1286, %v4082, %v3690
        %v4100 = vsel %vm1286, %v4084, %v3692
        %v4102 = vsel %vm1286, %v4086, %v3694
        %v4104 = vsel %vm1286, %v4088, %v3696
        %v4106 = vsel %vm1303, %v4090, %v3778
        %v4108 = vsel %vm1303, %v4092, %v3780
        %v4110 = vsel %vm1303, %v4094, %v3782
        %v4112 = vsel %vm1303, %v4096, %v3784
        %v4114 = vsel %vm1303, %v4098, %v3786
        %v4116 = vsel %vm1303, %v4100, %v3788
        %v4118 = vsel %vm1303, %v4102, %v3790
        %v4120 = vsel %vm1303, %v4104, %v3792
        %v4122 = vsel %vm1320, %v4106, %v3874
        %v4124 = vsel %vm1320, %v4108, %v3876
        %v4126 = vsel %vm1320, %v4110, %v3878
        %v4128 = vsel %vm1320, %v4112, %v3880
        %v4130 = vsel %vm1320, %v4114, %v3882
        %v4132 = vsel %vm1320, %v4116, %v3884
        %v4134 = vsel %vm1320, %v4118, %v3886
        %v4136 = vsel %vm1320, %v4120, %v3888
        %v4145 = vunpack.c.l.b16 %v1322
        %v4146 = vunpack.c.l.b16 %v1324
        %v4147 = vunpack.c.l.b16 %v1326
        %v4148 = vunpack.c.l.b16 %v1328
        %v4149 = vunpack.c.l.b16 %v1330
        %v4150 = vunpack.c.l.b16 %v1332
        %v4151 = vunpack.c.l.b16 %v1334
        %v4152 = vunpack.c.l.b16 %v1336
        %v4153 = vpack.c.b16 %v4146, %v4145
        %v4154 = vpack.c.b16 %v4148, %v4147
        %v4155 = vpack.c.b16 %v4150, %v4149
        %v4156 = vpack.c.b16 %v4152, %v4151
        %v4165 = vunpack.c.l.b16 %v2530
        %v4166 = vunpack.c.l.b16 %v2532
        %v4167 = vunpack.c.l.b16 %v2534
        %v4168 = vunpack.c.l.b16 %v2536
        %v4169 = vunpack.c.l.b16 %v2538
        %v4170 = vunpack.c.l.b16 %v2540
        %v4171 = vunpack.c.l.b16 %v2542
        %v4172 = vunpack.c.l.b16 %v2544
        %v4173 = vpack.c.b16 %v4166, %v4165
        %v4174 = vpack.c.b16 %v4168, %v4167
        %v4175 = vpack.c.b16 %v4170, %v4169
        %v4176 = vpack.c.b16 %v4172, %v4171
        %v4185 = vunpack.c.l.b16 %v3282
        %v4186 = vunpack.c.l.b16 %v3284
        %v4187 = vunpack.c.l.b16 %v3286
        %v4188 = vunpack.c.l.b16 %v3288
        %v4189 = vunpack.c.l.b16 %v3290
        %v4190 = vunpack.c.l.b16 %v3292
        %v4191 = vunpack.c.l.b16 %v3294
        %v4192 = vunpack.c.l.b16 %v3296
        %v4193 = vpack.c.b16 %v4186, %v4185
        %v4194 = vpack.c.b16 %v4188, %v4187
        %v4195 = vpack.c.b16 %v4190, %v4189
        %v4196 = vpack.c.b16 %v4192, %v4191
        %v4205 = vunpack.c.l.b16 %v4122
        %v4206 = vunpack.c.l.b16 %v4124
        %v4207 = vunpack.c.l.b16 %v4126
        %v4208 = vunpack.c.l.b16 %v4128
        %v4209 = vunpack.c.l.b16 %v4130
        %v4210 = vunpack.c.l.b16 %v4132
        %v4211 = vunpack.c.l.b16 %v4134
        %v4212 = vunpack.c.l.b16 %v4136
        %v4213 = vpack.c.b16 %v4206, %v4205
        %v4214 = vpack.c.b16 %v4208, %v4207
        %v4215 = vpack.c.b16 %v4210, %v4209
        %v4216 = vpack.c.b16 %v4212, %v4211
        %v4217 = vld [vmem:[%s1] sm:$0xf]
        %v4218 = vld [vmem:[%s1 + $0x4] sm:$0xf]
        %v4219 = vld [vmem:[%s1 + $0x8] sm:$0xf]
        %v4220 = vld [vmem:[%s1 + $0xc] sm:$0xf]
        %v4221 = vld [vmem:[%s1 + $0x10] sm:$0xf]
        %v4222 = vld [vmem:[%s1 + $0x14] sm:$0xf]
        %v4223 = vld [vmem:[%s1 + $0x18] sm:$0xf]
        %v4224 = vld [vmem:[%s1 + $0x1c] sm:$0xf]
        %v4225 = vld [vmem:[%s2] sm:$0x1]
        %v4227 = vlaneseq
        %v4228 = vshrl.u32 %v4227, 7
        %v4229 = vsub.s32 0, %v4228
        %v4230 = vrot.slane %v4225, %v4229
        %v4240 = vunpack.c.l.b16 %v4217
        %v4241 = vunpack.c.l.b16 %v4218
        %v4242 = vunpack.c.l.b16 %v4219
        %v4243 = vunpack.c.l.b16 %v4220
        %v4244 = vunpack.c.l.b16 %v4221
        %v4245 = vunpack.c.l.b16 %v4222
        %v4246 = vunpack.c.l.b16 %v4223
        %v4247 = vunpack.c.l.b16 %v4224
        %v4248 = vpack.c.b16 %v4241, %v4240
        %v4249 = vpack.c.b16 %v4243, %v4242
        %v4250 = vpack.c.b16 %v4245, %v4244
        %v4251 = vpack.c.b16 %v4247, %v4246
        %vm4256 = vcmask 523264
        %v4258 = vsel %vm4256, %v4153, 0
        %v4261 = vsel %vm4256, %v4154, 0
        %v4264 = vsel %vm4256, %v4155, 0
        %v4267 = vsel %vm4256, %v4156, 0
        %v4270 = vsel %vm4256, %v4173, 0
        %v4273 = vsel %vm4256, %v4174, 0
        %v4276 = vsel %vm4256, %v4175, 0
        %v4279 = vsel %vm4256, %v4176, 0
        %v4282 = vsel %vm4256, %v4193, 0
        %v4285 = vsel %vm4256, %v4194, 0
        %v4288 = vsel %vm4256, %v4195, 0
        %v4291 = vsel %vm4256, %v4196, 0
        %v4294 = vsel %vm4256, %v4213, 0
        %v4297 = vsel %vm4256, %v4214, 0
        %v4300 = vsel %vm4256, %v4215, 0
        %v4303 = vsel %vm4256, %v4216, 0
        %4305 = vmatprep.subr.bf16.mxu0 0
        %4306 = vmatpush1.bf16.msra.mxu0 %v4248
        %4307 = vmatprep.subr.bf16.mxu0 0
        %4308 = vmatpush1.bf16.msra.mxu0 %v4249
        %4309 = vmatprep.subr.bf16.mxu0 0
        %4310 = vmatpush1.bf16.msra.mxu0 %v4250
        %4311 = vmatprep.subr.bf16.mxu0 0
        %4312 = vmatpush1.bf16.msra.mxu0 %v4251
        %4313 = vmatprep.subr.bf16.mxu0 0
        %4314 = vmatpush1.bf16.msra.mxu0 0
        %4315 = vmatprep.subr.bf16.mxu0 0
        %4316 = vmatpush1.bf16.msra.mxu0 0
        %4317 = vmatprep.subr.bf16.mxu0 0
        %4318 = vmatpush1.bf16.msra.mxu0 0
        %4319 = vmatprep.subr.bf16.mxu0 0
        %4320 = vmatpush1.bf16.msra.mxu0 0
        %4321 = vmatprep.subr.bf16.mxu0 0
        %4322 = vmatpush1.bf16.msra.mxu0 0
        %4323 = vmatprep.subr.bf16.mxu0 0
        %4324 = vmatpush1.bf16.msra.mxu0 0
        %4325 = vmatprep.subr.bf16.mxu0 0
        %4326 = vmatpush1.bf16.msra.mxu0 0
        %4327 = vmatprep.subr.bf16.mxu0 0
        %4328 = vmatpush1.bf16.msra.mxu0 0
        %4329 = vmatprep.subr.bf16.mxu0 0
        %4330 = vmatpush1.bf16.msra.mxu0 0
        %4331 = vmatprep.subr.bf16.mxu0 0
        %4332 = vmatpush1.bf16.msra.mxu0 0
        %4333 = vmatprep.subr.bf16.mxu0 0
        %4334 = vmatpush1.bf16.msra.mxu0 0
        %4335 = vmatprep.subr.bf16.mxu0 0
        %4336 = vmatpush1.bf16.msra.mxu0 0
        %4337 = vmatprep.mubr.bf16.mxu0 0
        %4338 = vmatmul.mubr.bf16.gmra.mrb[0].mxu0 %v4258
        %v4339 = vpop.f32.mrb[0].mxu0
        %v4340 = vadd.f32 %v4230, %v4339
        %v4341 = vpop.f32.mrb[0].mxu0
        %v4342 = vpop.f32.mrb[0].mxu0
        %v4343 = vadd.f32 %v4230, %v4342
        %v4344 = vpop.f32.mrb[0].mxu0
        %4345 = vmatprep.mubr.bf16.mxu0 0
        %4346 = vmatmul.mubr.bf16.gmra.mrb[0].mxu0 %v4261
        %v4347 = vpop.f32.mrb[0].mxu0
        %v4348 = vadd.f32 %v4230, %v4347
        %v4349 = vpop.f32.mrb[0].mxu0
        %v4350 = vpop.f32.mrb[0].mxu0
        %v4351 = vadd.f32 %v4230, %v4350
        %v4352 = vpop.f32.mrb[0].mxu0
        %4353 = vmatprep.mubr.bf16.mxu0 0
        %4354 = vmatmul.mubr.bf16.gmra.mrb[0].mxu0 %v4264
        %v4355 = vpop.f32.mrb[0].mxu0
        %v4356 = vadd.f32 %v4230, %v4355
        %v4357 = vpop.f32.mrb[0].mxu0
        %v4358 = vpop.f32.mrb[0].mxu0
        %v4359 = vadd.f32 %v4230, %v4358
        %v4360 = vpop.f32.mrb[0].mxu0
        %4361 = vmatprep.mubr.bf16.mxu0 0
        %4362 = vmatmul.mubr.bf16.gmra.mrb[0].mxu0 %v4267
        %v4363 = vpop.f32.mrb[0].mxu0
        %v4364 = vadd.f32 %v4230, %v4363
        %v4365 = vpop.f32.mrb[0].mxu0
        %v4366 = vpop.f32.mrb[0].mxu0
        %v4367 = vadd.f32 %v4230, %v4366
        %v4368 = vpop.f32.mrb[0].mxu0
        %4369 = vmatprep.mubr.bf16.mxu0 0
        %4370 = vmatmul.mubr.bf16.gmra.mrb[0].mxu0 %v4270
        %v4371 = vpop.f32.mrb[0].mxu0
        %v4372 = vadd.f32 %v4230, %v4371
        %v4373 = vpop.f32.mrb[0].mxu0
        %v4374 = vpop.f32.mrb[0].mxu0
        %v4375 = vadd.f32 %v4230, %v4374
        %v4376 = vpop.f32.mrb[0].mxu0
        %4377 = vmatprep.mubr.bf16.mxu0 0
        %4378 = vmatmul.mubr.bf16.gmra.mrb[0].mxu0 %v4273
        %v4379 = vpop.f32.mrb[0].mxu0
        %v4380 = vadd.f32 %v4230, %v4379
        %v4381 = vpop.f32.mrb[0].mxu0
        %v4382 = vpop.f32.mrb[0].mxu0
        %v4383 = vadd.f32 %v4230, %v4382
        %v4384 = vpop.f32.mrb[0].mxu0
        %4385 = vmatprep.mubr.bf16.mxu0 0
        %4386 = vmatmul.mubr.bf16.gmra.mrb[0].mxu0 %v4276
        %v4387 = vpop.f32.mrb[0].mxu0
        %v4388 = vadd.f32 %v4230, %v4387
        %v4389 = vpop.f32.mrb[0].mxu0
        %v4390 = vpop.f32.mrb[0].mxu0
        %v4391 = vadd.f32 %v4230, %v4390
        %v4392 = vpop.f32.mrb[0].mxu0
        %4393 = vmatprep.mubr.bf16.mxu0 0
        %4394 = vmatmul.mubr.bf16.gmra.mrb[0].mxu0 %v4279
        %v4395 = vpop.f32.mrb[0].mxu0
        %v4396 = vadd.f32 %v4230, %v4395
        %v4397 = vpop.f32.mrb[0].mxu0
        %v4398 = vpop.f32.mrb[0].mxu0
        %v4399 = vadd.f32 %v4230, %v4398
        %v4400 = vpop.f32.mrb[0].mxu0
        %4401 = vmatprep.mubr.bf16.mxu0 0
        %4402 = vmatmul.mubr.bf16.gmra.mrb[0].mxu0 %v4282
        %v4403 = vpop.f32.mrb[0].mxu0
        %v4404 = vadd.f32 %v4230, %v4403
        %v4405 = vpop.f32.mrb[0].mxu0
        %v4406 = vpop.f32.mrb[0].mxu0
        %v4407 = vadd.f32 %v4230, %v4406
        %v4408 = vpop.f32.mrb[0].mxu0
        %4409 = vmatprep.mubr.bf16.mxu0 0
        %4410 = vmatmul.mubr.bf16.gmra.mrb[0].mxu0 %v4285
        %v4411 = vpop.f32.mrb[0].mxu0
        %v4412 = vadd.f32 %v4230, %v4411
        %v4413 = vpop.f32.mrb[0].mxu0
        %v4414 = vpop.f32.mrb[0].mxu0
        %v4415 = vadd.f32 %v4230, %v4414
        %v4416 = vpop.f32.mrb[0].mxu0
        %4417 = vmatprep.mubr.bf16.mxu0 0
        %4418 = vmatmul.mubr.bf16.gmra.mrb[0].mxu0 %v4288
        %v4419 = vpop.f32.mrb[0].mxu0
        %v4420 = vadd.f32 %v4230, %v4419
        %v4421 = vpop.f32.mrb[0].mxu0
        %v4422 = vpop.f32.mrb[0].mxu0
        %v4423 = vadd.f32 %v4230, %v4422
        %v4424 = vpop.f32.mrb[0].mxu0
        %4425 = vmatprep.mubr.bf16.mxu0 0
        %4426 = vmatmul.mubr.bf16.gmra.mrb[0].mxu0 %v4291
        %v4427 = vpop.f32.mrb[0].mxu0
        %v4428 = vadd.f32 %v4230, %v4427
        %v4429 = vpop.f32.mrb[0].mxu0
        %v4430 = vpop.f32.mrb[0].mxu0
        %v4431 = vadd.f32 %v4230, %v4430
        %v4432 = vpop.f32.mrb[0].mxu0
        %4433 = vmatprep.mubr.bf16.mxu0 0
        %4434 = vmatmul.mubr.bf16.gmra.mrb[0].mxu0 %v4294
        %v4435 = vpop.f32.mrb[0].mxu0
        %v4436 = vadd.f32 %v4230, %v4435
        %v4437 = vpop.f32.mrb[0].mxu0
        %v4438 = vpop.f32.mrb[0].mxu0
        %v4439 = vadd.f32 %v4230, %v4438
        %v4440 = vpop.f32.mrb[0].mxu0
        %4441 = vmatprep.mubr.bf16.mxu0 0
        %4442 = vmatmul.mubr.bf16.gmra.mrb[0].mxu0 %v4297
        %v4443 = vpop.f32.mrb[0].mxu0
        %v4444 = vadd.f32 %v4230, %v4443
        %v4445 = vpop.f32.mrb[0].mxu0
        %v4446 = vpop.f32.mrb[0].mxu0
        %v4447 = vadd.f32 %v4230, %v4446
        %v4448 = vpop.f32.mrb[0].mxu0
        %4449 = vmatprep.mubr.bf16.mxu0 0
        %4450 = vmatmul.mubr.bf16.gmra.mrb[0].mxu0 %v4300
        %v4451 = vpop.f32.mrb[0].mxu0
        %v4452 = vadd.f32 %v4230, %v4451
        %v4453 = vpop.f32.mrb[0].mxu0
        %v4454 = vpop.f32.mrb[0].mxu0
        %v4455 = vadd.f32 %v4230, %v4454
        %v4456 = vpop.f32.mrb[0].mxu0
        %4457 = vmatprep.mubr.bf16.mxu0 0
        %4458 = vmatmul.mubr.bf16.gmra.mrb[0].mxu0 %v4303
        %v4459 = vpop.f32.mrb[0].mxu0
        %v4460 = vadd.f32 %v4230, %v4459
        %v4461 = vpop.f32.mrb[0].mxu0
        %v4462 = vpop.f32.mrb[0].mxu0
        %v4463 = vadd.f32 %v4230, %v4462
        %v4464 = vpop.f32.mrb[0].mxu0
        %4465 = vdwg.mxu0
        %v4466 = vmax.f32 %v4340, 0.0
        %v4467 = vmax.f32 %v4343, 0.0
        %v4468 = vmax.f32 %v4348, 0.0
        %v4469 = vmax.f32 %v4351, 0.0
        %v4470 = vmax.f32 %v4356, 0.0
        %v4471 = vmax.f32 %v4359, 0.0
        %v4472 = vmax.f32 %v4364, 0.0
        %v4473 = vmax.f32 %v4367, 0.0
        %v4474 = vmax.f32 %v4372, 0.0
        %v4475 = vmax.f32 %v4375, 0.0
        %v4476 = vmax.f32 %v4380, 0.0
        %v4477 = vmax.f32 %v4383, 0.0
        %v4478 = vmax.f32 %v4388, 0.0
        %v4479 = vmax.f32 %v4391, 0.0
        %v4480 = vmax.f32 %v4396, 0.0
        %v4481 = vmax.f32 %v4399, 0.0
        %v4482 = vmax.f32 %v4404, 0.0
        %v4483 = vmax.f32 %v4407, 0.0
        %v4484 = vmax.f32 %v4412, 0.0
        %v4485 = vmax.f32 %v4415, 0.0
        %v4486 = vmax.f32 %v4420, 0.0
        %v4487 = vmax.f32 %v4423, 0.0
        %v4488 = vmax.f32 %v4428, 0.0
        %v4489 = vmax.f32 %v4431, 0.0
        %v4490 = vmax.f32 %v4436, 0.0
        %v4491 = vmax.f32 %v4439, 0.0
        %v4492 = vmax.f32 %v4444, 0.0
        %v4493 = vmax.f32 %v4447, 0.0
        %v4494 = vmax.f32 %v4452, 0.0
        %v4495 = vmax.f32 %v4455, 0.0
        %v4496 = vmax.f32 %v4460, 0.0
        %v4497 = vmax.f32 %v4463, 0.0
        %v4498 = vpack.c.bf16 %v4467, %v4466
        %v4499 = vpack.c.bf16 %v4469, %v4468
        %v4500 = vpack.c.bf16 %v4471, %v4470
        %v4501 = vpack.c.bf16 %v4473, %v4472
        %v4502 = vpack.c.bf16 %v4475, %v4474
        %v4503 = vpack.c.bf16 %v4477, %v4476
        %v4504 = vpack.c.bf16 %v4479, %v4478
        %v4505 = vpack.c.bf16 %v4481, %v4480
        %v4506 = vpack.c.bf16 %v4483, %v4482
        %v4507 = vpack.c.bf16 %v4485, %v4484
        %v4508 = vpack.c.bf16 %v4487, %v4486
        %v4509 = vpack.c.bf16 %v4489, %v4488
        %v4510 = vpack.c.bf16 %v4491, %v4490
        %v4511 = vpack.c.bf16 %v4493, %v4492
        %v4512 = vpack.c.bf16 %v4495, %v4494
        %v4513 = vpack.c.bf16 %v4497, %v4496
        %vm4514 = vcmask 519168
        %4515 = vst.msk [vmem:[#allocation2] sm:$0xf] %vm4514, 0
        %vm4516 = vcmask 516096
        %vm4517 = vsmask.f32 256
        %vm4518 = vmand %vm4516, %vm4517
        %v4519 = vld [vmem:[#allocation2 + $0x4] sm:$0x1]
        %v4520 = vsel %vm4518, 0, %v4519
        %4521 = vst [vmem:[#allocation2 + $0x4] sm:$0x1] %v4520
        %4522 = vst.msk [vmem:[#allocation2 + $0x8] sm:$0xf] %vm4514, 0
        %v4523 = vld [vmem:[#allocation2 + $0xc] sm:$0x1]
        %v4524 = vsel %vm4518, 0, %v4523
        %4525 = vst [vmem:[#allocation2 + $0xc] sm:$0x1] %v4524
        %4526 = vst.msk [vmem:[#allocation2 + $0x10] sm:$0xf] %vm4514, 0
        %v4527 = vld [vmem:[#allocation2 + $0x14] sm:$0x1]
        %v4528 = vsel %vm4518, 0, %v4527
        %4529 = vst [vmem:[#allocation2 + $0x14] sm:$0x1] %v4528
        %4530 = vst.msk [vmem:[#allocation2 + $0x18] sm:$0xf] %vm4514, 0
        %v4531 = vld [vmem:[#allocation2 + $0x1c] sm:$0x1]
        %v4532 = vsel %vm4518, 0, %v4531
        %4533 = vst [vmem:[#allocation2 + $0x1c] sm:$0x1] %v4532
        %4534 = vst.msk [vmem:[#allocation2 + $0x20] sm:$0xf] %vm4514, 0
        %v4535 = vld [vmem:[#allocation2 + $0x24] sm:$0x1]
        %v4536 = vsel %vm4518, 0, %v4535
        %4537 = vst [vmem:[#allocation2 + $0x24] sm:$0x1] %v4536
        %4538 = vst.msk [vmem:[#allocation2 + $0x28] sm:$0xf] %vm4514, 0
        %v4539 = vld [vmem:[#allocation2 + $0x2c] sm:$0x1]
        %v4540 = vsel %vm4518, 0, %v4539
        %4541 = vst [vmem:[#allocation2 + $0x2c] sm:$0x1] %v4540
        %4542 = vst.msk [vmem:[#allocation2 + $0x30] sm:$0xf] %vm4514, 0
        %v4543 = vld [vmem:[#allocation2 + $0x34] sm:$0x1]
        %v4544 = vsel %vm4518, 0, %v4543
        %4545 = vst [vmem:[#allocation2 + $0x34] sm:$0x1] %v4544
        %4546 = vst.msk [vmem:[#allocation2 + $0x38] sm:$0xf] %vm4514, 0
        %v4547 = vld [vmem:[#allocation2 + $0x3c] sm:$0x1]
        %v4548 = vsel %vm4518, 0, %v4547
        %4549 = vst [vmem:[#allocation2 + $0x3c] sm:$0x1] %v4548
        %4550 = vst.msk [vmem:[#allocation2 + $0x40] sm:$0xf] %vm4514, 0
        %v4551 = vld [vmem:[#allocation2 + $0x44] sm:$0x1]
        %v4552 = vsel %vm4518, 0, %v4551
        %4553 = vst [vmem:[#allocation2 + $0x44] sm:$0x1] %v4552
        %4554 = vst.msk [vmem:[#allocation2 + $0x48] sm:$0xf] %vm4514, 0
        %v4555 = vld [vmem:[#allocation2 + $0x4c] sm:$0x1]
        %v4556 = vsel %vm4518, 0, %v4555
        %4557 = vst [vmem:[#allocation2 + $0x4c] sm:$0x1] %v4556
        %4558 = vst.msk [vmem:[#allocation2 + $0x50] sm:$0xf] %vm4514, 0
        %v4559 = vld [vmem:[#allocation2 + $0x54] sm:$0x1]
        %v4560 = vsel %vm4518, 0, %v4559
        %4561 = vst [vmem:[#allocation2 + $0x54] sm:$0x1] %v4560
        %4562 = vst.msk [vmem:[#allocation2 + $0x58] sm:$0xf] %vm4514, 0
        %v4563 = vld [vmem:[#allocation2 + $0x5c] sm:$0x1]
        %v4564 = vsel %vm4518, 0, %v4563
        %4565 = vst [vmem:[#allocation2 + $0x5c] sm:$0x1] %v4564
        %4566 = vst.msk [vmem:[#allocation2 + $0x60] sm:$0xf] %vm4514, 0
        %v4567 = vld [vmem:[#allocation2 + $0x64] sm:$0x1]
        %v4568 = vsel %vm4518, 0, %v4567
        %4569 = vst [vmem:[#allocation2 + $0x64] sm:$0x1] %v4568
        %4570 = vst.msk [vmem:[#allocation2 + $0x68] sm:$0xf] %vm4514, 0
        %v4571 = vld [vmem:[#allocation2 + $0x6c] sm:$0x1]
        %v4572 = vsel %vm4518, 0, %v4571
        %4573 = vst [vmem:[#allocation2 + $0x6c] sm:$0x1] %v4572
        %4574 = vst.msk [vmem:[#allocation2 + $0x70] sm:$0xf] %vm4514, 0
        %v4575 = vld [vmem:[#allocation2 + $0x74] sm:$0x1]
        %v4576 = vsel %vm4518, 0, %v4575
        %4577 = vst [vmem:[#allocation2 + $0x74] sm:$0x1] %v4576
        %4578 = vst.msk [vmem:[#allocation2 + $0x78] sm:$0xf] %vm4514, 0
        %v4579 = vld [vmem:[#allocation2 + $0x7c] sm:$0x1]
        %v4580 = vsel %vm4518, 0, %v4579
        %4581 = vst [vmem:[#allocation2 + $0x7c] sm:$0x1] %v4580
        %4582 = vst.msk [vmem:[#allocation2 + $0x80] sm:$0xf] %vm4514, 0
        %v4583 = vld [vmem:[#allocation2 + $0x84] sm:$0x1]
        %v4584 = vsel %vm4518, 0, %v4583
        %4585 = vst [vmem:[#allocation2 + $0x84] sm:$0x1] %v4584
        %4586 = vst.msk [vmem:[#allocation2 + $0x88] sm:$0xf] %vm4514, 0
        %v4587 = vld [vmem:[#allocation2 + $0x8c] sm:$0x1]
        %v4588 = vsel %vm4518, 0, %v4587
        %4589 = vst [vmem:[#allocation2 + $0x8c] sm:$0x1] %v4588
        %4590 = vst.msk [vmem:[#allocation2 + $0x90] sm:$0xf] %vm4514, 0
        %v4591 = vld [vmem:[#allocation2 + $0x94] sm:$0x1]
        %v4592 = vsel %vm4518, 0, %v4591
        %4593 = vst [vmem:[#allocation2 + $0x94] sm:$0x1] %v4592
        %4594 = vst.msk [vmem:[#allocation2 + $0x98] sm:$0xf] %vm4514, 0
        %v4595 = vld [vmem:[#allocation2 + $0x9c] sm:$0x1]
        %v4596 = vsel %vm4518, 0, %v4595
        %4597 = vst [vmem:[#allocation2 + $0x9c] sm:$0x1] %v4596
        %4598 = vst.msk [vmem:[#allocation2 + $0xa0] sm:$0xf] %vm4514, 0
        %v4599 = vld [vmem:[#allocation2 + $0xa4] sm:$0x1]
        %v4600 = vsel %vm4518, 0, %v4599
        %4601 = vst [vmem:[#allocation2 + $0xa4] sm:$0x1] %v4600
        %4602 = vst.msk [vmem:[#allocation2 + $0xa8] sm:$0xf] %vm4514, 0
        %v4603 = vld [vmem:[#allocation2 + $0xac] sm:$0x1]
        %v4604 = vsel %vm4518, 0, %v4603
        %4605 = vst [vmem:[#allocation2 + $0xac] sm:$0x1] %v4604
        %4606 = vst.msk [vmem:[#allocation2 + $0xb0] sm:$0xf] %vm4514, 0
        %v4607 = vld [vmem:[#allocation2 + $0xb4] sm:$0x1]
        %v4608 = vsel %vm4518, 0, %v4607
        %4609 = vst [vmem:[#allocation2 + $0xb4] sm:$0x1] %v4608
        %4610 = vst.msk [vmem:[#allocation2 + $0xb8] sm:$0xf] %vm4514, 0
        %v4611 = vld [vmem:[#allocation2 + $0xbc] sm:$0x1]
        %v4612 = vsel %vm4518, 0, %v4611
        %4613 = vst [vmem:[#allocation2 + $0xbc] sm:$0x1] %v4612
        %4614 = vst.msk [vmem:[#allocation2 + $0xc0] sm:$0xf] %vm4514, 0
        %v4615 = vld [vmem:[#allocation2 + $0xc4] sm:$0x1]
        %v4616 = vsel %vm4518, 0, %v4615
        %4617 = vst [vmem:[#allocation2 + $0xc4] sm:$0x1] %v4616
        %4618 = vst.msk [vmem:[#allocation2 + $0xc8] sm:$0xf] %vm4514, 0
        %v4619 = vld [vmem:[#allocation2 + $0xcc] sm:$0x1]
        %v4620 = vsel %vm4518, 0, %v4619
        %4621 = vst [vmem:[#allocation2 + $0xcc] sm:$0x1] %v4620
        %4622 = vst.msk [vmem:[#allocation2 + $0xd0] sm:$0xf] %vm4514, 0
        %v4623 = vld [vmem:[#allocation2 + $0xd4] sm:$0x1]
        %v4624 = vsel %vm4518, 0, %v4623
        %4625 = vst [vmem:[#allocation2 + $0xd4] sm:$0x1] %v4624
        %4626 = vst.msk [vmem:[#allocation2 + $0xd8] sm:$0xf] %vm4514, 0
        %v4627 = vld [vmem:[#allocation2 + $0xdc] sm:$0x1]
        %v4628 = vsel %vm4518, 0, %v4627
        %4629 = vst [vmem:[#allocation2 + $0xdc] sm:$0x1] %v4628
        %4630 = vst.msk [vmem:[#allocation2 + $0xe0] sm:$0xf] %vm4514, 0
        %v4631 = vld [vmem:[#allocation2 + $0xe4] sm:$0x1]
        %v4632 = vsel %vm4518, 0, %v4631
        %4633 = vst [vmem:[#allocation2 + $0xe4] sm:$0x1] %v4632
        %4634 = vst.msk [vmem:[#allocation2 + $0xe8] sm:$0xf] %vm4514, 0
        %v4635 = vld [vmem:[#allocation2 + $0xec] sm:$0x1]
        %v4636 = vsel %vm4518, 0, %v4635
        %4637 = vst [vmem:[#allocation2 + $0xec] sm:$0x1] %v4636
        %4638 = vst.msk [vmem:[#allocation2 + $0xf0] sm:$0xf] %vm4514, 0
        %v4639 = vld [vmem:[#allocation2 + $0xf4] sm:$0x1]
        %v4640 = vsel %vm4518, 0, %v4639
        %4641 = vst [vmem:[#allocation2 + $0xf4] sm:$0x1] %v4640
        %4642 = vst.msk [vmem:[#allocation2 + $0xf8] sm:$0xf] %vm4514, 0
        %v4643 = vld [vmem:[#allocation2 + $0xfc] sm:$0x1]
        %v4644 = vsel %vm4518, 0, %v4643
        %4645 = vst [vmem:[#allocation2 + $0xfc] sm:$0x1] %v4644
        %4646 = vst.msk [vmem:[#allocation2 + $0x100] sm:$0xf] %vm4514, 0
        %v4647 = vld [vmem:[#allocation2 + $0x104] sm:$0x1]
        %v4648 = vsel %vm4518, 0, %v4647
        %4649 = vst [vmem:[#allocation2 + $0x104] sm:$0x1] %v4648
        %4650 = vst.msk [vmem:[#allocation2 + $0x108] sm:$0xf] %vm4514, 0
        %v4651 = vld [vmem:[#allocation2 + $0x10c] sm:$0x1]
        %v4652 = vsel %vm4518, 0, %v4651
        %4653 = vst [vmem:[#allocation2 + $0x10c] sm:$0x1] %v4652
        %4654 = vst.msk [vmem:[#allocation2 + $0x110] sm:$0xf] %vm4514, 0
        %v4655 = vld [vmem:[#allocation2 + $0x114] sm:$0x1]
        %v4656 = vsel %vm4518, 0, %v4655
        %4657 = vst [vmem:[#allocation2 + $0x114] sm:$0x1] %v4656
        %4658 = vst.msk [vmem:[#allocation2 + $0x118] sm:$0xf] %vm4514, 0
        %v4659 = vld [vmem:[#allocation2 + $0x11c] sm:$0x1]
        %v4660 = vsel %vm4518, 0, %v4659
        %4661 = vst [vmem:[#allocation2 + $0x11c] sm:$0x1] %v4660
        %v4666 = vunpack.c.l.b16 %v4498
        %v4667 = vunpack.c.h.b16 %v4498
        %v4668 = vunpack.c.l.b16 %v4499
        %v4669 = vunpack.c.h.b16 %v4499
        %v4670 = vunpack.c.l.b16 %v4500
        %v4671 = vunpack.c.h.b16 %v4500
        %v4672 = vunpack.c.l.b16 %v4501
        %v4673 = vunpack.c.h.b16 %v4501
        %v4674 = vpack.c.b16 %v4666, %v4666
        %v4675 = vpack.c.b16 %v4667, %v4667
        %v4676 = vpack.c.b16 %v4668, %v4668
        %v4677 = vpack.c.b16 %v4669, %v4669
        %v4678 = vpack.c.b16 %v4670, %v4670
        %v4679 = vpack.c.b16 %v4671, %v4671
        %v4680 = vpack.c.b16 %v4672, %v4672
        %v4681 = vpack.c.b16 %v4673, %v4673
        %s4690 = scalar_lea.vmem [#allocation2], 216
        %4691 = vst.msk [vmem:[%s4690] sm:$0xf] %vm4514, %v4674
        %4692 = vst.msk [vmem:[%s4690 + $0x8] sm:$0xf] %vm4514, %v4675
        %4693 = vst.msk [vmem:[%s4690 + $0x10] sm:$0xf] %vm4514, %v4676
        %4694 = vst.msk [vmem:[%s4690 + $0x18] sm:$0xf] %vm4514, %v4677
        %4695 = vst.msk [vmem:[%s4690 + $0x20] sm:$0xf] %vm4514, %v4678
        %4696 = vst.msk [vmem:[%s4690 + $0x28] sm:$0xf] %vm4514, %v4679
        %4697 = vst.msk [vmem:[%s4690 + $0x30] sm:$0xf] %vm4514, %v4680
        %4698 = vst.msk [vmem:[%s4690 + $0x38] sm:$0xf] %vm4514, %v4681
        %v4703 = vunpack.c.l.b16 %v4502
        %v4704 = vunpack.c.h.b16 %v4502
        %v4705 = vunpack.c.l.b16 %v4503
        %v4706 = vunpack.c.h.b16 %v4503
        %v4707 = vunpack.c.l.b16 %v4504
        %v4708 = vunpack.c.h.b16 %v4504
        %v4709 = vunpack.c.l.b16 %v4505
        %v4710 = vunpack.c.h.b16 %v4505
        %v4711 = vpack.c.b16 %v4703, %v4703
        %v4712 = vpack.c.b16 %v4704, %v4704
        %v4713 = vpack.c.b16 %v4705, %v4705
        %v4714 = vpack.c.b16 %v4706, %v4706
        %v4715 = vpack.c.b16 %v4707, %v4707
        %v4716 = vpack.c.b16 %v4708, %v4708
        %v4717 = vpack.c.b16 %v4709, %v4709
        %v4718 = vpack.c.b16 %v4710, %v4710
        %v4720 = vshrl.u32 %v4711, 16
        %v4722 = vrot.slane %v4720, 7
        %v4723 = vshll.u32 %v4711, 16
        %v4725 = vor.u32 %v4722, %v4723
        %v4726 = vrot.slane %v4722, 4
        %v4728 = vshrl.u32 %v4712, 16
        %v4730 = vrot.slane %v4728, 7
        %v4731 = vshll.u32 %v4712, 16
        %v4733 = vor.u32 %v4730, %v4731
        %v4734 = vrot.slane %v4730, 4
        %v4736 = vshrl.u32 %v4713, 16
        %v4738 = vrot.slane %v4736, 7
        %v4739 = vshll.u32 %v4713, 16
        %v4741 = vor.u32 %v4738, %v4739
        %v4742 = vrot.slane %v4738, 4
        %v4744 = vshrl.u32 %v4714, 16
        %v4746 = vrot.slane %v4744, 7
        %v4747 = vshll.u32 %v4714, 16
        %v4749 = vor.u32 %v4746, %v4747
        %v4750 = vrot.slane %v4746, 4
        %v4752 = vshrl.u32 %v4715, 16
        %v4754 = vrot.slane %v4752, 7
        %v4755 = vshll.u32 %v4715, 16
        %v4757 = vor.u32 %v4754, %v4755
        %v4758 = vrot.slane %v4754, 4
        %v4760 = vshrl.u32 %v4716, 16
        %v4762 = vrot.slane %v4760, 7
        %v4763 = vshll.u32 %v4716, 16
        %v4765 = vor.u32 %v4762, %v4763
        %v4766 = vrot.slane %v4762, 4
        %v4768 = vshrl.u32 %v4717, 16
        %v4770 = vrot.slane %v4768, 7
        %v4771 = vshll.u32 %v4717, 16
        %v4773 = vor.u32 %v4770, %v4771
        %v4774 = vrot.slane %v4770, 4
        %v4776 = vshrl.u32 %v4718, 16
        %v4778 = vrot.slane %v4776, 7
        %v4779 = vshll.u32 %v4718, 16
        %v4781 = vor.u32 %v4778, %v4779
        %v4782 = vrot.slane %v4778, 4
        %s4799 = scalar_lea.vmem [#allocation2], 144
        %vm4800 = vcmask 519168
        %vm4801 = vsmask.f32 7938
        %vm4802 = vmand %vm4800, %vm4801
        %v4803 = vld [vmem:[%s4799] sm:$0xf]
        %v4804 = vsel %vm4802, %v4725, %v4803
        %4805 = vst [vmem:[%s4799] sm:$0xf] %v4804
        %v4806 = vld [vmem:[%s4799 + $0x4] sm:$0x1]
        %v4807 = vsel %vm4518, %v4726, %v4806
        %4808 = vst [vmem:[%s4799 + $0x4] sm:$0x1] %v4807
        %v4809 = vld [vmem:[%s4799 + $0x8] sm:$0xf]
        %v4810 = vsel %vm4802, %v4733, %v4809
        %4811 = vst [vmem:[%s4799 + $0x8] sm:$0xf] %v4810
        %v4812 = vld [vmem:[%s4799 + $0xc] sm:$0x1]
        %v4813 = vsel %vm4518, %v4734, %v4812
        %4814 = vst [vmem:[%s4799 + $0xc] sm:$0x1] %v4813
        %v4815 = vld [vmem:[%s4799 + $0x10] sm:$0xf]
        %v4816 = vsel %vm4802, %v4741, %v4815
        %4817 = vst [vmem:[%s4799 + $0x10] sm:$0xf] %v4816
        %v4818 = vld [vmem:[%s4799 + $0x14] sm:$0x1]
        %v4819 = vsel %vm4518, %v4742, %v4818
        %4820 = vst [vmem:[%s4799 + $0x14] sm:$0x1] %v4819
        %v4821 = vld [vmem:[%s4799 + $0x18] sm:$0xf]
        %v4822 = vsel %vm4802, %v4749, %v4821
        %4823 = vst [vmem:[%s4799 + $0x18] sm:$0xf] %v4822
        %v4824 = vld [vmem:[%s4799 + $0x1c] sm:$0x1]
        %v4825 = vsel %vm4518, %v4750, %v4824
        %4826 = vst [vmem:[%s4799 + $0x1c] sm:$0x1] %v4825
        %v4827 = vld [vmem:[%s4799 + $0x20] sm:$0xf]
        %v4828 = vsel %vm4802, %v4757, %v4827
        %4829 = vst [vmem:[%s4799 + $0x20] sm:$0xf] %v4828
        %v4830 = vld [vmem:[%s4799 + $0x24] sm:$0x1]
        %v4831 = vsel %vm4518, %v4758, %v4830
        %4832 = vst [vmem:[%s4799 + $0x24] sm:$0x1] %v4831
        %v4833 = vld [vmem:[%s4799 + $0x28] sm:$0xf]
        %v4834 = vsel %vm4802, %v4765, %v4833
        %4835 = vst [vmem:[%s4799 + $0x28] sm:$0xf] %v4834
        %v4836 = vld [vmem:[%s4799 + $0x2c] sm:$0x1]
        %v4837 = vsel %vm4518, %v4766, %v4836
        %4838 = vst [vmem:[%s4799 + $0x2c] sm:$0x1] %v4837
        %v4839 = vld [vmem:[%s4799 + $0x30] sm:$0xf]
        %v4840 = vsel %vm4802, %v4773, %v4839
        %4841 = vst [vmem:[%s4799 + $0x30] sm:$0xf] %v4840
        %v4842 = vld [vmem:[%s4799 + $0x34] sm:$0x1]
        %v4843 = vsel %vm4518, %v4774, %v4842
        %4844 = vst [vmem:[%s4799 + $0x34] sm:$0x1] %v4843
        %v4845 = vld [vmem:[%s4799 + $0x38] sm:$0xf]
        %v4846 = vsel %vm4802, %v4781, %v4845
        %4847 = vst [vmem:[%s4799 + $0x38] sm:$0xf] %v4846
        %v4848 = vld [vmem:[%s4799 + $0x3c] sm:$0x1]
        %v4849 = vsel %vm4518, %v4782, %v4848
        %4850 = vst [vmem:[%s4799 + $0x3c] sm:$0x1] %v4849
        %v4855 = vunpack.c.l.b16 %v4506
        %v4856 = vunpack.c.h.b16 %v4506
        %v4857 = vunpack.c.l.b16 %v4507
        %v4858 = vunpack.c.h.b16 %v4507
        %v4859 = vunpack.c.l.b16 %v4508
        %v4860 = vunpack.c.h.b16 %v4508
        %v4861 = vunpack.c.l.b16 %v4509
        %v4862 = vunpack.c.h.b16 %v4509
        %v4863 = vpack.c.b16 %v4855, %v4855
        %v4864 = vpack.c.b16 %v4856, %v4856
        %v4865 = vpack.c.b16 %v4857, %v4857
        %v4866 = vpack.c.b16 %v4858, %v4858
        %v4867 = vpack.c.b16 %v4859, %v4859
        %v4868 = vpack.c.b16 %v4860, %v4860
        %v4869 = vpack.c.b16 %v4861, %v4861
        %v4870 = vpack.c.b16 %v4862, %v4862
        %s4879 = scalar_lea.vmem [#allocation2], 80
        %4880 = vst.msk [vmem:[%s4879] sm:$0xf] %vm4514, %v4863
        %4881 = vst.msk [vmem:[%s4879 + $0x8] sm:$0xf] %vm4514, %v4864
        %4882 = vst.msk [vmem:[%s4879 + $0x10] sm:$0xf] %vm4514, %v4865
        %4883 = vst.msk [vmem:[%s4879 + $0x18] sm:$0xf] %vm4514, %v4866
        %4884 = vst.msk [vmem:[%s4879 + $0x20] sm:$0xf] %vm4514, %v4867
        %4885 = vst.msk [vmem:[%s4879 + $0x28] sm:$0xf] %vm4514, %v4868
        %4886 = vst.msk [vmem:[%s4879 + $0x30] sm:$0xf] %vm4514, %v4869
        %4887 = vst.msk [vmem:[%s4879 + $0x38] sm:$0xf] %vm4514, %v4870
        %v4892 = vunpack.c.l.b16 %v4510
        %v4893 = vunpack.c.h.b16 %v4510
        %v4894 = vunpack.c.l.b16 %v4511
        %v4895 = vunpack.c.h.b16 %v4511
        %v4896 = vunpack.c.l.b16 %v4512
        %v4897 = vunpack.c.h.b16 %v4512
        %v4898 = vunpack.c.l.b16 %v4513
        %v4899 = vunpack.c.h.b16 %v4513
        %v4900 = vpack.c.b16 %v4892, %v4892
        %v4901 = vpack.c.b16 %v4893, %v4893
        %v4902 = vpack.c.b16 %v4894, %v4894
        %v4903 = vpack.c.b16 %v4895, %v4895
        %v4904 = vpack.c.b16 %v4896, %v4896
        %v4905 = vpack.c.b16 %v4897, %v4897
        %v4906 = vpack.c.b16 %v4898, %v4898
        %v4907 = vpack.c.b16 %v4899, %v4899
        %v4909 = vshrl.u32 %v4900, 16
        %v4911 = vrot.slane %v4909, 7
        %v4912 = vshll.u32 %v4900, 16
        %v4914 = vor.u32 %v4911, %v4912
        %v4915 = vrot.slane %v4911, 4
        %v4917 = vshrl.u32 %v4901, 16
        %v4919 = vrot.slane %v4917, 7
        %v4920 = vshll.u32 %v4901, 16
        %v4922 = vor.u32 %v4919, %v4920
        %v4923 = vrot.slane %v4919, 4
        %v4925 = vshrl.u32 %v4902, 16
        %v4927 = vrot.slane %v4925, 7
        %v4928 = vshll.u32 %v4902, 16
        %v4930 = vor.u32 %v4927, %v4928
        %v4931 = vrot.slane %v4927, 4
        %v4933 = vshrl.u32 %v4903, 16
        %v4935 = vrot.slane %v4933, 7
        %v4936 = vshll.u32 %v4903, 16
        %v4938 = vor.u32 %v4935, %v4936
        %v4939 = vrot.slane %v4935, 4
        %v4941 = vshrl.u32 %v4904, 16
        %v4943 = vrot.slane %v4941, 7
        %v4944 = vshll.u32 %v4904, 16
        %v4946 = vor.u32 %v4943, %v4944
        %v4947 = vrot.slane %v4943, 4
        %v4949 = vshrl.u32 %v4905, 16
        %v4951 = vrot.slane %v4949, 7
        %v4952 = vshll.u32 %v4905, 16
        %v4954 = vor.u32 %v4951, %v4952
        %v4955 = vrot.slane %v4951, 4
        %v4957 = vshrl.u32 %v4906, 16
        %v4959 = vrot.slane %v4957, 7
        %v4960 = vshll.u32 %v4906, 16
        %v4962 = vor.u32 %v4959, %v4960
        %v4963 = vrot.slane %v4959, 4
        %v4965 = vshrl.u32 %v4907, 16
        %v4967 = vrot.slane %v4965, 7
        %v4968 = vshll.u32 %v4907, 16
        %v4970 = vor.u32 %v4967, %v4968
        %v4971 = vrot.slane %v4967, 4
        %s4988 = scalar_lea.vmem [#allocation2], 8
        %v4989 = vld [vmem:[%s4988] sm:$0xf]
        %v4990 = vsel %vm4802, %v4914, %v4989
        %4991 = vst [vmem:[%s4988] sm:$0xf] %v4990
        %v4992 = vld [vmem:[%s4988 + $0x4] sm:$0x1]
        %v4993 = vsel %vm4518, %v4915, %v4992
        %4994 = vst [vmem:[%s4988 + $0x4] sm:$0x1] %v4993
        %v4995 = vld [vmem:[%s4988 + $0x8] sm:$0xf]
        %v4996 = vsel %vm4802, %v4922, %v4995
        %4997 = vst [vmem:[%s4988 + $0x8] sm:$0xf] %v4996
        %v4998 = vld [vmem:[%s4988 + $0xc] sm:$0x1]
        %v4999 = vsel %vm4518, %v4923, %v4998
        %5000 = vst [vmem:[%s4988 + $0xc] sm:$0x1] %v4999
        %v5001 = vld [vmem:[%s4988 + $0x10] sm:$0xf]
        %v5002 = vsel %vm4802, %v4930, %v5001
        %5003 = vst [vmem:[%s4988 + $0x10] sm:$0xf] %v5002
        %v5004 = vld [vmem:[%s4988 + $0x14] sm:$0x1]
        %v5005 = vsel %vm4518, %v4931, %v5004
        %5006 = vst [vmem:[%s4988 + $0x14] sm:$0x1] %v5005
        %v5007 = vld [vmem:[%s4988 + $0x18] sm:$0xf]
        %v5008 = vsel %vm4802, %v4938, %v5007
        %5009 = vst [vmem:[%s4988 + $0x18] sm:$0xf] %v5008
        %v5010 = vld [vmem:[%s4988 + $0x1c] sm:$0x1]
        %v5011 = vsel %vm4518, %v4939, %v5010
        %5012 = vst [vmem:[%s4988 + $0x1c] sm:$0x1] %v5011
        %v5013 = vld [vmem:[%s4988 + $0x20] sm:$0xf]
        %v5014 = vsel %vm4802, %v4946, %v5013
        %5015 = vst [vmem:[%s4988 + $0x20] sm:$0xf] %v5014
        %v5016 = vld [vmem:[%s4988 + $0x24] sm:$0x1]
        %v5017 = vsel %vm4518, %v4947, %v5016
        %5018 = vst [vmem:[%s4988 + $0x24] sm:$0x1] %v5017
        %v5019 = vld [vmem:[%s4988 + $0x28] sm:$0xf]
        %v5020 = vsel %vm4802, %v4954, %v5019
        %5021 = vst [vmem:[%s4988 + $0x28] sm:$0xf] %v5020
        %v5022 = vld [vmem:[%s4988 + $0x2c] sm:$0x1]
        %v5023 = vsel %vm4518, %v4955, %v5022
        %5024 = vst [vmem:[%s4988 + $0x2c] sm:$0x1] %v5023
        %v5025 = vld [vmem:[%s4988 + $0x30] sm:$0xf]
        %v5026 = vsel %vm4802, %v4962, %v5025
        %5027 = vst [vmem:[%s4988 + $0x30] sm:$0xf] %v5026
        %v5028 = vld [vmem:[%s4988 + $0x34] sm:$0x1]
        %v5029 = vsel %vm4518, %v4963, %v5028
        %5030 = vst [vmem:[%s4988 + $0x34] sm:$0x1] %v5029
        %v5031 = vld [vmem:[%s4988 + $0x38] sm:$0xf]
        %v5032 = vsel %vm4802, %v4970, %v5031
        %5033 = vst [vmem:[%s4988 + $0x38] sm:$0xf] %v5032
        %v5034 = vld [vmem:[%s4988 + $0x3c] sm:$0x1]
        %v5035 = vsel %vm4518, %v4971, %v5034
        %5036 = vst [vmem:[%s4988 + $0x3c] sm:$0x1] %v5035
        %v5037 = vld [vmem:[#allocation2] sm:$0xf]
        %v5038 = vld [vmem:[#allocation2 + $0x8] sm:$0xf]
        %v5039 = vld [vmem:[#allocation2 + $0x10] sm:$0xf]
        %v5040 = vld [vmem:[#allocation2 + $0x18] sm:$0xf]
        %v5041 = vld [vmem:[#allocation2 + $0x20] sm:$0xf]
        %v5042 = vld [vmem:[#allocation2 + $0x28] sm:$0xf]
        %v5043 = vld [vmem:[#allocation2 + $0x30] sm:$0xf]
        %v5044 = vld [vmem:[#allocation2 + $0x38] sm:$0xf]
        %s5045 = scalar_lea.vmem [#allocation2], 72
        %v5046 = vld [vmem:[%s5045] sm:$0xf]
        %v5047 = vld [vmem:[%s5045 + $0x8] sm:$0xf]
        %v5048 = vld [vmem:[%s5045 + $0x10] sm:$0xf]
        %v5049 = vld [vmem:[%s5045 + $0x18] sm:$0xf]
        %v5050 = vld [vmem:[%s5045 + $0x20] sm:$0xf]
        %v5051 = vld [vmem:[%s5045 + $0x28] sm:$0xf]
        %v5052 = vld [vmem:[%s5045 + $0x30] sm:$0xf]
        %v5053 = vld [vmem:[%s5045 + $0x38] sm:$0xf]
        %v5054 = vld [vmem:[#allocation2 + $0x4] sm:$0x1]
        %v5055 = vld [vmem:[#allocation2 + $0xc] sm:$0x1]
        %v5056 = vld [vmem:[#allocation2 + $0x14] sm:$0x1]
        %v5057 = vld [vmem:[#allocation2 + $0x1c] sm:$0x1]
        %v5058 = vld [vmem:[#allocation2 + $0x24] sm:$0x1]
        %v5059 = vld [vmem:[#allocation2 + $0x2c] sm:$0x1]
        %v5060 = vld [vmem:[#allocation2 + $0x34] sm:$0x1]
        %v5061 = vld [vmem:[#allocation2 + $0x3c] sm:$0x1]
        %v5062 = vld [vmem:[%s5045 + $0x4] sm:$0x1]
        %v5063 = vld [vmem:[%s5045 + $0xc] sm:$0x1]
        %v5064 = vld [vmem:[%s5045 + $0x14] sm:$0x1]
        %v5065 = vld [vmem:[%s5045 + $0x1c] sm:$0x1]
        %v5066 = vld [vmem:[%s5045 + $0x24] sm:$0x1]
        %v5067 = vld [vmem:[%s5045 + $0x2c] sm:$0x1]
        %v5068 = vld [vmem:[%s5045 + $0x34] sm:$0x1]
        %v5069 = vld [vmem:[%s5045 + $0x3c] sm:$0x1]
        %v5070 = vld [vmem:[%s4799] sm:$0xf]
        %v5071 = vld [vmem:[%s4799 + $0x8] sm:$0xf]
        %v5072 = vld [vmem:[%s4799 + $0x10] sm:$0xf]
        %v5073 = vld [vmem:[%s4799 + $0x18] sm:$0xf]
        %v5074 = vld [vmem:[%s4799 + $0x20] sm:$0xf]
        %v5075 = vld [vmem:[%s4799 + $0x28] sm:$0xf]
        %v5076 = vld [vmem:[%s4799 + $0x30] sm:$0xf]
        %v5077 = vld [vmem:[%s4799 + $0x38] sm:$0xf]
        %v5078 = vld [vmem:[%s4690] sm:$0xf]
        %v5079 = vld [vmem:[%s4690 + $0x8] sm:$0xf]
        %v5080 = vld [vmem:[%s4690 + $0x10] sm:$0xf]
        %v5081 = vld [vmem:[%s4690 + $0x18] sm:$0xf]
        %v5082 = vld [vmem:[%s4690 + $0x20] sm:$0xf]
        %v5083 = vld [vmem:[%s4690 + $0x28] sm:$0xf]
        %v5084 = vld [vmem:[%s4690 + $0x30] sm:$0xf]
        %v5085 = vld [vmem:[%s4690 + $0x38] sm:$0xf]
        %v5086 = vld [vmem:[%s4799 + $0x4] sm:$0x1]
        %v5087 = vld [vmem:[%s4799 + $0xc] sm:$0x1]
        %v5088 = vld [vmem:[%s4799 + $0x14] sm:$0x1]
        %v5089 = vld [vmem:[%s4799 + $0x1c] sm:$0x1]
        %v5090 = vld [vmem:[%s4799 + $0x24] sm:$0x1]
        %v5091 = vld [vmem:[%s4799 + $0x2c] sm:$0x1]
        %v5092 = vld [vmem:[%s4799 + $0x34] sm:$0x1]
        %v5093 = vld [vmem:[%s4799 + $0x3c] sm:$0x1]
        %v5094 = vld [vmem:[%s4690 + $0x4] sm:$0x1]
        %v5095 = vld [vmem:[%s4690 + $0xc] sm:$0x1]
        %v5096 = vld [vmem:[%s4690 + $0x14] sm:$0x1]
        %v5097 = vld [vmem:[%s4690 + $0x1c] sm:$0x1]
        %v5098 = vld [vmem:[%s4690 + $0x24] sm:$0x1]
        %v5099 = vld [vmem:[%s4690 + $0x2c] sm:$0x1]
        %v5100 = vld [vmem:[%s4690 + $0x34] sm:$0x1]
        %v5101 = vld [vmem:[%s4690 + $0x3c] sm:$0x1]
        %v5102 = vld [vmem:[%s4988] sm:$0xf]
        %v5103 = vld [vmem:[%s4988 + $0x8] sm:$0xf]
        %v5104 = vld [vmem:[%s4988 + $0x10] sm:$0xf]
        %v5105 = vld [vmem:[%s4988 + $0x18] sm:$0xf]
        %v5106 = vld [vmem:[%s4988 + $0x20] sm:$0xf]
        %v5107 = vld [vmem:[%s4988 + $0x28] sm:$0xf]
        %v5108 = vld [vmem:[%s4988 + $0x30] sm:$0xf]
        %v5109 = vld [vmem:[%s4988 + $0x38] sm:$0xf]
        %v5110 = vld [vmem:[%s4879] sm:$0xf]
        %v5111 = vld [vmem:[%s4879 + $0x8] sm:$0xf]
        %v5112 = vld [vmem:[%s4879 + $0x10] sm:$0xf]
        %v5113 = vld [vmem:[%s4879 + $0x18] sm:$0xf]
        %v5114 = vld [vmem:[%s4879 + $0x20] sm:$0xf]
        %v5115 = vld [vmem:[%s4879 + $0x28] sm:$0xf]
        %v5116 = vld [vmem:[%s4879 + $0x30] sm:$0xf]
        %v5117 = vld [vmem:[%s4879 + $0x38] sm:$0xf]
        %v5118 = vld [vmem:[%s4988 + $0x4] sm:$0x1]
        %v5119 = vld [vmem:[%s4988 + $0xc] sm:$0x1]
        %v5120 = vld [vmem:[%s4988 + $0x14] sm:$0x1]
        %v5121 = vld [vmem:[%s4988 + $0x1c] sm:$0x1]
        %v5122 = vld [vmem:[%s4988 + $0x24] sm:$0x1]
        %v5123 = vld [vmem:[%s4988 + $0x2c] sm:$0x1]
        %v5124 = vld [vmem:[%s4988 + $0x34] sm:$0x1]
        %v5125 = vld [vmem:[%s4988 + $0x3c] sm:$0x1]
        %v5126 = vld [vmem:[%s4879 + $0x4] sm:$0x1]
        %v5127 = vld [vmem:[%s4879 + $0xc] sm:$0x1]
        %v5128 = vld [vmem:[%s4879 + $0x14] sm:$0x1]
        %v5129 = vld [vmem:[%s4879 + $0x1c] sm:$0x1]
        %v5130 = vld [vmem:[%s4879 + $0x24] sm:$0x1]
        %v5131 = vld [vmem:[%s4879 + $0x2c] sm:$0x1]
        %v5132 = vld [vmem:[%s4879 + $0x34] sm:$0x1]
        %v5133 = vld [vmem:[%s4879 + $0x3c] sm:$0x1]
        %s5134 = scalar_lea.vmem [#allocation2], 152
        %v5135 = vld [vmem:[%s5134] sm:$0xf]
        %v5136 = vld [vmem:[%s5134 + $0x8] sm:$0xf]
        %v5137 = vld [vmem:[%s5134 + $0x10] sm:$0xf]
        %v5138 = vld [vmem:[%s5134 + $0x18] sm:$0xf]
        %v5139 = vld [vmem:[%s5134 + $0x20] sm:$0xf]
        %v5140 = vld [vmem:[%s5134 + $0x28] sm:$0xf]
        %v5141 = vld [vmem:[%s5134 + $0x30] sm:$0xf]
        %v5142 = vld [vmem:[%s5134 + $0x38] sm:$0xf]
        %s5143 = scalar_lea.vmem [#allocation2], 224
        %v5144 = vld [vmem:[%s5143] sm:$0xf]
        %v5145 = vld [vmem:[%s5143 + $0x8] sm:$0xf]
        %v5146 = vld [vmem:[%s5143 + $0x10] sm:$0xf]
        %v5147 = vld [vmem:[%s5143 + $0x18] sm:$0xf]
        %v5148 = vld [vmem:[%s5143 + $0x20] sm:$0xf]
        %v5149 = vld [vmem:[%s5143 + $0x28] sm:$0xf]
        %v5150 = vld [vmem:[%s5143 + $0x30] sm:$0xf]
        %v5151 = vld [vmem:[%s5143 + $0x38] sm:$0xf]
        %v5152 = vld [vmem:[%s5134 + $0x4] sm:$0x1]
        %v5153 = vld [vmem:[%s5134 + $0xc] sm:$0x1]
        %v5154 = vld [vmem:[%s5134 + $0x14] sm:$0x1]
        %v5155 = vld [vmem:[%s5134 + $0x1c] sm:$0x1]
        %v5156 = vld [vmem:[%s5134 + $0x24] sm:$0x1]
        %v5157 = vld [vmem:[%s5134 + $0x2c] sm:$0x1]
        %v5158 = vld [vmem:[%s5134 + $0x34] sm:$0x1]
        %v5159 = vld [vmem:[%s5134 + $0x3c] sm:$0x1]
        %v5160 = vld [vmem:[%s5143 + $0x4] sm:$0x1]
        %v5161 = vld [vmem:[%s5143 + $0xc] sm:$0x1]
        %v5162 = vld [vmem:[%s5143 + $0x14] sm:$0x1]
        %v5163 = vld [vmem:[%s5143 + $0x1c] sm:$0x1]
        %v5164 = vld [vmem:[%s5143 + $0x24] sm:$0x1]
        %v5165 = vld [vmem:[%s5143 + $0x2c] sm:$0x1]
        %v5166 = vld [vmem:[%s5143 + $0x34] sm:$0x1]
        %v5167 = vld [vmem:[%s5143 + $0x3c] sm:$0x1]
        %v5176 = vunpack.c.l.b16 %v5046
        %v5177 = vunpack.c.l.b16 %v5047
        %v5178 = vunpack.c.l.b16 %v5048
        %v5179 = vunpack.c.l.b16 %v5049
        %v5180 = vunpack.c.l.b16 %v5050
        %v5181 = vunpack.c.l.b16 %v5051
        %v5182 = vunpack.c.l.b16 %v5052
        %v5183 = vunpack.c.l.b16 %v5053
        %v5184 = vpack.c.b16 %v5176, %v5176
        %v5185 = vpack.c.b16 %v5177, %v5177
        %v5186 = vpack.c.b16 %v5178, %v5178
        %v5187 = vpack.c.b16 %v5179, %v5179
        %v5188 = vpack.c.b16 %v5180, %v5180
        %v5189 = vpack.c.b16 %v5181, %v5181
        %v5190 = vpack.c.b16 %v5182, %v5182
        %v5191 = vpack.c.b16 %v5183, %v5183
        %5192 = vrot.lane.b32.xlu0 %v5184, 64
        %v5193 = vpop.permute.xlu0 %5192
        %5194 = vrot.lane.b32.xlu0 %v5185, 64
        %v5195 = vpop.permute.xlu0 %5194
        %5196 = vrot.lane.b32.xlu0 %v5186, 64
        %v5197 = vpop.permute.xlu0 %5196
        %5198 = vrot.lane.b32.xlu0 %v5187, 64
        %v5199 = vpop.permute.xlu0 %5198
        %5200 = vrot.lane.b32.xlu0 %v5188, 64
        %v5201 = vpop.permute.xlu0 %5200
        %5202 = vrot.lane.b32.xlu0 %v5189, 64
        %v5203 = vpop.permute.xlu0 %5202
        %5204 = vrot.lane.b32.xlu0 %v5190, 64
        %v5205 = vpop.permute.xlu0 %5204
        %5206 = vrot.lane.b32.xlu0 %v5191, 64
        %v5207 = vpop.permute.xlu0 %5206
        %v5224 = vunpack.c.l.b16 %v5037
        %v5225 = vunpack.c.l.b16 %v5054
        %v5226 = vunpack.c.l.b16 %v5038
        %v5227 = vunpack.c.l.b16 %v5055
        %v5228 = vunpack.c.l.b16 %v5039
        %v5229 = vunpack.c.l.b16 %v5056
        %v5230 = vunpack.c.l.b16 %v5040
        %v5231 = vunpack.c.l.b16 %v5057
        %v5232 = vunpack.c.l.b16 %v5041
        %v5233 = vunpack.c.l.b16 %v5058
        %v5234 = vunpack.c.l.b16 %v5042
        %v5235 = vunpack.c.l.b16 %v5059
        %v5236 = vunpack.c.l.b16 %v5043
        %v5237 = vunpack.c.l.b16 %v5060
        %v5238 = vunpack.c.l.b16 %v5044
        %v5239 = vunpack.c.l.b16 %v5061
        %v5240 = vpack.c.b16 %v5225, %v5224
        %v5241 = vpack.c.b16 %v5227, %v5226
        %v5242 = vpack.c.b16 %v5229, %v5228
        %v5243 = vpack.c.b16 %v5231, %v5230
        %v5244 = vpack.c.b16 %v5233, %v5232
        %v5245 = vpack.c.b16 %v5235, %v5234
        %v5246 = vpack.c.b16 %v5237, %v5236
        %v5247 = vpack.c.b16 %v5239, %v5238
        %v5249 = vshrl.u32 %v5240, 16
        %v5251 = vshll.u32 %v5240, 16
        %v5253 = vrot.slane %v5251, 1
        %v5254 = vor.u32 %v5249, %v5253
        %v5256 = vshrl.u32 %v5241, 16
        %v5258 = vshll.u32 %v5241, 16
        %v5260 = vrot.slane %v5258, 1
        %v5261 = vor.u32 %v5256, %v5260
        %v5263 = vshrl.u32 %v5242, 16
        %v5265 = vshll.u32 %v5242, 16
        %v5267 = vrot.slane %v5265, 1
        %v5268 = vor.u32 %v5263, %v5267
        %v5270 = vshrl.u32 %v5243, 16
        %v5272 = vshll.u32 %v5243, 16
        %v5274 = vrot.slane %v5272, 1
        %v5275 = vor.u32 %v5270, %v5274
        %v5277 = vshrl.u32 %v5244, 16
        %v5279 = vshll.u32 %v5244, 16
        %v5281 = vrot.slane %v5279, 1
        %v5282 = vor.u32 %v5277, %v5281
        %v5284 = vshrl.u32 %v5245, 16
        %v5286 = vshll.u32 %v5245, 16
        %v5288 = vrot.slane %v5286, 1
        %v5289 = vor.u32 %v5284, %v5288
        %v5291 = vshrl.u32 %v5246, 16
        %v5293 = vshll.u32 %v5246, 16
        %v5295 = vrot.slane %v5293, 1
        %v5296 = vor.u32 %v5291, %v5295
        %v5298 = vshrl.u32 %v5247, 16
        %v5300 = vshll.u32 %v5247, 16
        %v5302 = vrot.slane %v5300, 1
        %v5303 = vor.u32 %v5298, %v5302
        %v5312 = vunpack.c.l.b16 %v5062
        %v5313 = vunpack.c.l.b16 %v5063
        %v5314 = vunpack.c.l.b16 %v5064
        %v5315 = vunpack.c.l.b16 %v5065
        %v5316 = vunpack.c.l.b16 %v5066
        %v5317 = vunpack.c.l.b16 %v5067
        %v5318 = vunpack.c.l.b16 %v5068
        %v5319 = vunpack.c.l.b16 %v5069
        %v5320 = vpack.c.b16 %v5312, %v5176
        %v5321 = vpack.c.b16 %v5313, %v5177
        %v5322 = vpack.c.b16 %v5314, %v5178
        %v5323 = vpack.c.b16 %v5315, %v5179
        %v5324 = vpack.c.b16 %v5316, %v5180
        %v5325 = vpack.c.b16 %v5317, %v5181
        %v5326 = vpack.c.b16 %v5318, %v5182
        %v5327 = vpack.c.b16 %v5319, %v5183
        %v5329 = vshrl.u32 %v5320, 16
        %v5331 = vshll.u32 %v5320, 16
        %v5333 = vrot.slane %v5331, 1
        %v5334 = vor.u32 %v5329, %v5333
        %v5336 = vshrl.u32 %v5321, 16
        %v5338 = vshll.u32 %v5321, 16
        %v5340 = vrot.slane %v5338, 1
        %v5341 = vor.u32 %v5336, %v5340
        %v5343 = vshrl.u32 %v5322, 16
        %v5345 = vshll.u32 %v5322, 16
        %v5347 = vrot.slane %v5345, 1
        %v5348 = vor.u32 %v5343, %v5347
        %v5350 = vshrl.u32 %v5323, 16
        %v5352 = vshll.u32 %v5323, 16
        %v5354 = vrot.slane %v5352, 1
        %v5355 = vor.u32 %v5350, %v5354
        %v5357 = vshrl.u32 %v5324, 16
        %v5359 = vshll.u32 %v5324, 16
        %v5361 = vrot.slane %v5359, 1
        %v5362 = vor.u32 %v5357, %v5361
        %v5364 = vshrl.u32 %v5325, 16
        %v5366 = vshll.u32 %v5325, 16
        %v5368 = vrot.slane %v5366, 1
        %v5369 = vor.u32 %v5364, %v5368
        %v5371 = vshrl.u32 %v5326, 16
        %v5373 = vshll.u32 %v5326, 16
        %v5375 = vrot.slane %v5373, 1
        %v5376 = vor.u32 %v5371, %v5375
        %v5378 = vshrl.u32 %v5327, 16
        %v5380 = vshll.u32 %v5327, 16
        %v5382 = vrot.slane %v5380, 1
        %v5383 = vor.u32 %v5378, %v5382
        %5384 = vrot.lane.b32.xlu0 %v5334, 64
        %v5385 = vpop.permute.xlu0 %5384
        %5386 = vrot.lane.b32.xlu0 %v5341, 64
        %v5387 = vpop.permute.xlu0 %5386
        %5388 = vrot.lane.b32.xlu0 %v5348, 64
        %v5389 = vpop.permute.xlu0 %5388
        %5390 = vrot.lane.b32.xlu0 %v5355, 64
        %v5391 = vpop.permute.xlu0 %5390
        %5392 = vrot.lane.b32.xlu0 %v5362, 64
        %v5393 = vpop.permute.xlu0 %5392
        %5394 = vrot.lane.b32.xlu0 %v5369, 64
        %v5395 = vpop.permute.xlu0 %5394
        %5396 = vrot.lane.b32.xlu0 %v5376, 64
        %v5397 = vpop.permute.xlu0 %5396
        %5398 = vrot.lane.b32.xlu0 %v5383, 64
        %v5399 = vpop.permute.xlu0 %5398
        %v5408 = vunpack.c.l.b16 %v5078
        %v5409 = vunpack.c.l.b16 %v5079
        %v5410 = vunpack.c.l.b16 %v5080
        %v5411 = vunpack.c.l.b16 %v5081
        %v5412 = vunpack.c.l.b16 %v5082
        %v5413 = vunpack.c.l.b16 %v5083
        %v5414 = vunpack.c.l.b16 %v5084
        %v5415 = vunpack.c.l.b16 %v5085
        %v5416 = vpack.c.b16 %v5408, %v5408
        %v5417 = vpack.c.b16 %v5409, %v5409
        %v5418 = vpack.c.b16 %v5410, %v5410
        %v5419 = vpack.c.b16 %v5411, %v5411
        %v5420 = vpack.c.b16 %v5412, %v5412
        %v5421 = vpack.c.b16 %v5413, %v5413
        %v5422 = vpack.c.b16 %v5414, %v5414
        %v5423 = vpack.c.b16 %v5415, %v5415
        %5424 = vrot.lane.b32.xlu0 %v5416, 64
        %v5425 = vpop.permute.xlu0 %5424
        %5426 = vrot.lane.b32.xlu0 %v5417, 64
        %v5427 = vpop.permute.xlu0 %5426
        %5428 = vrot.lane.b32.xlu0 %v5418, 64
        %v5429 = vpop.permute.xlu0 %5428
        %5430 = vrot.lane.b32.xlu0 %v5419, 64
        %v5431 = vpop.permute.xlu0 %5430
        %5432 = vrot.lane.b32.xlu0 %v5420, 64
        %v5433 = vpop.permute.xlu0 %5432
        %5434 = vrot.lane.b32.xlu0 %v5421, 64
        %v5435 = vpop.permute.xlu0 %5434
        %5436 = vrot.lane.b32.xlu0 %v5422, 64
        %v5437 = vpop.permute.xlu0 %5436
        %5438 = vrot.lane.b32.xlu0 %v5423, 64
        %v5439 = vpop.permute.xlu0 %5438
        %v5456 = vunpack.c.l.b16 %v5070
        %v5457 = vunpack.c.l.b16 %v5086
        %v5458 = vunpack.c.l.b16 %v5071
        %v5459 = vunpack.c.l.b16 %v5087
        %v5460 = vunpack.c.l.b16 %v5072
        %v5461 = vunpack.c.l.b16 %v5088
        %v5462 = vunpack.c.l.b16 %v5073
        %v5463 = vunpack.c.l.b16 %v5089
        %v5464 = vunpack.c.l.b16 %v5074
        %v5465 = vunpack.c.l.b16 %v5090
        %v5466 = vunpack.c.l.b16 %v5075
        %v5467 = vunpack.c.l.b16 %v5091
        %v5468 = vunpack.c.l.b16 %v5076
        %v5469 = vunpack.c.l.b16 %v5092
        %v5470 = vunpack.c.l.b16 %v5077
        %v5471 = vunpack.c.l.b16 %v5093
        %v5472 = vpack.c.b16 %v5457, %v5456
        %v5473 = vpack.c.b16 %v5459, %v5458
        %v5474 = vpack.c.b16 %v5461, %v5460
        %v5475 = vpack.c.b16 %v5463, %v5462
        %v5476 = vpack.c.b16 %v5465, %v5464
        %v5477 = vpack.c.b16 %v5467, %v5466
        %v5478 = vpack.c.b16 %v5469, %v5468
        %v5479 = vpack.c.b16 %v5471, %v5470
        %v5481 = vshrl.u32 %v5472, 16
        %v5483 = vshll.u32 %v5472, 16
        %v5485 = vrot.slane %v5483, 1
        %v5486 = vor.u32 %v5481, %v5485
        %v5488 = vshrl.u32 %v5473, 16
        %v5490 = vshll.u32 %v5473, 16
        %v5492 = vrot.slane %v5490, 1
        %v5493 = vor.u32 %v5488, %v5492
        %v5495 = vshrl.u32 %v5474, 16
        %v5497 = vshll.u32 %v5474, 16
        %v5499 = vrot.slane %v5497, 1
        %v5500 = vor.u32 %v5495, %v5499
        %v5502 = vshrl.u32 %v5475, 16
        %v5504 = vshll.u32 %v5475, 16
        %v5506 = vrot.slane %v5504, 1
        %v5507 = vor.u32 %v5502, %v5506
        %v5509 = vshrl.u32 %v5476, 16
        %v5511 = vshll.u32 %v5476, 16
        %v5513 = vrot.slane %v5511, 1
        %v5514 = vor.u32 %v5509, %v5513
        %v5516 = vshrl.u32 %v5477, 16
        %v5518 = vshll.u32 %v5477, 16
        %v5520 = vrot.slane %v5518, 1
        %v5521 = vor.u32 %v5516, %v5520
        %v5523 = vshrl.u32 %v5478, 16
        %v5525 = vshll.u32 %v5478, 16
        %v5527 = vrot.slane %v5525, 1
        %v5528 = vor.u32 %v5523, %v5527
        %v5530 = vshrl.u32 %v5479, 16
        %v5532 = vshll.u32 %v5479, 16
        %v5534 = vrot.slane %v5532, 1
        %v5535 = vor.u32 %v5530, %v5534
        %v5544 = vunpack.c.l.b16 %v5094
        %v5545 = vunpack.c.l.b16 %v5095
        %v5546 = vunpack.c.l.b16 %v5096
        %v5547 = vunpack.c.l.b16 %v5097
        %v5548 = vunpack.c.l.b16 %v5098
        %v5549 = vunpack.c.l.b16 %v5099
        %v5550 = vunpack.c.l.b16 %v5100
        %v5551 = vunpack.c.l.b16 %v5101
        %v5552 = vpack.c.b16 %v5544, %v5408
        %v5553 = vpack.c.b16 %v5545, %v5409
        %v5554 = vpack.c.b16 %v5546, %v5410
        %v5555 = vpack.c.b16 %v5547, %v5411
        %v5556 = vpack.c.b16 %v5548, %v5412
        %v5557 = vpack.c.b16 %v5549, %v5413
        %v5558 = vpack.c.b16 %v5550, %v5414
        %v5559 = vpack.c.b16 %v5551, %v5415
        %v5561 = vshrl.u32 %v5552, 16
        %v5563 = vshll.u32 %v5552, 16
        %v5565 = vrot.slane %v5563, 1
        %v5566 = vor.u32 %v5561, %v5565
        %v5568 = vshrl.u32 %v5553, 16
        %v5570 = vshll.u32 %v5553, 16
        %v5572 = vrot.slane %v5570, 1
        %v5573 = vor.u32 %v5568, %v5572
        %v5575 = vshrl.u32 %v5554, 16
        %v5577 = vshll.u32 %v5554, 16
        %v5579 = vrot.slane %v5577, 1
        %v5580 = vor.u32 %v5575, %v5579
        %v5582 = vshrl.u32 %v5555, 16
        %v5584 = vshll.u32 %v5555, 16
        %v5586 = vrot.slane %v5584, 1
        %v5587 = vor.u32 %v5582, %v5586
        %v5589 = vshrl.u32 %v5556, 16
        %v5591 = vshll.u32 %v5556, 16
        %v5593 = vrot.slane %v5591, 1
        %v5594 = vor.u32 %v5589, %v5593
        %v5596 = vshrl.u32 %v5557, 16
        %v5598 = vshll.u32 %v5557, 16
        %v5600 = vrot.slane %v5598, 1
        %v5601 = vor.u32 %v5596, %v5600
        %v5603 = vshrl.u32 %v5558, 16
        %v5605 = vshll.u32 %v5558, 16
        %v5607 = vrot.slane %v5605, 1
        %v5608 = vor.u32 %v5603, %v5607
        %v5610 = vshrl.u32 %v5559, 16
        %v5612 = vshll.u32 %v5559, 16
        %v5614 = vrot.slane %v5612, 1
        %v5615 = vor.u32 %v5610, %v5614
        %5616 = vrot.lane.b32.xlu0 %v5566, 64
        %v5617 = vpop.permute.xlu0 %5616
        %5618 = vrot.lane.b32.xlu0 %v5573, 64
        %v5619 = vpop.permute.xlu0 %5618
        %5620 = vrot.lane.b32.xlu0 %v5580, 64
        %v5621 = vpop.permute.xlu0 %5620
        %5622 = vrot.lane.b32.xlu0 %v5587, 64
        %v5623 = vpop.permute.xlu0 %5622
        %5624 = vrot.lane.b32.xlu0 %v5594, 64
        %v5625 = vpop.permute.xlu0 %5624
        %5626 = vrot.lane.b32.xlu0 %v5601, 64
        %v5627 = vpop.permute.xlu0 %5626
        %5628 = vrot.lane.b32.xlu0 %v5608, 64
        %v5629 = vpop.permute.xlu0 %5628
        %5630 = vrot.lane.b32.xlu0 %v5615, 64
        %v5631 = vpop.permute.xlu0 %5630
        %v5640 = vunpack.c.l.b16 %v5110
        %v5641 = vunpack.c.l.b16 %v5111
        %v5642 = vunpack.c.l.b16 %v5112
        %v5643 = vunpack.c.l.b16 %v5113
        %v5644 = vunpack.c.l.b16 %v5114
        %v5645 = vunpack.c.l.b16 %v5115
        %v5646 = vunpack.c.l.b16 %v5116
        %v5647 = vunpack.c.l.b16 %v5117
        %v5648 = vpack.c.b16 %v5640, %v5640
        %v5649 = vpack.c.b16 %v5641, %v5641
        %v5650 = vpack.c.b16 %v5642, %v5642
        %v5651 = vpack.c.b16 %v5643, %v5643
        %v5652 = vpack.c.b16 %v5644, %v5644
        %v5653 = vpack.c.b16 %v5645, %v5645
        %v5654 = vpack.c.b16 %v5646, %v5646
        %v5655 = vpack.c.b16 %v5647, %v5647
        %5656 = vrot.lane.b32.xlu0 %v5648, 64
        %v5657 = vpop.permute.xlu0 %5656
        %5658 = vrot.lane.b32.xlu0 %v5649, 64
        %v5659 = vpop.permute.xlu0 %5658
        %5660 = vrot.lane.b32.xlu0 %v5650, 64
        %v5661 = vpop.permute.xlu0 %5660
        %5662 = vrot.lane.b32.xlu0 %v5651, 64
        %v5663 = vpop.permute.xlu0 %5662
        %5664 = vrot.lane.b32.xlu0 %v5652, 64
        %v5665 = vpop.permute.xlu0 %5664
        %5666 = vrot.lane.b32.xlu0 %v5653, 64
        %v5667 = vpop.permute.xlu0 %5666
        %5668 = vrot.lane.b32.xlu0 %v5654, 64
        %v5669 = vpop.permute.xlu0 %5668
        %5670 = vrot.lane.b32.xlu0 %v5655, 64
        %v5671 = vpop.permute.xlu0 %5670
        %v5688 = vunpack.c.l.b16 %v5102
        %v5689 = vunpack.c.l.b16 %v5118
        %v5690 = vunpack.c.l.b16 %v5103
        %v5691 = vunpack.c.l.b16 %v5119
        %v5692 = vunpack.c.l.b16 %v5104
        %v5693 = vunpack.c.l.b16 %v5120
        %v5694 = vunpack.c.l.b16 %v5105
        %v5695 = vunpack.c.l.b16 %v5121
        %v5696 = vunpack.c.l.b16 %v5106
        %v5697 = vunpack.c.l.b16 %v5122
        %v5698 = vunpack.c.l.b16 %v5107
        %v5699 = vunpack.c.l.b16 %v5123
        %v5700 = vunpack.c.l.b16 %v5108
        %v5701 = vunpack.c.l.b16 %v5124
        %v5702 = vunpack.c.l.b16 %v5109
        %v5703 = vunpack.c.l.b16 %v5125
        %v5704 = vpack.c.b16 %v5689, %v5688
        %v5705 = vpack.c.b16 %v5691, %v5690
        %v5706 = vpack.c.b16 %v5693, %v5692
        %v5707 = vpack.c.b16 %v5695, %v5694
        %v5708 = vpack.c.b16 %v5697, %v5696
        %v5709 = vpack.c.b16 %v5699, %v5698
        %v5710 = vpack.c.b16 %v5701, %v5700
        %v5711 = vpack.c.b16 %v5703, %v5702
        %v5713 = vshrl.u32 %v5704, 16
        %v5715 = vshll.u32 %v5704, 16
        %v5717 = vrot.slane %v5715, 1
        %v5718 = vor.u32 %v5713, %v5717
        %v5720 = vshrl.u32 %v5705, 16
        %v5722 = vshll.u32 %v5705, 16
        %v5724 = vrot.slane %v5722, 1
        %v5725 = vor.u32 %v5720, %v5724
        %v5727 = vshrl.u32 %v5706, 16
        %v5729 = vshll.u32 %v5706, 16
        %v5731 = vrot.slane %v5729, 1
        %v5732 = vor.u32 %v5727, %v5731
        %v5734 = vshrl.u32 %v5707, 16
        %v5736 = vshll.u32 %v5707, 16
        %v5738 = vrot.slane %v5736, 1
        %v5739 = vor.u32 %v5734, %v5738
        %v5741 = vshrl.u32 %v5708, 16
        %v5743 = vshll.u32 %v5708, 16
        %v5745 = vrot.slane %v5743, 1
        %v5746 = vor.u32 %v5741, %v5745
        %v5748 = vshrl.u32 %v5709, 16
        %v5750 = vshll.u32 %v5709, 16
        %v5752 = vrot.slane %v5750, 1
        %v5753 = vor.u32 %v5748, %v5752
        %v5755 = vshrl.u32 %v5710, 16
        %v5757 = vshll.u32 %v5710, 16
        %v5759 = vrot.slane %v5757, 1
        %v5760 = vor.u32 %v5755, %v5759
        %v5762 = vshrl.u32 %v5711, 16
        %v5764 = vshll.u32 %v5711, 16
        %v5766 = vrot.slane %v5764, 1
        %v5767 = vor.u32 %v5762, %v5766
        %v5776 = vunpack.c.l.b16 %v5126
        %v5777 = vunpack.c.l.b16 %v5127
        %v5778 = vunpack.c.l.b16 %v5128
        %v5779 = vunpack.c.l.b16 %v5129
        %v5780 = vunpack.c.l.b16 %v5130
        %v5781 = vunpack.c.l.b16 %v5131
        %v5782 = vunpack.c.l.b16 %v5132
        %v5783 = vunpack.c.l.b16 %v5133
        %v5784 = vpack.c.b16 %v5776, %v5640
        %v5785 = vpack.c.b16 %v5777, %v5641
        %v5786 = vpack.c.b16 %v5778, %v5642
        %v5787 = vpack.c.b16 %v5779, %v5643
        %v5788 = vpack.c.b16 %v5780, %v5644
        %v5789 = vpack.c.b16 %v5781, %v5645
        %v5790 = vpack.c.b16 %v5782, %v5646
        %v5791 = vpack.c.b16 %v5783, %v5647
        %v5793 = vshrl.u32 %v5784, 16
        %v5795 = vshll.u32 %v5784, 16
        %v5797 = vrot.slane %v5795, 1
        %v5798 = vor.u32 %v5793, %v5797
        %v5800 = vshrl.u32 %v5785, 16
        %v5802 = vshll.u32 %v5785, 16
        %v5804 = vrot.slane %v5802, 1
        %v5805 = vor.u32 %v5800, %v5804
        %v5807 = vshrl.u32 %v5786, 16
        %v5809 = vshll.u32 %v5786, 16
        %v5811 = vrot.slane %v5809, 1
        %v5812 = vor.u32 %v5807, %v5811
        %v5814 = vshrl.u32 %v5787, 16
        %v5816 = vshll.u32 %v5787, 16
        %v5818 = vrot.slane %v5816, 1
        %v5819 = vor.u32 %v5814, %v5818
        %v5821 = vshrl.u32 %v5788, 16
        %v5823 = vshll.u32 %v5788, 16
        %v5825 = vrot.slane %v5823, 1
        %v5826 = vor.u32 %v5821, %v5825
        %v5828 = vshrl.u32 %v5789, 16
        %v5830 = vshll.u32 %v5789, 16
        %v5832 = vrot.slane %v5830, 1
        %v5833 = vor.u32 %v5828, %v5832
        %v5835 = vshrl.u32 %v5790, 16
        %v5837 = vshll.u32 %v5790, 16
        %v5839 = vrot.slane %v5837, 1
        %v5840 = vor.u32 %v5835, %v5839
        %v5842 = vshrl.u32 %v5791, 16
        %v5844 = vshll.u32 %v5791, 16
        %v5846 = vrot.slane %v5844, 1
        %v5847 = vor.u32 %v5842, %v5846
        %5848 = vrot.lane.b32.xlu0 %v5798, 64
        %v5849 = vpop.permute.xlu0 %5848
        %5850 = vrot.lane.b32.xlu0 %v5805, 64
        %v5851 = vpop.permute.xlu0 %5850
        %5852 = vrot.lane.b32.xlu0 %v5812, 64
        %v5853 = vpop.permute.xlu0 %5852
        %5854 = vrot.lane.b32.xlu0 %v5819, 64
        %v5855 = vpop.permute.xlu0 %5854
        %5856 = vrot.lane.b32.xlu0 %v5826, 64
        %v5857 = vpop.permute.xlu0 %5856
        %5858 = vrot.lane.b32.xlu0 %v5833, 64
        %v5859 = vpop.permute.xlu0 %5858
        %5860 = vrot.lane.b32.xlu0 %v5840, 64
        %v5861 = vpop.permute.xlu0 %5860
        %5862 = vrot.lane.b32.xlu0 %v5847, 64
        %v5863 = vpop.permute.xlu0 %5862
        %v5872 = vunpack.c.l.b16 %v5144
        %v5873 = vunpack.c.l.b16 %v5145
        %v5874 = vunpack.c.l.b16 %v5146
        %v5875 = vunpack.c.l.b16 %v5147
        %v5876 = vunpack.c.l.b16 %v5148
        %v5877 = vunpack.c.l.b16 %v5149
        %v5878 = vunpack.c.l.b16 %v5150
        %v5879 = vunpack.c.l.b16 %v5151
        %v5880 = vpack.c.b16 %v5872, %v5872
        %v5881 = vpack.c.b16 %v5873, %v5873
        %v5882 = vpack.c.b16 %v5874, %v5874
        %v5883 = vpack.c.b16 %v5875, %v5875
        %v5884 = vpack.c.b16 %v5876, %v5876
        %v5885 = vpack.c.b16 %v5877, %v5877
        %v5886 = vpack.c.b16 %v5878, %v5878
        %v5887 = vpack.c.b16 %v5879, %v5879
        %5888 = vrot.lane.b32.xlu0 %v5880, 64
        %v5889 = vpop.permute.xlu0 %5888
        %5890 = vrot.lane.b32.xlu0 %v5881, 64
        %v5891 = vpop.permute.xlu0 %5890
        %5892 = vrot.lane.b32.xlu0 %v5882, 64
        %v5893 = vpop.permute.xlu0 %5892
        %5894 = vrot.lane.b32.xlu0 %v5883, 64
        %v5895 = vpop.permute.xlu0 %5894
        %5896 = vrot.lane.b32.xlu0 %v5884, 64
        %v5897 = vpop.permute.xlu0 %5896
        %5898 = vrot.lane.b32.xlu0 %v5885, 64
        %v5899 = vpop.permute.xlu0 %5898
        %5900 = vrot.lane.b32.xlu0 %v5886, 64
        %v5901 = vpop.permute.xlu0 %5900
        %5902 = vrot.lane.b32.xlu0 %v5887, 64
        %v5903 = vpop.permute.xlu0 %5902
        %v5920 = vunpack.c.l.b16 %v5135
        %v5921 = vunpack.c.l.b16 %v5152
        %v5922 = vunpack.c.l.b16 %v5136
        %v5923 = vunpack.c.l.b16 %v5153
        %v5924 = vunpack.c.l.b16 %v5137
        %v5925 = vunpack.c.l.b16 %v5154
        %v5926 = vunpack.c.l.b16 %v5138
        %v5927 = vunpack.c.l.b16 %v5155
        %v5928 = vunpack.c.l.b16 %v5139
        %v5929 = vunpack.c.l.b16 %v5156
        %v5930 = vunpack.c.l.b16 %v5140
        %v5931 = vunpack.c.l.b16 %v5157
        %v5932 = vunpack.c.l.b16 %v5141
        %v5933 = vunpack.c.l.b16 %v5158
        %v5934 = vunpack.c.l.b16 %v5142
        %v5935 = vunpack.c.l.b16 %v5159
        %v5936 = vpack.c.b16 %v5921, %v5920
        %v5937 = vpack.c.b16 %v5923, %v5922
        %v5938 = vpack.c.b16 %v5925, %v5924
        %v5939 = vpack.c.b16 %v5927, %v5926
        %v5940 = vpack.c.b16 %v5929, %v5928
        %v5941 = vpack.c.b16 %v5931, %v5930
        %v5942 = vpack.c.b16 %v5933, %v5932
        %v5943 = vpack.c.b16 %v5935, %v5934
        %v5945 = vshrl.u32 %v5936, 16
        %v5947 = vshll.u32 %v5936, 16
        %v5949 = vrot.slane %v5947, 1
        %v5950 = vor.u32 %v5945, %v5949
        %v5952 = vshrl.u32 %v5937, 16
        %v5954 = vshll.u32 %v5937, 16
        %v5956 = vrot.slane %v5954, 1
        %v5957 = vor.u32 %v5952, %v5956
        %v5959 = vshrl.u32 %v5938, 16
        %v5961 = vshll.u32 %v5938, 16
        %v5963 = vrot.slane %v5961, 1
        %v5964 = vor.u32 %v5959, %v5963
        %v5966 = vshrl.u32 %v5939, 16
        %v5968 = vshll.u32 %v5939, 16
        %v5970 = vrot.slane %v5968, 1
        %v5971 = vor.u32 %v5966, %v5970
        %v5973 = vshrl.u32 %v5940, 16
        %v5975 = vshll.u32 %v5940, 16
        %v5977 = vrot.slane %v5975, 1
        %v5978 = vor.u32 %v5973, %v5977
        %v5980 = vshrl.u32 %v5941, 16
        %v5982 = vshll.u32 %v5941, 16
        %v5984 = vrot.slane %v5982, 1
        %v5985 = vor.u32 %v5980, %v5984
        %v5987 = vshrl.u32 %v5942, 16
        %v5989 = vshll.u32 %v5942, 16
        %v5991 = vrot.slane %v5989, 1
        %v5992 = vor.u32 %v5987, %v5991
        %v5994 = vshrl.u32 %v5943, 16
        %v5996 = vshll.u32 %v5943, 16
        %v5998 = vrot.slane %v5996, 1
        %v5999 = vor.u32 %v5994, %v5998
        %v6008 = vunpack.c.l.b16 %v5160
        %v6009 = vunpack.c.l.b16 %v5161
        %v6010 = vunpack.c.l.b16 %v5162
        %v6011 = vunpack.c.l.b16 %v5163
        %v6012 = vunpack.c.l.b16 %v5164
        %v6013 = vunpack.c.l.b16 %v5165
        %v6014 = vunpack.c.l.b16 %v5166
        %v6015 = vunpack.c.l.b16 %v5167
        %v6016 = vpack.c.b16 %v6008, %v5872
        %v6017 = vpack.c.b16 %v6009, %v5873
        %v6018 = vpack.c.b16 %v6010, %v5874
        %v6019 = vpack.c.b16 %v6011, %v5875
        %v6020 = vpack.c.b16 %v6012, %v5876
        %v6021 = vpack.c.b16 %v6013, %v5877
        %v6022 = vpack.c.b16 %v6014, %v5878
        %v6023 = vpack.c.b16 %v6015, %v5879
        %v6025 = vshrl.u32 %v6016, 16
        %v6027 = vshll.u32 %v6016, 16
        %v6029 = vrot.slane %v6027, 1
        %v6030 = vor.u32 %v6025, %v6029
        %v6032 = vshrl.u32 %v6017, 16
        %v6034 = vshll.u32 %v6017, 16
        %v6036 = vrot.slane %v6034, 1
        %v6037 = vor.u32 %v6032, %v6036
        %v6039 = vshrl.u32 %v6018, 16
        %v6041 = vshll.u32 %v6018, 16
        %v6043 = vrot.slane %v6041, 1
        %v6044 = vor.u32 %v6039, %v6043
        %v6046 = vshrl.u32 %v6019, 16
        %v6048 = vshll.u32 %v6019, 16
        %v6050 = vrot.slane %v6048, 1
        %v6051 = vor.u32 %v6046, %v6050
        %v6053 = vshrl.u32 %v6020, 16
        %v6055 = vshll.u32 %v6020, 16
        %v6057 = vrot.slane %v6055, 1
        %v6058 = vor.u32 %v6053, %v6057
        %v6060 = vshrl.u32 %v6021, 16
        %v6062 = vshll.u32 %v6021, 16
        %v6064 = vrot.slane %v6062, 1
        %v6065 = vor.u32 %v6060, %v6064
        %v6067 = vshrl.u32 %v6022, 16
        %v6069 = vshll.u32 %v6022, 16
        %v6071 = vrot.slane %v6069, 1
        %v6072 = vor.u32 %v6067, %v6071
        %v6074 = vshrl.u32 %v6023, 16
        %v6076 = vshll.u32 %v6023, 16
        %v6078 = vrot.slane %v6076, 1
        %v6079 = vor.u32 %v6074, %v6078
        %6080 = vrot.lane.b32.xlu0 %v6030, 64
        %v6081 = vpop.permute.xlu0 %6080
        %6082 = vrot.lane.b32.xlu0 %v6037, 64
        %v6083 = vpop.permute.xlu0 %6082
        %6084 = vrot.lane.b32.xlu0 %v6044, 64
        %v6085 = vpop.permute.xlu0 %6084
        %6086 = vrot.lane.b32.xlu0 %v6051, 64
        %v6087 = vpop.permute.xlu0 %6086
        %6088 = vrot.lane.b32.xlu0 %v6058, 64
        %v6089 = vpop.permute.xlu0 %6088
        %6090 = vrot.lane.b32.xlu0 %v6065, 64
        %v6091 = vpop.permute.xlu0 %6090
        %6092 = vrot.lane.b32.xlu0 %v6072, 64
        %v6093 = vpop.permute.xlu0 %6092
        %6094 = vrot.lane.b32.xlu0 %v6079, 64
        %v6095 = vpop.permute.xlu0 %6094
        %v6098 = vsel %vm4256, %v5037, %v5193
        %v6101 = vsel %vm4256, %v5038, %v5195
        %v6104 = vsel %vm4256, %v5039, %v5197
        %v6107 = vsel %vm4256, %v5040, %v5199
        %v6110 = vsel %vm4256, %v5041, %v5201
        %v6113 = vsel %vm4256, %v5042, %v5203
        %v6116 = vsel %vm4256, %v5043, %v5205
        %v6119 = vsel %vm4256, %v5044, %v5207
        %v6122 = vsel %vm4256, %v5254, %v5385
        %v6125 = vsel %vm4256, %v5261, %v5387
        %v6128 = vsel %vm4256, %v5268, %v5389
        %v6131 = vsel %vm4256, %v5275, %v5391
        %v6134 = vsel %vm4256, %v5282, %v5393
        %v6137 = vsel %vm4256, %v5289, %v5395
        %v6140 = vsel %vm4256, %v5296, %v5397
        %v6143 = vsel %vm4256, %v5303, %v5399
        %v6146 = vsel %vm4256, %v5070, %v5425
        %v6149 = vsel %vm4256, %v5071, %v5427
        %v6152 = vsel %vm4256, %v5072, %v5429
        %v6155 = vsel %vm4256, %v5073, %v5431
        %v6158 = vsel %vm4256, %v5074, %v5433
        %v6161 = vsel %vm4256, %v5075, %v5435
        %v6164 = vsel %vm4256, %v5076, %v5437
        %v6167 = vsel %vm4256, %v5077, %v5439
        %v6170 = vsel %vm4256, %v5486, %v5617
        %v6173 = vsel %vm4256, %v5493, %v5619
        %v6176 = vsel %vm4256, %v5500, %v5621
        %v6179 = vsel %vm4256, %v5507, %v5623
        %v6182 = vsel %vm4256, %v5514, %v5625
        %v6185 = vsel %vm4256, %v5521, %v5627
        %v6188 = vsel %vm4256, %v5528, %v5629
        %v6191 = vsel %vm4256, %v5535, %v5631
        %v6194 = vsel %vm4256, %v5102, %v5657
        %v6197 = vsel %vm4256, %v5103, %v5659
        %v6200 = vsel %vm4256, %v5104, %v5661
        %v6203 = vsel %vm4256, %v5105, %v5663
        %v6206 = vsel %vm4256, %v5106, %v5665
        %v6209 = vsel %vm4256, %v5107, %v5667
        %v6212 = vsel %vm4256, %v5108, %v5669
        %v6215 = vsel %vm4256, %v5109, %v5671
        %v6218 = vsel %vm4256, %v5718, %v5849
        %v6221 = vsel %vm4256, %v5725, %v5851
        %v6224 = vsel %vm4256, %v5732, %v5853
        %v6227 = vsel %vm4256, %v5739, %v5855
        %v6230 = vsel %vm4256, %v5746, %v5857
        %v6233 = vsel %vm4256, %v5753, %v5859
        %v6236 = vsel %vm4256, %v5760, %v5861
        %v6239 = vsel %vm4256, %v5767, %v5863
        %v6242 = vsel %vm4256, %v5135, %v5889
        %v6245 = vsel %vm4256, %v5136, %v5891
        %v6248 = vsel %vm4256, %v5137, %v5893
        %v6251 = vsel %vm4256, %v5138, %v5895
        %v6254 = vsel %vm4256, %v5139, %v5897
        %v6257 = vsel %vm4256, %v5140, %v5899
        %v6260 = vsel %vm4256, %v5141, %v5901
        %v6263 = vsel %vm4256, %v5142, %v5903
        %v6266 = vsel %vm4256, %v5950, %v6081
        %v6269 = vsel %vm4256, %v5957, %v6083
        %v6272 = vsel %vm4256, %v5964, %v6085
        %v6275 = vsel %vm4256, %v5971, %v6087
        %v6278 = vsel %vm4256, %v5978, %v6089
        %v6281 = vsel %vm4256, %v5985, %v6091
        %v6284 = vsel %vm4256, %v5992, %v6093
        %v6287 = vsel %vm4256, %v5999, %v6095
        %v6352 = vunpack.c.l.b16 %v6098
        %v6353 = vunpack.c.l.b16 %v6122
        %v6354 = vunpack.c.l.b16 %v6146
        %v6355 = vunpack.c.l.b16 %v6170
        %v6356 = vunpack.c.l.b16 %v6194
        %v6357 = vunpack.c.l.b16 %v6218
        %v6358 = vunpack.c.l.b16 %v6242
        %v6359 = vunpack.c.l.b16 %v6266
        %v6360 = vunpack.c.l.b16 %v6101
        %v6361 = vunpack.c.l.b16 %v6125
        %v6362 = vunpack.c.l.b16 %v6149
        %v6363 = vunpack.c.l.b16 %v6173
        %v6364 = vunpack.c.l.b16 %v6197
        %v6365 = vunpack.c.l.b16 %v6221
        %v6366 = vunpack.c.l.b16 %v6245
        %v6367 = vunpack.c.l.b16 %v6269
        %v6368 = vunpack.c.l.b16 %v6104
        %v6369 = vunpack.c.l.b16 %v6128
        %v6370 = vunpack.c.l.b16 %v6152
        %v6371 = vunpack.c.l.b16 %v6176
        %v6372 = vunpack.c.l.b16 %v6200
        %v6373 = vunpack.c.l.b16 %v6224
        %v6374 = vunpack.c.l.b16 %v6248
        %v6375 = vunpack.c.l.b16 %v6272
        %v6376 = vunpack.c.l.b16 %v6107
        %v6377 = vunpack.c.l.b16 %v6131
        %v6378 = vunpack.c.l.b16 %v6155
        %v6379 = vunpack.c.l.b16 %v6179
        %v6380 = vunpack.c.l.b16 %v6203
        %v6381 = vunpack.c.l.b16 %v6227
        %v6382 = vunpack.c.l.b16 %v6251
        %v6383 = vunpack.c.l.b16 %v6275
        %v6384 = vunpack.c.l.b16 %v6110
        %v6385 = vunpack.c.l.b16 %v6134
        %v6386 = vunpack.c.l.b16 %v6158
        %v6387 = vunpack.c.l.b16 %v6182
        %v6388 = vunpack.c.l.b16 %v6206
        %v6389 = vunpack.c.l.b16 %v6230
        %v6390 = vunpack.c.l.b16 %v6254
        %v6391 = vunpack.c.l.b16 %v6278
        %v6392 = vunpack.c.l.b16 %v6113
        %v6393 = vunpack.c.l.b16 %v6137
        %v6394 = vunpack.c.l.b16 %v6161
        %v6395 = vunpack.c.l.b16 %v6185
        %v6396 = vunpack.c.l.b16 %v6209
        %v6397 = vunpack.c.l.b16 %v6233
        %v6398 = vunpack.c.l.b16 %v6257
        %v6399 = vunpack.c.l.b16 %v6281
        %v6400 = vunpack.c.l.b16 %v6116
        %v6401 = vunpack.c.l.b16 %v6140
        %v6402 = vunpack.c.l.b16 %v6164
        %v6403 = vunpack.c.l.b16 %v6188
        %v6404 = vunpack.c.l.b16 %v6212
        %v6405 = vunpack.c.l.b16 %v6236
        %v6406 = vunpack.c.l.b16 %v6260
        %v6407 = vunpack.c.l.b16 %v6284
        %v6408 = vunpack.c.l.b16 %v6119
        %v6409 = vunpack.c.l.b16 %v6143
        %v6410 = vunpack.c.l.b16 %v6167
        %v6411 = vunpack.c.l.b16 %v6191
        %v6412 = vunpack.c.l.b16 %v6215
        %v6413 = vunpack.c.l.b16 %v6239
        %v6414 = vunpack.c.l.b16 %v6263
        %v6415 = vunpack.c.l.b16 %v6287
        %v6416 = vld [vmem:[%s3] sm:$0xf]
        %v6417 = vld [vmem:[%s3 + $0x4] sm:$0xf]
        %v6418 = vld [vmem:[%s3 + $0x8] sm:$0xf]
        %v6419 = vld [vmem:[%s3 + $0xc] sm:$0xf]
        %v6420 = vld [vmem:[%s3 + $0x10] sm:$0xf]
        %v6421 = vld [vmem:[%s3 + $0x14] sm:$0xf]
        %v6422 = vld [vmem:[%s3 + $0x18] sm:$0xf]
        %v6423 = vld [vmem:[%s3 + $0x1c] sm:$0xf]
        %v6424 = vld [vmem:[%s3 + $0x20] sm:$0xf]
        %v6425 = vld [vmem:[%s3 + $0x24] sm:$0xf]
        %v6426 = vld [vmem:[%s3 + $0x28] sm:$0xf]
        %v6427 = vld [vmem:[%s3 + $0x2c] sm:$0xf]
        %v6428 = vld [vmem:[%s3 + $0x30] sm:$0xf]
        %v6429 = vld [vmem:[%s3 + $0x34] sm:$0xf]
        %v6430 = vld [vmem:[%s3 + $0x38] sm:$0xf]
        %v6431 = vld [vmem:[%s3 + $0x3c] sm:$0xf]
        %v6432 = vld [vmem:[%s3 + $0x40] sm:$0xf]
        %v6433 = vld [vmem:[%s3 + $0x44] sm:$0xf]
        %v6434 = vld [vmem:[%s3 + $0x48] sm:$0xf]
        %v6435 = vld [vmem:[%s3 + $0x4c] sm:$0xf]
        %v6436 = vld [vmem:[%s3 + $0x50] sm:$0xf]
        %v6437 = vld [vmem:[%s3 + $0x54] sm:$0xf]
        %v6438 = vld [vmem:[%s3 + $0x58] sm:$0xf]
        %v6439 = vld [vmem:[%s3 + $0x5c] sm:$0xf]
        %v6440 = vld [vmem:[%s3 + $0x60] sm:$0xf]
        %v6441 = vld [vmem:[%s3 + $0x64] sm:$0xf]
        %v6442 = vld [vmem:[%s3 + $0x68] sm:$0xf]
        %v6443 = vld [vmem:[%s3 + $0x6c] sm:$0xf]
        %v6444 = vld [vmem:[%s3 + $0x70] sm:$0xf]
        %v6445 = vld [vmem:[%s3 + $0x74] sm:$0xf]
        %v6446 = vld [vmem:[%s3 + $0x78] sm:$0xf]
        %v6447 = vld [vmem:[%s3 + $0x7c] sm:$0xf]
        %v6448 = vld [vmem:[%s3 + $0x80] sm:$0xf]
        %v6449 = vld [vmem:[%s3 + $0x84] sm:$0xf]
        %v6450 = vld [vmem:[%s3 + $0x88] sm:$0xf]
        %v6451 = vld [vmem:[%s3 + $0x8c] sm:$0xf]
        %v6452 = vld [vmem:[%s3 + $0x90] sm:$0xf]
        %v6453 = vld [vmem:[%s3 + $0x94] sm:$0xf]
        %v6454 = vld [vmem:[%s3 + $0x98] sm:$0xf]
        %v6455 = vld [vmem:[%s3 + $0x9c] sm:$0xf]
        %v6456 = vld [vmem:[%s3 + $0xa0] sm:$0xf]
        %v6457 = vld [vmem:[%s3 + $0xa4] sm:$0xf]
        %v6458 = vld [vmem:[%s3 + $0xa8] sm:$0xf]
        %v6459 = vld [vmem:[%s3 + $0xac] sm:$0xf]
        %v6460 = vld [vmem:[%s3 + $0xb0] sm:$0xf]
        %v6461 = vld [vmem:[%s3 + $0xb4] sm:$0xf]
        %v6462 = vld [vmem:[%s3 + $0xb8] sm:$0xf]
        %v6463 = vld [vmem:[%s3 + $0xbc] sm:$0xf]
        %v6464 = vld [vmem:[%s3 + $0xc0] sm:$0xf]
        %v6465 = vld [vmem:[%s3 + $0xc4] sm:$0xf]
        %v6466 = vld [vmem:[%s3 + $0xc8] sm:$0xf]
        %v6467 = vld [vmem:[%s3 + $0xcc] sm:$0xf]
        %v6468 = vld [vmem:[%s3 + $0xd0] sm:$0xf]
        %v6469 = vld [vmem:[%s3 + $0xd4] sm:$0xf]
        %v6470 = vld [vmem:[%s3 + $0xd8] sm:$0xf]
        %v6471 = vld [vmem:[%s3 + $0xdc] sm:$0xf]
        %v6472 = vld [vmem:[%s3 + $0xe0] sm:$0xf]
        %v6473 = vld [vmem:[%s3 + $0xe4] sm:$0xf]
        %v6474 = vld [vmem:[%s3 + $0xe8] sm:$0xf]
        %v6475 = vld [vmem:[%s3 + $0xec] sm:$0xf]
        %v6476 = vld [vmem:[%s3 + $0xf0] sm:$0xf]
        %v6477 = vld [vmem:[%s3 + $0xf4] sm:$0xf]
        %v6478 = vld [vmem:[%s3 + $0xf8] sm:$0xf]
        %v6479 = vld [vmem:[%s3 + $0xfc] sm:$0xf]
        %v6480 = vld [vmem:[%s3 + $0x100] sm:$0xf]
        %v6481 = vld [vmem:[%s3 + $0x104] sm:$0xf]
        %v6482 = vld [vmem:[%s3 + $0x108] sm:$0xf]
        %v6483 = vld [vmem:[%s3 + $0x10c] sm:$0xf]
        %v6484 = vld [vmem:[%s3 + $0x110] sm:$0xf]
        %v6485 = vld [vmem:[%s3 + $0x114] sm:$0xf]
        %v6486 = vld [vmem:[%s3 + $0x118] sm:$0xf]
        %v6487 = vld [vmem:[%s3 + $0x11c] sm:$0xf]
        %v6488 = vld [vmem:[%s3 + $0x120] sm:$0xf]
        %v6489 = vld [vmem:[%s3 + $0x124] sm:$0xf]
        %v6490 = vld [vmem:[%s3 + $0x128] sm:$0xf]
        %v6491 = vld [vmem:[%s3 + $0x12c] sm:$0xf]
        %v6492 = vld [vmem:[%s3 + $0x130] sm:$0xf]
        %v6493 = vld [vmem:[%s3 + $0x134] sm:$0xf]
        %v6494 = vld [vmem:[%s3 + $0x138] sm:$0xf]
        %v6495 = vld [vmem:[%s3 + $0x13c] sm:$0xf]
        %v6496 = vld [vmem:[%s3 + $0x140] sm:$0xf]
        %v6497 = vld [vmem:[%s3 + $0x144] sm:$0xf]
        %v6498 = vld [vmem:[%s3 + $0x148] sm:$0xf]
        %v6499 = vld [vmem:[%s3 + $0x14c] sm:$0xf]
        %v6500 = vld [vmem:[%s3 + $0x150] sm:$0xf]
        %v6501 = vld [vmem:[%s3 + $0x154] sm:$0xf]
        %v6502 = vld [vmem:[%s3 + $0x158] sm:$0xf]
        %v6503 = vld [vmem:[%s3 + $0x15c] sm:$0xf]
        %v6504 = vld [vmem:[%s3 + $0x160] sm:$0xf]
        %v6505 = vld [vmem:[%s3 + $0x164] sm:$0xf]
        %v6506 = vld [vmem:[%s3 + $0x168] sm:$0xf]
        %v6507 = vld [vmem:[%s3 + $0x16c] sm:$0xf]
        %v6508 = vld [vmem:[%s3 + $0x170] sm:$0xf]
        %v6509 = vld [vmem:[%s3 + $0x174] sm:$0xf]
        %v6510 = vld [vmem:[%s3 + $0x178] sm:$0xf]
        %v6511 = vld [vmem:[%s3 + $0x17c] sm:$0xf]
        %v6512 = vld [vmem:[%s3 + $0x180] sm:$0xf]
        %v6513 = vld [vmem:[%s3 + $0x184] sm:$0xf]
        %v6514 = vld [vmem:[%s3 + $0x188] sm:$0xf]
        %v6515 = vld [vmem:[%s3 + $0x18c] sm:$0xf]
        %v6516 = vld [vmem:[%s3 + $0x190] sm:$0xf]
        %v6517 = vld [vmem:[%s3 + $0x194] sm:$0xf]
        %v6518 = vld [vmem:[%s3 + $0x198] sm:$0xf]
        %v6519 = vld [vmem:[%s3 + $0x19c] sm:$0xf]
        %v6520 = vld [vmem:[%s3 + $0x1a0] sm:$0xf]
        %v6521 = vld [vmem:[%s3 + $0x1a4] sm:$0xf]
        %v6522 = vld [vmem:[%s3 + $0x1a8] sm:$0xf]
        %v6523 = vld [vmem:[%s3 + $0x1ac] sm:$0xf]
        %v6524 = vld [vmem:[%s3 + $0x1b0] sm:$0xf]
        %v6525 = vld [vmem:[%s3 + $0x1b4] sm:$0xf]
        %v6526 = vld [vmem:[%s3 + $0x1b8] sm:$0xf]
        %v6527 = vld [vmem:[%s3 + $0x1bc] sm:$0xf]
        %v6528 = vld [vmem:[%s3 + $0x1c0] sm:$0xf]
        %v6529 = vld [vmem:[%s3 + $0x1c4] sm:$0xf]
        %v6530 = vld [vmem:[%s3 + $0x1c8] sm:$0xf]
        %v6531 = vld [vmem:[%s3 + $0x1cc] sm:$0xf]
        %v6532 = vld [vmem:[%s3 + $0x1d0] sm:$0xf]
        %v6533 = vld [vmem:[%s3 + $0x1d4] sm:$0xf]
        %v6534 = vld [vmem:[%s3 + $0x1d8] sm:$0xf]
        %v6535 = vld [vmem:[%s3 + $0x1dc] sm:$0xf]
        %v6536 = vld [vmem:[%s3 + $0x1e0] sm:$0xf]
        %v6537 = vld [vmem:[%s3 + $0x1e4] sm:$0xf]
        %v6538 = vld [vmem:[%s3 + $0x1e8] sm:$0xf]
        %v6539 = vld [vmem:[%s3 + $0x1ec] sm:$0xf]
        %v6540 = vld [vmem:[%s3 + $0x1f0] sm:$0xf]
        %v6541 = vld [vmem:[%s3 + $0x1f4] sm:$0xf]
        %v6542 = vld [vmem:[%s3 + $0x1f8] sm:$0xf]
        %v6543 = vld [vmem:[%s3 + $0x1fc] sm:$0xf]
        %v6544 = vld [vmem:[%s4] sm:$0x1]
        %v6546 = vlaneseq
        %v6547 = vshrl.u32 %v6546, 7
        %v6548 = vsub.s32 0, %v6547
        %v6549 = vrot.slane %v6544, %v6548
        %v6551 = vpack.c.b16 %v6360, %v6352
        %v6552 = vpack.c.b16 %v6361, %v6353
        %v6553 = vpack.c.b16 %v6362, %v6354
        %v6554 = vpack.c.b16 %v6363, %v6355
        %v6555 = vpack.c.b16 %v6364, %v6356
        %v6556 = vpack.c.b16 %v6365, %v6357
        %v6557 = vpack.c.b16 %v6366, %v6358
        %v6558 = vpack.c.b16 %v6367, %v6359
        %v6559 = vpack.c.b16 %v6376, %v6368
        %v6560 = vpack.c.b16 %v6377, %v6369
        %v6561 = vpack.c.b16 %v6378, %v6370
        %v6562 = vpack.c.b16 %v6379, %v6371
        %v6563 = vpack.c.b16 %v6380, %v6372
        %v6564 = vpack.c.b16 %v6381, %v6373
        %v6565 = vpack.c.b16 %v6382, %v6374
        %v6566 = vpack.c.b16 %v6383, %v6375
        %v6567 = vpack.c.b16 %v6392, %v6384
        %v6568 = vpack.c.b16 %v6393, %v6385
        %v6569 = vpack.c.b16 %v6394, %v6386
        %v6570 = vpack.c.b16 %v6395, %v6387
        %v6571 = vpack.c.b16 %v6396, %v6388
        %v6572 = vpack.c.b16 %v6397, %v6389
        %v6573 = vpack.c.b16 %v6398, %v6390
        %v6574 = vpack.c.b16 %v6399, %v6391
        %v6575 = vpack.c.b16 %v6408, %v6400
        %v6576 = vpack.c.b16 %v6409, %v6401
        %v6577 = vpack.c.b16 %v6410, %v6402
        %v6578 = vpack.c.b16 %v6411, %v6403
        %v6579 = vpack.c.b16 %v6412, %v6404
        %v6580 = vpack.c.b16 %v6413, %v6405
        %v6581 = vpack.c.b16 %v6414, %v6406
        %v6582 = vpack.c.b16 %v6415, %v6407
        %v6743 = vunpack.c.l.b16 %v6416
        %v6744 = vunpack.c.l.b16 %v6417
        %v6745 = vunpack.c.l.b16 %v6418
        %v6746 = vunpack.c.l.b16 %v6419
        %v6747 = vunpack.c.l.b16 %v6420
        %v6748 = vunpack.c.l.b16 %v6421
        %v6749 = vunpack.c.l.b16 %v6422
        %v6750 = vunpack.c.l.b16 %v6423
        %v6751 = vunpack.c.l.b16 %v6424
        %v6752 = vunpack.c.l.b16 %v6425
        %v6753 = vunpack.c.l.b16 %v6426
        %v6754 = vunpack.c.l.b16 %v6427
        %v6755 = vunpack.c.l.b16 %v6428
        %v6756 = vunpack.c.l.b16 %v6429
        %v6757 = vunpack.c.l.b16 %v6430
        %v6758 = vunpack.c.l.b16 %v6431
        %v6759 = vunpack.c.l.b16 %v6432
        %v6760 = vunpack.c.l.b16 %v6433
        %v6761 = vunpack.c.l.b16 %v6434
        %v6762 = vunpack.c.l.b16 %v6435
        %v6763 = vunpack.c.l.b16 %v6436
        %v6764 = vunpack.c.l.b16 %v6437
        %v6765 = vunpack.c.l.b16 %v6438
        %v6766 = vunpack.c.l.b16 %v6439
        %v6767 = vunpack.c.l.b16 %v6440
        %v6768 = vunpack.c.l.b16 %v6441
        %v6769 = vunpack.c.l.b16 %v6442
        %v6770 = vunpack.c.l.b16 %v6443
        %v6771 = vunpack.c.l.b16 %v6444
        %v6772 = vunpack.c.l.b16 %v6445
        %v6773 = vunpack.c.l.b16 %v6446
        %v6774 = vunpack.c.l.b16 %v6447
        %v6775 = vunpack.c.l.b16 %v6448
        %v6776 = vunpack.c.l.b16 %v6449
        %v6777 = vunpack.c.l.b16 %v6450
        %v6778 = vunpack.c.l.b16 %v6451
        %v6779 = vunpack.c.l.b16 %v6452
        %v6780 = vunpack.c.l.b16 %v6453
        %v6781 = vunpack.c.l.b16 %v6454
        %v6782 = vunpack.c.l.b16 %v6455
        %v6783 = vunpack.c.l.b16 %v6456
        %v6784 = vunpack.c.l.b16 %v6457
        %v6785 = vunpack.c.l.b16 %v6458
        %v6786 = vunpack.c.l.b16 %v6459
        %v6787 = vunpack.c.l.b16 %v6460
        %v6788 = vunpack.c.l.b16 %v6461
        %v6789 = vunpack.c.l.b16 %v6462
        %v6790 = vunpack.c.l.b16 %v6463
        %v6791 = vunpack.c.l.b16 %v6464
        %v6792 = vunpack.c.l.b16 %v6465
        %v6793 = vunpack.c.l.b16 %v6466
        %v6794 = vunpack.c.l.b16 %v6467
        %v6795 = vunpack.c.l.b16 %v6468
        %v6796 = vunpack.c.l.b16 %v6469
        %v6797 = vunpack.c.l.b16 %v6470
        %v6798 = vunpack.c.l.b16 %v6471
        %v6799 = vunpack.c.l.b16 %v6472
        %v6800 = vunpack.c.l.b16 %v6473
        %v6801 = vunpack.c.l.b16 %v6474
        %v6802 = vunpack.c.l.b16 %v6475
        %v6803 = vunpack.c.l.b16 %v6476
        %v6804 = vunpack.c.l.b16 %v6477
        %v6805 = vunpack.c.l.b16 %v6478
        %v6806 = vunpack.c.l.b16 %v6479
        %v6807 = vunpack.c.l.b16 %v6480
        %v6808 = vunpack.c.l.b16 %v6481
        %v6809 = vunpack.c.l.b16 %v6482
        %v6810 = vunpack.c.l.b16 %v6483
        %v6811 = vunpack.c.l.b16 %v6484
        %v6812 = vunpack.c.l.b16 %v6485
        %v6813 = vunpack.c.l.b16 %v6486
        %v6814 = vunpack.c.l.b16 %v6487
        %v6815 = vunpack.c.l.b16 %v6488
        %v6816 = vunpack.c.l.b16 %v6489
        %v6817 = vunpack.c.l.b16 %v6490
        %v6818 = vunpack.c.l.b16 %v6491
        %v6819 = vunpack.c.l.b16 %v6492
        %v6820 = vunpack.c.l.b16 %v6493
        %v6821 = vunpack.c.l.b16 %v6494
        %v6822 = vunpack.c.l.b16 %v6495
        %v6823 = vunpack.c.l.b16 %v6496
        %v6824 = vunpack.c.l.b16 %v6497
        %v6825 = vunpack.c.l.b16 %v6498
        %v6826 = vunpack.c.l.b16 %v6499
        %v6827 = vunpack.c.l.b16 %v6500
        %v6828 = vunpack.c.l.b16 %v6501
        %v6829 = vunpack.c.l.b16 %v6502
        %v6830 = vunpack.c.l.b16 %v6503
        %v6831 = vunpack.c.l.b16 %v6504
        %v6832 = vunpack.c.l.b16 %v6505
        %v6833 = vunpack.c.l.b16 %v6506
        %v6834 = vunpack.c.l.b16 %v6507
        %v6835 = vunpack.c.l.b16 %v6508
        %v6836 = vunpack.c.l.b16 %v6509
        %v6837 = vunpack.c.l.b16 %v6510
        %v6838 = vunpack.c.l.b16 %v6511
        %v6839 = vunpack.c.l.b16 %v6512
        %v6840 = vunpack.c.l.b16 %v6513
        %v6841 = vunpack.c.l.b16 %v6514
        %v6842 = vunpack.c.l.b16 %v6515
        %v6843 = vunpack.c.l.b16 %v6516
        %v6844 = vunpack.c.l.b16 %v6517
        %v6845 = vunpack.c.l.b16 %v6518
        %v6846 = vunpack.c.l.b16 %v6519
        %v6847 = vunpack.c.l.b16 %v6520
        %v6848 = vunpack.c.l.b16 %v6521
        %v6849 = vunpack.c.l.b16 %v6522
        %v6850 = vunpack.c.l.b16 %v6523
        %v6851 = vunpack.c.l.b16 %v6524
        %v6852 = vunpack.c.l.b16 %v6525
        %v6853 = vunpack.c.l.b16 %v6526
        %v6854 = vunpack.c.l.b16 %v6527
        %v6855 = vunpack.c.l.b16 %v6528
        %v6856 = vunpack.c.l.b16 %v6529
        %v6857 = vunpack.c.l.b16 %v6530
        %v6858 = vunpack.c.l.b16 %v6531
        %v6859 = vunpack.c.l.b16 %v6532
        %v6860 = vunpack.c.l.b16 %v6533
        %v6861 = vunpack.c.l.b16 %v6534
        %v6862 = vunpack.c.l.b16 %v6535
        %v6863 = vunpack.c.l.b16 %v6536
        %v6864 = vunpack.c.l.b16 %v6537
        %v6865 = vunpack.c.l.b16 %v6538
        %v6866 = vunpack.c.l.b16 %v6539
        %v6867 = vunpack.c.l.b16 %v6540
        %v6868 = vunpack.c.l.b16 %v6541
        %v6869 = vunpack.c.l.b16 %v6542
        %v6870 = vunpack.c.l.b16 %v6543
        %v6871 = vpack.c.b16 %v6744, %v6743
        %v6872 = vpack.c.b16 %v6746, %v6745
        %v6873 = vpack.c.b16 %v6748, %v6747
        %v6874 = vpack.c.b16 %v6750, %v6749
        %v6875 = vpack.c.b16 %v6752, %v6751
        %v6876 = vpack.c.b16 %v6754, %v6753
        %v6877 = vpack.c.b16 %v6756, %v6755
        %v6878 = vpack.c.b16 %v6758, %v6757
        %v6879 = vpack.c.b16 %v6760, %v6759
        %v6880 = vpack.c.b16 %v6762, %v6761
        %v6881 = vpack.c.b16 %v6764, %v6763
        %v6882 = vpack.c.b16 %v6766, %v6765
        %v6883 = vpack.c.b16 %v6768, %v6767
        %v6884 = vpack.c.b16 %v6770, %v6769
        %v6885 = vpack.c.b16 %v6772, %v6771
        %v6886 = vpack.c.b16 %v6774, %v6773
        %v6887 = vpack.c.b16 %v6776, %v6775
        %v6888 = vpack.c.b16 %v6778, %v6777
        %v6889 = vpack.c.b16 %v6780, %v6779
        %v6890 = vpack.c.b16 %v6782, %v6781
        %v6891 = vpack.c.b16 %v6784, %v6783
        %v6892 = vpack.c.b16 %v6786, %v6785
        %v6893 = vpack.c.b16 %v6788, %v6787
        %v6894 = vpack.c.b16 %v6790, %v6789
        %v6895 = vpack.c.b16 %v6792, %v6791
        %v6896 = vpack.c.b16 %v6794, %v6793
        %v6897 = vpack.c.b16 %v6796, %v6795
        %v6898 = vpack.c.b16 %v6798, %v6797
        %v6899 = vpack.c.b16 %v6800, %v6799
        %v6900 = vpack.c.b16 %v6802, %v6801
        %v6901 = vpack.c.b16 %v6804, %v6803
        %v6902 = vpack.c.b16 %v6806, %v6805
        %v6903 = vpack.c.b16 %v6808, %v6807
        %v6904 = vpack.c.b16 %v6810, %v6809
        %v6905 = vpack.c.b16 %v6812, %v6811
        %v6906 = vpack.c.b16 %v6814, %v6813
        %v6907 = vpack.c.b16 %v6816, %v6815
        %v6908 = vpack.c.b16 %v6818, %v6817
        %v6909 = vpack.c.b16 %v6820, %v6819
        %v6910 = vpack.c.b16 %v6822, %v6821
        %v6911 = vpack.c.b16 %v6824, %v6823
        %v6912 = vpack.c.b16 %v6826, %v6825
        %v6913 = vpack.c.b16 %v6828, %v6827
        %v6914 = vpack.c.b16 %v6830, %v6829
        %v6915 = vpack.c.b16 %v6832, %v6831
        %v6916 = vpack.c.b16 %v6834, %v6833
        %v6917 = vpack.c.b16 %v6836, %v6835
        %v6918 = vpack.c.b16 %v6838, %v6837
        %v6919 = vpack.c.b16 %v6840, %v6839
        %v6920 = vpack.c.b16 %v6842, %v6841
        %v6921 = vpack.c.b16 %v6844, %v6843
        %v6922 = vpack.c.b16 %v6846, %v6845
        %v6923 = vpack.c.b16 %v6848, %v6847
        %v6924 = vpack.c.b16 %v6850, %v6849
        %v6925 = vpack.c.b16 %v6852, %v6851
        %v6926 = vpack.c.b16 %v6854, %v6853
        %v6927 = vpack.c.b16 %v6856, %v6855
        %v6928 = vpack.c.b16 %v6858, %v6857
        %v6929 = vpack.c.b16 %v6860, %v6859
        %v6930 = vpack.c.b16 %v6862, %v6861
        %v6931 = vpack.c.b16 %v6864, %v6863
        %v6932 = vpack.c.b16 %v6866, %v6865
        %v6933 = vpack.c.b16 %v6868, %v6867
        %v6934 = vpack.c.b16 %v6870, %v6869
        %6999 = vmatprep.subr.bf16.mxu0 0
        %7000 = vmatpush1.bf16.msra.mxu0 %v6871
        %7001 = vmatprep.subr.bf16.mxu0 0
        %7002 = vmatpush1.bf16.msra.mxu0 %v6872
        %7003 = vmatprep.subr.bf16.mxu0 0
        %7004 = vmatpush1.bf16.msra.mxu0 %v6873
        %7005 = vmatprep.subr.bf16.mxu0 0
        %7006 = vmatpush1.bf16.msra.mxu0 %v6874
        %7007 = vmatprep.subr.bf16.mxu0 0
        %7008 = vmatpush1.bf16.msra.mxu0 %v6875
        %7009 = vmatprep.subr.bf16.mxu0 0
        %7010 = vmatpush1.bf16.msra.mxu0 %v6876
        %7011 = vmatprep.subr.bf16.mxu0 0
        %7012 = vmatpush1.bf16.msra.mxu0 %v6877
        %7013 = vmatprep.subr.bf16.mxu0 0
        %7014 = vmatpush1.bf16.msra.mxu0 %v6878
        %7015 = vmatprep.subr.bf16.mxu0 0
        %7016 = vmatpush1.bf16.msra.mxu0 %v6879
        %7017 = vmatprep.subr.bf16.mxu0 0
        %7018 = vmatpush1.bf16.msra.mxu0 %v6880
        %7019 = vmatprep.subr.bf16.mxu0 0
        %7020 = vmatpush1.bf16.msra.mxu0 %v6881
        %7021 = vmatprep.subr.bf16.mxu0 0
        %7022 = vmatpush1.bf16.msra.mxu0 %v6882
        %7023 = vmatprep.subr.bf16.mxu0 0
        %7024 = vmatpush1.bf16.msra.mxu0 %v6883
        %7025 = vmatprep.subr.bf16.mxu0 0
        %7026 = vmatpush1.bf16.msra.mxu0 %v6884
        %7027 = vmatprep.subr.bf16.mxu0 0
        %7028 = vmatpush1.bf16.msra.mxu0 %v6885
        %7029 = vmatprep.subr.bf16.mxu0 0
        %7030 = vmatpush1.bf16.msra.mxu0 %v6886
        %7031 = vmatprep.mubr.bf16.mxu0 %v6552
        %7032 = vmatmul.mubr.bf16.gmra.mrb[0].mxu0 %v6551
        %v7033 = vpop.f32.mrb[0].mxu0
        %v7034 = vadd.f32 %v6549, %v7033
        %v7035 = vpop.f32.mrb[0].mxu0
        %v7036 = vpop.f32.mrb[0].mxu0
        %v7037 = vadd.f32 %v6549, %v7036
        %v7038 = vpop.f32.mrb[0].mxu0
        %7039 = vmatprep.mubr.bf16.mxu0 %v6560
        %7040 = vmatmul.mubr.bf16.gmra.mrb[0].mxu0 %v6559
        %v7041 = vpop.f32.mrb[0].mxu0
        %v7042 = vadd.f32 %v6549, %v7041
        %v7043 = vpop.f32.mrb[0].mxu0
        %v7044 = vpop.f32.mrb[0].mxu0
        %v7045 = vadd.f32 %v6549, %v7044
        %v7046 = vpop.f32.mrb[0].mxu0
        %7047 = vmatprep.mubr.bf16.mxu0 %v6568
        %7048 = vmatmul.mubr.bf16.gmra.mrb[0].mxu0 %v6567
        %v7049 = vpop.f32.mrb[0].mxu0
        %v7050 = vadd.f32 %v6549, %v7049
        %v7051 = vpop.f32.mrb[0].mxu0
        %v7052 = vpop.f32.mrb[0].mxu0
        %v7053 = vadd.f32 %v6549, %v7052
        %v7054 = vpop.f32.mrb[0].mxu0
        %7055 = vmatprep.mubr.bf16.mxu0 %v6576
        %7056 = vmatmul.mubr.bf16.gmra.mrb[0].mxu0 %v6575
        %v7057 = vpop.f32.mrb[0].mxu0
        %v7058 = vadd.f32 %v6549, %v7057
        %v7059 = vpop.f32.mrb[0].mxu0
        %v7060 = vpop.f32.mrb[0].mxu0
        %v7061 = vadd.f32 %v6549, %v7060
        %v7062 = vpop.f32.mrb[0].mxu0
        %7063 = vdwg.mxu0
        %7064 = vmatprep.subr.bf16.mxu0 0
        %7065 = vmatpush1.bf16.msra.mxu0 %v6887
        %7066 = vmatprep.subr.bf16.mxu0 0
        %7067 = vmatpush1.bf16.msra.mxu0 %v6888
        %7068 = vmatprep.subr.bf16.mxu0 0
        %7069 = vmatpush1.bf16.msra.mxu0 %v6889
        %7070 = vmatprep.subr.bf16.mxu0 0
        %7071 = vmatpush1.bf16.msra.mxu0 %v6890
        %7072 = vmatprep.subr.bf16.mxu0 0
        %7073 = vmatpush1.bf16.msra.mxu0 %v6891
        %7074 = vmatprep.subr.bf16.mxu0 0
        %7075 = vmatpush1.bf16.msra.mxu0 %v6892
        %7076 = vmatprep.subr.bf16.mxu0 0
        %7077 = vmatpush1.bf16.msra.mxu0 %v6893
        %7078 = vmatprep.subr.bf16.mxu0 0
        %7079 = vmatpush1.bf16.msra.mxu0 %v6894
        %7080 = vmatprep.subr.bf16.mxu0 0
        %7081 = vmatpush1.bf16.msra.mxu0 %v6895
        %7082 = vmatprep.subr.bf16.mxu0 0
        %7083 = vmatpush1.bf16.msra.mxu0 %v6896
        %7084 = vmatprep.subr.bf16.mxu0 0
        %7085 = vmatpush1.bf16.msra.mxu0 %v6897
        %7086 = vmatprep.subr.bf16.mxu0 0
        %7087 = vmatpush1.bf16.msra.mxu0 %v6898
        %7088 = vmatprep.subr.bf16.mxu0 0
        %7089 = vmatpush1.bf16.msra.mxu0 %v6899
        %7090 = vmatprep.subr.bf16.mxu0 0
        %7091 = vmatpush1.bf16.msra.mxu0 %v6900
        %7092 = vmatprep.subr.bf16.mxu0 0
        %7093 = vmatpush1.bf16.msra.mxu0 %v6901
        %7094 = vmatprep.subr.bf16.mxu0 0
        %7095 = vmatpush1.bf16.msra.mxu0 %v6902
        %7096 = vmatprep.mubr.bf16.mxu0 %v6554
        %7097 = vmatmul.mubr.bf16.gmra.mrb[0].mxu0 %v6553
        %v7098 = vpop.f32.mrb[0].mxu0
        %v7099 = vadd.f32 %v7034, %v7098
        %v7100 = vpop.f32.mrb[0].mxu0
        %v7101 = vpop.f32.mrb[0].mxu0
        %v7102 = vadd.f32 %v7037, %v7101
        %v7103 = vpop.f32.mrb[0].mxu0
        %7104 = vmatprep.mubr.bf16.mxu0 %v6562
        %7105 = vmatmul.mubr.bf16.gmra.mrb[0].mxu0 %v6561
        %v7106 = vpop.f32.mrb[0].mxu0
        %v7107 = vadd.f32 %v7042, %v7106
        %v7108 = vpop.f32.mrb[0].mxu0
        %v7109 = vpop.f32.mrb[0].mxu0
        %v7110 = vadd.f32 %v7045, %v7109
        %v7111 = vpop.f32.mrb[0].mxu0
        %7112 = vmatprep.mubr.bf16.mxu0 %v6570
        %7113 = vmatmul.mubr.bf16.gmra.mrb[0].mxu0 %v6569
        %v7114 = vpop.f32.mrb[0].mxu0
        %v7115 = vadd.f32 %v7050, %v7114
        %v7116 = vpop.f32.mrb[0].mxu0
        %v7117 = vpop.f32.mrb[0].mxu0
        %v7118 = vadd.f32 %v7053, %v7117
        %v7119 = vpop.f32.mrb[0].mxu0
        %7120 = vmatprep.mubr.bf16.mxu0 %v6578
        %7121 = vmatmul.mubr.bf16.gmra.mrb[0].mxu0 %v6577
        %v7122 = vpop.f32.mrb[0].mxu0
        %v7123 = vadd.f32 %v7058, %v7122
        %v7124 = vpop.f32.mrb[0].mxu0
        %v7125 = vpop.f32.mrb[0].mxu0
        %v7126 = vadd.f32 %v7061, %v7125
        %v7127 = vpop.f32.mrb[0].mxu0
        %7128 = vdwg.mxu0
        %7129 = vmatprep.subr.bf16.mxu0 0
        %7130 = vmatpush1.bf16.msra.mxu0 %v6903
        %7131 = vmatprep.subr.bf16.mxu0 0
        %7132 = vmatpush1.bf16.msra.mxu0 %v6904
        %7133 = vmatprep.subr.bf16.mxu0 0
        %7134 = vmatpush1.bf16.msra.mxu0 %v6905
        %7135 = vmatprep.subr.bf16.mxu0 0
        %7136 = vmatpush1.bf16.msra.mxu0 %v6906
        %7137 = vmatprep.subr.bf16.mxu0 0
        %7138 = vmatpush1.bf16.msra.mxu0 %v6907
        %7139 = vmatprep.subr.bf16.mxu0 0
        %7140 = vmatpush1.bf16.msra.mxu0 %v6908
        %7141 = vmatprep.subr.bf16.mxu0 0
        %7142 = vmatpush1.bf16.msra.mxu0 %v6909
        %7143 = vmatprep.subr.bf16.mxu0 0
        %7144 = vmatpush1.bf16.msra.mxu0 %v6910
        %7145 = vmatprep.subr.bf16.mxu0 0
        %7146 = vmatpush1.bf16.msra.mxu0 %v6911
        %7147 = vmatprep.subr.bf16.mxu0 0
        %7148 = vmatpush1.bf16.msra.mxu0 %v6912
        %7149 = vmatprep.subr.bf16.mxu0 0
        %7150 = vmatpush1.bf16.msra.mxu0 %v6913
        %7151 = vmatprep.subr.bf16.mxu0 0
        %7152 = vmatpush1.bf16.msra.mxu0 %v6914
        %7153 = vmatprep.subr.bf16.mxu0 0
        %7154 = vmatpush1.bf16.msra.mxu0 %v6915
        %7155 = vmatprep.subr.bf16.mxu0 0
        %7156 = vmatpush1.bf16.msra.mxu0 %v6916
        %7157 = vmatprep.subr.bf16.mxu0 0
        %7158 = vmatpush1.bf16.msra.mxu0 %v6917
        %7159 = vmatprep.subr.bf16.mxu0 0
        %7160 = vmatpush1.bf16.msra.mxu0 %v6918
        %7161 = vmatprep.mubr.bf16.mxu0 %v6556
        %7162 = vmatmul.mubr.bf16.gmra.mrb[0].mxu0 %v6555
        %v7163 = vpop.f32.mrb[0].mxu0
        %v7164 = vadd.f32 %v7099, %v7163
        %v7165 = vpop.f32.mrb[0].mxu0
        %v7166 = vpop.f32.mrb[0].mxu0
        %v7167 = vadd.f32 %v7102, %v7166
        %v7168 = vpop.f32.mrb[0].mxu0
        %7169 = vmatprep.mubr.bf16.mxu0 %v6564
        %7170 = vmatmul.mubr.bf16.gmra.mrb[0].mxu0 %v6563
        %v7171 = vpop.f32.mrb[0].mxu0
        %v7172 = vadd.f32 %v7107, %v7171
        %v7173 = vpop.f32.mrb[0].mxu0
        %v7174 = vpop.f32.mrb[0].mxu0
        %v7175 = vadd.f32 %v7110, %v7174
        %v7176 = vpop.f32.mrb[0].mxu0
        %7177 = vmatprep.mubr.bf16.mxu0 %v6572
        %7178 = vmatmul.mubr.bf16.gmra.mrb[0].mxu0 %v6571
        %v7179 = vpop.f32.mrb[0].mxu0
        %v7180 = vadd.f32 %v7115, %v7179
        %v7181 = vpop.f32.mrb[0].mxu0
        %v7182 = vpop.f32.mrb[0].mxu0
        %v7183 = vadd.f32 %v7118, %v7182
        %v7184 = vpop.f32.mrb[0].mxu0
        %7185 = vmatprep.mubr.bf16.mxu0 %v6580
        %7186 = vmatmul.mubr.bf16.gmra.mrb[0].mxu0 %v6579
        %v7187 = vpop.f32.mrb[0].mxu0
        %v7188 = vadd.f32 %v7123, %v7187
        %v7189 = vpop.f32.mrb[0].mxu0
        %v7190 = vpop.f32.mrb[0].mxu0
        %v7191 = vadd.f32 %v7126, %v7190
        %v7192 = vpop.f32.mrb[0].mxu0
        %7193 = vdwg.mxu0
        %7194 = vmatprep.subr.bf16.mxu0 0
        %7195 = vmatpush1.bf16.msra.mxu0 %v6919
        %7196 = vmatprep.subr.bf16.mxu0 0
        %7197 = vmatpush1.bf16.msra.mxu0 %v6920
        %7198 = vmatprep.subr.bf16.mxu0 0
        %7199 = vmatpush1.bf16.msra.mxu0 %v6921
        %7200 = vmatprep.subr.bf16.mxu0 0
        %7201 = vmatpush1.bf16.msra.mxu0 %v6922
        %7202 = vmatprep.subr.bf16.mxu0 0
        %7203 = vmatpush1.bf16.msra.mxu0 %v6923
        %7204 = vmatprep.subr.bf16.mxu0 0
        %7205 = vmatpush1.bf16.msra.mxu0 %v6924
        %7206 = vmatprep.subr.bf16.mxu0 0
        %7207 = vmatpush1.bf16.msra.mxu0 %v6925
        %7208 = vmatprep.subr.bf16.mxu0 0
        %7209 = vmatpush1.bf16.msra.mxu0 %v6926
        %7210 = vmatprep.subr.bf16.mxu0 0
        %7211 = vmatpush1.bf16.msra.mxu0 %v6927
        %7212 = vmatprep.subr.bf16.mxu0 0
        %7213 = vmatpush1.bf16.msra.mxu0 %v6928
        %7214 = vmatprep.subr.bf16.mxu0 0
        %7215 = vmatpush1.bf16.msra.mxu0 %v6929
        %7216 = vmatprep.subr.bf16.mxu0 0
        %7217 = vmatpush1.bf16.msra.mxu0 %v6930
        %7218 = vmatprep.subr.bf16.mxu0 0
        %7219 = vmatpush1.bf16.msra.mxu0 %v6931
        %7220 = vmatprep.subr.bf16.mxu0 0
        %7221 = vmatpush1.bf16.msra.mxu0 %v6932
        %7222 = vmatprep.subr.bf16.mxu0 0
        %7223 = vmatpush1.bf16.msra.mxu0 %v6933
        %7224 = vmatprep.subr.bf16.mxu0 0
        %7225 = vmatpush1.bf16.msra.mxu0 %v6934
        %7226 = vmatprep.mubr.bf16.mxu0 %v6558
        %7227 = vmatmul.mubr.bf16.gmra.mrb[0].mxu0 %v6557
        %v7228 = vpop.f32.mrb[0].mxu0
        %v7229 = vadd.f32 %v7164, %v7228
        %v7230 = vpop.f32.mrb[0].mxu0
        %v7231 = vpop.f32.mrb[0].mxu0
        %v7232 = vadd.f32 %v7167, %v7231
        %v7233 = vpop.f32.mrb[0].mxu0
        %7234 = vmatprep.mubr.bf16.mxu0 %v6566
        %7235 = vmatmul.mubr.bf16.gmra.mrb[0].mxu0 %v6565
        %v7236 = vpop.f32.mrb[0].mxu0
        %v7237 = vadd.f32 %v7172, %v7236
        %v7238 = vpop.f32.mrb[0].mxu0
        %v7239 = vpop.f32.mrb[0].mxu0
        %v7240 = vadd.f32 %v7175, %v7239
        %v7241 = vpop.f32.mrb[0].mxu0
        %7242 = vmatprep.mubr.bf16.mxu0 %v6574
        %7243 = vmatmul.mubr.bf16.gmra.mrb[0].mxu0 %v6573
        %v7244 = vpop.f32.mrb[0].mxu0
        %v7245 = vadd.f32 %v7180, %v7244
        %v7246 = vpop.f32.mrb[0].mxu0
        %v7247 = vpop.f32.mrb[0].mxu0
        %v7248 = vadd.f32 %v7183, %v7247
        %v7249 = vpop.f32.mrb[0].mxu0
        %7250 = vmatprep.mubr.bf16.mxu0 %v6582
        %7251 = vmatmul.mubr.bf16.gmra.mrb[0].mxu0 %v6581
        %v7252 = vpop.f32.mrb[0].mxu0
        %v7253 = vadd.f32 %v7188, %v7252
        %v7254 = vpop.f32.mrb[0].mxu0
        %v7255 = vpop.f32.mrb[0].mxu0
        %v7256 = vadd.f32 %v7191, %v7255
        %v7257 = vpop.f32.mrb[0].mxu0
        %7258 = vdwg.mxu0
        %v7259 = vmax.f32 %v7229, 0.0
        %v7260 = vmax.f32 %v7232, 0.0
        %v7261 = vmax.f32 %v7237, 0.0
        %v7262 = vmax.f32 %v7240, 0.0
        %v7263 = vmax.f32 %v7245, 0.0
        %v7264 = vmax.f32 %v7248, 0.0
        %v7265 = vmax.f32 %v7253, 0.0
        %v7266 = vmax.f32 %v7256, 0.0
        %v7267 = vpack.c.bf16 %v7260, %v7259
        %v7268 = vpack.c.bf16 %v7262, %v7261
        %v7269 = vpack.c.bf16 %v7264, %v7263
        %v7270 = vpack.c.bf16 %v7266, %v7265
        %7271 = vst.msk [vmem:[#allocation3] sm:$0xf] %vm4514, 0
        %vm7272 = vcmask 517120
        %vm7273 = vsmask.f32 1280
        %vm7274 = vmand %vm7272, %vm7273
        %v7275 = vld [vmem:[#allocation3 + $0x4] sm:$0x3]
        %v7276 = vsel %vm7274, 0, %v7275
        %7277 = vst [vmem:[#allocation3 + $0x4] sm:$0x3] %v7276
        %7278 = vst.msk [vmem:[#allocation3 + $0x8] sm:$0xf] %vm4514, 0
        %v7279 = vld [vmem:[#allocation3 + $0xc] sm:$0x3]
        %v7280 = vsel %vm7274, 0, %v7279
        %7281 = vst [vmem:[#allocation3 + $0xc] sm:$0x3] %v7280
        %7282 = vst.msk [vmem:[#allocation3 + $0x10] sm:$0xf] %vm4514, 0
        %v7283 = vld [vmem:[#allocation3 + $0x14] sm:$0x3]
        %v7284 = vsel %vm7274, 0, %v7283
        %7285 = vst [vmem:[#allocation3 + $0x14] sm:$0x3] %v7284
        %7286 = vst.msk [vmem:[#allocation3 + $0x18] sm:$0xf] %vm4514, 0
        %v7287 = vld [vmem:[#allocation3 + $0x1c] sm:$0x3]
        %v7288 = vsel %vm7274, 0, %v7287
        %7289 = vst [vmem:[#allocation3 + $0x1c] sm:$0x3] %v7288
        %7290 = vst.msk [vmem:[#allocation3 + $0x20] sm:$0xf] %vm4514, 0
        %v7291 = vld [vmem:[#allocation3 + $0x24] sm:$0x3]
        %v7292 = vsel %vm7274, 0, %v7291
        %7293 = vst [vmem:[#allocation3 + $0x24] sm:$0x3] %v7292
        %7294 = vst.msk [vmem:[#allocation3 + $0x28] sm:$0xf] %vm4514, 0
        %v7295 = vld [vmem:[#allocation3 + $0x2c] sm:$0x3]
        %v7296 = vsel %vm7274, 0, %v7295
        %7297 = vst [vmem:[#allocation3 + $0x2c] sm:$0x3] %v7296
        %7298 = vst.msk [vmem:[#allocation3 + $0x30] sm:$0xf] %vm4514, 0
        %v7299 = vld [vmem:[#allocation3 + $0x34] sm:$0x3]
        %v7300 = vsel %vm7274, 0, %v7299
        %7301 = vst [vmem:[#allocation3 + $0x34] sm:$0x3] %v7300
        %7302 = vst.msk [vmem:[#allocation3 + $0x38] sm:$0xf] %vm4514, 0
        %v7303 = vld [vmem:[#allocation3 + $0x3c] sm:$0x3]
        %v7304 = vsel %vm7274, 0, %v7303
        %7305 = vst [vmem:[#allocation3 + $0x3c] sm:$0x3] %v7304
        %7306 = vst.msk [vmem:[#allocation3 + $0x40] sm:$0xf] %vm4514, 0
        %v7307 = vld [vmem:[#allocation3 + $0x44] sm:$0x3]
        %v7308 = vsel %vm7274, 0, %v7307
        %7309 = vst [vmem:[#allocation3 + $0x44] sm:$0x3] %v7308
        %7310 = vst.msk [vmem:[#allocation3 + $0x48] sm:$0xf] %vm4514, 0
        %v7311 = vld [vmem:[#allocation3 + $0x4c] sm:$0x3]
        %v7312 = vsel %vm7274, 0, %v7311
        %7313 = vst [vmem:[#allocation3 + $0x4c] sm:$0x3] %v7312
        %7314 = vst.msk [vmem:[#allocation3 + $0x50] sm:$0xf] %vm4514, 0
        %v7315 = vld [vmem:[#allocation3 + $0x54] sm:$0x3]
        %v7316 = vsel %vm7274, 0, %v7315
        %7317 = vst [vmem:[#allocation3 + $0x54] sm:$0x3] %v7316
        %v7322 = vunpack.c.l.b16 %v7267
        %v7323 = vunpack.c.h.b16 %v7267
        %v7324 = vunpack.c.l.b16 %v7268
        %v7325 = vunpack.c.h.b16 %v7268
        %v7326 = vunpack.c.l.b16 %v7269
        %v7327 = vunpack.c.h.b16 %v7269
        %v7328 = vunpack.c.l.b16 %v7270
        %v7329 = vunpack.c.h.b16 %v7270
        %v7330 = vpack.c.b16 %v7322, %v7322
        %v7331 = vpack.c.b16 %v7323, %v7323
        %v7332 = vpack.c.b16 %v7324, %v7324
        %v7333 = vpack.c.b16 %v7325, %v7325
        %v7334 = vpack.c.b16 %v7326, %v7326
        %v7335 = vpack.c.b16 %v7327, %v7327
        %v7336 = vpack.c.b16 %v7328, %v7328
        %v7337 = vpack.c.b16 %v7329, %v7329
        %v7339 = vshrl.u32 %v7330, 16
        %v7341 = vrot.slane %v7339, 7
        %v7342 = vshll.u32 %v7330, 16
        %v7344 = vor.u32 %v7341, %v7342
        %v7345 = vrot.slane %v7341, 4
        %v7347 = vshrl.u32 %v7331, 16
        %v7349 = vrot.slane %v7347, 7
        %v7350 = vshll.u32 %v7331, 16
        %v7352 = vor.u32 %v7349, %v7350
        %v7353 = vrot.slane %v7349, 4
        %v7355 = vshrl.u32 %v7332, 16
        %v7357 = vrot.slane %v7355, 7
        %v7358 = vshll.u32 %v7332, 16
        %v7360 = vor.u32 %v7357, %v7358
        %v7361 = vrot.slane %v7357, 4
        %v7363 = vshrl.u32 %v7333, 16
        %v7365 = vrot.slane %v7363, 7
        %v7366 = vshll.u32 %v7333, 16
        %v7368 = vor.u32 %v7365, %v7366
        %v7369 = vrot.slane %v7365, 4
        %v7371 = vshrl.u32 %v7334, 16
        %v7373 = vrot.slane %v7371, 7
        %v7374 = vshll.u32 %v7334, 16
        %v7376 = vor.u32 %v7373, %v7374
        %v7377 = vrot.slane %v7373, 4
        %v7379 = vshrl.u32 %v7335, 16
        %v7381 = vrot.slane %v7379, 7
        %v7382 = vshll.u32 %v7335, 16
        %v7384 = vor.u32 %v7381, %v7382
        %v7385 = vrot.slane %v7381, 4
        %v7387 = vshrl.u32 %v7336, 16
        %v7389 = vrot.slane %v7387, 7
        %v7390 = vshll.u32 %v7336, 16
        %v7392 = vor.u32 %v7389, %v7390
        %v7393 = vrot.slane %v7389, 4
        %v7395 = vshrl.u32 %v7337, 16
        %v7397 = vrot.slane %v7395, 7
        %v7398 = vshll.u32 %v7337, 16
        %v7400 = vor.u32 %v7397, %v7398
        %v7401 = vrot.slane %v7397, 4
        %s7418 = scalar_lea.vmem [#allocation3], 8
        %v7419 = vld [vmem:[%s7418] sm:$0xf]
        %v7420 = vsel %vm4802, %v7344, %v7419
        %7421 = vst [vmem:[%s7418] sm:$0xf] %v7420
        %v7422 = vld [vmem:[%s7418 + $0x4] sm:$0x1]
        %v7423 = vsel %vm4518, %v7345, %v7422
        %7424 = vst [vmem:[%s7418 + $0x4] sm:$0x1] %v7423
        %v7425 = vld [vmem:[%s7418 + $0x8] sm:$0xf]
        %v7426 = vsel %vm4802, %v7352, %v7425
        %7427 = vst [vmem:[%s7418 + $0x8] sm:$0xf] %v7426
        %v7428 = vld [vmem:[%s7418 + $0xc] sm:$0x1]
        %v7429 = vsel %vm4518, %v7353, %v7428
        %7430 = vst [vmem:[%s7418 + $0xc] sm:$0x1] %v7429
        %v7431 = vld [vmem:[%s7418 + $0x10] sm:$0xf]
        %v7432 = vsel %vm4802, %v7360, %v7431
        %7433 = vst [vmem:[%s7418 + $0x10] sm:$0xf] %v7432
        %v7434 = vld [vmem:[%s7418 + $0x14] sm:$0x1]
        %v7435 = vsel %vm4518, %v7361, %v7434
        %7436 = vst [vmem:[%s7418 + $0x14] sm:$0x1] %v7435
        %v7437 = vld [vmem:[%s7418 + $0x18] sm:$0xf]
        %v7438 = vsel %vm4802, %v7368, %v7437
        %7439 = vst [vmem:[%s7418 + $0x18] sm:$0xf] %v7438
        %v7440 = vld [vmem:[%s7418 + $0x1c] sm:$0x1]
        %v7441 = vsel %vm4518, %v7369, %v7440
        %7442 = vst [vmem:[%s7418 + $0x1c] sm:$0x1] %v7441
        %v7443 = vld [vmem:[%s7418 + $0x20] sm:$0xf]
        %v7444 = vsel %vm4802, %v7376, %v7443
        %7445 = vst [vmem:[%s7418 + $0x20] sm:$0xf] %v7444
        %v7446 = vld [vmem:[%s7418 + $0x24] sm:$0x1]
        %v7447 = vsel %vm4518, %v7377, %v7446
        %7448 = vst [vmem:[%s7418 + $0x24] sm:$0x1] %v7447
        %v7449 = vld [vmem:[%s7418 + $0x28] sm:$0xf]
        %v7450 = vsel %vm4802, %v7384, %v7449
        %7451 = vst [vmem:[%s7418 + $0x28] sm:$0xf] %v7450
        %v7452 = vld [vmem:[%s7418 + $0x2c] sm:$0x1]
        %v7453 = vsel %vm4518, %v7385, %v7452
        %7454 = vst [vmem:[%s7418 + $0x2c] sm:$0x1] %v7453
        %v7455 = vld [vmem:[%s7418 + $0x30] sm:$0xf]
        %v7456 = vsel %vm4802, %v7392, %v7455
        %7457 = vst [vmem:[%s7418 + $0x30] sm:$0xf] %v7456
        %v7458 = vld [vmem:[%s7418 + $0x34] sm:$0x1]
        %v7459 = vsel %vm4518, %v7393, %v7458
        %7460 = vst [vmem:[%s7418 + $0x34] sm:$0x1] %v7459
        %v7461 = vld [vmem:[%s7418 + $0x38] sm:$0xf]
        %v7462 = vsel %vm4802, %v7400, %v7461
        %7463 = vst [vmem:[%s7418 + $0x38] sm:$0xf] %v7462
        %v7464 = vld [vmem:[%s7418 + $0x3c] sm:$0x1]
        %v7465 = vsel %vm4518, %v7401, %v7464
        %7466 = vst [vmem:[%s7418 + $0x3c] sm:$0x1] %v7465
        %v7467 = vld [vmem:[#allocation3] sm:$0xf]
        %v7468 = vld [vmem:[#allocation3 + $0x8] sm:$0xf]
        %v7469 = vld [vmem:[#allocation3 + $0x10] sm:$0xf]
        %v7470 = vld [vmem:[#allocation3 + $0x18] sm:$0xf]
        %v7471 = vld [vmem:[#allocation3 + $0x20] sm:$0xf]
        %v7472 = vld [vmem:[#allocation3 + $0x28] sm:$0xf]
        %v7473 = vld [vmem:[#allocation3 + $0x30] sm:$0xf]
        %v7474 = vld [vmem:[#allocation3 + $0x38] sm:$0xf]
        %v7475 = vld [vmem:[#allocation3 + $0x4] sm:$0x1]
        %v7476 = vld [vmem:[#allocation3 + $0xc] sm:$0x1]
        %v7477 = vld [vmem:[#allocation3 + $0x14] sm:$0x1]
        %v7478 = vld [vmem:[#allocation3 + $0x1c] sm:$0x1]
        %v7479 = vld [vmem:[#allocation3 + $0x24] sm:$0x1]
        %v7480 = vld [vmem:[#allocation3 + $0x2c] sm:$0x1]
        %v7481 = vld [vmem:[#allocation3 + $0x34] sm:$0x1]
        %v7482 = vld [vmem:[#allocation3 + $0x3c] sm:$0x1]
        %v7483 = vld [vmem:[#allocation3] sm:$0xe]
        %v7484 = vld [vmem:[#allocation3 + $0x8] sm:$0xe]
        %v7485 = vld [vmem:[#allocation3 + $0x10] sm:$0xe]
        %v7486 = vld [vmem:[#allocation3 + $0x18] sm:$0xe]
        %v7487 = vld [vmem:[#allocation3 + $0x20] sm:$0xe]
        %v7488 = vld [vmem:[#allocation3 + $0x28] sm:$0xe]
        %v7489 = vld [vmem:[#allocation3 + $0x30] sm:$0xe]
        %v7490 = vld [vmem:[#allocation3 + $0x38] sm:$0xe]
        %v7491 = vld [vmem:[#allocation3 + $0x4] sm:$0x3]
        %v7492 = vld [vmem:[#allocation3 + $0xc] sm:$0x3]
        %v7493 = vld [vmem:[#allocation3 + $0x14] sm:$0x3]
        %v7494 = vld [vmem:[#allocation3 + $0x1c] sm:$0x3]
        %v7495 = vld [vmem:[#allocation3 + $0x24] sm:$0x3]
        %v7496 = vld [vmem:[#allocation3 + $0x2c] sm:$0x3]
        %v7497 = vld [vmem:[#allocation3 + $0x34] sm:$0x3]
        %v7498 = vld [vmem:[#allocation3 + $0x3c] sm:$0x3]
        %v7499 = vld [vmem:[%s7418] sm:$0xf]
        %v7500 = vld [vmem:[%s7418 + $0x8] sm:$0xf]
        %v7501 = vld [vmem:[%s7418 + $0x10] sm:$0xf]
        %v7502 = vld [vmem:[%s7418 + $0x18] sm:$0xf]
        %v7503 = vld [vmem:[%s7418 + $0x20] sm:$0xf]
        %v7504 = vld [vmem:[%s7418 + $0x28] sm:$0xf]
        %v7505 = vld [vmem:[%s7418 + $0x30] sm:$0xf]
        %v7506 = vld [vmem:[%s7418 + $0x38] sm:$0xf]
        %v7507 = vld [vmem:[%s7418 + $0x4] sm:$0x1]
        %v7508 = vld [vmem:[%s7418 + $0xc] sm:$0x1]
        %v7509 = vld [vmem:[%s7418 + $0x14] sm:$0x1]
        %v7510 = vld [vmem:[%s7418 + $0x1c] sm:$0x1]
        %v7511 = vld [vmem:[%s7418 + $0x24] sm:$0x1]
        %v7512 = vld [vmem:[%s7418 + $0x2c] sm:$0x1]
        %v7513 = vld [vmem:[%s7418 + $0x34] sm:$0x1]
        %v7514 = vld [vmem:[%s7418 + $0x3c] sm:$0x1]
        %v7515 = vld [vmem:[%s7418] sm:$0xe]
        %v7516 = vld [vmem:[%s7418 + $0x8] sm:$0xe]
        %v7517 = vld [vmem:[%s7418 + $0x10] sm:$0xe]
        %v7518 = vld [vmem:[%s7418 + $0x18] sm:$0xe]
        %v7519 = vld [vmem:[%s7418 + $0x20] sm:$0xe]
        %v7520 = vld [vmem:[%s7418 + $0x28] sm:$0xe]
        %v7521 = vld [vmem:[%s7418 + $0x30] sm:$0xe]
        %v7522 = vld [vmem:[%s7418 + $0x38] sm:$0xe]
        %v7523 = vld [vmem:[%s7418 + $0x4] sm:$0x3]
        %v7524 = vld [vmem:[%s7418 + $0xc] sm:$0x3]
        %v7525 = vld [vmem:[%s7418 + $0x14] sm:$0x3]
        %v7526 = vld [vmem:[%s7418 + $0x1c] sm:$0x3]
        %v7527 = vld [vmem:[%s7418 + $0x24] sm:$0x3]
        %v7528 = vld [vmem:[%s7418 + $0x2c] sm:$0x3]
        %v7529 = vld [vmem:[%s7418 + $0x34] sm:$0x3]
        %v7530 = vld [vmem:[%s7418 + $0x3c] sm:$0x3]
        %s7531 = scalar_lea.vmem [#allocation3], 16
        %v7532 = vld [vmem:[%s7531] sm:$0xf]
        %v7533 = vld [vmem:[%s7531 + $0x8] sm:$0xf]
        %v7534 = vld [vmem:[%s7531 + $0x10] sm:$0xf]
        %v7535 = vld [vmem:[%s7531 + $0x18] sm:$0xf]
        %v7536 = vld [vmem:[%s7531 + $0x20] sm:$0xf]
        %v7537 = vld [vmem:[%s7531 + $0x28] sm:$0xf]
        %v7538 = vld [vmem:[%s7531 + $0x30] sm:$0xf]
        %v7539 = vld [vmem:[%s7531 + $0x38] sm:$0xf]
        %v7540 = vld [vmem:[%s7531 + $0x4] sm:$0x1]
        %v7541 = vld [vmem:[%s7531 + $0xc] sm:$0x1]
        %v7542 = vld [vmem:[%s7531 + $0x14] sm:$0x1]
        %v7543 = vld [vmem:[%s7531 + $0x1c] sm:$0x1]
        %v7544 = vld [vmem:[%s7531 + $0x24] sm:$0x1]
        %v7545 = vld [vmem:[%s7531 + $0x2c] sm:$0x1]
        %v7546 = vld [vmem:[%s7531 + $0x34] sm:$0x1]
        %v7547 = vld [vmem:[%s7531 + $0x3c] sm:$0x1]
        %v7548 = vld [vmem:[%s7531] sm:$0xe]
        %v7549 = vld [vmem:[%s7531 + $0x8] sm:$0xe]
        %v7550 = vld [vmem:[%s7531 + $0x10] sm:$0xe]
        %v7551 = vld [vmem:[%s7531 + $0x18] sm:$0xe]
        %v7552 = vld [vmem:[%s7531 + $0x20] sm:$0xe]
        %v7553 = vld [vmem:[%s7531 + $0x28] sm:$0xe]
        %v7554 = vld [vmem:[%s7531 + $0x30] sm:$0xe]
        %v7555 = vld [vmem:[%s7531 + $0x38] sm:$0xe]
        %v7556 = vld [vmem:[%s7531 + $0x4] sm:$0x3]
        %v7557 = vld [vmem:[%s7531 + $0xc] sm:$0x3]
        %v7558 = vld [vmem:[%s7531 + $0x14] sm:$0x3]
        %v7559 = vld [vmem:[%s7531 + $0x1c] sm:$0x3]
        %v7560 = vld [vmem:[%s7531 + $0x24] sm:$0x3]
        %v7561 = vld [vmem:[%s7531 + $0x2c] sm:$0x3]
        %v7562 = vld [vmem:[%s7531 + $0x34] sm:$0x3]
        %v7563 = vld [vmem:[%s7531 + $0x3c] sm:$0x3]
        %s7564 = scalar_lea.vmem [#allocation3], 24
        %v7565 = vld [vmem:[%s7564] sm:$0xf]
        %v7566 = vld [vmem:[%s7564 + $0x8] sm:$0xf]
        %v7567 = vld [vmem:[%s7564 + $0x10] sm:$0xf]
        %v7568 = vld [vmem:[%s7564 + $0x18] sm:$0xf]
        %v7569 = vld [vmem:[%s7564 + $0x20] sm:$0xf]
        %v7570 = vld [vmem:[%s7564 + $0x28] sm:$0xf]
        %v7571 = vld [vmem:[%s7564 + $0x30] sm:$0xf]
        %v7572 = vld [vmem:[%s7564 + $0x38] sm:$0xf]
        %v7573 = vld [vmem:[%s7564 + $0x4] sm:$0x1]
        %v7574 = vld [vmem:[%s7564 + $0xc] sm:$0x1]
        %v7575 = vld [vmem:[%s7564 + $0x14] sm:$0x1]
        %v7576 = vld [vmem:[%s7564 + $0x1c] sm:$0x1]
        %v7577 = vld [vmem:[%s7564 + $0x24] sm:$0x1]
        %v7578 = vld [vmem:[%s7564 + $0x2c] sm:$0x1]
        %v7579 = vld [vmem:[%s7564 + $0x34] sm:$0x1]
        %v7580 = vld [vmem:[%s7564 + $0x3c] sm:$0x1]
        %v7581 = vld [vmem:[%s7564] sm:$0xe]
        %v7582 = vld [vmem:[%s7564 + $0x8] sm:$0xe]
        %v7583 = vld [vmem:[%s7564 + $0x10] sm:$0xe]
        %v7584 = vld [vmem:[%s7564 + $0x18] sm:$0xe]
        %v7585 = vld [vmem:[%s7564 + $0x20] sm:$0xe]
        %v7586 = vld [vmem:[%s7564 + $0x28] sm:$0xe]
        %v7587 = vld [vmem:[%s7564 + $0x30] sm:$0xe]
        %v7588 = vld [vmem:[%s7564 + $0x38] sm:$0xe]
        %v7589 = vld [vmem:[%s7564 + $0x4] sm:$0x3]
        %v7590 = vld [vmem:[%s7564 + $0xc] sm:$0x3]
        %v7591 = vld [vmem:[%s7564 + $0x14] sm:$0x3]
        %v7592 = vld [vmem:[%s7564 + $0x1c] sm:$0x3]
        %v7593 = vld [vmem:[%s7564 + $0x24] sm:$0x3]
        %v7594 = vld [vmem:[%s7564 + $0x2c] sm:$0x3]
        %v7595 = vld [vmem:[%s7564 + $0x34] sm:$0x3]
        %v7596 = vld [vmem:[%s7564 + $0x3c] sm:$0x3]
        %v7613 = vunpack.c.l.b16 %v7467
        %v7614 = vunpack.c.l.b16 %v7475
        %v7615 = vunpack.c.l.b16 %v7468
        %v7616 = vunpack.c.l.b16 %v7476
        %v7617 = vunpack.c.l.b16 %v7469
        %v7618 = vunpack.c.l.b16 %v7477
        %v7619 = vunpack.c.l.b16 %v7470
        %v7620 = vunpack.c.l.b16 %v7478
        %v7621 = vunpack.c.l.b16 %v7471
        %v7622 = vunpack.c.l.b16 %v7479
        %v7623 = vunpack.c.l.b16 %v7472
        %v7624 = vunpack.c.l.b16 %v7480
        %v7625 = vunpack.c.l.b16 %v7473
        %v7626 = vunpack.c.l.b16 %v7481
        %v7627 = vunpack.c.l.b16 %v7474
        %v7628 = vunpack.c.l.b16 %v7482
        %v7629 = vpack.c.b16 %v7614, %v7613
        %v7630 = vpack.c.b16 %v7616, %v7615
        %v7631 = vpack.c.b16 %v7618, %v7617
        %v7632 = vpack.c.b16 %v7620, %v7619
        %v7633 = vpack.c.b16 %v7622, %v7621
        %v7634 = vpack.c.b16 %v7624, %v7623
        %v7635 = vpack.c.b16 %v7626, %v7625
        %v7636 = vpack.c.b16 %v7628, %v7627
        %v7638 = vshrl.u32 %v7629, 16
        %v7640 = vshll.u32 %v7629, 16
        %v7642 = vrot.slane %v7640, 1
        %v7643 = vor.u32 %v7638, %v7642
        %v7645 = vshrl.u32 %v7630, 16
        %v7647 = vshll.u32 %v7630, 16
        %v7649 = vrot.slane %v7647, 1
        %v7650 = vor.u32 %v7645, %v7649
        %v7652 = vshrl.u32 %v7631, 16
        %v7654 = vshll.u32 %v7631, 16
        %v7656 = vrot.slane %v7654, 1
        %v7657 = vor.u32 %v7652, %v7656
        %v7659 = vshrl.u32 %v7632, 16
        %v7661 = vshll.u32 %v7632, 16
        %v7663 = vrot.slane %v7661, 1
        %v7664 = vor.u32 %v7659, %v7663
        %v7666 = vshrl.u32 %v7633, 16
        %v7668 = vshll.u32 %v7633, 16
        %v7670 = vrot.slane %v7668, 1
        %v7671 = vor.u32 %v7666, %v7670
        %v7673 = vshrl.u32 %v7634, 16
        %v7675 = vshll.u32 %v7634, 16
        %v7677 = vrot.slane %v7675, 1
        %v7678 = vor.u32 %v7673, %v7677
        %v7680 = vshrl.u32 %v7635, 16
        %v7682 = vshll.u32 %v7635, 16
        %v7684 = vrot.slane %v7682, 1
        %v7685 = vor.u32 %v7680, %v7684
        %v7687 = vshrl.u32 %v7636, 16
        %v7689 = vshll.u32 %v7636, 16
        %v7691 = vrot.slane %v7689, 1
        %v7692 = vor.u32 %v7687, %v7691
        %7693 = vrot.lane.b32.xlu0 %v7643, 64
        %v7694 = vpop.permute.xlu0 %7693
        %7695 = vrot.lane.b32.xlu0 %v7650, 64
        %v7696 = vpop.permute.xlu0 %7695
        %7697 = vrot.lane.b32.xlu0 %v7657, 64
        %v7698 = vpop.permute.xlu0 %7697
        %7699 = vrot.lane.b32.xlu0 %v7664, 64
        %v7700 = vpop.permute.xlu0 %7699
        %7701 = vrot.lane.b32.xlu0 %v7671, 64
        %v7702 = vpop.permute.xlu0 %7701
        %7703 = vrot.lane.b32.xlu0 %v7678, 64
        %v7704 = vpop.permute.xlu0 %7703
        %7705 = vrot.lane.b32.xlu0 %v7685, 64
        %v7706 = vpop.permute.xlu0 %7705
        %7707 = vrot.lane.b32.xlu0 %v7692, 64
        %v7708 = vpop.permute.xlu0 %7707
        %v7717 = vunpack.c.l.b16 %v7483
        %v7718 = vunpack.c.l.b16 %v7484
        %v7719 = vunpack.c.l.b16 %v7485
        %v7720 = vunpack.c.l.b16 %v7486
        %v7721 = vunpack.c.l.b16 %v7487
        %v7722 = vunpack.c.l.b16 %v7488
        %v7723 = vunpack.c.l.b16 %v7489
        %v7724 = vunpack.c.l.b16 %v7490
        %v7725 = vpack.c.b16 %v7614, %v7717
        %v7726 = vpack.c.b16 %v7616, %v7718
        %v7727 = vpack.c.b16 %v7618, %v7719
        %v7728 = vpack.c.b16 %v7620, %v7720
        %v7729 = vpack.c.b16 %v7622, %v7721
        %v7730 = vpack.c.b16 %v7624, %v7722
        %v7731 = vpack.c.b16 %v7626, %v7723
        %v7732 = vpack.c.b16 %v7628, %v7724
        %v7733 = vrot.slane %v7725, 1
        %v7734 = vrot.slane %v7726, 1
        %v7735 = vrot.slane %v7727, 1
        %v7736 = vrot.slane %v7728, 1
        %v7737 = vrot.slane %v7729, 1
        %v7738 = vrot.slane %v7730, 1
        %v7739 = vrot.slane %v7731, 1
        %v7740 = vrot.slane %v7732, 1
        %v7749 = vunpack.c.l.b16 %v7491
        %v7750 = vunpack.c.l.b16 %v7492
        %v7751 = vunpack.c.l.b16 %v7493
        %v7752 = vunpack.c.l.b16 %v7494
        %v7753 = vunpack.c.l.b16 %v7495
        %v7754 = vunpack.c.l.b16 %v7496
        %v7755 = vunpack.c.l.b16 %v7497
        %v7756 = vunpack.c.l.b16 %v7498
        %v7757 = vpack.c.b16 %v7749, %v7717
        %v7758 = vpack.c.b16 %v7750, %v7718
        %v7759 = vpack.c.b16 %v7751, %v7719
        %v7760 = vpack.c.b16 %v7752, %v7720
        %v7761 = vpack.c.b16 %v7753, %v7721
        %v7762 = vpack.c.b16 %v7754, %v7722
        %v7763 = vpack.c.b16 %v7755, %v7723
        %v7764 = vpack.c.b16 %v7756, %v7724
        %v7766 = vshrl.u32 %v7757, 16
        %v7768 = vrot.slane %v7766, 1
        %v7769 = vshll.u32 %v7757, 16
        %v7771 = vrot.slane %v7769, 2
        %v7772 = vor.u32 %v7768, %v7771
        %v7774 = vshrl.u32 %v7758, 16
        %v7776 = vrot.slane %v7774, 1
        %v7777 = vshll.u32 %v7758, 16
        %v7779 = vrot.slane %v7777, 2
        %v7780 = vor.u32 %v7776, %v7779
        %v7782 = vshrl.u32 %v7759, 16
        %v7784 = vrot.slane %v7782, 1
        %v7785 = vshll.u32 %v7759, 16
        %v7787 = vrot.slane %v7785, 2
        %v7788 = vor.u32 %v7784, %v7787
        %v7790 = vshrl.u32 %v7760, 16
        %v7792 = vrot.slane %v7790, 1
        %v7793 = vshll.u32 %v7760, 16
        %v7795 = vrot.slane %v7793, 2
        %v7796 = vor.u32 %v7792, %v7795
        %v7798 = vshrl.u32 %v7761, 16
        %v7800 = vrot.slane %v7798, 1
        %v7801 = vshll.u32 %v7761, 16
        %v7803 = vrot.slane %v7801, 2
        %v7804 = vor.u32 %v7800, %v7803
        %v7806 = vshrl.u32 %v7762, 16
        %v7808 = vrot.slane %v7806, 1
        %v7809 = vshll.u32 %v7762, 16
        %v7811 = vrot.slane %v7809, 2
        %v7812 = vor.u32 %v7808, %v7811
        %v7814 = vshrl.u32 %v7763, 16
        %v7816 = vrot.slane %v7814, 1
        %v7817 = vshll.u32 %v7763, 16
        %v7819 = vrot.slane %v7817, 2
        %v7820 = vor.u32 %v7816, %v7819
        %v7822 = vshrl.u32 %v7764, 16
        %v7824 = vrot.slane %v7822, 1
        %v7825 = vshll.u32 %v7764, 16
        %v7827 = vrot.slane %v7825, 2
        %v7828 = vor.u32 %v7824, %v7827
        %7829 = vrot.lane.b32.xlu0 %v7772, 64
        %v7830 = vpop.permute.xlu0 %7829
        %7831 = vrot.lane.b32.xlu0 %v7780, 64
        %v7832 = vpop.permute.xlu0 %7831
        %7833 = vrot.lane.b32.xlu0 %v7788, 64
        %v7834 = vpop.permute.xlu0 %7833
        %7835 = vrot.lane.b32.xlu0 %v7796, 64
        %v7836 = vpop.permute.xlu0 %7835
        %7837 = vrot.lane.b32.xlu0 %v7804, 64
        %v7838 = vpop.permute.xlu0 %7837
        %7839 = vrot.lane.b32.xlu0 %v7812, 64
        %v7840 = vpop.permute.xlu0 %7839
        %7841 = vrot.lane.b32.xlu0 %v7820, 64
        %v7842 = vpop.permute.xlu0 %7841
        %7843 = vrot.lane.b32.xlu0 %v7828, 64
        %v7844 = vpop.permute.xlu0 %7843
        %v7861 = vunpack.c.l.b16 %v7499
        %v7862 = vunpack.c.l.b16 %v7507
        %v7863 = vunpack.c.l.b16 %v7500
        %v7864 = vunpack.c.l.b16 %v7508
        %v7865 = vunpack.c.l.b16 %v7501
        %v7866 = vunpack.c.l.b16 %v7509
        %v7867 = vunpack.c.l.b16 %v7502
        %v7868 = vunpack.c.l.b16 %v7510
        %v7869 = vunpack.c.l.b16 %v7503
        %v7870 = vunpack.c.l.b16 %v7511
        %v7871 = vunpack.c.l.b16 %v7504
        %v7872 = vunpack.c.l.b16 %v7512
        %v7873 = vunpack.c.l.b16 %v7505
        %v7874 = vunpack.c.l.b16 %v7513
        %v7875 = vunpack.c.l.b16 %v7506
        %v7876 = vunpack.c.l.b16 %v7514
        %v7877 = vpack.c.b16 %v7862, %v7861
        %v7878 = vpack.c.b16 %v7864, %v7863
        %v7879 = vpack.c.b16 %v7866, %v7865
        %v7880 = vpack.c.b16 %v7868, %v7867
        %v7881 = vpack.c.b16 %v7870, %v7869
        %v7882 = vpack.c.b16 %v7872, %v7871
        %v7883 = vpack.c.b16 %v7874, %v7873
        %v7884 = vpack.c.b16 %v7876, %v7875
        %v7886 = vshrl.u32 %v7877, 16
        %v7888 = vshll.u32 %v7877, 16
        %v7890 = vrot.slane %v7888, 1
        %v7891 = vor.u32 %v7886, %v7890
        %v7893 = vshrl.u32 %v7878, 16
        %v7895 = vshll.u32 %v7878, 16
        %v7897 = vrot.slane %v7895, 1
        %v7898 = vor.u32 %v7893, %v7897
        %v7900 = vshrl.u32 %v7879, 16
        %v7902 = vshll.u32 %v7879, 16
        %v7904 = vrot.slane %v7902, 1
        %v7905 = vor.u32 %v7900, %v7904
        %v7907 = vshrl.u32 %v7880, 16
        %v7909 = vshll.u32 %v7880, 16
        %v7911 = vrot.slane %v7909, 1
        %v7912 = vor.u32 %v7907, %v7911
        %v7914 = vshrl.u32 %v7881, 16
        %v7916 = vshll.u32 %v7881, 16
        %v7918 = vrot.slane %v7916, 1
        %v7919 = vor.u32 %v7914, %v7918
        %v7921 = vshrl.u32 %v7882, 16
        %v7923 = vshll.u32 %v7882, 16
        %v7925 = vrot.slane %v7923, 1
        %v7926 = vor.u32 %v7921, %v7925
        %v7928 = vshrl.u32 %v7883, 16
        %v7930 = vshll.u32 %v7883, 16
        %v7932 = vrot.slane %v7930, 1
        %v7933 = vor.u32 %v7928, %v7932
        %v7935 = vshrl.u32 %v7884, 16
        %v7937 = vshll.u32 %v7884, 16
        %v7939 = vrot.slane %v7937, 1
        %v7940 = vor.u32 %v7935, %v7939
        %7941 = vrot.lane.b32.xlu0 %v7891, 64
        %v7942 = vpop.permute.xlu0 %7941
        %7943 = vrot.lane.b32.xlu0 %v7898, 64
        %v7944 = vpop.permute.xlu0 %7943
        %7945 = vrot.lane.b32.xlu0 %v7905, 64
        %v7946 = vpop.permute.xlu0 %7945
        %7947 = vrot.lane.b32.xlu0 %v7912, 64
        %v7948 = vpop.permute.xlu0 %7947
        %7949 = vrot.lane.b32.xlu0 %v7919, 64
        %v7950 = vpop.permute.xlu0 %7949
        %7951 = vrot.lane.b32.xlu0 %v7926, 64
        %v7952 = vpop.permute.xlu0 %7951
        %7953 = vrot.lane.b32.xlu0 %v7933, 64
        %v7954 = vpop.permute.xlu0 %7953
        %7955 = vrot.lane.b32.xlu0 %v7940, 64
        %v7956 = vpop.permute.xlu0 %7955
        %v7965 = vunpack.c.l.b16 %v7515
        %v7966 = vunpack.c.l.b16 %v7516
        %v7967 = vunpack.c.l.b16 %v7517
        %v7968 = vunpack.c.l.b16 %v7518
        %v7969 = vunpack.c.l.b16 %v7519
        %v7970 = vunpack.c.l.b16 %v7520
        %v7971 = vunpack.c.l.b16 %v7521
        %v7972 = vunpack.c.l.b16 %v7522
        %v7973 = vpack.c.b16 %v7862, %v7965
        %v7974 = vpack.c.b16 %v7864, %v7966
        %v7975 = vpack.c.b16 %v7866, %v7967
        %v7976 = vpack.c.b16 %v7868, %v7968
        %v7977 = vpack.c.b16 %v7870, %v7969
        %v7978 = vpack.c.b16 %v7872, %v7970
        %v7979 = vpack.c.b16 %v7874, %v7971
        %v7980 = vpack.c.b16 %v7876, %v7972
        %v7981 = vrot.slane %v7973, 1
        %v7982 = vrot.slane %v7974, 1
        %v7983 = vrot.slane %v7975, 1
        %v7984 = vrot.slane %v7976, 1
        %v7985 = vrot.slane %v7977, 1
        %v7986 = vrot.slane %v7978, 1
        %v7987 = vrot.slane %v7979, 1
        %v7988 = vrot.slane %v7980, 1
        %v7997 = vunpack.c.l.b16 %v7523
        %v7998 = vunpack.c.l.b16 %v7524
        %v7999 = vunpack.c.l.b16 %v7525
        %v8000 = vunpack.c.l.b16 %v7526
        %v8001 = vunpack.c.l.b16 %v7527
        %v8002 = vunpack.c.l.b16 %v7528
        %v8003 = vunpack.c.l.b16 %v7529
        %v8004 = vunpack.c.l.b16 %v7530
        %v8005 = vpack.c.b16 %v7997, %v7965
        %v8006 = vpack.c.b16 %v7998, %v7966
        %v8007 = vpack.c.b16 %v7999, %v7967
        %v8008 = vpack.c.b16 %v8000, %v7968
        %v8009 = vpack.c.b16 %v8001, %v7969
        %v8010 = vpack.c.b16 %v8002, %v7970
        %v8011 = vpack.c.b16 %v8003, %v7971
        %v8012 = vpack.c.b16 %v8004, %v7972
        %v8014 = vshrl.u32 %v8005, 16
        %v8016 = vrot.slane %v8014, 1
        %v8017 = vshll.u32 %v8005, 16
        %v8019 = vrot.slane %v8017, 2
        %v8020 = vor.u32 %v8016, %v8019
        %v8022 = vshrl.u32 %v8006, 16
        %v8024 = vrot.slane %v8022, 1
        %v8025 = vshll.u32 %v8006, 16
        %v8027 = vrot.slane %v8025, 2
        %v8028 = vor.u32 %v8024, %v8027
        %v8030 = vshrl.u32 %v8007, 16
        %v8032 = vrot.slane %v8030, 1
        %v8033 = vshll.u32 %v8007, 16
        %v8035 = vrot.slane %v8033, 2
        %v8036 = vor.u32 %v8032, %v8035
        %v8038 = vshrl.u32 %v8008, 16
        %v8040 = vrot.slane %v8038, 1
        %v8041 = vshll.u32 %v8008, 16
        %v8043 = vrot.slane %v8041, 2
        %v8044 = vor.u32 %v8040, %v8043
        %v8046 = vshrl.u32 %v8009, 16
        %v8048 = vrot.slane %v8046, 1
        %v8049 = vshll.u32 %v8009, 16
        %v8051 = vrot.slane %v8049, 2
        %v8052 = vor.u32 %v8048, %v8051
        %v8054 = vshrl.u32 %v8010, 16
        %v8056 = vrot.slane %v8054, 1
        %v8057 = vshll.u32 %v8010, 16
        %v8059 = vrot.slane %v8057, 2
        %v8060 = vor.u32 %v8056, %v8059
        %v8062 = vshrl.u32 %v8011, 16
        %v8064 = vrot.slane %v8062, 1
        %v8065 = vshll.u32 %v8011, 16
        %v8067 = vrot.slane %v8065, 2
        %v8068 = vor.u32 %v8064, %v8067
        %v8070 = vshrl.u32 %v8012, 16
        %v8072 = vrot.slane %v8070, 1
        %v8073 = vshll.u32 %v8012, 16
        %v8075 = vrot.slane %v8073, 2
        %v8076 = vor.u32 %v8072, %v8075
        %8077 = vrot.lane.b32.xlu0 %v8020, 64
        %v8078 = vpop.permute.xlu0 %8077
        %8079 = vrot.lane.b32.xlu0 %v8028, 64
        %v8080 = vpop.permute.xlu0 %8079
        %8081 = vrot.lane.b32.xlu0 %v8036, 64
        %v8082 = vpop.permute.xlu0 %8081
        %8083 = vrot.lane.b32.xlu0 %v8044, 64
        %v8084 = vpop.permute.xlu0 %8083
        %8085 = vrot.lane.b32.xlu0 %v8052, 64
        %v8086 = vpop.permute.xlu0 %8085
        %8087 = vrot.lane.b32.xlu0 %v8060, 64
        %v8088 = vpop.permute.xlu0 %8087
        %8089 = vrot.lane.b32.xlu0 %v8068, 64
        %v8090 = vpop.permute.xlu0 %8089
        %8091 = vrot.lane.b32.xlu0 %v8076, 64
        %v8092 = vpop.permute.xlu0 %8091
        %v8109 = vunpack.c.l.b16 %v7532
        %v8110 = vunpack.c.l.b16 %v7540
        %v8111 = vunpack.c.l.b16 %v7533
        %v8112 = vunpack.c.l.b16 %v7541
        %v8113 = vunpack.c.l.b16 %v7534
        %v8114 = vunpack.c.l.b16 %v7542
        %v8115 = vunpack.c.l.b16 %v7535
        %v8116 = vunpack.c.l.b16 %v7543
        %v8117 = vunpack.c.l.b16 %v7536
        %v8118 = vunpack.c.l.b16 %v7544
        %v8119 = vunpack.c.l.b16 %v7537
        %v8120 = vunpack.c.l.b16 %v7545
        %v8121 = vunpack.c.l.b16 %v7538
        %v8122 = vunpack.c.l.b16 %v7546
        %v8123 = vunpack.c.l.b16 %v7539
        %v8124 = vunpack.c.l.b16 %v7547
        %v8125 = vpack.c.b16 %v8110, %v8109
        %v8126 = vpack.c.b16 %v8112, %v8111
        %v8127 = vpack.c.b16 %v8114, %v8113
        %v8128 = vpack.c.b16 %v8116, %v8115
        %v8129 = vpack.c.b16 %v8118, %v8117
        %v8130 = vpack.c.b16 %v8120, %v8119
        %v8131 = vpack.c.b16 %v8122, %v8121
        %v8132 = vpack.c.b16 %v8124, %v8123
        %v8134 = vshrl.u32 %v8125, 16
        %v8136 = vshll.u32 %v8125, 16
        %v8138 = vrot.slane %v8136, 1
        %v8139 = vor.u32 %v8134, %v8138
        %v8141 = vshrl.u32 %v8126, 16
        %v8143 = vshll.u32 %v8126, 16
        %v8145 = vrot.slane %v8143, 1
        %v8146 = vor.u32 %v8141, %v8145
        %v8148 = vshrl.u32 %v8127, 16
        %v8150 = vshll.u32 %v8127, 16
        %v8152 = vrot.slane %v8150, 1
        %v8153 = vor.u32 %v8148, %v8152
        %v8155 = vshrl.u32 %v8128, 16
        %v8157 = vshll.u32 %v8128, 16
        %v8159 = vrot.slane %v8157, 1
        %v8160 = vor.u32 %v8155, %v8159
        %v8162 = vshrl.u32 %v8129, 16
        %v8164 = vshll.u32 %v8129, 16
        %v8166 = vrot.slane %v8164, 1
        %v8167 = vor.u32 %v8162, %v8166
        %v8169 = vshrl.u32 %v8130, 16
        %v8171 = vshll.u32 %v8130, 16
        %v8173 = vrot.slane %v8171, 1
        %v8174 = vor.u32 %v8169, %v8173
        %v8176 = vshrl.u32 %v8131, 16
        %v8178 = vshll.u32 %v8131, 16
        %v8180 = vrot.slane %v8178, 1
        %v8181 = vor.u32 %v8176, %v8180
        %v8183 = vshrl.u32 %v8132, 16
        %v8185 = vshll.u32 %v8132, 16
        %v8187 = vrot.slane %v8185, 1
        %v8188 = vor.u32 %v8183, %v8187
        %8189 = vrot.lane.b32.xlu0 %v8139, 64
        %v8190 = vpop.permute.xlu0 %8189
        %8191 = vrot.lane.b32.xlu0 %v8146, 64
        %v8192 = vpop.permute.xlu0 %8191
        %8193 = vrot.lane.b32.xlu0 %v8153, 64
        %v8194 = vpop.permute.xlu0 %8193
        %8195 = vrot.lane.b32.xlu0 %v8160, 64
        %v8196 = vpop.permute.xlu0 %8195
        %8197 = vrot.lane.b32.xlu0 %v8167, 64
        %v8198 = vpop.permute.xlu0 %8197
        %8199 = vrot.lane.b32.xlu0 %v8174, 64
        %v8200 = vpop.permute.xlu0 %8199
        %8201 = vrot.lane.b32.xlu0 %v8181, 64
        %v8202 = vpop.permute.xlu0 %8201
        %8203 = vrot.lane.b32.xlu0 %v8188, 64
        %v8204 = vpop.permute.xlu0 %8203
        %v8213 = vunpack.c.l.b16 %v7548
        %v8214 = vunpack.c.l.b16 %v7549
        %v8215 = vunpack.c.l.b16 %v7550
        %v8216 = vunpack.c.l.b16 %v7551
        %v8217 = vunpack.c.l.b16 %v7552
        %v8218 = vunpack.c.l.b16 %v7553
        %v8219 = vunpack.c.l.b16 %v7554
        %v8220 = vunpack.c.l.b16 %v7555
        %v8221 = vpack.c.b16 %v8110, %v8213
        %v8222 = vpack.c.b16 %v8112, %v8214
        %v8223 = vpack.c.b16 %v8114, %v8215
        %v8224 = vpack.c.b16 %v8116, %v8216
        %v8225 = vpack.c.b16 %v8118, %v8217
        %v8226 = vpack.c.b16 %v8120, %v8218
        %v8227 = vpack.c.b16 %v8122, %v8219
        %v8228 = vpack.c.b16 %v8124, %v8220
        %v8229 = vrot.slane %v8221, 1
        %v8230 = vrot.slane %v8222, 1
        %v8231 = vrot.slane %v8223, 1
        %v8232 = vrot.slane %v8224, 1
        %v8233 = vrot.slane %v8225, 1
        %v8234 = vrot.slane %v8226, 1
        %v8235 = vrot.slane %v8227, 1
        %v8236 = vrot.slane %v8228, 1
        %v8245 = vunpack.c.l.b16 %v7556
        %v8246 = vunpack.c.l.b16 %v7557
        %v8247 = vunpack.c.l.b16 %v7558
        %v8248 = vunpack.c.l.b16 %v7559
        %v8249 = vunpack.c.l.b16 %v7560
        %v8250 = vunpack.c.l.b16 %v7561
        %v8251 = vunpack.c.l.b16 %v7562
        %v8252 = vunpack.c.l.b16 %v7563
        %v8253 = vpack.c.b16 %v8245, %v8213
        %v8254 = vpack.c.b16 %v8246, %v8214
        %v8255 = vpack.c.b16 %v8247, %v8215
        %v8256 = vpack.c.b16 %v8248, %v8216
        %v8257 = vpack.c.b16 %v8249, %v8217
        %v8258 = vpack.c.b16 %v8250, %v8218
        %v8259 = vpack.c.b16 %v8251, %v8219
        %v8260 = vpack.c.b16 %v8252, %v8220
        %v8262 = vshrl.u32 %v8253, 16
        %v8264 = vrot.slane %v8262, 1
        %v8265 = vshll.u32 %v8253, 16
        %v8267 = vrot.slane %v8265, 2
        %v8268 = vor.u32 %v8264, %v8267
        %v8270 = vshrl.u32 %v8254, 16
        %v8272 = vrot.slane %v8270, 1
        %v8273 = vshll.u32 %v8254, 16
        %v8275 = vrot.slane %v8273, 2
        %v8276 = vor.u32 %v8272, %v8275
        %v8278 = vshrl.u32 %v8255, 16
        %v8280 = vrot.slane %v8278, 1
        %v8281 = vshll.u32 %v8255, 16
        %v8283 = vrot.slane %v8281, 2
        %v8284 = vor.u32 %v8280, %v8283
        %v8286 = vshrl.u32 %v8256, 16
        %v8288 = vrot.slane %v8286, 1
        %v8289 = vshll.u32 %v8256, 16
        %v8291 = vrot.slane %v8289, 2
        %v8292 = vor.u32 %v8288, %v8291
        %v8294 = vshrl.u32 %v8257, 16
        %v8296 = vrot.slane %v8294, 1
        %v8297 = vshll.u32 %v8257, 16
        %v8299 = vrot.slane %v8297, 2
        %v8300 = vor.u32 %v8296, %v8299
        %v8302 = vshrl.u32 %v8258, 16
        %v8304 = vrot.slane %v8302, 1
        %v8305 = vshll.u32 %v8258, 16
        %v8307 = vrot.slane %v8305, 2
        %v8308 = vor.u32 %v8304, %v8307
        %v8310 = vshrl.u32 %v8259, 16
        %v8312 = vrot.slane %v8310, 1
        %v8313 = vshll.u32 %v8259, 16
        %v8315 = vrot.slane %v8313, 2
        %v8316 = vor.u32 %v8312, %v8315
        %v8318 = vshrl.u32 %v8260, 16
        %v8320 = vrot.slane %v8318, 1
        %v8321 = vshll.u32 %v8260, 16
        %v8323 = vrot.slane %v8321, 2
        %v8324 = vor.u32 %v8320, %v8323
        %8325 = vrot.lane.b32.xlu0 %v8268, 64
        %v8326 = vpop.permute.xlu0 %8325
        %8327 = vrot.lane.b32.xlu0 %v8276, 64
        %v8328 = vpop.permute.xlu0 %8327
        %8329 = vrot.lane.b32.xlu0 %v8284, 64
        %v8330 = vpop.permute.xlu0 %8329
        %8331 = vrot.lane.b32.xlu0 %v8292, 64
        %v8332 = vpop.permute.xlu0 %8331
        %8333 = vrot.lane.b32.xlu0 %v8300, 64
        %v8334 = vpop.permute.xlu0 %8333
        %8335 = vrot.lane.b32.xlu0 %v8308, 64
        %v8336 = vpop.permute.xlu0 %8335
        %8337 = vrot.lane.b32.xlu0 %v8316, 64
        %v8338 = vpop.permute.xlu0 %8337
        %8339 = vrot.lane.b32.xlu0 %v8324, 64
        %v8340 = vpop.permute.xlu0 %8339
        %v8357 = vunpack.c.l.b16 %v7565
        %v8358 = vunpack.c.l.b16 %v7573
        %v8359 = vunpack.c.l.b16 %v7566
        %v8360 = vunpack.c.l.b16 %v7574
        %v8361 = vunpack.c.l.b16 %v7567
        %v8362 = vunpack.c.l.b16 %v7575
        %v8363 = vunpack.c.l.b16 %v7568
        %v8364 = vunpack.c.l.b16 %v7576
        %v8365 = vunpack.c.l.b16 %v7569
        %v8366 = vunpack.c.l.b16 %v7577
        %v8367 = vunpack.c.l.b16 %v7570
        %v8368 = vunpack.c.l.b16 %v7578
        %v8369 = vunpack.c.l.b16 %v7571
        %v8370 = vunpack.c.l.b16 %v7579
        %v8371 = vunpack.c.l.b16 %v7572
        %v8372 = vunpack.c.l.b16 %v7580
        %v8373 = vpack.c.b16 %v8358, %v8357
        %v8374 = vpack.c.b16 %v8360, %v8359
        %v8375 = vpack.c.b16 %v8362, %v8361
        %v8376 = vpack.c.b16 %v8364, %v8363
        %v8377 = vpack.c.b16 %v8366, %v8365
        %v8378 = vpack.c.b16 %v8368, %v8367
        %v8379 = vpack.c.b16 %v8370, %v8369
        %v8380 = vpack.c.b16 %v8372, %v8371
        %v8382 = vshrl.u32 %v8373, 16
        %v8384 = vshll.u32 %v8373, 16
        %v8386 = vrot.slane %v8384, 1
        %v8387 = vor.u32 %v8382, %v8386
        %v8389 = vshrl.u32 %v8374, 16
        %v8391 = vshll.u32 %v8374, 16
        %v8393 = vrot.slane %v8391, 1
        %v8394 = vor.u32 %v8389, %v8393
        %v8396 = vshrl.u32 %v8375, 16
        %v8398 = vshll.u32 %v8375, 16
        %v8400 = vrot.slane %v8398, 1
        %v8401 = vor.u32 %v8396, %v8400
        %v8403 = vshrl.u32 %v8376, 16
        %v8405 = vshll.u32 %v8376, 16
        %v8407 = vrot.slane %v8405, 1
        %v8408 = vor.u32 %v8403, %v8407
        %v8410 = vshrl.u32 %v8377, 16
        %v8412 = vshll.u32 %v8377, 16
        %v8414 = vrot.slane %v8412, 1
        %v8415 = vor.u32 %v8410, %v8414
        %v8417 = vshrl.u32 %v8378, 16
        %v8419 = vshll.u32 %v8378, 16
        %v8421 = vrot.slane %v8419, 1
        %v8422 = vor.u32 %v8417, %v8421
        %v8424 = vshrl.u32 %v8379, 16
        %v8426 = vshll.u32 %v8379, 16
        %v8428 = vrot.slane %v8426, 1
        %v8429 = vor.u32 %v8424, %v8428
        %v8431 = vshrl.u32 %v8380, 16
        %v8433 = vshll.u32 %v8380, 16
        %v8435 = vrot.slane %v8433, 1
        %v8436 = vor.u32 %v8431, %v8435
        %8437 = vrot.lane.b32.xlu0 %v8387, 64
        %v8438 = vpop.permute.xlu0 %8437
        %8439 = vrot.lane.b32.xlu0 %v8394, 64
        %v8440 = vpop.permute.xlu0 %8439
        %8441 = vrot.lane.b32.xlu0 %v8401, 64
        %v8442 = vpop.permute.xlu0 %8441
        %8443 = vrot.lane.b32.xlu0 %v8408, 64
        %v8444 = vpop.permute.xlu0 %8443
        %8445 = vrot.lane.b32.xlu0 %v8415, 64
        %v8446 = vpop.permute.xlu0 %8445
        %8447 = vrot.lane.b32.xlu0 %v8422, 64
        %v8448 = vpop.permute.xlu0 %8447
        %8449 = vrot.lane.b32.xlu0 %v8429, 64
        %v8450 = vpop.permute.xlu0 %8449
        %8451 = vrot.lane.b32.xlu0 %v8436, 64
        %v8452 = vpop.permute.xlu0 %8451
        %v8461 = vunpack.c.l.b16 %v7581
        %v8462 = vunpack.c.l.b16 %v7582
        %v8463 = vunpack.c.l.b16 %v7583
        %v8464 = vunpack.c.l.b16 %v7584
        %v8465 = vunpack.c.l.b16 %v7585
        %v8466 = vunpack.c.l.b16 %v7586
        %v8467 = vunpack.c.l.b16 %v7587
        %v8468 = vunpack.c.l.b16 %v7588
        %v8469 = vpack.c.b16 %v8358, %v8461
        %v8470 = vpack.c.b16 %v8360, %v8462
        %v8471 = vpack.c.b16 %v8362, %v8463
        %v8472 = vpack.c.b16 %v8364, %v8464
        %v8473 = vpack.c.b16 %v8366, %v8465
        %v8474 = vpack.c.b16 %v8368, %v8466
        %v8475 = vpack.c.b16 %v8370, %v8467
        %v8476 = vpack.c.b16 %v8372, %v8468
        %v8477 = vrot.slane %v8469, 1
        %v8478 = vrot.slane %v8470, 1
        %v8479 = vrot.slane %v8471, 1
        %v8480 = vrot.slane %v8472, 1
        %v8481 = vrot.slane %v8473, 1
        %v8482 = vrot.slane %v8474, 1
        %v8483 = vrot.slane %v8475, 1
        %v8484 = vrot.slane %v8476, 1
        %v8493 = vunpack.c.l.b16 %v7589
        %v8494 = vunpack.c.l.b16 %v7590
        %v8495 = vunpack.c.l.b16 %v7591
        %v8496 = vunpack.c.l.b16 %v7592
        %v8497 = vunpack.c.l.b16 %v7593
        %v8498 = vunpack.c.l.b16 %v7594
        %v8499 = vunpack.c.l.b16 %v7595
        %v8500 = vunpack.c.l.b16 %v7596
        %v8501 = vpack.c.b16 %v8493, %v8461
        %v8502 = vpack.c.b16 %v8494, %v8462
        %v8503 = vpack.c.b16 %v8495, %v8463
        %v8504 = vpack.c.b16 %v8496, %v8464
        %v8505 = vpack.c.b16 %v8497, %v8465
        %v8506 = vpack.c.b16 %v8498, %v8466
        %v8507 = vpack.c.b16 %v8499, %v8467
        %v8508 = vpack.c.b16 %v8500, %v8468
        %v8510 = vshrl.u32 %v8501, 16
        %v8512 = vrot.slane %v8510, 1
        %v8513 = vshll.u32 %v8501, 16
        %v8515 = vrot.slane %v8513, 2
        %v8516 = vor.u32 %v8512, %v8515
        %v8518 = vshrl.u32 %v8502, 16
        %v8520 = vrot.slane %v8518, 1
        %v8521 = vshll.u32 %v8502, 16
        %v8523 = vrot.slane %v8521, 2
        %v8524 = vor.u32 %v8520, %v8523
        %v8526 = vshrl.u32 %v8503, 16
        %v8528 = vrot.slane %v8526, 1
        %v8529 = vshll.u32 %v8503, 16
        %v8531 = vrot.slane %v8529, 2
        %v8532 = vor.u32 %v8528, %v8531
        %v8534 = vshrl.u32 %v8504, 16
        %v8536 = vrot.slane %v8534, 1
        %v8537 = vshll.u32 %v8504, 16
        %v8539 = vrot.slane %v8537, 2
        %v8540 = vor.u32 %v8536, %v8539
        %v8542 = vshrl.u32 %v8505, 16
        %v8544 = vrot.slane %v8542, 1
        %v8545 = vshll.u32 %v8505, 16
        %v8547 = vrot.slane %v8545, 2
        %v8548 = vor.u32 %v8544, %v8547
        %v8550 = vshrl.u32 %v8506, 16
        %v8552 = vrot.slane %v8550, 1
        %v8553 = vshll.u32 %v8506, 16
        %v8555 = vrot.slane %v8553, 2
        %v8556 = vor.u32 %v8552, %v8555
        %v8558 = vshrl.u32 %v8507, 16
        %v8560 = vrot.slane %v8558, 1
        %v8561 = vshll.u32 %v8507, 16
        %v8563 = vrot.slane %v8561, 2
        %v8564 = vor.u32 %v8560, %v8563
        %v8566 = vshrl.u32 %v8508, 16
        %v8568 = vrot.slane %v8566, 1
        %v8569 = vshll.u32 %v8508, 16
        %v8571 = vrot.slane %v8569, 2
        %v8572 = vor.u32 %v8568, %v8571
        %8573 = vrot.lane.b32.xlu0 %v8516, 64
        %v8574 = vpop.permute.xlu0 %8573
        %8575 = vrot.lane.b32.xlu0 %v8524, 64
        %v8576 = vpop.permute.xlu0 %8575
        %8577 = vrot.lane.b32.xlu0 %v8532, 64
        %v8578 = vpop.permute.xlu0 %8577
        %8579 = vrot.lane.b32.xlu0 %v8540, 64
        %v8580 = vpop.permute.xlu0 %8579
        %8581 = vrot.lane.b32.xlu0 %v8548, 64
        %v8582 = vpop.permute.xlu0 %8581
        %8583 = vrot.lane.b32.xlu0 %v8556, 64
        %v8584 = vpop.permute.xlu0 %8583
        %8585 = vrot.lane.b32.xlu0 %v8564, 64
        %v8586 = vpop.permute.xlu0 %8585
        %8587 = vrot.lane.b32.xlu0 %v8572, 64
        %v8588 = vpop.permute.xlu0 %8587
        %v8591 = vsel %vm4256, %v7467, %v7694
        %v8594 = vsel %vm4256, %v7468, %v7696
        %v8597 = vsel %vm4256, %v7469, %v7698
        %v8600 = vsel %vm4256, %v7470, %v7700
        %v8603 = vsel %vm4256, %v7471, %v7702
        %v8606 = vsel %vm4256, %v7472, %v7704
        %v8609 = vsel %vm4256, %v7473, %v7706
        %v8612 = vsel %vm4256, %v7474, %v7708
        %v8615 = vsel %vm4256, %v7733, %v7830
        %v8618 = vsel %vm4256, %v7734, %v7832
        %v8621 = vsel %vm4256, %v7735, %v7834
        %v8624 = vsel %vm4256, %v7736, %v7836
        %v8627 = vsel %vm4256, %v7737, %v7838
        %v8630 = vsel %vm4256, %v7738, %v7840
        %v8633 = vsel %vm4256, %v7739, %v7842
        %v8636 = vsel %vm4256, %v7740, %v7844
        %v8639 = vsel %vm4256, %v7499, %v7942
        %v8642 = vsel %vm4256, %v7500, %v7944
        %v8645 = vsel %vm4256, %v7501, %v7946
        %v8648 = vsel %vm4256, %v7502, %v7948
        %v8651 = vsel %vm4256, %v7503, %v7950
        %v8654 = vsel %vm4256, %v7504, %v7952
        %v8657 = vsel %vm4256, %v7505, %v7954
        %v8660 = vsel %vm4256, %v7506, %v7956
        %v8663 = vsel %vm4256, %v7981, %v8078
        %v8666 = vsel %vm4256, %v7982, %v8080
        %v8669 = vsel %vm4256, %v7983, %v8082
        %v8672 = vsel %vm4256, %v7984, %v8084
        %v8675 = vsel %vm4256, %v7985, %v8086
        %v8678 = vsel %vm4256, %v7986, %v8088
        %v8681 = vsel %vm4256, %v7987, %v8090
        %v8684 = vsel %vm4256, %v7988, %v8092
        %v8687 = vsel %vm4256, %v7532, %v8190
        %v8690 = vsel %vm4256, %v7533, %v8192
        %v8693 = vsel %vm4256, %v7534, %v8194
        %v8696 = vsel %vm4256, %v7535, %v8196
        %v8699 = vsel %vm4256, %v7536, %v8198
        %v8702 = vsel %vm4256, %v7537, %v8200
        %v8705 = vsel %vm4256, %v7538, %v8202
        %v8708 = vsel %vm4256, %v7539, %v8204
        %v8711 = vsel %vm4256, %v8229, %v8326
        %v8714 = vsel %vm4256, %v8230, %v8328
        %v8717 = vsel %vm4256, %v8231, %v8330
        %v8720 = vsel %vm4256, %v8232, %v8332
        %v8723 = vsel %vm4256, %v8233, %v8334
        %v8726 = vsel %vm4256, %v8234, %v8336
        %v8729 = vsel %vm4256, %v8235, %v8338
        %v8732 = vsel %vm4256, %v8236, %v8340
        %v8735 = vsel %vm4256, %v7565, %v8438
        %v8738 = vsel %vm4256, %v7566, %v8440
        %v8741 = vsel %vm4256, %v7567, %v8442
        %v8744 = vsel %vm4256, %v7568, %v8444
        %v8747 = vsel %vm4256, %v7569, %v8446
        %v8750 = vsel %vm4256, %v7570, %v8448
        %v8753 = vsel %vm4256, %v7571, %v8450
        %v8756 = vsel %vm4256, %v7572, %v8452
        %v8759 = vsel %vm4256, %v8477, %v8574
        %v8762 = vsel %vm4256, %v8478, %v8576
        %v8765 = vsel %vm4256, %v8479, %v8578
        %v8768 = vsel %vm4256, %v8480, %v8580
        %v8771 = vsel %vm4256, %v8481, %v8582
        %v8774 = vsel %vm4256, %v8482, %v8584
        %v8777 = vsel %vm4256, %v8483, %v8586
        %v8780 = vsel %vm4256, %v8484, %v8588
        %v8845 = vunpack.c.l.b16 %v8591
        %v8846 = vunpack.c.l.b16 %v8615
        %v8847 = vunpack.c.l.b16 %v8639
        %v8848 = vunpack.c.l.b16 %v8663
        %v8849 = vunpack.c.l.b16 %v8687
        %v8850 = vunpack.c.l.b16 %v8711
        %v8851 = vunpack.c.l.b16 %v8735
        %v8852 = vunpack.c.l.b16 %v8759
        %v8853 = vunpack.c.l.b16 %v8594
        %v8854 = vunpack.c.l.b16 %v8618
        %v8855 = vunpack.c.l.b16 %v8642
        %v8856 = vunpack.c.l.b16 %v8666
        %v8857 = vunpack.c.l.b16 %v8690
        %v8858 = vunpack.c.l.b16 %v8714
        %v8859 = vunpack.c.l.b16 %v8738
        %v8860 = vunpack.c.l.b16 %v8762
        %v8861 = vunpack.c.l.b16 %v8597
        %v8862 = vunpack.c.l.b16 %v8621
        %v8863 = vunpack.c.l.b16 %v8645
        %v8864 = vunpack.c.l.b16 %v8669
        %v8865 = vunpack.c.l.b16 %v8693
        %v8866 = vunpack.c.l.b16 %v8717
        %v8867 = vunpack.c.l.b16 %v8741
        %v8868 = vunpack.c.l.b16 %v8765
        %v8869 = vunpack.c.l.b16 %v8600
        %v8870 = vunpack.c.l.b16 %v8624
        %v8871 = vunpack.c.l.b16 %v8648
        %v8872 = vunpack.c.l.b16 %v8672
        %v8873 = vunpack.c.l.b16 %v8696
        %v8874 = vunpack.c.l.b16 %v8720
        %v8875 = vunpack.c.l.b16 %v8744
        %v8876 = vunpack.c.l.b16 %v8768
        %v8877 = vunpack.c.l.b16 %v8603
        %v8878 = vunpack.c.l.b16 %v8627
        %v8879 = vunpack.c.l.b16 %v8651
        %v8880 = vunpack.c.l.b16 %v8675
        %v8881 = vunpack.c.l.b16 %v8699
        %v8882 = vunpack.c.l.b16 %v8723
        %v8883 = vunpack.c.l.b16 %v8747
        %v8884 = vunpack.c.l.b16 %v8771
        %v8885 = vunpack.c.l.b16 %v8606
        %v8886 = vunpack.c.l.b16 %v8630
        %v8887 = vunpack.c.l.b16 %v8654
        %v8888 = vunpack.c.l.b16 %v8678
        %v8889 = vunpack.c.l.b16 %v8702
        %v8890 = vunpack.c.l.b16 %v8726
        %v8891 = vunpack.c.l.b16 %v8750
        %v8892 = vunpack.c.l.b16 %v8774
        %v8893 = vunpack.c.l.b16 %v8609
        %v8894 = vunpack.c.l.b16 %v8633
        %v8895 = vunpack.c.l.b16 %v8657
        %v8896 = vunpack.c.l.b16 %v8681
        %v8897 = vunpack.c.l.b16 %v8705
        %v8898 = vunpack.c.l.b16 %v8729
        %v8899 = vunpack.c.l.b16 %v8753
        %v8900 = vunpack.c.l.b16 %v8777
        %v8901 = vunpack.c.l.b16 %v8612
        %v8902 = vunpack.c.l.b16 %v8636
        %v8903 = vunpack.c.l.b16 %v8660
        %v8904 = vunpack.c.l.b16 %v8684
        %v8905 = vunpack.c.l.b16 %v8708
        %v8906 = vunpack.c.l.b16 %v8732
        %v8907 = vunpack.c.l.b16 %v8756
        %v8908 = vunpack.c.l.b16 %v8780
        %v8909 = vld [vmem:[%s5] sm:$0xf]
        %v8910 = vld [vmem:[%s5 + $0x4] sm:$0xf]
        %v8911 = vld [vmem:[%s5 + $0x8] sm:$0xf]
        %v8912 = vld [vmem:[%s5 + $0xc] sm:$0xf]
        %v8913 = vld [vmem:[%s5 + $0x10] sm:$0xf]
        %v8914 = vld [vmem:[%s5 + $0x14] sm:$0xf]
        %v8915 = vld [vmem:[%s5 + $0x18] sm:$0xf]
        %v8916 = vld [vmem:[%s5 + $0x1c] sm:$0xf]
        %v8917 = vld [vmem:[%s5 + $0x20] sm:$0xf]
        %v8918 = vld [vmem:[%s5 + $0x24] sm:$0xf]
        %v8919 = vld [vmem:[%s5 + $0x28] sm:$0xf]
        %v8920 = vld [vmem:[%s5 + $0x2c] sm:$0xf]
        %v8921 = vld [vmem:[%s5 + $0x30] sm:$0xf]
        %v8922 = vld [vmem:[%s5 + $0x34] sm:$0xf]
        %v8923 = vld [vmem:[%s5 + $0x38] sm:$0xf]
        %v8924 = vld [vmem:[%s5 + $0x3c] sm:$0xf]
        %v8925 = vld [vmem:[%s5 + $0x40] sm:$0xf]
        %v8926 = vld [vmem:[%s5 + $0x44] sm:$0xf]
        %v8927 = vld [vmem:[%s5 + $0x48] sm:$0xf]
        %v8928 = vld [vmem:[%s5 + $0x4c] sm:$0xf]
        %v8929 = vld [vmem:[%s5 + $0x50] sm:$0xf]
        %v8930 = vld [vmem:[%s5 + $0x54] sm:$0xf]
        %v8931 = vld [vmem:[%s5 + $0x58] sm:$0xf]
        %v8932 = vld [vmem:[%s5 + $0x5c] sm:$0xf]
        %v8933 = vld [vmem:[%s5 + $0x60] sm:$0xf]
        %v8934 = vld [vmem:[%s5 + $0x64] sm:$0xf]
        %v8935 = vld [vmem:[%s5 + $0x68] sm:$0xf]
        %v8936 = vld [vmem:[%s5 + $0x6c] sm:$0xf]
        %v8937 = vld [vmem:[%s5 + $0x70] sm:$0xf]
        %v8938 = vld [vmem:[%s5 + $0x74] sm:$0xf]
        %v8939 = vld [vmem:[%s5 + $0x78] sm:$0xf]
        %v8940 = vld [vmem:[%s5 + $0x7c] sm:$0xf]
        %v8941 = vld [vmem:[%s5 + $0x80] sm:$0xf]
        %v8942 = vld [vmem:[%s5 + $0x84] sm:$0xf]
        %v8943 = vld [vmem:[%s5 + $0x88] sm:$0xf]
        %v8944 = vld [vmem:[%s5 + $0x8c] sm:$0xf]
        %v8945 = vld [vmem:[%s5 + $0x90] sm:$0xf]
        %v8946 = vld [vmem:[%s5 + $0x94] sm:$0xf]
        %v8947 = vld [vmem:[%s5 + $0x98] sm:$0xf]
        %v8948 = vld [vmem:[%s5 + $0x9c] sm:$0xf]
        %v8949 = vld [vmem:[%s5 + $0xa0] sm:$0xf]
        %v8950 = vld [vmem:[%s5 + $0xa4] sm:$0xf]
        %v8951 = vld [vmem:[%s5 + $0xa8] sm:$0xf]
        %v8952 = vld [vmem:[%s5 + $0xac] sm:$0xf]
        %v8953 = vld [vmem:[%s5 + $0xb0] sm:$0xf]
        %v8954 = vld [vmem:[%s5 + $0xb4] sm:$0xf]
        %v8955 = vld [vmem:[%s5 + $0xb8] sm:$0xf]
        %v8956 = vld [vmem:[%s5 + $0xbc] sm:$0xf]
        %v8957 = vld [vmem:[%s5 + $0xc0] sm:$0xf]
        %v8958 = vld [vmem:[%s5 + $0xc4] sm:$0xf]
        %v8959 = vld [vmem:[%s5 + $0xc8] sm:$0xf]
        %v8960 = vld [vmem:[%s5 + $0xcc] sm:$0xf]
        %v8961 = vld [vmem:[%s5 + $0xd0] sm:$0xf]
        %v8962 = vld [vmem:[%s5 + $0xd4] sm:$0xf]
        %v8963 = vld [vmem:[%s5 + $0xd8] sm:$0xf]
        %v8964 = vld [vmem:[%s5 + $0xdc] sm:$0xf]
        %v8965 = vld [vmem:[%s5 + $0xe0] sm:$0xf]
        %v8966 = vld [vmem:[%s5 + $0xe4] sm:$0xf]
        %v8967 = vld [vmem:[%s5 + $0xe8] sm:$0xf]
        %v8968 = vld [vmem:[%s5 + $0xec] sm:$0xf]
        %v8969 = vld [vmem:[%s5 + $0xf0] sm:$0xf]
        %v8970 = vld [vmem:[%s5 + $0xf4] sm:$0xf]
        %v8971 = vld [vmem:[%s5 + $0xf8] sm:$0xf]
        %v8972 = vld [vmem:[%s5 + $0xfc] sm:$0xf]
        %v8973 = vld [vmem:[%s5 + $0x100] sm:$0xf]
        %v8974 = vld [vmem:[%s5 + $0x104] sm:$0xf]
        %v8975 = vld [vmem:[%s5 + $0x108] sm:$0xf]
        %v8976 = vld [vmem:[%s5 + $0x10c] sm:$0xf]
        %v8977 = vld [vmem:[%s5 + $0x110] sm:$0xf]
        %v8978 = vld [vmem:[%s5 + $0x114] sm:$0xf]
        %v8979 = vld [vmem:[%s5 + $0x118] sm:$0xf]
        %v8980 = vld [vmem:[%s5 + $0x11c] sm:$0xf]
        %v8981 = vld [vmem:[%s5 + $0x120] sm:$0xf]
        %v8982 = vld [vmem:[%s5 + $0x124] sm:$0xf]
        %v8983 = vld [vmem:[%s5 + $0x128] sm:$0xf]
        %v8984 = vld [vmem:[%s5 + $0x12c] sm:$0xf]
        %v8985 = vld [vmem:[%s5 + $0x130] sm:$0xf]
        %v8986 = vld [vmem:[%s5 + $0x134] sm:$0xf]
        %v8987 = vld [vmem:[%s5 + $0x138] sm:$0xf]
        %v8988 = vld [vmem:[%s5 + $0x13c] sm:$0xf]
        %v8989 = vld [vmem:[%s5 + $0x140] sm:$0xf]
        %v8990 = vld [vmem:[%s5 + $0x144] sm:$0xf]
        %v8991 = vld [vmem:[%s5 + $0x148] sm:$0xf]
        %v8992 = vld [vmem:[%s5 + $0x14c] sm:$0xf]
        %v8993 = vld [vmem:[%s5 + $0x150] sm:$0xf]
        %v8994 = vld [vmem:[%s5 + $0x154] sm:$0xf]
        %v8995 = vld [vmem:[%s5 + $0x158] sm:$0xf]
        %v8996 = vld [vmem:[%s5 + $0x15c] sm:$0xf]
        %v8997 = vld [vmem:[%s5 + $0x160] sm:$0xf]
        %v8998 = vld [vmem:[%s5 + $0x164] sm:$0xf]
        %v8999 = vld [vmem:[%s5 + $0x168] sm:$0xf]
        %v9000 = vld [vmem:[%s5 + $0x16c] sm:$0xf]
        %v9001 = vld [vmem:[%s5 + $0x170] sm:$0xf]
        %v9002 = vld [vmem:[%s5 + $0x174] sm:$0xf]
        %v9003 = vld [vmem:[%s5 + $0x178] sm:$0xf]
        %v9004 = vld [vmem:[%s5 + $0x17c] sm:$0xf]
        %v9005 = vld [vmem:[%s5 + $0x180] sm:$0xf]
        %v9006 = vld [vmem:[%s5 + $0x184] sm:$0xf]
        %v9007 = vld [vmem:[%s5 + $0x188] sm:$0xf]
        %v9008 = vld [vmem:[%s5 + $0x18c] sm:$0xf]
        %v9009 = vld [vmem:[%s5 + $0x190] sm:$0xf]
        %v9010 = vld [vmem:[%s5 + $0x194] sm:$0xf]
        %v9011 = vld [vmem:[%s5 + $0x198] sm:$0xf]
        %v9012 = vld [vmem:[%s5 + $0x19c] sm:$0xf]
        %v9013 = vld [vmem:[%s5 + $0x1a0] sm:$0xf]
        %v9014 = vld [vmem:[%s5 + $0x1a4] sm:$0xf]
        %v9015 = vld [vmem:[%s5 + $0x1a8] sm:$0xf]
        %v9016 = vld [vmem:[%s5 + $0x1ac] sm:$0xf]
        %v9017 = vld [vmem:[%s5 + $0x1b0] sm:$0xf]
        %v9018 = vld [vmem:[%s5 + $0x1b4] sm:$0xf]
        %v9019 = vld [vmem:[%s5 + $0x1b8] sm:$0xf]
        %v9020 = vld [vmem:[%s5 + $0x1bc] sm:$0xf]
        %v9021 = vld [vmem:[%s5 + $0x1c0] sm:$0xf]
        %v9022 = vld [vmem:[%s5 + $0x1c4] sm:$0xf]
        %v9023 = vld [vmem:[%s5 + $0x1c8] sm:$0xf]
        %v9024 = vld [vmem:[%s5 + $0x1cc] sm:$0xf]
        %v9025 = vld [vmem:[%s5 + $0x1d0] sm:$0xf]
        %v9026 = vld [vmem:[%s5 + $0x1d4] sm:$0xf]
        %v9027 = vld [vmem:[%s5 + $0x1d8] sm:$0xf]
        %v9028 = vld [vmem:[%s5 + $0x1dc] sm:$0xf]
        %v9029 = vld [vmem:[%s5 + $0x1e0] sm:$0xf]
        %v9030 = vld [vmem:[%s5 + $0x1e4] sm:$0xf]
        %v9031 = vld [vmem:[%s5 + $0x1e8] sm:$0xf]
        %v9032 = vld [vmem:[%s5 + $0x1ec] sm:$0xf]
        %v9033 = vld [vmem:[%s5 + $0x1f0] sm:$0xf]
        %v9034 = vld [vmem:[%s5 + $0x1f4] sm:$0xf]
        %v9035 = vld [vmem:[%s5 + $0x1f8] sm:$0xf]
        %v9036 = vld [vmem:[%s5 + $0x1fc] sm:$0xf]
        %v9037 = vld [vmem:[%s6] sm:$0x1]
        %v9039 = vlaneseq
        %v9040 = vshrl.u32 %v9039, 7
        %v9041 = vsub.s32 0, %v9040
        %v9042 = vrot.slane %v9037, %v9041
        %v9044 = vpack.c.b16 %v8853, %v8845
        %v9045 = vpack.c.b16 %v8854, %v8846
        %v9046 = vpack.c.b16 %v8855, %v8847
        %v9047 = vpack.c.b16 %v8856, %v8848
        %v9048 = vpack.c.b16 %v8857, %v8849
        %v9049 = vpack.c.b16 %v8858, %v8850
        %v9050 = vpack.c.b16 %v8859, %v8851
        %v9051 = vpack.c.b16 %v8860, %v8852
        %v9052 = vpack.c.b16 %v8869, %v8861
        %v9053 = vpack.c.b16 %v8870, %v8862
        %v9054 = vpack.c.b16 %v8871, %v8863
        %v9055 = vpack.c.b16 %v8872, %v8864
        %v9056 = vpack.c.b16 %v8873, %v8865
        %v9057 = vpack.c.b16 %v8874, %v8866
        %v9058 = vpack.c.b16 %v8875, %v8867
        %v9059 = vpack.c.b16 %v8876, %v8868
        %v9060 = vpack.c.b16 %v8885, %v8877
        %v9061 = vpack.c.b16 %v8886, %v8878
        %v9062 = vpack.c.b16 %v8887, %v8879
        %v9063 = vpack.c.b16 %v8888, %v8880
        %v9064 = vpack.c.b16 %v8889, %v8881
        %v9065 = vpack.c.b16 %v8890, %v8882
        %v9066 = vpack.c.b16 %v8891, %v8883
        %v9067 = vpack.c.b16 %v8892, %v8884
        %v9068 = vpack.c.b16 %v8901, %v8893
        %v9069 = vpack.c.b16 %v8902, %v8894
        %v9070 = vpack.c.b16 %v8903, %v8895
        %v9071 = vpack.c.b16 %v8904, %v8896
        %v9072 = vpack.c.b16 %v8905, %v8897
        %v9073 = vpack.c.b16 %v8906, %v8898
        %v9074 = vpack.c.b16 %v8907, %v8899
        %v9075 = vpack.c.b16 %v8908, %v8900
        %v9236 = vunpack.c.l.b16 %v8909
        %v9237 = vunpack.c.l.b16 %v8910
        %v9238 = vunpack.c.l.b16 %v8911
        %v9239 = vunpack.c.l.b16 %v8912
        %v9240 = vunpack.c.l.b16 %v8913
        %v9241 = vunpack.c.l.b16 %v8914
        %v9242 = vunpack.c.l.b16 %v8915
        %v9243 = vunpack.c.l.b16 %v8916
        %v9244 = vunpack.c.l.b16 %v8917
        %v9245 = vunpack.c.l.b16 %v8918
        %v9246 = vunpack.c.l.b16 %v8919
        %v9247 = vunpack.c.l.b16 %v8920
        %v9248 = vunpack.c.l.b16 %v8921
        %v9249 = vunpack.c.l.b16 %v8922
        %v9250 = vunpack.c.l.b16 %v8923
        %v9251 = vunpack.c.l.b16 %v8924
        %v9252 = vunpack.c.l.b16 %v8925
        %v9253 = vunpack.c.l.b16 %v8926
        %v9254 = vunpack.c.l.b16 %v8927
        %v9255 = vunpack.c.l.b16 %v8928
        %v9256 = vunpack.c.l.b16 %v8929
        %v9257 = vunpack.c.l.b16 %v8930
        %v9258 = vunpack.c.l.b16 %v8931
        %v9259 = vunpack.c.l.b16 %v8932
        %v9260 = vunpack.c.l.b16 %v8933
        %v9261 = vunpack.c.l.b16 %v8934
        %v9262 = vunpack.c.l.b16 %v8935
        %v9263 = vunpack.c.l.b16 %v8936
        %v9264 = vunpack.c.l.b16 %v8937
        %v9265 = vunpack.c.l.b16 %v8938
        %v9266 = vunpack.c.l.b16 %v8939
        %v9267 = vunpack.c.l.b16 %v8940
        %v9268 = vunpack.c.l.b16 %v8941
        %v9269 = vunpack.c.l.b16 %v8942
        %v9270 = vunpack.c.l.b16 %v8943
        %v9271 = vunpack.c.l.b16 %v8944
        %v9272 = vunpack.c.l.b16 %v8945
        %v9273 = vunpack.c.l.b16 %v8946
        %v9274 = vunpack.c.l.b16 %v8947
        %v9275 = vunpack.c.l.b16 %v8948
        %v9276 = vunpack.c.l.b16 %v8949
        %v9277 = vunpack.c.l.b16 %v8950
        %v9278 = vunpack.c.l.b16 %v8951
        %v9279 = vunpack.c.l.b16 %v8952
        %v9280 = vunpack.c.l.b16 %v8953
        %v9281 = vunpack.c.l.b16 %v8954
        %v9282 = vunpack.c.l.b16 %v8955
        %v9283 = vunpack.c.l.b16 %v8956
        %v9284 = vunpack.c.l.b16 %v8957
        %v9285 = vunpack.c.l.b16 %v8958
        %v9286 = vunpack.c.l.b16 %v8959
        %v9287 = vunpack.c.l.b16 %v8960
        %v9288 = vunpack.c.l.b16 %v8961
        %v9289 = vunpack.c.l.b16 %v8962
        %v9290 = vunpack.c.l.b16 %v8963
        %v9291 = vunpack.c.l.b16 %v8964
        %v9292 = vunpack.c.l.b16 %v8965
        %v9293 = vunpack.c.l.b16 %v8966
        %v9294 = vunpack.c.l.b16 %v8967
        %v9295 = vunpack.c.l.b16 %v8968
        %v9296 = vunpack.c.l.b16 %v8969
        %v9297 = vunpack.c.l.b16 %v8970
        %v9298 = vunpack.c.l.b16 %v8971
        %v9299 = vunpack.c.l.b16 %v8972
        %v9300 = vunpack.c.l.b16 %v8973
        %v9301 = vunpack.c.l.b16 %v8974
        %v9302 = vunpack.c.l.b16 %v8975
        %v9303 = vunpack.c.l.b16 %v8976
        %v9304 = vunpack.c.l.b16 %v8977
        %v9305 = vunpack.c.l.b16 %v8978
        %v9306 = vunpack.c.l.b16 %v8979
        %v9307 = vunpack.c.l.b16 %v8980
        %v9308 = vunpack.c.l.b16 %v8981
        %v9309 = vunpack.c.l.b16 %v8982
        %v9310 = vunpack.c.l.b16 %v8983
        %v9311 = vunpack.c.l.b16 %v8984
        %v9312 = vunpack.c.l.b16 %v8985
        %v9313 = vunpack.c.l.b16 %v8986
        %v9314 = vunpack.c.l.b16 %v8987
        %v9315 = vunpack.c.l.b16 %v8988
        %v9316 = vunpack.c.l.b16 %v8989
        %v9317 = vunpack.c.l.b16 %v8990
        %v9318 = vunpack.c.l.b16 %v8991
        %v9319 = vunpack.c.l.b16 %v8992
        %v9320 = vunpack.c.l.b16 %v8993
        %v9321 = vunpack.c.l.b16 %v8994
        %v9322 = vunpack.c.l.b16 %v8995
        %v9323 = vunpack.c.l.b16 %v8996
        %v9324 = vunpack.c.l.b16 %v8997
        %v9325 = vunpack.c.l.b16 %v8998
        %v9326 = vunpack.c.l.b16 %v8999
        %v9327 = vunpack.c.l.b16 %v9000
        %v9328 = vunpack.c.l.b16 %v9001
        %v9329 = vunpack.c.l.b16 %v9002
        %v9330 = vunpack.c.l.b16 %v9003
        %v9331 = vunpack.c.l.b16 %v9004
        %v9332 = vunpack.c.l.b16 %v9005
        %v9333 = vunpack.c.l.b16 %v9006
        %v9334 = vunpack.c.l.b16 %v9007
        %v9335 = vunpack.c.l.b16 %v9008
        %v9336 = vunpack.c.l.b16 %v9009
        %v9337 = vunpack.c.l.b16 %v9010
        %v9338 = vunpack.c.l.b16 %v9011
        %v9339 = vunpack.c.l.b16 %v9012
        %v9340 = vunpack.c.l.b16 %v9013
        %v9341 = vunpack.c.l.b16 %v9014
        %v9342 = vunpack.c.l.b16 %v9015
        %v9343 = vunpack.c.l.b16 %v9016
        %v9344 = vunpack.c.l.b16 %v9017
        %v9345 = vunpack.c.l.b16 %v9018
        %v9346 = vunpack.c.l.b16 %v9019
        %v9347 = vunpack.c.l.b16 %v9020
        %v9348 = vunpack.c.l.b16 %v9021
        %v9349 = vunpack.c.l.b16 %v9022
        %v9350 = vunpack.c.l.b16 %v9023
        %v9351 = vunpack.c.l.b16 %v9024
        %v9352 = vunpack.c.l.b16 %v9025
        %v9353 = vunpack.c.l.b16 %v9026
        %v9354 = vunpack.c.l.b16 %v9027
        %v9355 = vunpack.c.l.b16 %v9028
        %v9356 = vunpack.c.l.b16 %v9029
        %v9357 = vunpack.c.l.b16 %v9030
        %v9358 = vunpack.c.l.b16 %v9031
        %v9359 = vunpack.c.l.b16 %v9032
        %v9360 = vunpack.c.l.b16 %v9033
        %v9361 = vunpack.c.l.b16 %v9034
        %v9362 = vunpack.c.l.b16 %v9035
        %v9363 = vunpack.c.l.b16 %v9036
        %v9364 = vpack.c.b16 %v9237, %v9236
        %v9365 = vpack.c.b16 %v9239, %v9238
        %v9366 = vpack.c.b16 %v9241, %v9240
        %v9367 = vpack.c.b16 %v9243, %v9242
        %v9368 = vpack.c.b16 %v9245, %v9244
        %v9369 = vpack.c.b16 %v9247, %v9246
        %v9370 = vpack.c.b16 %v9249, %v9248
        %v9371 = vpack.c.b16 %v9251, %v9250
        %v9372 = vpack.c.b16 %v9253, %v9252
        %v9373 = vpack.c.b16 %v9255, %v9254
        %v9374 = vpack.c.b16 %v9257, %v9256
        %v9375 = vpack.c.b16 %v9259, %v9258
        %v9376 = vpack.c.b16 %v9261, %v9260
        %v9377 = vpack.c.b16 %v9263, %v9262
        %v9378 = vpack.c.b16 %v9265, %v9264
        %v9379 = vpack.c.b16 %v9267, %v9266
        %v9380 = vpack.c.b16 %v9269, %v9268
        %v9381 = vpack.c.b16 %v9271, %v9270
        %v9382 = vpack.c.b16 %v9273, %v9272
        %v9383 = vpack.c.b16 %v9275, %v9274
        %v9384 = vpack.c.b16 %v9277, %v9276
        %v9385 = vpack.c.b16 %v9279, %v9278
        %v9386 = vpack.c.b16 %v9281, %v9280
        %v9387 = vpack.c.b16 %v9283, %v9282
        %v9388 = vpack.c.b16 %v9285, %v9284
        %v9389 = vpack.c.b16 %v9287, %v9286
        %v9390 = vpack.c.b16 %v9289, %v9288
        %v9391 = vpack.c.b16 %v9291, %v9290
        %v9392 = vpack.c.b16 %v9293, %v9292
        %v9393 = vpack.c.b16 %v9295, %v9294
        %v9394 = vpack.c.b16 %v9297, %v9296
        %v9395 = vpack.c.b16 %v9299, %v9298
        %v9396 = vpack.c.b16 %v9301, %v9300
        %v9397 = vpack.c.b16 %v9303, %v9302
        %v9398 = vpack.c.b16 %v9305, %v9304
        %v9399 = vpack.c.b16 %v9307, %v9306
        %v9400 = vpack.c.b16 %v9309, %v9308
        %v9401 = vpack.c.b16 %v9311, %v9310
        %v9402 = vpack.c.b16 %v9313, %v9312
        %v9403 = vpack.c.b16 %v9315, %v9314
        %v9404 = vpack.c.b16 %v9317, %v9316
        %v9405 = vpack.c.b16 %v9319, %v9318
        %v9406 = vpack.c.b16 %v9321, %v9320
        %v9407 = vpack.c.b16 %v9323, %v9322
        %v9408 = vpack.c.b16 %v9325, %v9324
        %v9409 = vpack.c.b16 %v9327, %v9326
        %v9410 = vpack.c.b16 %v9329, %v9328
        %v9411 = vpack.c.b16 %v9331, %v9330
        %v9412 = vpack.c.b16 %v9333, %v9332
        %v9413 = vpack.c.b16 %v9335, %v9334
        %v9414 = vpack.c.b16 %v9337, %v9336
        %v9415 = vpack.c.b16 %v9339, %v9338
        %v9416 = vpack.c.b16 %v9341, %v9340
        %v9417 = vpack.c.b16 %v9343, %v9342
        %v9418 = vpack.c.b16 %v9345, %v9344
        %v9419 = vpack.c.b16 %v9347, %v9346
        %v9420 = vpack.c.b16 %v9349, %v9348
        %v9421 = vpack.c.b16 %v9351, %v9350
        %v9422 = vpack.c.b16 %v9353, %v9352
        %v9423 = vpack.c.b16 %v9355, %v9354
        %v9424 = vpack.c.b16 %v9357, %v9356
        %v9425 = vpack.c.b16 %v9359, %v9358
        %v9426 = vpack.c.b16 %v9361, %v9360
        %v9427 = vpack.c.b16 %v9363, %v9362
        %9492 = vmatprep.subr.bf16.mxu0 0
        %9493 = vmatpush1.bf16.msra.mxu0 %v9364
        %9494 = vmatprep.subr.bf16.mxu0 0
        %9495 = vmatpush1.bf16.msra.mxu0 %v9365
        %9496 = vmatprep.subr.bf16.mxu0 0
        %9497 = vmatpush1.bf16.msra.mxu0 %v9366
        %9498 = vmatprep.subr.bf16.mxu0 0
        %9499 = vmatpush1.bf16.msra.mxu0 %v9367
        %9500 = vmatprep.subr.bf16.mxu0 0
        %9501 = vmatpush1.bf16.msra.mxu0 %v9368
        %9502 = vmatprep.subr.bf16.mxu0 0
        %9503 = vmatpush1.bf16.msra.mxu0 %v9369
        %9504 = vmatprep.subr.bf16.mxu0 0
        %9505 = vmatpush1.bf16.msra.mxu0 %v9370
        %9506 = vmatprep.subr.bf16.mxu0 0
        %9507 = vmatpush1.bf16.msra.mxu0 %v9371
        %9508 = vmatprep.subr.bf16.mxu0 0
        %9509 = vmatpush1.bf16.msra.mxu0 %v9372
        %9510 = vmatprep.subr.bf16.mxu0 0
        %9511 = vmatpush1.bf16.msra.mxu0 %v9373
        %9512 = vmatprep.subr.bf16.mxu0 0
        %9513 = vmatpush1.bf16.msra.mxu0 %v9374
        %9514 = vmatprep.subr.bf16.mxu0 0
        %9515 = vmatpush1.bf16.msra.mxu0 %v9375
        %9516 = vmatprep.subr.bf16.mxu0 0
        %9517 = vmatpush1.bf16.msra.mxu0 %v9376
        %9518 = vmatprep.subr.bf16.mxu0 0
        %9519 = vmatpush1.bf16.msra.mxu0 %v9377
        %9520 = vmatprep.subr.bf16.mxu0 0
        %9521 = vmatpush1.bf16.msra.mxu0 %v9378
        %9522 = vmatprep.subr.bf16.mxu0 0
        %9523 = vmatpush1.bf16.msra.mxu0 %v9379
        %9524 = vmatprep.mubr.bf16.mxu0 %v9045
        %9525 = vmatmul.mubr.bf16.gmra.mrb[0].mxu0 %v9044
        %v9526 = vpop.f32.mrb[0].mxu0
        %v9527 = vadd.f32 %v9042, %v9526
        %v9528 = vpop.f32.mrb[0].mxu0
        %v9529 = vpop.f32.mrb[0].mxu0
        %v9530 = vadd.f32 %v9042, %v9529
        %v9531 = vpop.f32.mrb[0].mxu0
        %9532 = vmatprep.mubr.bf16.mxu0 %v9053
        %9533 = vmatmul.mubr.bf16.gmra.mrb[0].mxu0 %v9052
        %v9534 = vpop.f32.mrb[0].mxu0
        %v9535 = vadd.f32 %v9042, %v9534
        %v9536 = vpop.f32.mrb[0].mxu0
        %v9537 = vpop.f32.mrb[0].mxu0
        %v9538 = vadd.f32 %v9042, %v9537
        %v9539 = vpop.f32.mrb[0].mxu0
        %9540 = vmatprep.mubr.bf16.mxu0 %v9061
        %9541 = vmatmul.mubr.bf16.gmra.mrb[0].mxu0 %v9060
        %v9542 = vpop.f32.mrb[0].mxu0
        %v9543 = vadd.f32 %v9042, %v9542
        %v9544 = vpop.f32.mrb[0].mxu0
        %v9545 = vpop.f32.mrb[0].mxu0
        %v9546 = vadd.f32 %v9042, %v9545
        %v9547 = vpop.f32.mrb[0].mxu0
        %9548 = vmatprep.mubr.bf16.mxu0 %v9069
        %9549 = vmatmul.mubr.bf16.gmra.mrb[0].mxu0 %v9068
        %v9550 = vpop.f32.mrb[0].mxu0
        %v9551 = vadd.f32 %v9042, %v9550
        %v9552 = vpop.f32.mrb[0].mxu0
        %v9553 = vpop.f32.mrb[0].mxu0
        %v9554 = vadd.f32 %v9042, %v9553
        %v9555 = vpop.f32.mrb[0].mxu0
        %9556 = vdwg.mxu0
        %9557 = vmatprep.subr.bf16.mxu0 0
        %9558 = vmatpush1.bf16.msra.mxu0 %v9380
        %9559 = vmatprep.subr.bf16.mxu0 0
        %9560 = vmatpush1.bf16.msra.mxu0 %v9381
        %9561 = vmatprep.subr.bf16.mxu0 0
        %9562 = vmatpush1.bf16.msra.mxu0 %v9382
        %9563 = vmatprep.subr.bf16.mxu0 0
        %9564 = vmatpush1.bf16.msra.mxu0 %v9383
        %9565 = vmatprep.subr.bf16.mxu0 0
        %9566 = vmatpush1.bf16.msra.mxu0 %v9384
        %9567 = vmatprep.subr.bf16.mxu0 0
        %9568 = vmatpush1.bf16.msra.mxu0 %v9385
        %9569 = vmatprep.subr.bf16.mxu0 0
        %9570 = vmatpush1.bf16.msra.mxu0 %v9386
        %9571 = vmatprep.subr.bf16.mxu0 0
        %9572 = vmatpush1.bf16.msra.mxu0 %v9387
        %9573 = vmatprep.subr.bf16.mxu0 0
        %9574 = vmatpush1.bf16.msra.mxu0 %v9388
        %9575 = vmatprep.subr.bf16.mxu0 0
        %9576 = vmatpush1.bf16.msra.mxu0 %v9389
        %9577 = vmatprep.subr.bf16.mxu0 0
        %9578 = vmatpush1.bf16.msra.mxu0 %v9390
        %9579 = vmatprep.subr.bf16.mxu0 0
        %9580 = vmatpush1.bf16.msra.mxu0 %v9391
        %9581 = vmatprep.subr.bf16.mxu0 0
        %9582 = vmatpush1.bf16.msra.mxu0 %v9392
        %9583 = vmatprep.subr.bf16.mxu0 0
        %9584 = vmatpush1.bf16.msra.mxu0 %v9393
        %9585 = vmatprep.subr.bf16.mxu0 0
        %9586 = vmatpush1.bf16.msra.mxu0 %v9394
        %9587 = vmatprep.subr.bf16.mxu0 0
        %9588 = vmatpush1.bf16.msra.mxu0 %v9395
        %9589 = vmatprep.mubr.bf16.mxu0 %v9047
        %9590 = vmatmul.mubr.bf16.gmra.mrb[0].mxu0 %v9046
        %v9591 = vpop.f32.mrb[0].mxu0
        %v9592 = vadd.f32 %v9527, %v9591
        %v9593 = vpop.f32.mrb[0].mxu0
        %v9594 = vpop.f32.mrb[0].mxu0
        %v9595 = vadd.f32 %v9530, %v9594
        %v9596 = vpop.f32.mrb[0].mxu0
        %9597 = vmatprep.mubr.bf16.mxu0 %v9055
        %9598 = vmatmul.mubr.bf16.gmra.mrb[0].mxu0 %v9054
        %v9599 = vpop.f32.mrb[0].mxu0
        %v9600 = vadd.f32 %v9535, %v9599
        %v9601 = vpop.f32.mrb[0].mxu0
        %v9602 = vpop.f32.mrb[0].mxu0
        %v9603 = vadd.f32 %v9538, %v9602
        %v9604 = vpop.f32.mrb[0].mxu0
        %9605 = vmatprep.mubr.bf16.mxu0 %v9063
        %9606 = vmatmul.mubr.bf16.gmra.mrb[0].mxu0 %v9062
        %v9607 = vpop.f32.mrb[0].mxu0
        %v9608 = vadd.f32 %v9543, %v9607
        %v9609 = vpop.f32.mrb[0].mxu0
        %v9610 = vpop.f32.mrb[0].mxu0
        %v9611 = vadd.f32 %v9546, %v9610
        %v9612 = vpop.f32.mrb[0].mxu0
        %9613 = vmatprep.mubr.bf16.mxu0 %v9071
        %9614 = vmatmul.mubr.bf16.gmra.mrb[0].mxu0 %v9070
        %v9615 = vpop.f32.mrb[0].mxu0
        %v9616 = vadd.f32 %v9551, %v9615
        %v9617 = vpop.f32.mrb[0].mxu0
        %v9618 = vpop.f32.mrb[0].mxu0
        %v9619 = vadd.f32 %v9554, %v9618
        %v9620 = vpop.f32.mrb[0].mxu0
        %9621 = vdwg.mxu0
        %9622 = vmatprep.subr.bf16.mxu0 0
        %9623 = vmatpush1.bf16.msra.mxu0 %v9396
        %9624 = vmatprep.subr.bf16.mxu0 0
        %9625 = vmatpush1.bf16.msra.mxu0 %v9397
        %9626 = vmatprep.subr.bf16.mxu0 0
        %9627 = vmatpush1.bf16.msra.mxu0 %v9398
        %9628 = vmatprep.subr.bf16.mxu0 0
        %9629 = vmatpush1.bf16.msra.mxu0 %v9399
        %9630 = vmatprep.subr.bf16.mxu0 0
        %9631 = vmatpush1.bf16.msra.mxu0 %v9400
        %9632 = vmatprep.subr.bf16.mxu0 0
        %9633 = vmatpush1.bf16.msra.mxu0 %v9401
        %9634 = vmatprep.subr.bf16.mxu0 0
        %9635 = vmatpush1.bf16.msra.mxu0 %v9402
        %9636 = vmatprep.subr.bf16.mxu0 0
        %9637 = vmatpush1.bf16.msra.mxu0 %v9403
        %9638 = vmatprep.subr.bf16.mxu0 0
        %9639 = vmatpush1.bf16.msra.mxu0 %v9404
        %9640 = vmatprep.subr.bf16.mxu0 0
        %9641 = vmatpush1.bf16.msra.mxu0 %v9405
        %9642 = vmatprep.subr.bf16.mxu0 0
        %9643 = vmatpush1.bf16.msra.mxu0 %v9406
        %9644 = vmatprep.subr.bf16.mxu0 0
        %9645 = vmatpush1.bf16.msra.mxu0 %v9407
        %9646 = vmatprep.subr.bf16.mxu0 0
        %9647 = vmatpush1.bf16.msra.mxu0 %v9408
        %9648 = vmatprep.subr.bf16.mxu0 0
        %9649 = vmatpush1.bf16.msra.mxu0 %v9409
        %9650 = vmatprep.subr.bf16.mxu0 0
        %9651 = vmatpush1.bf16.msra.mxu0 %v9410
        %9652 = vmatprep.subr.bf16.mxu0 0
        %9653 = vmatpush1.bf16.msra.mxu0 %v9411
        %9654 = vmatprep.mubr.bf16.mxu0 %v9049
        %9655 = vmatmul.mubr.bf16.gmra.mrb[0].mxu0 %v9048
        %v9656 = vpop.f32.mrb[0].mxu0
        %v9657 = vadd.f32 %v9592, %v9656
        %v9658 = vpop.f32.mrb[0].mxu0
        %v9659 = vpop.f32.mrb[0].mxu0
        %v9660 = vadd.f32 %v9595, %v9659
        %v9661 = vpop.f32.mrb[0].mxu0
        %9662 = vmatprep.mubr.bf16.mxu0 %v9057
        %9663 = vmatmul.mubr.bf16.gmra.mrb[0].mxu0 %v9056
        %v9664 = vpop.f32.mrb[0].mxu0
        %v9665 = vadd.f32 %v9600, %v9664
        %v9666 = vpop.f32.mrb[0].mxu0
        %v9667 = vpop.f32.mrb[0].mxu0
        %v9668 = vadd.f32 %v9603, %v9667
        %v9669 = vpop.f32.mrb[0].mxu0
        %9670 = vmatprep.mubr.bf16.mxu0 %v9065
        %9671 = vmatmul.mubr.bf16.gmra.mrb[0].mxu0 %v9064
        %v9672 = vpop.f32.mrb[0].mxu0
        %v9673 = vadd.f32 %v9608, %v9672
        %v9674 = vpop.f32.mrb[0].mxu0
        %v9675 = vpop.f32.mrb[0].mxu0
        %v9676 = vadd.f32 %v9611, %v9675
        %v9677 = vpop.f32.mrb[0].mxu0
        %9678 = vmatprep.mubr.bf16.mxu0 %v9073
        %9679 = vmatmul.mubr.bf16.gmra.mrb[0].mxu0 %v9072
        %v9680 = vpop.f32.mrb[0].mxu0
        %v9681 = vadd.f32 %v9616, %v9680
        %v9682 = vpop.f32.mrb[0].mxu0
        %v9683 = vpop.f32.mrb[0].mxu0
        %v9684 = vadd.f32 %v9619, %v9683
        %v9685 = vpop.f32.mrb[0].mxu0
        %9686 = vdwg.mxu0
        %9687 = vmatprep.subr.bf16.mxu0 0
        %9688 = vmatpush1.bf16.msra.mxu0 %v9412
        %9689 = vmatprep.subr.bf16.mxu0 0
        %9690 = vmatpush1.bf16.msra.mxu0 %v9413
        %9691 = vmatprep.subr.bf16.mxu0 0
        %9692 = vmatpush1.bf16.msra.mxu0 %v9414
        %9693 = vmatprep.subr.bf16.mxu0 0
        %9694 = vmatpush1.bf16.msra.mxu0 %v9415
        %9695 = vmatprep.subr.bf16.mxu0 0
        %9696 = vmatpush1.bf16.msra.mxu0 %v9416
        %9697 = vmatprep.subr.bf16.mxu0 0
        %9698 = vmatpush1.bf16.msra.mxu0 %v9417
        %9699 = vmatprep.subr.bf16.mxu0 0
        %9700 = vmatpush1.bf16.msra.mxu0 %v9418
        %9701 = vmatprep.subr.bf16.mxu0 0
        %9702 = vmatpush1.bf16.msra.mxu0 %v9419
        %9703 = vmatprep.subr.bf16.mxu0 0
        %9704 = vmatpush1.bf16.msra.mxu0 %v9420
        %9705 = vmatprep.subr.bf16.mxu0 0
        %9706 = vmatpush1.bf16.msra.mxu0 %v9421
        %9707 = vmatprep.subr.bf16.mxu0 0
        %9708 = vmatpush1.bf16.msra.mxu0 %v9422
        %9709 = vmatprep.subr.bf16.mxu0 0
        %9710 = vmatpush1.bf16.msra.mxu0 %v9423
        %9711 = vmatprep.subr.bf16.mxu0 0
        %9712 = vmatpush1.bf16.msra.mxu0 %v9424
        %9713 = vmatprep.subr.bf16.mxu0 0
        %9714 = vmatpush1.bf16.msra.mxu0 %v9425
        %9715 = vmatprep.subr.bf16.mxu0 0
        %9716 = vmatpush1.bf16.msra.mxu0 %v9426
        %9717 = vmatprep.subr.bf16.mxu0 0
        %9718 = vmatpush1.bf16.msra.mxu0 %v9427
        %9719 = vmatprep.mubr.bf16.mxu0 %v9051
        %9720 = vmatmul.mubr.bf16.gmra.mrb[0].mxu0 %v9050
        %v9721 = vpop.f32.mrb[0].mxu0
        %v9722 = vadd.f32 %v9657, %v9721
        %v9723 = vpop.f32.mrb[0].mxu0
        %v9724 = vpop.f32.mrb[0].mxu0
        %v9725 = vadd.f32 %v9660, %v9724
        %v9726 = vpop.f32.mrb[0].mxu0
        %9727 = vmatprep.mubr.bf16.mxu0 %v9059
        %9728 = vmatmul.mubr.bf16.gmra.mrb[0].mxu0 %v9058
        %v9729 = vpop.f32.mrb[0].mxu0
        %v9730 = vadd.f32 %v9665, %v9729
        %v9731 = vpop.f32.mrb[0].mxu0
        %v9732 = vpop.f32.mrb[0].mxu0
        %v9733 = vadd.f32 %v9668, %v9732
        %v9734 = vpop.f32.mrb[0].mxu0
        %9735 = vmatprep.mubr.bf16.mxu0 %v9067
        %9736 = vmatmul.mubr.bf16.gmra.mrb[0].mxu0 %v9066
        %v9737 = vpop.f32.mrb[0].mxu0
        %v9738 = vadd.f32 %v9673, %v9737
        %v9739 = vpop.f32.mrb[0].mxu0
        %v9740 = vpop.f32.mrb[0].mxu0
        %v9741 = vadd.f32 %v9676, %v9740
        %v9742 = vpop.f32.mrb[0].mxu0
        %9743 = vmatprep.mubr.bf16.mxu0 %v9075
        %9744 = vmatmul.mubr.bf16.gmra.mrb[0].mxu0 %v9074
        %v9745 = vpop.f32.mrb[0].mxu0
        %v9746 = vadd.f32 %v9681, %v9745
        %v9747 = vpop.f32.mrb[0].mxu0
        %v9748 = vpop.f32.mrb[0].mxu0
        %v9749 = vadd.f32 %v9684, %v9748
        %v9750 = vpop.f32.mrb[0].mxu0
        %9751 = vdwg.mxu0
        %v9752 = vmax.f32 %v9722, 0.0
        %v9753 = vmax.f32 %v9725, 0.0
        %v9754 = vmax.f32 %v9730, 0.0
        %v9755 = vmax.f32 %v9733, 0.0
        %v9756 = vmax.f32 %v9738, 0.0
        %v9757 = vmax.f32 %v9741, 0.0
        %v9758 = vmax.f32 %v9746, 0.0
        %v9759 = vmax.f32 %v9749, 0.0
        %v9760 = vpack.c.bf16 %v9753, %v9752
        %v9761 = vpack.c.bf16 %v9755, %v9754
        %v9762 = vpack.c.bf16 %v9757, %v9756
        %v9763 = vpack.c.bf16 %v9759, %v9758
        %v9765 = vshrl.u32 %v9760, 16
        %9767 = vrot.lane.b32.xlu0 %v9765, 64
        %v9768 = vpop.permute.xlu0 %9767
        %v9770 = vrot.slane %v9760, 1
        %v9771 = vrot.slane %v9765, 1
        %9772 = vrot.lane.b32.xlu0 %v9771, 64
        %v9773 = vpop.permute.xlu0 %9772
        %v9774 = vrot.slane %v9760, 2
        %v9775 = vrot.slane %v9765, 2
        %9776 = vrot.lane.b32.xlu0 %v9775, 64
        %v9777 = vpop.permute.xlu0 %9776
        %v9778 = vrot.slane %v9760, 3
        %v9779 = vrot.slane %v9765, 3
        %9780 = vrot.lane.b32.xlu0 %v9779, 64
        %v9781 = vpop.permute.xlu0 %9780
        %v9782 = vrot.slane %v9760, 4
        %v9783 = vrot.slane %v9765, 4
        %9784 = vrot.lane.b32.xlu0 %v9783, 64
        %v9785 = vpop.permute.xlu0 %9784
        %v9786 = vrot.slane %v9760, 5
        %v9787 = vrot.slane %v9765, 5
        %9788 = vrot.lane.b32.xlu0 %v9787, 64
        %v9789 = vpop.permute.xlu0 %9788
        %v9790 = vrot.slane %v9760, 6
        %v9791 = vrot.slane %v9765, 6
        %9792 = vrot.lane.b32.xlu0 %v9791, 64
        %v9793 = vpop.permute.xlu0 %9792
        %v9794 = vrot.slane %v9760, 7
        %v9795 = vrot.slane %v9765, 7
        %9796 = vrot.lane.b32.xlu0 %v9795, 64
        %v9797 = vpop.permute.xlu0 %9796
        %v9799 = vsel %vm4256, %v9760, %v9768
        %v9803 = vsel %vm4256, %v9770, %v9773
        %v9807 = vsel %vm4256, %v9774, %v9777
        %v9811 = vsel %vm4256, %v9778, %v9781
        %v9815 = vsel %vm4256, %v9782, %v9785
        %v9819 = vsel %vm4256, %v9786, %v9789
        %v9823 = vsel %vm4256, %v9790, %v9793
        %v9827 = vsel %vm4256, %v9794, %v9797
        %v9830 = vshrl.u32 %v9761, 16
        %9832 = vrot.lane.b32.xlu0 %v9830, 64
        %v9833 = vpop.permute.xlu0 %9832
        %v9835 = vrot.slane %v9761, 1
        %v9836 = vrot.slane %v9830, 1
        %9837 = vrot.lane.b32.xlu0 %v9836, 64
        %v9838 = vpop.permute.xlu0 %9837
        %v9839 = vrot.slane %v9761, 2
        %v9840 = vrot.slane %v9830, 2
        %9841 = vrot.lane.b32.xlu0 %v9840, 64
        %v9842 = vpop.permute.xlu0 %9841
        %v9843 = vrot.slane %v9761, 3
        %v9844 = vrot.slane %v9830, 3
        %9845 = vrot.lane.b32.xlu0 %v9844, 64
        %v9846 = vpop.permute.xlu0 %9845
        %v9847 = vrot.slane %v9761, 4
        %v9848 = vrot.slane %v9830, 4
        %9849 = vrot.lane.b32.xlu0 %v9848, 64
        %v9850 = vpop.permute.xlu0 %9849
        %v9851 = vrot.slane %v9761, 5
        %v9852 = vrot.slane %v9830, 5
        %9853 = vrot.lane.b32.xlu0 %v9852, 64
        %v9854 = vpop.permute.xlu0 %9853
        %v9855 = vrot.slane %v9761, 6
        %v9856 = vrot.slane %v9830, 6
        %9857 = vrot.lane.b32.xlu0 %v9856, 64
        %v9858 = vpop.permute.xlu0 %9857
        %v9859 = vrot.slane %v9761, 7
        %v9860 = vrot.slane %v9830, 7
        %9861 = vrot.lane.b32.xlu0 %v9860, 64
        %v9862 = vpop.permute.xlu0 %9861
        %v9864 = vsel %vm4256, %v9761, %v9833
        %v9868 = vsel %vm4256, %v9835, %v9838
        %v9872 = vsel %vm4256, %v9839, %v9842
        %v9876 = vsel %vm4256, %v9843, %v9846
        %v9880 = vsel %vm4256, %v9847, %v9850
        %v9884 = vsel %vm4256, %v9851, %v9854
        %v9888 = vsel %vm4256, %v9855, %v9858
        %v9892 = vsel %vm4256, %v9859, %v9862
        %v9895 = vshrl.u32 %v9762, 16
        %9897 = vrot.lane.b32.xlu0 %v9895, 64
        %v9898 = vpop.permute.xlu0 %9897
        %v9900 = vrot.slane %v9762, 1
        %v9901 = vrot.slane %v9895, 1
        %9902 = vrot.lane.b32.xlu0 %v9901, 64
        %v9903 = vpop.permute.xlu0 %9902
        %v9904 = vrot.slane %v9762, 2
        %v9905 = vrot.slane %v9895, 2
        %9906 = vrot.lane.b32.xlu0 %v9905, 64
        %v9907 = vpop.permute.xlu0 %9906
        %v9908 = vrot.slane %v9762, 3
        %v9909 = vrot.slane %v9895, 3
        %9910 = vrot.lane.b32.xlu0 %v9909, 64
        %v9911 = vpop.permute.xlu0 %9910
        %v9912 = vrot.slane %v9762, 4
        %v9913 = vrot.slane %v9895, 4
        %9914 = vrot.lane.b32.xlu0 %v9913, 64
        %v9915 = vpop.permute.xlu0 %9914
        %v9916 = vrot.slane %v9762, 5
        %v9917 = vrot.slane %v9895, 5
        %9918 = vrot.lane.b32.xlu0 %v9917, 64
        %v9919 = vpop.permute.xlu0 %9918
        %v9920 = vrot.slane %v9762, 6
        %v9921 = vrot.slane %v9895, 6
        %9922 = vrot.lane.b32.xlu0 %v9921, 64
        %v9923 = vpop.permute.xlu0 %9922
        %v9924 = vrot.slane %v9762, 7
        %v9925 = vrot.slane %v9895, 7
        %9926 = vrot.lane.b32.xlu0 %v9925, 64
        %v9927 = vpop.permute.xlu0 %9926
        %v9929 = vsel %vm4256, %v9762, %v9898
        %v9933 = vsel %vm4256, %v9900, %v9903
        %v9937 = vsel %vm4256, %v9904, %v9907
        %v9941 = vsel %vm4256, %v9908, %v9911
        %v9945 = vsel %vm4256, %v9912, %v9915
        %v9949 = vsel %vm4256, %v9916, %v9919
        %v9953 = vsel %vm4256, %v9920, %v9923
        %v9957 = vsel %vm4256, %v9924, %v9927
        %v9960 = vshrl.u32 %v9763, 16
        %9962 = vrot.lane.b32.xlu0 %v9960, 64
        %v9963 = vpop.permute.xlu0 %9962
        %v9965 = vrot.slane %v9763, 1
        %v9966 = vrot.slane %v9960, 1
        %9967 = vrot.lane.b32.xlu0 %v9966, 64
        %v9968 = vpop.permute.xlu0 %9967
        %v9969 = vrot.slane %v9763, 2
        %v9970 = vrot.slane %v9960, 2
        %9971 = vrot.lane.b32.xlu0 %v9970, 64
        %v9972 = vpop.permute.xlu0 %9971
        %v9973 = vrot.slane %v9763, 3
        %v9974 = vrot.slane %v9960, 3
        %9975 = vrot.lane.b32.xlu0 %v9974, 64
        %v9976 = vpop.permute.xlu0 %9975
        %v9977 = vrot.slane %v9763, 4
        %v9978 = vrot.slane %v9960, 4
        %9979 = vrot.lane.b32.xlu0 %v9978, 64
        %v9980 = vpop.permute.xlu0 %9979
        %v9981 = vrot.slane %v9763, 5
        %v9982 = vrot.slane %v9960, 5
        %9983 = vrot.lane.b32.xlu0 %v9982, 64
        %v9984 = vpop.permute.xlu0 %9983
        %v9985 = vrot.slane %v9763, 6
        %v9986 = vrot.slane %v9960, 6
        %9987 = vrot.lane.b32.xlu0 %v9986, 64
        %v9988 = vpop.permute.xlu0 %9987
        %v9989 = vrot.slane %v9763, 7
        %v9990 = vrot.slane %v9960, 7
        %9991 = vrot.lane.b32.xlu0 %v9990, 64
        %v9992 = vpop.permute.xlu0 %9991
        %v9994 = vsel %vm4256, %v9763, %v9963
        %v9998 = vsel %vm4256, %v9965, %v9968
        %v10002 = vsel %vm4256, %v9969, %v9972
        %v10006 = vsel %vm4256, %v9973, %v9976
        %v10010 = vsel %vm4256, %v9977, %v9980
        %v10014 = vsel %vm4256, %v9981, %v9984
        %v10018 = vsel %vm4256, %v9985, %v9988
        %v10022 = vsel %vm4256, %v9989, %v9992
        %v10024 = vld [vmem:[%s7] sm:$0xf]
        %v10025 = vld [vmem:[%s7 + $0x4] sm:$0xf]
        %v10026 = vld [vmem:[%s7 + $0x8] sm:$0xf]
        %v10027 = vld [vmem:[%s7 + $0xc] sm:$0xf]
        %v10028 = vld [vmem:[%s7 + $0x10] sm:$0xf]
        %v10029 = vld [vmem:[%s7 + $0x14] sm:$0xf]
        %v10030 = vld [vmem:[%s7 + $0x18] sm:$0xf]
        %v10031 = vld [vmem:[%s7 + $0x1c] sm:$0xf]
        %v10032 = vld [vmem:[%s7 + $0x20] sm:$0xf]
        %v10033 = vld [vmem:[%s7 + $0x24] sm:$0xf]
        %v10034 = vld [vmem:[%s7 + $0x28] sm:$0xf]
        %v10035 = vld [vmem:[%s7 + $0x2c] sm:$0xf]
        %v10036 = vld [vmem:[%s7 + $0x30] sm:$0xf]
        %v10037 = vld [vmem:[%s7 + $0x34] sm:$0xf]
        %v10038 = vld [vmem:[%s7 + $0x38] sm:$0xf]
        %v10039 = vld [vmem:[%s7 + $0x3c] sm:$0xf]
        %v10040 = vld [vmem:[%s7 + $0x40] sm:$0xf]
        %v10041 = vld [vmem:[%s7 + $0x44] sm:$0xf]
        %v10042 = vld [vmem:[%s7 + $0x48] sm:$0xf]
        %v10043 = vld [vmem:[%s7 + $0x4c] sm:$0xf]
        %v10044 = vld [vmem:[%s7 + $0x50] sm:$0xf]
        %v10045 = vld [vmem:[%s7 + $0x54] sm:$0xf]
        %v10046 = vld [vmem:[%s7 + $0x58] sm:$0xf]
        %v10047 = vld [vmem:[%s7 + $0x5c] sm:$0xf]
        %v10048 = vld [vmem:[%s7 + $0x60] sm:$0xf]
        %v10049 = vld [vmem:[%s7 + $0x64] sm:$0xf]
        %v10050 = vld [vmem:[%s7 + $0x68] sm:$0xf]
        %v10051 = vld [vmem:[%s7 + $0x6c] sm:$0xf]
        %v10052 = vld [vmem:[%s7 + $0x70] sm:$0xf]
        %v10053 = vld [vmem:[%s7 + $0x74] sm:$0xf]
        %v10054 = vld [vmem:[%s7 + $0x78] sm:$0xf]
        %v10055 = vld [vmem:[%s7 + $0x7c] sm:$0xf]
        %v10056 = vld [vmem:[%s7 + $0x80] sm:$0xf]
        %v10057 = vld [vmem:[%s7 + $0x84] sm:$0xf]
        %v10058 = vld [vmem:[%s7 + $0x88] sm:$0xf]
        %v10059 = vld [vmem:[%s7 + $0x8c] sm:$0xf]
        %v10060 = vld [vmem:[%s7 + $0x90] sm:$0xf]
        %v10061 = vld [vmem:[%s7 + $0x94] sm:$0xf]
        %v10062 = vld [vmem:[%s7 + $0x98] sm:$0xf]
        %v10063 = vld [vmem:[%s7 + $0x9c] sm:$0xf]
        %v10064 = vld [vmem:[%s7 + $0xa0] sm:$0xf]
        %v10065 = vld [vmem:[%s7 + $0xa4] sm:$0xf]
        %v10066 = vld [vmem:[%s7 + $0xa8] sm:$0xf]
        %v10067 = vld [vmem:[%s7 + $0xac] sm:$0xf]
        %v10068 = vld [vmem:[%s7 + $0xb0] sm:$0xf]
        %v10069 = vld [vmem:[%s7 + $0xb4] sm:$0xf]
        %v10070 = vld [vmem:[%s7 + $0xb8] sm:$0xf]
        %v10071 = vld [vmem:[%s7 + $0xbc] sm:$0xf]
        %v10072 = vld [vmem:[%s7 + $0xc0] sm:$0xf]
        %v10073 = vld [vmem:[%s7 + $0xc4] sm:$0xf]
        %v10074 = vld [vmem:[%s7 + $0xc8] sm:$0xf]
        %v10075 = vld [vmem:[%s7 + $0xcc] sm:$0xf]
        %v10076 = vld [vmem:[%s7 + $0xd0] sm:$0xf]
        %v10077 = vld [vmem:[%s7 + $0xd4] sm:$0xf]
        %v10078 = vld [vmem:[%s7 + $0xd8] sm:$0xf]
        %v10079 = vld [vmem:[%s7 + $0xdc] sm:$0xf]
        %v10080 = vld [vmem:[%s7 + $0xe0] sm:$0xf]
        %v10081 = vld [vmem:[%s7 + $0xe4] sm:$0xf]
        %v10082 = vld [vmem:[%s7 + $0xe8] sm:$0xf]
        %v10083 = vld [vmem:[%s7 + $0xec] sm:$0xf]
        %v10084 = vld [vmem:[%s7 + $0xf0] sm:$0xf]
        %v10085 = vld [vmem:[%s7 + $0xf4] sm:$0xf]
        %v10086 = vld [vmem:[%s7 + $0xf8] sm:$0xf]
        %v10087 = vld [vmem:[%s7 + $0xfc] sm:$0xf]
        %v10088 = vld [vmem:[%s7 + $0x100] sm:$0xf]
        %v10089 = vld [vmem:[%s7 + $0x104] sm:$0xf]
        %v10090 = vld [vmem:[%s7 + $0x108] sm:$0xf]
        %v10091 = vld [vmem:[%s7 + $0x10c] sm:$0xf]
        %v10092 = vld [vmem:[%s7 + $0x110] sm:$0xf]
        %v10093 = vld [vmem:[%s7 + $0x114] sm:$0xf]
        %v10094 = vld [vmem:[%s7 + $0x118] sm:$0xf]
        %v10095 = vld [vmem:[%s7 + $0x11c] sm:$0xf]
        %v10096 = vld [vmem:[%s7 + $0x120] sm:$0xf]
        %v10097 = vld [vmem:[%s7 + $0x124] sm:$0xf]
        %v10098 = vld [vmem:[%s7 + $0x128] sm:$0xf]
        %v10099 = vld [vmem:[%s7 + $0x12c] sm:$0xf]
        %v10100 = vld [vmem:[%s7 + $0x130] sm:$0xf]
        %v10101 = vld [vmem:[%s7 + $0x134] sm:$0xf]
        %v10102 = vld [vmem:[%s7 + $0x138] sm:$0xf]
        %v10103 = vld [vmem:[%s7 + $0x13c] sm:$0xf]
        %v10104 = vld [vmem:[%s7 + $0x140] sm:$0xf]
        %v10105 = vld [vmem:[%s7 + $0x144] sm:$0xf]
        %v10106 = vld [vmem:[%s7 + $0x148] sm:$0xf]
        %v10107 = vld [vmem:[%s7 + $0x14c] sm:$0xf]
        %v10108 = vld [vmem:[%s7 + $0x150] sm:$0xf]
        %v10109 = vld [vmem:[%s7 + $0x154] sm:$0xf]
        %v10110 = vld [vmem:[%s7 + $0x158] sm:$0xf]
        %v10111 = vld [vmem:[%s7 + $0x15c] sm:$0xf]
        %v10112 = vld [vmem:[%s7 + $0x160] sm:$0xf]
        %v10113 = vld [vmem:[%s7 + $0x164] sm:$0xf]
        %v10114 = vld [vmem:[%s7 + $0x168] sm:$0xf]
        %v10115 = vld [vmem:[%s7 + $0x16c] sm:$0xf]
        %v10116 = vld [vmem:[%s7 + $0x170] sm:$0xf]
        %v10117 = vld [vmem:[%s7 + $0x174] sm:$0xf]
        %v10118 = vld [vmem:[%s7 + $0x178] sm:$0xf]
        %v10119 = vld [vmem:[%s7 + $0x17c] sm:$0xf]
        %v10120 = vld [vmem:[%s7 + $0x180] sm:$0xf]
        %v10121 = vld [vmem:[%s7 + $0x184] sm:$0xf]
        %v10122 = vld [vmem:[%s7 + $0x188] sm:$0xf]
        %v10123 = vld [vmem:[%s7 + $0x18c] sm:$0xf]
        %v10124 = vld [vmem:[%s7 + $0x190] sm:$0xf]
        %v10125 = vld [vmem:[%s7 + $0x194] sm:$0xf]
        %v10126 = vld [vmem:[%s7 + $0x198] sm:$0xf]
        %v10127 = vld [vmem:[%s7 + $0x19c] sm:$0xf]
        %v10128 = vld [vmem:[%s7 + $0x1a0] sm:$0xf]
        %v10129 = vld [vmem:[%s7 + $0x1a4] sm:$0xf]
        %v10130 = vld [vmem:[%s7 + $0x1a8] sm:$0xf]
        %v10131 = vld [vmem:[%s7 + $0x1ac] sm:$0xf]
        %v10132 = vld [vmem:[%s7 + $0x1b0] sm:$0xf]
        %v10133 = vld [vmem:[%s7 + $0x1b4] sm:$0xf]
        %v10134 = vld [vmem:[%s7 + $0x1b8] sm:$0xf]
        %v10135 = vld [vmem:[%s7 + $0x1bc] sm:$0xf]
        %v10136 = vld [vmem:[%s7 + $0x1c0] sm:$0xf]
        %v10137 = vld [vmem:[%s7 + $0x1c4] sm:$0xf]
        %v10138 = vld [vmem:[%s7 + $0x1c8] sm:$0xf]
        %v10139 = vld [vmem:[%s7 + $0x1cc] sm:$0xf]
        %v10140 = vld [vmem:[%s7 + $0x1d0] sm:$0xf]
        %v10141 = vld [vmem:[%s7 + $0x1d4] sm:$0xf]
        %v10142 = vld [vmem:[%s7 + $0x1d8] sm:$0xf]
        %v10143 = vld [vmem:[%s7 + $0x1dc] sm:$0xf]
        %v10144 = vld [vmem:[%s7 + $0x1e0] sm:$0xf]
        %v10145 = vld [vmem:[%s7 + $0x1e4] sm:$0xf]
        %v10146 = vld [vmem:[%s7 + $0x1e8] sm:$0xf]
        %v10147 = vld [vmem:[%s7 + $0x1ec] sm:$0xf]
        %v10148 = vld [vmem:[%s7 + $0x1f0] sm:$0xf]
        %v10149 = vld [vmem:[%s7 + $0x1f4] sm:$0xf]
        %v10150 = vld [vmem:[%s7 + $0x1f8] sm:$0xf]
        %v10151 = vld [vmem:[%s7 + $0x1fc] sm:$0xf]
        %v10152 = vld [vmem:[%s7 + $0x200] sm:$0xf]
        %v10153 = vld [vmem:[%s7 + $0x204] sm:$0xf]
        %v10154 = vld [vmem:[%s7 + $0x208] sm:$0xf]
        %v10155 = vld [vmem:[%s7 + $0x20c] sm:$0xf]
        %v10156 = vld [vmem:[%s7 + $0x210] sm:$0xf]
        %v10157 = vld [vmem:[%s7 + $0x214] sm:$0xf]
        %v10158 = vld [vmem:[%s7 + $0x218] sm:$0xf]
        %v10159 = vld [vmem:[%s7 + $0x21c] sm:$0xf]
        %v10160 = vld [vmem:[%s7 + $0x220] sm:$0xf]
        %v10161 = vld [vmem:[%s7 + $0x224] sm:$0xf]
        %v10162 = vld [vmem:[%s7 + $0x228] sm:$0xf]
        %v10163 = vld [vmem:[%s7 + $0x22c] sm:$0xf]
        %v10164 = vld [vmem:[%s7 + $0x230] sm:$0xf]
        %v10165 = vld [vmem:[%s7 + $0x234] sm:$0xf]
        %v10166 = vld [vmem:[%s7 + $0x238] sm:$0xf]
        %v10167 = vld [vmem:[%s7 + $0x23c] sm:$0xf]
        %v10168 = vld [vmem:[%s7 + $0x240] sm:$0xf]
        %v10169 = vld [vmem:[%s7 + $0x244] sm:$0xf]
        %v10170 = vld [vmem:[%s7 + $0x248] sm:$0xf]
        %v10171 = vld [vmem:[%s7 + $0x24c] sm:$0xf]
        %v10172 = vld [vmem:[%s7 + $0x250] sm:$0xf]
        %v10173 = vld [vmem:[%s7 + $0x254] sm:$0xf]
        %v10174 = vld [vmem:[%s7 + $0x258] sm:$0xf]
        %v10175 = vld [vmem:[%s7 + $0x25c] sm:$0xf]
        %v10176 = vld [vmem:[%s7 + $0x260] sm:$0xf]
        %v10177 = vld [vmem:[%s7 + $0x264] sm:$0xf]
        %v10178 = vld [vmem:[%s7 + $0x268] sm:$0xf]
        %v10179 = vld [vmem:[%s7 + $0x26c] sm:$0xf]
        %v10180 = vld [vmem:[%s7 + $0x270] sm:$0xf]
        %v10181 = vld [vmem:[%s7 + $0x274] sm:$0xf]
        %v10182 = vld [vmem:[%s7 + $0x278] sm:$0xf]
        %v10183 = vld [vmem:[%s7 + $0x27c] sm:$0xf]
        %v10184 = vld [vmem:[%s7 + $0x280] sm:$0xf]
        %v10185 = vld [vmem:[%s7 + $0x284] sm:$0xf]
        %v10186 = vld [vmem:[%s7 + $0x288] sm:$0xf]
        %v10187 = vld [vmem:[%s7 + $0x28c] sm:$0xf]
        %v10188 = vld [vmem:[%s7 + $0x290] sm:$0xf]
        %v10189 = vld [vmem:[%s7 + $0x294] sm:$0xf]
        %v10190 = vld [vmem:[%s7 + $0x298] sm:$0xf]
        %v10191 = vld [vmem:[%s7 + $0x29c] sm:$0xf]
        %v10192 = vld [vmem:[%s7 + $0x2a0] sm:$0xf]
        %v10193 = vld [vmem:[%s7 + $0x2a4] sm:$0xf]
        %v10194 = vld [vmem:[%s7 + $0x2a8] sm:$0xf]
        %v10195 = vld [vmem:[%s7 + $0x2ac] sm:$0xf]
        %v10196 = vld [vmem:[%s7 + $0x2b0] sm:$0xf]
        %v10197 = vld [vmem:[%s7 + $0x2b4] sm:$0xf]
        %v10198 = vld [vmem:[%s7 + $0x2b8] sm:$0xf]
        %v10199 = vld [vmem:[%s7 + $0x2bc] sm:$0xf]
        %v10200 = vld [vmem:[%s7 + $0x2c0] sm:$0xf]
        %v10201 = vld [vmem:[%s7 + $0x2c4] sm:$0xf]
        %v10202 = vld [vmem:[%s7 + $0x2c8] sm:$0xf]
        %v10203 = vld [vmem:[%s7 + $0x2cc] sm:$0xf]
        %v10204 = vld [vmem:[%s7 + $0x2d0] sm:$0xf]
        %v10205 = vld [vmem:[%s7 + $0x2d4] sm:$0xf]
        %v10206 = vld [vmem:[%s7 + $0x2d8] sm:$0xf]
        %v10207 = vld [vmem:[%s7 + $0x2dc] sm:$0xf]
        %v10208 = vld [vmem:[%s7 + $0x2e0] sm:$0xf]
        %v10209 = vld [vmem:[%s7 + $0x2e4] sm:$0xf]
        %v10210 = vld [vmem:[%s7 + $0x2e8] sm:$0xf]
        %v10211 = vld [vmem:[%s7 + $0x2ec] sm:$0xf]
        %v10212 = vld [vmem:[%s7 + $0x2f0] sm:$0xf]
        %v10213 = vld [vmem:[%s7 + $0x2f4] sm:$0xf]
        %v10214 = vld [vmem:[%s7 + $0x2f8] sm:$0xf]
        %v10215 = vld [vmem:[%s7 + $0x2fc] sm:$0xf]
        %v10216 = vld [vmem:[%s7 + $0x300] sm:$0xf]
        %v10217 = vld [vmem:[%s7 + $0x304] sm:$0xf]
        %v10218 = vld [vmem:[%s7 + $0x308] sm:$0xf]
        %v10219 = vld [vmem:[%s7 + $0x30c] sm:$0xf]
        %v10220 = vld [vmem:[%s7 + $0x310] sm:$0xf]
        %v10221 = vld [vmem:[%s7 + $0x314] sm:$0xf]
        %v10222 = vld [vmem:[%s7 + $0x318] sm:$0xf]
        %v10223 = vld [vmem:[%s7 + $0x31c] sm:$0xf]
        %v10224 = vld [vmem:[%s7 + $0x320] sm:$0xf]
        %v10225 = vld [vmem:[%s7 + $0x324] sm:$0xf]
        %v10226 = vld [vmem:[%s7 + $0x328] sm:$0xf]
        %v10227 = vld [vmem:[%s7 + $0x32c] sm:$0xf]
        %v10228 = vld [vmem:[%s7 + $0x330] sm:$0xf]
        %v10229 = vld [vmem:[%s7 + $0x334] sm:$0xf]
        %v10230 = vld [vmem:[%s7 + $0x338] sm:$0xf]
        %v10231 = vld [vmem:[%s7 + $0x33c] sm:$0xf]
        %v10232 = vld [vmem:[%s7 + $0x340] sm:$0xf]
        %v10233 = vld [vmem:[%s7 + $0x344] sm:$0xf]
        %v10234 = vld [vmem:[%s7 + $0x348] sm:$0xf]
        %v10235 = vld [vmem:[%s7 + $0x34c] sm:$0xf]
        %v10236 = vld [vmem:[%s7 + $0x350] sm:$0xf]
        %v10237 = vld [vmem:[%s7 + $0x354] sm:$0xf]
        %v10238 = vld [vmem:[%s7 + $0x358] sm:$0xf]
        %v10239 = vld [vmem:[%s7 + $0x35c] sm:$0xf]
        %v10240 = vld [vmem:[%s7 + $0x360] sm:$0xf]
        %v10241 = vld [vmem:[%s7 + $0x364] sm:$0xf]
        %v10242 = vld [vmem:[%s7 + $0x368] sm:$0xf]
        %v10243 = vld [vmem:[%s7 + $0x36c] sm:$0xf]
        %v10244 = vld [vmem:[%s7 + $0x370] sm:$0xf]
        %v10245 = vld [vmem:[%s7 + $0x374] sm:$0xf]
        %v10246 = vld [vmem:[%s7 + $0x378] sm:$0xf]
        %v10247 = vld [vmem:[%s7 + $0x37c] sm:$0xf]
        %v10248 = vld [vmem:[%s7 + $0x380] sm:$0xf]
        %v10249 = vld [vmem:[%s7 + $0x384] sm:$0xf]
        %v10250 = vld [vmem:[%s7 + $0x388] sm:$0xf]
        %v10251 = vld [vmem:[%s7 + $0x38c] sm:$0xf]
        %v10252 = vld [vmem:[%s7 + $0x390] sm:$0xf]
        %v10253 = vld [vmem:[%s7 + $0x394] sm:$0xf]
        %v10254 = vld [vmem:[%s7 + $0x398] sm:$0xf]
        %v10255 = vld [vmem:[%s7 + $0x39c] sm:$0xf]
        %v10256 = vld [vmem:[%s7 + $0x3a0] sm:$0xf]
        %v10257 = vld [vmem:[%s7 + $0x3a4] sm:$0xf]
        %v10258 = vld [vmem:[%s7 + $0x3a8] sm:$0xf]
        %v10259 = vld [vmem:[%s7 + $0x3ac] sm:$0xf]
        %v10260 = vld [vmem:[%s7 + $0x3b0] sm:$0xf]
        %v10261 = vld [vmem:[%s7 + $0x3b4] sm:$0xf]
        %v10262 = vld [vmem:[%s7 + $0x3b8] sm:$0xf]
        %v10263 = vld [vmem:[%s7 + $0x3bc] sm:$0xf]
        %v10264 = vld [vmem:[%s7 + $0x3c0] sm:$0xf]
        %v10265 = vld [vmem:[%s7 + $0x3c4] sm:$0xf]
        %v10266 = vld [vmem:[%s7 + $0x3c8] sm:$0xf]
        %v10267 = vld [vmem:[%s7 + $0x3cc] sm:$0xf]
        %v10268 = vld [vmem:[%s7 + $0x3d0] sm:$0xf]
        %v10269 = vld [vmem:[%s7 + $0x3d4] sm:$0xf]
        %v10270 = vld [vmem:[%s7 + $0x3d8] sm:$0xf]
        %v10271 = vld [vmem:[%s7 + $0x3dc] sm:$0xf]
        %v10272 = vld [vmem:[%s7 + $0x3e0] sm:$0xf]
        %v10273 = vld [vmem:[%s7 + $0x3e4] sm:$0xf]
        %v10274 = vld [vmem:[%s7 + $0x3e8] sm:$0xf]
        %v10275 = vld [vmem:[%s7 + $0x3ec] sm:$0xf]
        %v10276 = vld [vmem:[%s7 + $0x3f0] sm:$0xf]
        %v10277 = vld [vmem:[%s7 + $0x3f4] sm:$0xf]
        %v10278 = vld [vmem:[%s7 + $0x3f8] sm:$0xf]
        %v10279 = vld [vmem:[%s7 + $0x3fc] sm:$0xf]
        %v10280 = vld [vmem:[%s7 + $0x400] sm:$0xf]
        %v10281 = vld [vmem:[%s7 + $0x404] sm:$0xf]
        %v10282 = vld [vmem:[%s7 + $0x408] sm:$0xf]
        %v10283 = vld [vmem:[%s7 + $0x40c] sm:$0xf]
        %v10284 = vld [vmem:[%s7 + $0x410] sm:$0xf]
        %v10285 = vld [vmem:[%s7 + $0x414] sm:$0xf]
        %v10286 = vld [vmem:[%s7 + $0x418] sm:$0xf]
        %v10287 = vld [vmem:[%s7 + $0x41c] sm:$0xf]
        %v10288 = vld [vmem:[%s7 + $0x420] sm:$0xf]
        %v10289 = vld [vmem:[%s7 + $0x424] sm:$0xf]
        %v10290 = vld [vmem:[%s7 + $0x428] sm:$0xf]
        %v10291 = vld [vmem:[%s7 + $0x42c] sm:$0xf]
        %v10292 = vld [vmem:[%s7 + $0x430] sm:$0xf]
        %v10293 = vld [vmem:[%s7 + $0x434] sm:$0xf]
        %v10294 = vld [vmem:[%s7 + $0x438] sm:$0xf]
        %v10295 = vld [vmem:[%s7 + $0x43c] sm:$0xf]
        %v10296 = vld [vmem:[%s7 + $0x440] sm:$0xf]
        %v10297 = vld [vmem:[%s7 + $0x444] sm:$0xf]
        %v10298 = vld [vmem:[%s7 + $0x448] sm:$0xf]
        %v10299 = vld [vmem:[%s7 + $0x44c] sm:$0xf]
        %v10300 = vld [vmem:[%s7 + $0x450] sm:$0xf]
        %v10301 = vld [vmem:[%s7 + $0x454] sm:$0xf]
        %v10302 = vld [vmem:[%s7 + $0x458] sm:$0xf]
        %v10303 = vld [vmem:[%s7 + $0x45c] sm:$0xf]
        %v10304 = vld [vmem:[%s7 + $0x460] sm:$0xf]
        %v10305 = vld [vmem:[%s7 + $0x464] sm:$0xf]
        %v10306 = vld [vmem:[%s7 + $0x468] sm:$0xf]
        %v10307 = vld [vmem:[%s7 + $0x46c] sm:$0xf]
        %v10308 = vld [vmem:[%s7 + $0x470] sm:$0xf]
        %v10309 = vld [vmem:[%s7 + $0x474] sm:$0xf]
        %v10310 = vld [vmem:[%s7 + $0x478] sm:$0xf]
        %v10311 = vld [vmem:[%s7 + $0x47c] sm:$0xf]
        %v10312 = vld [vmem:[%s7 + $0x480] sm:$0xf]
        %v10313 = vld [vmem:[%s7 + $0x484] sm:$0xf]
        %v10314 = vld [vmem:[%s7 + $0x488] sm:$0xf]
        %v10315 = vld [vmem:[%s7 + $0x48c] sm:$0xf]
        %v10316 = vld [vmem:[%s7 + $0x490] sm:$0xf]
        %v10317 = vld [vmem:[%s7 + $0x494] sm:$0xf]
        %v10318 = vld [vmem:[%s7 + $0x498] sm:$0xf]
        %v10319 = vld [vmem:[%s7 + $0x49c] sm:$0xf]
        %v10320 = vld [vmem:[%s7 + $0x4a0] sm:$0xf]
        %v10321 = vld [vmem:[%s7 + $0x4a4] sm:$0xf]
        %v10322 = vld [vmem:[%s7 + $0x4a8] sm:$0xf]
        %v10323 = vld [vmem:[%s7 + $0x4ac] sm:$0xf]
        %v10324 = vld [vmem:[%s7 + $0x4b0] sm:$0xf]
        %v10325 = vld [vmem:[%s7 + $0x4b4] sm:$0xf]
        %v10326 = vld [vmem:[%s7 + $0x4b8] sm:$0xf]
        %v10327 = vld [vmem:[%s7 + $0x4bc] sm:$0xf]
        %v10328 = vld [vmem:[%s7 + $0x4c0] sm:$0xf]
        %v10329 = vld [vmem:[%s7 + $0x4c4] sm:$0xf]
        %v10330 = vld [vmem:[%s7 + $0x4c8] sm:$0xf]
        %v10331 = vld [vmem:[%s7 + $0x4cc] sm:$0xf]
        %v10332 = vld [vmem:[%s7 + $0x4d0] sm:$0xf]
        %v10333 = vld [vmem:[%s7 + $0x4d4] sm:$0xf]
        %v10334 = vld [vmem:[%s7 + $0x4d8] sm:$0xf]
        %v10335 = vld [vmem:[%s7 + $0x4dc] sm:$0xf]
        %v10336 = vld [vmem:[%s7 + $0x4e0] sm:$0xf]
        %v10337 = vld [vmem:[%s7 + $0x4e4] sm:$0xf]
        %v10338 = vld [vmem:[%s7 + $0x4e8] sm:$0xf]
        %v10339 = vld [vmem:[%s7 + $0x4ec] sm:$0xf]
        %v10340 = vld [vmem:[%s7 + $0x4f0] sm:$0xf]
        %v10341 = vld [vmem:[%s7 + $0x4f4] sm:$0xf]
        %v10342 = vld [vmem:[%s7 + $0x4f8] sm:$0xf]
        %v10343 = vld [vmem:[%s7 + $0x4fc] sm:$0xf]
        %v10344 = vld [vmem:[%s7 + $0x500] sm:$0xf]
        %v10345 = vld [vmem:[%s7 + $0x504] sm:$0xf]
        %v10346 = vld [vmem:[%s7 + $0x508] sm:$0xf]
        %v10347 = vld [vmem:[%s7 + $0x50c] sm:$0xf]
        %v10348 = vld [vmem:[%s7 + $0x510] sm:$0xf]
        %v10349 = vld [vmem:[%s7 + $0x514] sm:$0xf]
        %v10350 = vld [vmem:[%s7 + $0x518] sm:$0xf]
        %v10351 = vld [vmem:[%s7 + $0x51c] sm:$0xf]
        %v10352 = vld [vmem:[%s7 + $0x520] sm:$0xf]
        %v10353 = vld [vmem:[%s7 + $0x524] sm:$0xf]
        %v10354 = vld [vmem:[%s7 + $0x528] sm:$0xf]
        %v10355 = vld [vmem:[%s7 + $0x52c] sm:$0xf]
        %v10356 = vld [vmem:[%s7 + $0x530] sm:$0xf]
        %v10357 = vld [vmem:[%s7 + $0x534] sm:$0xf]
        %v10358 = vld [vmem:[%s7 + $0x538] sm:$0xf]
        %v10359 = vld [vmem:[%s7 + $0x53c] sm:$0xf]
        %v10360 = vld [vmem:[%s7 + $0x540] sm:$0xf]
        %v10361 = vld [vmem:[%s7 + $0x544] sm:$0xf]
        %v10362 = vld [vmem:[%s7 + $0x548] sm:$0xf]
        %v10363 = vld [vmem:[%s7 + $0x54c] sm:$0xf]
        %v10364 = vld [vmem:[%s7 + $0x550] sm:$0xf]
        %v10365 = vld [vmem:[%s7 + $0x554] sm:$0xf]
        %v10366 = vld [vmem:[%s7 + $0x558] sm:$0xf]
        %v10367 = vld [vmem:[%s7 + $0x55c] sm:$0xf]
        %v10368 = vld [vmem:[%s7 + $0x560] sm:$0xf]
        %v10369 = vld [vmem:[%s7 + $0x564] sm:$0xf]
        %v10370 = vld [vmem:[%s7 + $0x568] sm:$0xf]
        %v10371 = vld [vmem:[%s7 + $0x56c] sm:$0xf]
        %v10372 = vld [vmem:[%s7 + $0x570] sm:$0xf]
        %v10373 = vld [vmem:[%s7 + $0x574] sm:$0xf]
        %v10374 = vld [vmem:[%s7 + $0x578] sm:$0xf]
        %v10375 = vld [vmem:[%s7 + $0x57c] sm:$0xf]
        %v10376 = vld [vmem:[%s7 + $0x580] sm:$0xf]
        %v10377 = vld [vmem:[%s7 + $0x584] sm:$0xf]
        %v10378 = vld [vmem:[%s7 + $0x588] sm:$0xf]
        %v10379 = vld [vmem:[%s7 + $0x58c] sm:$0xf]
        %v10380 = vld [vmem:[%s7 + $0x590] sm:$0xf]
        %v10381 = vld [vmem:[%s7 + $0x594] sm:$0xf]
        %v10382 = vld [vmem:[%s7 + $0x598] sm:$0xf]
        %v10383 = vld [vmem:[%s7 + $0x59c] sm:$0xf]
        %v10384 = vld [vmem:[%s7 + $0x5a0] sm:$0xf]
        %v10385 = vld [vmem:[%s7 + $0x5a4] sm:$0xf]
        %v10386 = vld [vmem:[%s7 + $0x5a8] sm:$0xf]
        %v10387 = vld [vmem:[%s7 + $0x5ac] sm:$0xf]
        %v10388 = vld [vmem:[%s7 + $0x5b0] sm:$0xf]
        %v10389 = vld [vmem:[%s7 + $0x5b4] sm:$0xf]
        %v10390 = vld [vmem:[%s7 + $0x5b8] sm:$0xf]
        %v10391 = vld [vmem:[%s7 + $0x5bc] sm:$0xf]
        %v10392 = vld [vmem:[%s7 + $0x5c0] sm:$0xf]
        %v10393 = vld [vmem:[%s7 + $0x5c4] sm:$0xf]
        %v10394 = vld [vmem:[%s7 + $0x5c8] sm:$0xf]
        %v10395 = vld [vmem:[%s7 + $0x5cc] sm:$0xf]
        %v10396 = vld [vmem:[%s7 + $0x5d0] sm:$0xf]
        %v10397 = vld [vmem:[%s7 + $0x5d4] sm:$0xf]
        %v10398 = vld [vmem:[%s7 + $0x5d8] sm:$0xf]
        %v10399 = vld [vmem:[%s7 + $0x5dc] sm:$0xf]
        %v10400 = vld [vmem:[%s7 + $0x5e0] sm:$0xf]
        %v10401 = vld [vmem:[%s7 + $0x5e4] sm:$0xf]
        %v10402 = vld [vmem:[%s7 + $0x5e8] sm:$0xf]
        %v10403 = vld [vmem:[%s7 + $0x5ec] sm:$0xf]
        %v10404 = vld [vmem:[%s7 + $0x5f0] sm:$0xf]
        %v10405 = vld [vmem:[%s7 + $0x5f4] sm:$0xf]
        %v10406 = vld [vmem:[%s7 + $0x5f8] sm:$0xf]
        %v10407 = vld [vmem:[%s7 + $0x5fc] sm:$0xf]
        %v10408 = vld [vmem:[%s7 + $0x600] sm:$0xf]
        %v10409 = vld [vmem:[%s7 + $0x604] sm:$0xf]
        %v10410 = vld [vmem:[%s7 + $0x608] sm:$0xf]
        %v10411 = vld [vmem:[%s7 + $0x60c] sm:$0xf]
        %v10412 = vld [vmem:[%s7 + $0x610] sm:$0xf]
        %v10413 = vld [vmem:[%s7 + $0x614] sm:$0xf]
        %v10414 = vld [vmem:[%s7 + $0x618] sm:$0xf]
        %v10415 = vld [vmem:[%s7 + $0x61c] sm:$0xf]
        %v10416 = vld [vmem:[%s7 + $0x620] sm:$0xf]
        %v10417 = vld [vmem:[%s7 + $0x624] sm:$0xf]
        %v10418 = vld [vmem:[%s7 + $0x628] sm:$0xf]
        %v10419 = vld [vmem:[%s7 + $0x62c] sm:$0xf]
        %v10420 = vld [vmem:[%s7 + $0x630] sm:$0xf]
        %v10421 = vld [vmem:[%s7 + $0x634] sm:$0xf]
        %v10422 = vld [vmem:[%s7 + $0x638] sm:$0xf]
        %v10423 = vld [vmem:[%s7 + $0x63c] sm:$0xf]
        %v10424 = vld [vmem:[%s7 + $0x640] sm:$0xf]
        %v10425 = vld [vmem:[%s7 + $0x644] sm:$0xf]
        %v10426 = vld [vmem:[%s7 + $0x648] sm:$0xf]
        %v10427 = vld [vmem:[%s7 + $0x64c] sm:$0xf]
        %v10428 = vld [vmem:[%s7 + $0x650] sm:$0xf]
        %v10429 = vld [vmem:[%s7 + $0x654] sm:$0xf]
        %v10430 = vld [vmem:[%s7 + $0x658] sm:$0xf]
        %v10431 = vld [vmem:[%s7 + $0x65c] sm:$0xf]
        %v10432 = vld [vmem:[%s7 + $0x660] sm:$0xf]
        %v10433 = vld [vmem:[%s7 + $0x664] sm:$0xf]
        %v10434 = vld [vmem:[%s7 + $0x668] sm:$0xf]
        %v10435 = vld [vmem:[%s7 + $0x66c] sm:$0xf]
        %v10436 = vld [vmem:[%s7 + $0x670] sm:$0xf]
        %v10437 = vld [vmem:[%s7 + $0x674] sm:$0xf]
        %v10438 = vld [vmem:[%s7 + $0x678] sm:$0xf]
        %v10439 = vld [vmem:[%s7 + $0x67c] sm:$0xf]
        %v10440 = vld [vmem:[%s7 + $0x680] sm:$0xf]
        %v10441 = vld [vmem:[%s7 + $0x684] sm:$0xf]
        %v10442 = vld [vmem:[%s7 + $0x688] sm:$0xf]
        %v10443 = vld [vmem:[%s7 + $0x68c] sm:$0xf]
        %v10444 = vld [vmem:[%s7 + $0x690] sm:$0xf]
        %v10445 = vld [vmem:[%s7 + $0x694] sm:$0xf]
        %v10446 = vld [vmem:[%s7 + $0x698] sm:$0xf]
        %v10447 = vld [vmem:[%s7 + $0x69c] sm:$0xf]
        %v10448 = vld [vmem:[%s7 + $0x6a0] sm:$0xf]
        %v10449 = vld [vmem:[%s7 + $0x6a4] sm:$0xf]
        %v10450 = vld [vmem:[%s7 + $0x6a8] sm:$0xf]
        %v10451 = vld [vmem:[%s7 + $0x6ac] sm:$0xf]
        %v10452 = vld [vmem:[%s7 + $0x6b0] sm:$0xf]
        %v10453 = vld [vmem:[%s7 + $0x6b4] sm:$0xf]
        %v10454 = vld [vmem:[%s7 + $0x6b8] sm:$0xf]
        %v10455 = vld [vmem:[%s7 + $0x6bc] sm:$0xf]
        %v10456 = vld [vmem:[%s7 + $0x6c0] sm:$0xf]
        %v10457 = vld [vmem:[%s7 + $0x6c4] sm:$0xf]
        %v10458 = vld [vmem:[%s7 + $0x6c8] sm:$0xf]
        %v10459 = vld [vmem:[%s7 + $0x6cc] sm:$0xf]
        %v10460 = vld [vmem:[%s7 + $0x6d0] sm:$0xf]
        %v10461 = vld [vmem:[%s7 + $0x6d4] sm:$0xf]
        %v10462 = vld [vmem:[%s7 + $0x6d8] sm:$0xf]
        %v10463 = vld [vmem:[%s7 + $0x6dc] sm:$0xf]
        %v10464 = vld [vmem:[%s7 + $0x6e0] sm:$0xf]
        %v10465 = vld [vmem:[%s7 + $0x6e4] sm:$0xf]
        %v10466 = vld [vmem:[%s7 + $0x6e8] sm:$0xf]
        %v10467 = vld [vmem:[%s7 + $0x6ec] sm:$0xf]
        %v10468 = vld [vmem:[%s7 + $0x6f0] sm:$0xf]
        %v10469 = vld [vmem:[%s7 + $0x6f4] sm:$0xf]
        %v10470 = vld [vmem:[%s7 + $0x6f8] sm:$0xf]
        %v10471 = vld [vmem:[%s7 + $0x6fc] sm:$0xf]
        %v10472 = vld [vmem:[%s7 + $0x700] sm:$0xf]
        %v10473 = vld [vmem:[%s7 + $0x704] sm:$0xf]
        %v10474 = vld [vmem:[%s7 + $0x708] sm:$0xf]
        %v10475 = vld [vmem:[%s7 + $0x70c] sm:$0xf]
        %v10476 = vld [vmem:[%s7 + $0x710] sm:$0xf]
        %v10477 = vld [vmem:[%s7 + $0x714] sm:$0xf]
        %v10478 = vld [vmem:[%s7 + $0x718] sm:$0xf]
        %v10479 = vld [vmem:[%s7 + $0x71c] sm:$0xf]
        %v10480 = vld [vmem:[%s7 + $0x720] sm:$0xf]
        %v10481 = vld [vmem:[%s7 + $0x724] sm:$0xf]
        %v10482 = vld [vmem:[%s7 + $0x728] sm:$0xf]
        %v10483 = vld [vmem:[%s7 + $0x72c] sm:$0xf]
        %v10484 = vld [vmem:[%s7 + $0x730] sm:$0xf]
        %v10485 = vld [vmem:[%s7 + $0x734] sm:$0xf]
        %v10486 = vld [vmem:[%s7 + $0x738] sm:$0xf]
        %v10487 = vld [vmem:[%s7 + $0x73c] sm:$0xf]
        %v10488 = vld [vmem:[%s7 + $0x740] sm:$0xf]
        %v10489 = vld [vmem:[%s7 + $0x744] sm:$0xf]
        %v10490 = vld [vmem:[%s7 + $0x748] sm:$0xf]
        %v10491 = vld [vmem:[%s7 + $0x74c] sm:$0xf]
        %v10492 = vld [vmem:[%s7 + $0x750] sm:$0xf]
        %v10493 = vld [vmem:[%s7 + $0x754] sm:$0xf]
        %v10494 = vld [vmem:[%s7 + $0x758] sm:$0xf]
        %v10495 = vld [vmem:[%s7 + $0x75c] sm:$0xf]
        %v10496 = vld [vmem:[%s7 + $0x760] sm:$0xf]
        %v10497 = vld [vmem:[%s7 + $0x764] sm:$0xf]
        %v10498 = vld [vmem:[%s7 + $0x768] sm:$0xf]
        %v10499 = vld [vmem:[%s7 + $0x76c] sm:$0xf]
        %v10500 = vld [vmem:[%s7 + $0x770] sm:$0xf]
        %v10501 = vld [vmem:[%s7 + $0x774] sm:$0xf]
        %v10502 = vld [vmem:[%s7 + $0x778] sm:$0xf]
        %v10503 = vld [vmem:[%s7 + $0x77c] sm:$0xf]
        %v10504 = vld [vmem:[%s7 + $0x780] sm:$0xf]
        %v10505 = vld [vmem:[%s7 + $0x784] sm:$0xf]
        %v10506 = vld [vmem:[%s7 + $0x788] sm:$0xf]
        %v10507 = vld [vmem:[%s7 + $0x78c] sm:$0xf]
        %v10508 = vld [vmem:[%s7 + $0x790] sm:$0xf]
        %v10509 = vld [vmem:[%s7 + $0x794] sm:$0xf]
        %v10510 = vld [vmem:[%s7 + $0x798] sm:$0xf]
        %v10511 = vld [vmem:[%s7 + $0x79c] sm:$0xf]
        %v10512 = vld [vmem:[%s7 + $0x7a0] sm:$0xf]
        %v10513 = vld [vmem:[%s7 + $0x7a4] sm:$0xf]
        %v10514 = vld [vmem:[%s7 + $0x7a8] sm:$0xf]
        %v10515 = vld [vmem:[%s7 + $0x7ac] sm:$0xf]
        %v10516 = vld [vmem:[%s7 + $0x7b0] sm:$0xf]
        %v10517 = vld [vmem:[%s7 + $0x7b4] sm:$0xf]
        %v10518 = vld [vmem:[%s7 + $0x7b8] sm:$0xf]
        %v10519 = vld [vmem:[%s7 + $0x7bc] sm:$0xf]
        %v10520 = vld [vmem:[%s7 + $0x7c0] sm:$0xf]
        %v10521 = vld [vmem:[%s7 + $0x7c4] sm:$0xf]
        %v10522 = vld [vmem:[%s7 + $0x7c8] sm:$0xf]
        %v10523 = vld [vmem:[%s7 + $0x7cc] sm:$0xf]
        %v10524 = vld [vmem:[%s7 + $0x7d0] sm:$0xf]
        %v10525 = vld [vmem:[%s7 + $0x7d4] sm:$0xf]
        %v10526 = vld [vmem:[%s7 + $0x7d8] sm:$0xf]
        %v10527 = vld [vmem:[%s7 + $0x7dc] sm:$0xf]
        %v10528 = vld [vmem:[%s7 + $0x7e0] sm:$0xf]
        %v10529 = vld [vmem:[%s7 + $0x7e4] sm:$0xf]
        %v10530 = vld [vmem:[%s7 + $0x7e8] sm:$0xf]
        %v10531 = vld [vmem:[%s7 + $0x7ec] sm:$0xf]
        %v10532 = vld [vmem:[%s7 + $0x7f0] sm:$0xf]
        %v10533 = vld [vmem:[%s7 + $0x7f4] sm:$0xf]
        %v10534 = vld [vmem:[%s7 + $0x7f8] sm:$0xf]
        %v10535 = vld [vmem:[%s7 + $0x7fc] sm:$0xf]
        %v10536 = vld [vmem:[%s8] sm:$0x1]
        %v11049 = vunpack.c.l.b16 %v10024
        %v11050 = vunpack.c.l.b16 %v10025
        %v11051 = vunpack.c.l.b16 %v10026
        %v11052 = vunpack.c.l.b16 %v10027
        %v11053 = vunpack.c.l.b16 %v10028
        %v11054 = vunpack.c.l.b16 %v10029
        %v11055 = vunpack.c.l.b16 %v10030
        %v11056 = vunpack.c.l.b16 %v10031
        %v11057 = vunpack.c.l.b16 %v10032
        %v11058 = vunpack.c.l.b16 %v10033
        %v11059 = vunpack.c.l.b16 %v10034
        %v11060 = vunpack.c.l.b16 %v10035
        %v11061 = vunpack.c.l.b16 %v10036
        %v11062 = vunpack.c.l.b16 %v10037
        %v11063 = vunpack.c.l.b16 %v10038
        %v11064 = vunpack.c.l.b16 %v10039
        %v11065 = vunpack.c.l.b16 %v10040
        %v11066 = vunpack.c.l.b16 %v10041
        %v11067 = vunpack.c.l.b16 %v10042
        %v11068 = vunpack.c.l.b16 %v10043
        %v11069 = vunpack.c.l.b16 %v10044
        %v11070 = vunpack.c.l.b16 %v10045
        %v11071 = vunpack.c.l.b16 %v10046
        %v11072 = vunpack.c.l.b16 %v10047
        %v11073 = vunpack.c.l.b16 %v10048
        %v11074 = vunpack.c.l.b16 %v10049
        %v11075 = vunpack.c.l.b16 %v10050
        %v11076 = vunpack.c.l.b16 %v10051
        %v11077 = vunpack.c.l.b16 %v10052
        %v11078 = vunpack.c.l.b16 %v10053
        %v11079 = vunpack.c.l.b16 %v10054
        %v11080 = vunpack.c.l.b16 %v10055
        %v11081 = vunpack.c.l.b16 %v10056
        %v11082 = vunpack.c.l.b16 %v10057
        %v11083 = vunpack.c.l.b16 %v10058
        %v11084 = vunpack.c.l.b16 %v10059
        %v11085 = vunpack.c.l.b16 %v10060
        %v11086 = vunpack.c.l.b16 %v10061
        %v11087 = vunpack.c.l.b16 %v10062
        %v11088 = vunpack.c.l.b16 %v10063
        %v11089 = vunpack.c.l.b16 %v10064
        %v11090 = vunpack.c.l.b16 %v10065
        %v11091 = vunpack.c.l.b16 %v10066
        %v11092 = vunpack.c.l.b16 %v10067
        %v11093 = vunpack.c.l.b16 %v10068
        %v11094 = vunpack.c.l.b16 %v10069
        %v11095 = vunpack.c.l.b16 %v10070
        %v11096 = vunpack.c.l.b16 %v10071
        %v11097 = vunpack.c.l.b16 %v10072
        %v11098 = vunpack.c.l.b16 %v10073
        %v11099 = vunpack.c.l.b16 %v10074
        %v11100 = vunpack.c.l.b16 %v10075
        %v11101 = vunpack.c.l.b16 %v10076
        %v11102 = vunpack.c.l.b16 %v10077
        %v11103 = vunpack.c.l.b16 %v10078
        %v11104 = vunpack.c.l.b16 %v10079
        %v11105 = vunpack.c.l.b16 %v10080
        %v11106 = vunpack.c.l.b16 %v10081
        %v11107 = vunpack.c.l.b16 %v10082
        %v11108 = vunpack.c.l.b16 %v10083
        %v11109 = vunpack.c.l.b16 %v10084
        %v11110 = vunpack.c.l.b16 %v10085
        %v11111 = vunpack.c.l.b16 %v10086
        %v11112 = vunpack.c.l.b16 %v10087
        %v11113 = vunpack.c.l.b16 %v10088
        %v11114 = vunpack.c.l.b16 %v10089
        %v11115 = vunpack.c.l.b16 %v10090
        %v11116 = vunpack.c.l.b16 %v10091
        %v11117 = vunpack.c.l.b16 %v10092
        %v11118 = vunpack.c.l.b16 %v10093
        %v11119 = vunpack.c.l.b16 %v10094
        %v11120 = vunpack.c.l.b16 %v10095
        %v11121 = vunpack.c.l.b16 %v10096
        %v11122 = vunpack.c.l.b16 %v10097
        %v11123 = vunpack.c.l.b16 %v10098
        %v11124 = vunpack.c.l.b16 %v10099
        %v11125 = vunpack.c.l.b16 %v10100
        %v11126 = vunpack.c.l.b16 %v10101
        %v11127 = vunpack.c.l.b16 %v10102
        %v11128 = vunpack.c.l.b16 %v10103
        %v11129 = vunpack.c.l.b16 %v10104
        %v11130 = vunpack.c.l.b16 %v10105
        %v11131 = vunpack.c.l.b16 %v10106
        %v11132 = vunpack.c.l.b16 %v10107
        %v11133 = vunpack.c.l.b16 %v10108
        %v11134 = vunpack.c.l.b16 %v10109
        %v11135 = vunpack.c.l.b16 %v10110
        %v11136 = vunpack.c.l.b16 %v10111
        %v11137 = vunpack.c.l.b16 %v10112
        %v11138 = vunpack.c.l.b16 %v10113
        %v11139 = vunpack.c.l.b16 %v10114
        %v11140 = vunpack.c.l.b16 %v10115
        %v11141 = vunpack.c.l.b16 %v10116
        %v11142 = vunpack.c.l.b16 %v10117
        %v11143 = vunpack.c.l.b16 %v10118
        %v11144 = vunpack.c.l.b16 %v10119
        %v11145 = vunpack.c.l.b16 %v10120
        %v11146 = vunpack.c.l.b16 %v10121
        %v11147 = vunpack.c.l.b16 %v10122
        %v11148 = vunpack.c.l.b16 %v10123
        %v11149 = vunpack.c.l.b16 %v10124
        %v11150 = vunpack.c.l.b16 %v10125
        %v11151 = vunpack.c.l.b16 %v10126
        %v11152 = vunpack.c.l.b16 %v10127
        %v11153 = vunpack.c.l.b16 %v10128
        %v11154 = vunpack.c.l.b16 %v10129
        %v11155 = vunpack.c.l.b16 %v10130
        %v11156 = vunpack.c.l.b16 %v10131
        %v11157 = vunpack.c.l.b16 %v10132
        %v11158 = vunpack.c.l.b16 %v10133
        %v11159 = vunpack.c.l.b16 %v10134
        %v11160 = vunpack.c.l.b16 %v10135
        %v11161 = vunpack.c.l.b16 %v10136
        %v11162 = vunpack.c.l.b16 %v10137
        %v11163 = vunpack.c.l.b16 %v10138
        %v11164 = vunpack.c.l.b16 %v10139
        %v11165 = vunpack.c.l.b16 %v10140
        %v11166 = vunpack.c.l.b16 %v10141
        %v11167 = vunpack.c.l.b16 %v10142
        %v11168 = vunpack.c.l.b16 %v10143
        %v11169 = vunpack.c.l.b16 %v10144
        %v11170 = vunpack.c.l.b16 %v10145
        %v11171 = vunpack.c.l.b16 %v10146
        %v11172 = vunpack.c.l.b16 %v10147
        %v11173 = vunpack.c.l.b16 %v10148
        %v11174 = vunpack.c.l.b16 %v10149
        %v11175 = vunpack.c.l.b16 %v10150
        %v11176 = vunpack.c.l.b16 %v10151
        %v11177 = vunpack.c.l.b16 %v10152
        %v11178 = vunpack.c.l.b16 %v10153
        %v11179 = vunpack.c.l.b16 %v10154
        %v11180 = vunpack.c.l.b16 %v10155
        %v11181 = vunpack.c.l.b16 %v10156
        %v11182 = vunpack.c.l.b16 %v10157
        %v11183 = vunpack.c.l.b16 %v10158
        %v11184 = vunpack.c.l.b16 %v10159
        %v11185 = vunpack.c.l.b16 %v10160
        %v11186 = vunpack.c.l.b16 %v10161
        %v11187 = vunpack.c.l.b16 %v10162
        %v11188 = vunpack.c.l.b16 %v10163
        %v11189 = vunpack.c.l.b16 %v10164
        %v11190 = vunpack.c.l.b16 %v10165
        %v11191 = vunpack.c.l.b16 %v10166
        %v11192 = vunpack.c.l.b16 %v10167
        %v11193 = vunpack.c.l.b16 %v10168
        %v11194 = vunpack.c.l.b16 %v10169
        %v11195 = vunpack.c.l.b16 %v10170
        %v11196 = vunpack.c.l.b16 %v10171
        %v11197 = vunpack.c.l.b16 %v10172
        %v11198 = vunpack.c.l.b16 %v10173
        %v11199 = vunpack.c.l.b16 %v10174
        %v11200 = vunpack.c.l.b16 %v10175
        %v11201 = vunpack.c.l.b16 %v10176
        %v11202 = vunpack.c.l.b16 %v10177
        %v11203 = vunpack.c.l.b16 %v10178
        %v11204 = vunpack.c.l.b16 %v10179
        %v11205 = vunpack.c.l.b16 %v10180
        %v11206 = vunpack.c.l.b16 %v10181
        %v11207 = vunpack.c.l.b16 %v10182
        %v11208 = vunpack.c.l.b16 %v10183
        %v11209 = vunpack.c.l.b16 %v10184
        %v11210 = vunpack.c.l.b16 %v10185
        %v11211 = vunpack.c.l.b16 %v10186
        %v11212 = vunpack.c.l.b16 %v10187
        %v11213 = vunpack.c.l.b16 %v10188
        %v11214 = vunpack.c.l.b16 %v10189
        %v11215 = vunpack.c.l.b16 %v10190
        %v11216 = vunpack.c.l.b16 %v10191
        %v11217 = vunpack.c.l.b16 %v10192
        %v11218 = vunpack.c.l.b16 %v10193
        %v11219 = vunpack.c.l.b16 %v10194
        %v11220 = vunpack.c.l.b16 %v10195
        %v11221 = vunpack.c.l.b16 %v10196
        %v11222 = vunpack.c.l.b16 %v10197
        %v11223 = vunpack.c.l.b16 %v10198
        %v11224 = vunpack.c.l.b16 %v10199
        %v11225 = vunpack.c.l.b16 %v10200
        %v11226 = vunpack.c.l.b16 %v10201
        %v11227 = vunpack.c.l.b16 %v10202
        %v11228 = vunpack.c.l.b16 %v10203
        %v11229 = vunpack.c.l.b16 %v10204
        %v11230 = vunpack.c.l.b16 %v10205
        %v11231 = vunpack.c.l.b16 %v10206
        %v11232 = vunpack.c.l.b16 %v10207
        %v11233 = vunpack.c.l.b16 %v10208
        %v11234 = vunpack.c.l.b16 %v10209
        %v11235 = vunpack.c.l.b16 %v10210
        %v11236 = vunpack.c.l.b16 %v10211
        %v11237 = vunpack.c.l.b16 %v10212
        %v11238 = vunpack.c.l.b16 %v10213
        %v11239 = vunpack.c.l.b16 %v10214
        %v11240 = vunpack.c.l.b16 %v10215
        %v11241 = vunpack.c.l.b16 %v10216
        %v11242 = vunpack.c.l.b16 %v10217
        %v11243 = vunpack.c.l.b16 %v10218
        %v11244 = vunpack.c.l.b16 %v10219
        %v11245 = vunpack.c.l.b16 %v10220
        %v11246 = vunpack.c.l.b16 %v10221
        %v11247 = vunpack.c.l.b16 %v10222
        %v11248 = vunpack.c.l.b16 %v10223
        %v11249 = vunpack.c.l.b16 %v10224
        %v11250 = vunpack.c.l.b16 %v10225
        %v11251 = vunpack.c.l.b16 %v10226
        %v11252 = vunpack.c.l.b16 %v10227
        %v11253 = vunpack.c.l.b16 %v10228
        %v11254 = vunpack.c.l.b16 %v10229
        %v11255 = vunpack.c.l.b16 %v10230
        %v11256 = vunpack.c.l.b16 %v10231
        %v11257 = vunpack.c.l.b16 %v10232
        %v11258 = vunpack.c.l.b16 %v10233
        %v11259 = vunpack.c.l.b16 %v10234
        %v11260 = vunpack.c.l.b16 %v10235
        %v11261 = vunpack.c.l.b16 %v10236
        %v11262 = vunpack.c.l.b16 %v10237
        %v11263 = vunpack.c.l.b16 %v10238
        %v11264 = vunpack.c.l.b16 %v10239
        %v11265 = vunpack.c.l.b16 %v10240
        %v11266 = vunpack.c.l.b16 %v10241
        %v11267 = vunpack.c.l.b16 %v10242
        %v11268 = vunpack.c.l.b16 %v10243
        %v11269 = vunpack.c.l.b16 %v10244
        %v11270 = vunpack.c.l.b16 %v10245
        %v11271 = vunpack.c.l.b16 %v10246
        %v11272 = vunpack.c.l.b16 %v10247
        %v11273 = vunpack.c.l.b16 %v10248
        %v11274 = vunpack.c.l.b16 %v10249
        %v11275 = vunpack.c.l.b16 %v10250
        %v11276 = vunpack.c.l.b16 %v10251
        %v11277 = vunpack.c.l.b16 %v10252
        %v11278 = vunpack.c.l.b16 %v10253
        %v11279 = vunpack.c.l.b16 %v10254
        %v11280 = vunpack.c.l.b16 %v10255
        %v11281 = vunpack.c.l.b16 %v10256
        %v11282 = vunpack.c.l.b16 %v10257
        %v11283 = vunpack.c.l.b16 %v10258
        %v11284 = vunpack.c.l.b16 %v10259
        %v11285 = vunpack.c.l.b16 %v10260
        %v11286 = vunpack.c.l.b16 %v10261
        %v11287 = vunpack.c.l.b16 %v10262
        %v11288 = vunpack.c.l.b16 %v10263
        %v11289 = vunpack.c.l.b16 %v10264
        %v11290 = vunpack.c.l.b16 %v10265
        %v11291 = vunpack.c.l.b16 %v10266
        %v11292 = vunpack.c.l.b16 %v10267
        %v11293 = vunpack.c.l.b16 %v10268
        %v11294 = vunpack.c.l.b16 %v10269
        %v11295 = vunpack.c.l.b16 %v10270
        %v11296 = vunpack.c.l.b16 %v10271
        %v11297 = vunpack.c.l.b16 %v10272
        %v11298 = vunpack.c.l.b16 %v10273
        %v11299 = vunpack.c.l.b16 %v10274
        %v11300 = vunpack.c.l.b16 %v10275
        %v11301 = vunpack.c.l.b16 %v10276
        %v11302 = vunpack.c.l.b16 %v10277
        %v11303 = vunpack.c.l.b16 %v10278
        %v11304 = vunpack.c.l.b16 %v10279
        %v11305 = vunpack.c.l.b16 %v10280
        %v11306 = vunpack.c.l.b16 %v10281
        %v11307 = vunpack.c.l.b16 %v10282
        %v11308 = vunpack.c.l.b16 %v10283
        %v11309 = vunpack.c.l.b16 %v10284
        %v11310 = vunpack.c.l.b16 %v10285
        %v11311 = vunpack.c.l.b16 %v10286
        %v11312 = vunpack.c.l.b16 %v10287
        %v11313 = vunpack.c.l.b16 %v10288
        %v11314 = vunpack.c.l.b16 %v10289
        %v11315 = vunpack.c.l.b16 %v10290
        %v11316 = vunpack.c.l.b16 %v10291
        %v11317 = vunpack.c.l.b16 %v10292
        %v11318 = vunpack.c.l.b16 %v10293
        %v11319 = vunpack.c.l.b16 %v10294
        %v11320 = vunpack.c.l.b16 %v10295
        %v11321 = vunpack.c.l.b16 %v10296
        %v11322 = vunpack.c.l.b16 %v10297
        %v11323 = vunpack.c.l.b16 %v10298
        %v11324 = vunpack.c.l.b16 %v10299
        %v11325 = vunpack.c.l.b16 %v10300
        %v11326 = vunpack.c.l.b16 %v10301
        %v11327 = vunpack.c.l.b16 %v10302
        %v11328 = vunpack.c.l.b16 %v10303
        %v11329 = vunpack.c.l.b16 %v10304
        %v11330 = vunpack.c.l.b16 %v10305
        %v11331 = vunpack.c.l.b16 %v10306
        %v11332 = vunpack.c.l.b16 %v10307
        %v11333 = vunpack.c.l.b16 %v10308
        %v11334 = vunpack.c.l.b16 %v10309
        %v11335 = vunpack.c.l.b16 %v10310
        %v11336 = vunpack.c.l.b16 %v10311
        %v11337 = vunpack.c.l.b16 %v10312
        %v11338 = vunpack.c.l.b16 %v10313
        %v11339 = vunpack.c.l.b16 %v10314
        %v11340 = vunpack.c.l.b16 %v10315
        %v11341 = vunpack.c.l.b16 %v10316
        %v11342 = vunpack.c.l.b16 %v10317
        %v11343 = vunpack.c.l.b16 %v10318
        %v11344 = vunpack.c.l.b16 %v10319
        %v11345 = vunpack.c.l.b16 %v10320
        %v11346 = vunpack.c.l.b16 %v10321
        %v11347 = vunpack.c.l.b16 %v10322
        %v11348 = vunpack.c.l.b16 %v10323
        %v11349 = vunpack.c.l.b16 %v10324
        %v11350 = vunpack.c.l.b16 %v10325
        %v11351 = vunpack.c.l.b16 %v10326
        %v11352 = vunpack.c.l.b16 %v10327
        %v11353 = vunpack.c.l.b16 %v10328
        %v11354 = vunpack.c.l.b16 %v10329
        %v11355 = vunpack.c.l.b16 %v10330
        %v11356 = vunpack.c.l.b16 %v10331
        %v11357 = vunpack.c.l.b16 %v10332
        %v11358 = vunpack.c.l.b16 %v10333
        %v11359 = vunpack.c.l.b16 %v10334
        %v11360 = vunpack.c.l.b16 %v10335
        %v11361 = vunpack.c.l.b16 %v10336
        %v11362 = vunpack.c.l.b16 %v10337
        %v11363 = vunpack.c.l.b16 %v10338
        %v11364 = vunpack.c.l.b16 %v10339
        %v11365 = vunpack.c.l.b16 %v10340
        %v11366 = vunpack.c.l.b16 %v10341
        %v11367 = vunpack.c.l.b16 %v10342
        %v11368 = vunpack.c.l.b16 %v10343
        %v11369 = vunpack.c.l.b16 %v10344
        %v11370 = vunpack.c.l.b16 %v10345
        %v11371 = vunpack.c.l.b16 %v10346
        %v11372 = vunpack.c.l.b16 %v10347
        %v11373 = vunpack.c.l.b16 %v10348
        %v11374 = vunpack.c.l.b16 %v10349
        %v11375 = vunpack.c.l.b16 %v10350
        %v11376 = vunpack.c.l.b16 %v10351
        %v11377 = vunpack.c.l.b16 %v10352
        %v11378 = vunpack.c.l.b16 %v10353
        %v11379 = vunpack.c.l.b16 %v10354
        %v11380 = vunpack.c.l.b16 %v10355
        %v11381 = vunpack.c.l.b16 %v10356
        %v11382 = vunpack.c.l.b16 %v10357
        %v11383 = vunpack.c.l.b16 %v10358
        %v11384 = vunpack.c.l.b16 %v10359
        %v11385 = vunpack.c.l.b16 %v10360
        %v11386 = vunpack.c.l.b16 %v10361
        %v11387 = vunpack.c.l.b16 %v10362
        %v11388 = vunpack.c.l.b16 %v10363
        %v11389 = vunpack.c.l.b16 %v10364
        %v11390 = vunpack.c.l.b16 %v10365
        %v11391 = vunpack.c.l.b16 %v10366
        %v11392 = vunpack.c.l.b16 %v10367
        %v11393 = vunpack.c.l.b16 %v10368
        %v11394 = vunpack.c.l.b16 %v10369
        %v11395 = vunpack.c.l.b16 %v10370
        %v11396 = vunpack.c.l.b16 %v10371
        %v11397 = vunpack.c.l.b16 %v10372
        %v11398 = vunpack.c.l.b16 %v10373
        %v11399 = vunpack.c.l.b16 %v10374
        %v11400 = vunpack.c.l.b16 %v10375
        %v11401 = vunpack.c.l.b16 %v10376
        %v11402 = vunpack.c.l.b16 %v10377
        %v11403 = vunpack.c.l.b16 %v10378
        %v11404 = vunpack.c.l.b16 %v10379
        %v11405 = vunpack.c.l.b16 %v10380
        %v11406 = vunpack.c.l.b16 %v10381
        %v11407 = vunpack.c.l.b16 %v10382
        %v11408 = vunpack.c.l.b16 %v10383
        %v11409 = vunpack.c.l.b16 %v10384
        %v11410 = vunpack.c.l.b16 %v10385
        %v11411 = vunpack.c.l.b16 %v10386
        %v11412 = vunpack.c.l.b16 %v10387
        %v11413 = vunpack.c.l.b16 %v10388
        %v11414 = vunpack.c.l.b16 %v10389
        %v11415 = vunpack.c.l.b16 %v10390
        %v11416 = vunpack.c.l.b16 %v10391
        %v11417 = vunpack.c.l.b16 %v10392
        %v11418 = vunpack.c.l.b16 %v10393
        %v11419 = vunpack.c.l.b16 %v10394
        %v11420 = vunpack.c.l.b16 %v10395
        %v11421 = vunpack.c.l.b16 %v10396
        %v11422 = vunpack.c.l.b16 %v10397
        %v11423 = vunpack.c.l.b16 %v10398
        %v11424 = vunpack.c.l.b16 %v10399
        %v11425 = vunpack.c.l.b16 %v10400
        %v11426 = vunpack.c.l.b16 %v10401
        %v11427 = vunpack.c.l.b16 %v10402
        %v11428 = vunpack.c.l.b16 %v10403
        %v11429 = vunpack.c.l.b16 %v10404
        %v11430 = vunpack.c.l.b16 %v10405
        %v11431 = vunpack.c.l.b16 %v10406
        %v11432 = vunpack.c.l.b16 %v10407
        %v11433 = vunpack.c.l.b16 %v10408
        %v11434 = vunpack.c.l.b16 %v10409
        %v11435 = vunpack.c.l.b16 %v10410
        %v11436 = vunpack.c.l.b16 %v10411
        %v11437 = vunpack.c.l.b16 %v10412
        %v11438 = vunpack.c.l.b16 %v10413
        %v11439 = vunpack.c.l.b16 %v10414
        %v11440 = vunpack.c.l.b16 %v10415
        %v11441 = vunpack.c.l.b16 %v10416
        %v11442 = vunpack.c.l.b16 %v10417
        %v11443 = vunpack.c.l.b16 %v10418
        %v11444 = vunpack.c.l.b16 %v10419
        %v11445 = vunpack.c.l.b16 %v10420
        %v11446 = vunpack.c.l.b16 %v10421
        %v11447 = vunpack.c.l.b16 %v10422
        %v11448 = vunpack.c.l.b16 %v10423
        %v11449 = vunpack.c.l.b16 %v10424
        %v11450 = vunpack.c.l.b16 %v10425
        %v11451 = vunpack.c.l.b16 %v10426
        %v11452 = vunpack.c.l.b16 %v10427
        %v11453 = vunpack.c.l.b16 %v10428
        %v11454 = vunpack.c.l.b16 %v10429
        %v11455 = vunpack.c.l.b16 %v10430
        %v11456 = vunpack.c.l.b16 %v10431
        %v11457 = vunpack.c.l.b16 %v10432
        %v11458 = vunpack.c.l.b16 %v10433
        %v11459 = vunpack.c.l.b16 %v10434
        %v11460 = vunpack.c.l.b16 %v10435
        %v11461 = vunpack.c.l.b16 %v10436
        %v11462 = vunpack.c.l.b16 %v10437
        %v11463 = vunpack.c.l.b16 %v10438
        %v11464 = vunpack.c.l.b16 %v10439
        %v11465 = vunpack.c.l.b16 %v10440
        %v11466 = vunpack.c.l.b16 %v10441
        %v11467 = vunpack.c.l.b16 %v10442
        %v11468 = vunpack.c.l.b16 %v10443
        %v11469 = vunpack.c.l.b16 %v10444
        %v11470 = vunpack.c.l.b16 %v10445
        %v11471 = vunpack.c.l.b16 %v10446
        %v11472 = vunpack.c.l.b16 %v10447
        %v11473 = vunpack.c.l.b16 %v10448
        %v11474 = vunpack.c.l.b16 %v10449
        %v11475 = vunpack.c.l.b16 %v10450
        %v11476 = vunpack.c.l.b16 %v10451
        %v11477 = vunpack.c.l.b16 %v10452
        %v11478 = vunpack.c.l.b16 %v10453
        %v11479 = vunpack.c.l.b16 %v10454
        %v11480 = vunpack.c.l.b16 %v10455
        %v11481 = vunpack.c.l.b16 %v10456
        %v11482 = vunpack.c.l.b16 %v10457
        %v11483 = vunpack.c.l.b16 %v10458
        %v11484 = vunpack.c.l.b16 %v10459
        %v11485 = vunpack.c.l.b16 %v10460
        %v11486 = vunpack.c.l.b16 %v10461
        %v11487 = vunpack.c.l.b16 %v10462
        %v11488 = vunpack.c.l.b16 %v10463
        %v11489 = vunpack.c.l.b16 %v10464
        %v11490 = vunpack.c.l.b16 %v10465
        %v11491 = vunpack.c.l.b16 %v10466
        %v11492 = vunpack.c.l.b16 %v10467
        %v11493 = vunpack.c.l.b16 %v10468
        %v11494 = vunpack.c.l.b16 %v10469
        %v11495 = vunpack.c.l.b16 %v10470
        %v11496 = vunpack.c.l.b16 %v10471
        %v11497 = vunpack.c.l.b16 %v10472
        %v11498 = vunpack.c.l.b16 %v10473
        %v11499 = vunpack.c.l.b16 %v10474
        %v11500 = vunpack.c.l.b16 %v10475
        %v11501 = vunpack.c.l.b16 %v10476
        %v11502 = vunpack.c.l.b16 %v10477
        %v11503 = vunpack.c.l.b16 %v10478
        %v11504 = vunpack.c.l.b16 %v10479
        %v11505 = vunpack.c.l.b16 %v10480
        %v11506 = vunpack.c.l.b16 %v10481
        %v11507 = vunpack.c.l.b16 %v10482
        %v11508 = vunpack.c.l.b16 %v10483
        %v11509 = vunpack.c.l.b16 %v10484
        %v11510 = vunpack.c.l.b16 %v10485
        %v11511 = vunpack.c.l.b16 %v10486
        %v11512 = vunpack.c.l.b16 %v10487
        %v11513 = vunpack.c.l.b16 %v10488
        %v11514 = vunpack.c.l.b16 %v10489
        %v11515 = vunpack.c.l.b16 %v10490
        %v11516 = vunpack.c.l.b16 %v10491
        %v11517 = vunpack.c.l.b16 %v10492
        %v11518 = vunpack.c.l.b16 %v10493
        %v11519 = vunpack.c.l.b16 %v10494
        %v11520 = vunpack.c.l.b16 %v10495
        %v11521 = vunpack.c.l.b16 %v10496
        %v11522 = vunpack.c.l.b16 %v10497
        %v11523 = vunpack.c.l.b16 %v10498
        %v11524 = vunpack.c.l.b16 %v10499
        %v11525 = vunpack.c.l.b16 %v10500
        %v11526 = vunpack.c.l.b16 %v10501
        %v11527 = vunpack.c.l.b16 %v10502
        %v11528 = vunpack.c.l.b16 %v10503
        %v11529 = vunpack.c.l.b16 %v10504
        %v11530 = vunpack.c.l.b16 %v10505
        %v11531 = vunpack.c.l.b16 %v10506
        %v11532 = vunpack.c.l.b16 %v10507
        %v11533 = vunpack.c.l.b16 %v10508
        %v11534 = vunpack.c.l.b16 %v10509
        %v11535 = vunpack.c.l.b16 %v10510
        %v11536 = vunpack.c.l.b16 %v10511
        %v11537 = vunpack.c.l.b16 %v10512
        %v11538 = vunpack.c.l.b16 %v10513
        %v11539 = vunpack.c.l.b16 %v10514
        %v11540 = vunpack.c.l.b16 %v10515
        %v11541 = vunpack.c.l.b16 %v10516
        %v11542 = vunpack.c.l.b16 %v10517
        %v11543 = vunpack.c.l.b16 %v10518
        %v11544 = vunpack.c.l.b16 %v10519
        %v11545 = vunpack.c.l.b16 %v10520
        %v11546 = vunpack.c.l.b16 %v10521
        %v11547 = vunpack.c.l.b16 %v10522
        %v11548 = vunpack.c.l.b16 %v10523
        %v11549 = vunpack.c.l.b16 %v10524
        %v11550 = vunpack.c.l.b16 %v10525
        %v11551 = vunpack.c.l.b16 %v10526
        %v11552 = vunpack.c.l.b16 %v10527
        %v11553 = vunpack.c.l.b16 %v10528
        %v11554 = vunpack.c.l.b16 %v10529
        %v11555 = vunpack.c.l.b16 %v10530
        %v11556 = vunpack.c.l.b16 %v10531
        %v11557 = vunpack.c.l.b16 %v10532
        %v11558 = vunpack.c.l.b16 %v10533
        %v11559 = vunpack.c.l.b16 %v10534
        %v11560 = vunpack.c.l.b16 %v10535
        %v11561 = vpack.c.b16 %v11050, %v11049
        %v11562 = vpack.c.b16 %v11052, %v11051
        %v11563 = vpack.c.b16 %v11054, %v11053
        %v11564 = vpack.c.b16 %v11056, %v11055
        %v11565 = vpack.c.b16 %v11058, %v11057
        %v11566 = vpack.c.b16 %v11060, %v11059
        %v11567 = vpack.c.b16 %v11062, %v11061
        %v11568 = vpack.c.b16 %v11064, %v11063
        %v11569 = vpack.c.b16 %v11066, %v11065
        %v11570 = vpack.c.b16 %v11068, %v11067
        %v11571 = vpack.c.b16 %v11070, %v11069
        %v11572 = vpack.c.b16 %v11072, %v11071
        %v11573 = vpack.c.b16 %v11074, %v11073
        %v11574 = vpack.c.b16 %v11076, %v11075
        %v11575 = vpack.c.b16 %v11078, %v11077
        %v11576 = vpack.c.b16 %v11080, %v11079
        %v11577 = vpack.c.b16 %v11082, %v11081
        %v11578 = vpack.c.b16 %v11084, %v11083
        %v11579 = vpack.c.b16 %v11086, %v11085
        %v11580 = vpack.c.b16 %v11088, %v11087
        %v11581 = vpack.c.b16 %v11090, %v11089
        %v11582 = vpack.c.b16 %v11092, %v11091
        %v11583 = vpack.c.b16 %v11094, %v11093
        %v11584 = vpack.c.b16 %v11096, %v11095
        %v11585 = vpack.c.b16 %v11098, %v11097
        %v11586 = vpack.c.b16 %v11100, %v11099
        %v11587 = vpack.c.b16 %v11102, %v11101
        %v11588 = vpack.c.b16 %v11104, %v11103
        %v11589 = vpack.c.b16 %v11106, %v11105
        %v11590 = vpack.c.b16 %v11108, %v11107
        %v11591 = vpack.c.b16 %v11110, %v11109
        %v11592 = vpack.c.b16 %v11112, %v11111
        %v11593 = vpack.c.b16 %v11114, %v11113
        %v11594 = vpack.c.b16 %v11116, %v11115
        %v11595 = vpack.c.b16 %v11118, %v11117
        %v11596 = vpack.c.b16 %v11120, %v11119
        %v11597 = vpack.c.b16 %v11122, %v11121
        %v11598 = vpack.c.b16 %v11124, %v11123
        %v11599 = vpack.c.b16 %v11126, %v11125
        %v11600 = vpack.c.b16 %v11128, %v11127
        %v11601 = vpack.c.b16 %v11130, %v11129
        %v11602 = vpack.c.b16 %v11132, %v11131
        %v11603 = vpack.c.b16 %v11134, %v11133
        %v11604 = vpack.c.b16 %v11136, %v11135
        %v11605 = vpack.c.b16 %v11138, %v11137
        %v11606 = vpack.c.b16 %v11140, %v11139
        %v11607 = vpack.c.b16 %v11142, %v11141
        %v11608 = vpack.c.b16 %v11144, %v11143
        %v11609 = vpack.c.b16 %v11146, %v11145
        %v11610 = vpack.c.b16 %v11148, %v11147
        %v11611 = vpack.c.b16 %v11150, %v11149
        %v11612 = vpack.c.b16 %v11152, %v11151
        %v11613 = vpack.c.b16 %v11154, %v11153
        %v11614 = vpack.c.b16 %v11156, %v11155
        %v11615 = vpack.c.b16 %v11158, %v11157
        %v11616 = vpack.c.b16 %v11160, %v11159
        %v11617 = vpack.c.b16 %v11162, %v11161
        %v11618 = vpack.c.b16 %v11164, %v11163
        %v11619 = vpack.c.b16 %v11166, %v11165
        %v11620 = vpack.c.b16 %v11168, %v11167
        %v11621 = vpack.c.b16 %v11170, %v11169
        %v11622 = vpack.c.b16 %v11172, %v11171
        %v11623 = vpack.c.b16 %v11174, %v11173
        %v11624 = vpack.c.b16 %v11176, %v11175
        %v11625 = vpack.c.b16 %v11178, %v11177
        %v11626 = vpack.c.b16 %v11180, %v11179
        %v11627 = vpack.c.b16 %v11182, %v11181
        %v11628 = vpack.c.b16 %v11184, %v11183
        %v11629 = vpack.c.b16 %v11186, %v11185
        %v11630 = vpack.c.b16 %v11188, %v11187
        %v11631 = vpack.c.b16 %v11190, %v11189
        %v11632 = vpack.c.b16 %v11192, %v11191
        %v11633 = vpack.c.b16 %v11194, %v11193
        %v11634 = vpack.c.b16 %v11196, %v11195
        %v11635 = vpack.c.b16 %v11198, %v11197
        %v11636 = vpack.c.b16 %v11200, %v11199
        %v11637 = vpack.c.b16 %v11202, %v11201
        %v11638 = vpack.c.b16 %v11204, %v11203
        %v11639 = vpack.c.b16 %v11206, %v11205
        %v11640 = vpack.c.b16 %v11208, %v11207
        %v11641 = vpack.c.b16 %v11210, %v11209
        %v11642 = vpack.c.b16 %v11212, %v11211
        %v11643 = vpack.c.b16 %v11214, %v11213
        %v11644 = vpack.c.b16 %v11216, %v11215
        %v11645 = vpack.c.b16 %v11218, %v11217
        %v11646 = vpack.c.b16 %v11220, %v11219
        %v11647 = vpack.c.b16 %v11222, %v11221
        %v11648 = vpack.c.b16 %v11224, %v11223
        %v11649 = vpack.c.b16 %v11226, %v11225
        %v11650 = vpack.c.b16 %v11228, %v11227
        %v11651 = vpack.c.b16 %v11230, %v11229
        %v11652 = vpack.c.b16 %v11232, %v11231
        %v11653 = vpack.c.b16 %v11234, %v11233
        %v11654 = vpack.c.b16 %v11236, %v11235
        %v11655 = vpack.c.b16 %v11238, %v11237
        %v11656 = vpack.c.b16 %v11240, %v11239
        %v11657 = vpack.c.b16 %v11242, %v11241
        %v11658 = vpack.c.b16 %v11244, %v11243
        %v11659 = vpack.c.b16 %v11246, %v11245
        %v11660 = vpack.c.b16 %v11248, %v11247
        %v11661 = vpack.c.b16 %v11250, %v11249
        %v11662 = vpack.c.b16 %v11252, %v11251
        %v11663 = vpack.c.b16 %v11254, %v11253
        %v11664 = vpack.c.b16 %v11256, %v11255
        %v11665 = vpack.c.b16 %v11258, %v11257
        %v11666 = vpack.c.b16 %v11260, %v11259
        %v11667 = vpack.c.b16 %v11262, %v11261
        %v11668 = vpack.c.b16 %v11264, %v11263
        %v11669 = vpack.c.b16 %v11266, %v11265
        %v11670 = vpack.c.b16 %v11268, %v11267
        %v11671 = vpack.c.b16 %v11270, %v11269
        %v11672 = vpack.c.b16 %v11272, %v11271
        %v11673 = vpack.c.b16 %v11274, %v11273
        %v11674 = vpack.c.b16 %v11276, %v11275
        %v11675 = vpack.c.b16 %v11278, %v11277
        %v11676 = vpack.c.b16 %v11280, %v11279
        %v11677 = vpack.c.b16 %v11282, %v11281
        %v11678 = vpack.c.b16 %v11284, %v11283
        %v11679 = vpack.c.b16 %v11286, %v11285
        %v11680 = vpack.c.b16 %v11288, %v11287
        %v11681 = vpack.c.b16 %v11290, %v11289
        %v11682 = vpack.c.b16 %v11292, %v11291
        %v11683 = vpack.c.b16 %v11294, %v11293
        %v11684 = vpack.c.b16 %v11296, %v11295
        %v11685 = vpack.c.b16 %v11298, %v11297
        %v11686 = vpack.c.b16 %v11300, %v11299
        %v11687 = vpack.c.b16 %v11302, %v11301
        %v11688 = vpack.c.b16 %v11304, %v11303
        %v11689 = vpack.c.b16 %v11306, %v11305
        %v11690 = vpack.c.b16 %v11308, %v11307
        %v11691 = vpack.c.b16 %v11310, %v11309
        %v11692 = vpack.c.b16 %v11312, %v11311
        %v11693 = vpack.c.b16 %v11314, %v11313
        %v11694 = vpack.c.b16 %v11316, %v11315
        %v11695 = vpack.c.b16 %v11318, %v11317
        %v11696 = vpack.c.b16 %v11320, %v11319
        %v11697 = vpack.c.b16 %v11322, %v11321
        %v11698 = vpack.c.b16 %v11324, %v11323
        %v11699 = vpack.c.b16 %v11326, %v11325
        %v11700 = vpack.c.b16 %v11328, %v11327
        %v11701 = vpack.c.b16 %v11330, %v11329
        %v11702 = vpack.c.b16 %v11332, %v11331
        %v11703 = vpack.c.b16 %v11334, %v11333
        %v11704 = vpack.c.b16 %v11336, %v11335
        %v11705 = vpack.c.b16 %v11338, %v11337
        %v11706 = vpack.c.b16 %v11340, %v11339
        %v11707 = vpack.c.b16 %v11342, %v11341
        %v11708 = vpack.c.b16 %v11344, %v11343
        %v11709 = vpack.c.b16 %v11346, %v11345
        %v11710 = vpack.c.b16 %v11348, %v11347
        %v11711 = vpack.c.b16 %v11350, %v11349
        %v11712 = vpack.c.b16 %v11352, %v11351
        %v11713 = vpack.c.b16 %v11354, %v11353
        %v11714 = vpack.c.b16 %v11356, %v11355
        %v11715 = vpack.c.b16 %v11358, %v11357
        %v11716 = vpack.c.b16 %v11360, %v11359
        %v11717 = vpack.c.b16 %v11362, %v11361
        %v11718 = vpack.c.b16 %v11364, %v11363
        %v11719 = vpack.c.b16 %v11366, %v11365
        %v11720 = vpack.c.b16 %v11368, %v11367
        %v11721 = vpack.c.b16 %v11370, %v11369
        %v11722 = vpack.c.b16 %v11372, %v11371
        %v11723 = vpack.c.b16 %v11374, %v11373
        %v11724 = vpack.c.b16 %v11376, %v11375
        %v11725 = vpack.c.b16 %v11378, %v11377
        %v11726 = vpack.c.b16 %v11380, %v11379
        %v11727 = vpack.c.b16 %v11382, %v11381
        %v11728 = vpack.c.b16 %v11384, %v11383
        %v11729 = vpack.c.b16 %v11386, %v11385
        %v11730 = vpack.c.b16 %v11388, %v11387
        %v11731 = vpack.c.b16 %v11390, %v11389
        %v11732 = vpack.c.b16 %v11392, %v11391
        %v11733 = vpack.c.b16 %v11394, %v11393
        %v11734 = vpack.c.b16 %v11396, %v11395
        %v11735 = vpack.c.b16 %v11398, %v11397
        %v11736 = vpack.c.b16 %v11400, %v11399
        %v11737 = vpack.c.b16 %v11402, %v11401
        %v11738 = vpack.c.b16 %v11404, %v11403
        %v11739 = vpack.c.b16 %v11406, %v11405
        %v11740 = vpack.c.b16 %v11408, %v11407
        %v11741 = vpack.c.b16 %v11410, %v11409
        %v11742 = vpack.c.b16 %v11412, %v11411
        %v11743 = vpack.c.b16 %v11414, %v11413
        %v11744 = vpack.c.b16 %v11416, %v11415
        %v11745 = vpack.c.b16 %v11418, %v11417
        %v11746 = vpack.c.b16 %v11420, %v11419
        %v11747 = vpack.c.b16 %v11422, %v11421
        %v11748 = vpack.c.b16 %v11424, %v11423
        %v11749 = vpack.c.b16 %v11426, %v11425
        %v11750 = vpack.c.b16 %v11428, %v11427
        %v11751 = vpack.c.b16 %v11430, %v11429
        %v11752 = vpack.c.b16 %v11432, %v11431
        %v11753 = vpack.c.b16 %v11434, %v11433
        %v11754 = vpack.c.b16 %v11436, %v11435
        %v11755 = vpack.c.b16 %v11438, %v11437
        %v11756 = vpack.c.b16 %v11440, %v11439
        %v11757 = vpack.c.b16 %v11442, %v11441
        %v11758 = vpack.c.b16 %v11444, %v11443
        %v11759 = vpack.c.b16 %v11446, %v11445
        %v11760 = vpack.c.b16 %v11448, %v11447
        %v11761 = vpack.c.b16 %v11450, %v11449
        %v11762 = vpack.c.b16 %v11452, %v11451
        %v11763 = vpack.c.b16 %v11454, %v11453
        %v11764 = vpack.c.b16 %v11456, %v11455
        %v11765 = vpack.c.b16 %v11458, %v11457
        %v11766 = vpack.c.b16 %v11460, %v11459
        %v11767 = vpack.c.b16 %v11462, %v11461
        %v11768 = vpack.c.b16 %v11464, %v11463
        %v11769 = vpack.c.b16 %v11466, %v11465
        %v11770 = vpack.c.b16 %v11468, %v11467
        %v11771 = vpack.c.b16 %v11470, %v11469
        %v11772 = vpack.c.b16 %v11472, %v11471
        %v11773 = vpack.c.b16 %v11474, %v11473
        %v11774 = vpack.c.b16 %v11476, %v11475
        %v11775 = vpack.c.b16 %v11478, %v11477
        %v11776 = vpack.c.b16 %v11480, %v11479
        %v11777 = vpack.c.b16 %v11482, %v11481
        %v11778 = vpack.c.b16 %v11484, %v11483
        %v11779 = vpack.c.b16 %v11486, %v11485
        %v11780 = vpack.c.b16 %v11488, %v11487
        %v11781 = vpack.c.b16 %v11490, %v11489
        %v11782 = vpack.c.b16 %v11492, %v11491
        %v11783 = vpack.c.b16 %v11494, %v11493
        %v11784 = vpack.c.b16 %v11496, %v11495
        %v11785 = vpack.c.b16 %v11498, %v11497
        %v11786 = vpack.c.b16 %v11500, %v11499
        %v11787 = vpack.c.b16 %v11502, %v11501
        %v11788 = vpack.c.b16 %v11504, %v11503
        %v11789 = vpack.c.b16 %v11506, %v11505
        %v11790 = vpack.c.b16 %v11508, %v11507
        %v11791 = vpack.c.b16 %v11510, %v11509
        %v11792 = vpack.c.b16 %v11512, %v11511
        %v11793 = vpack.c.b16 %v11514, %v11513
        %v11794 = vpack.c.b16 %v11516, %v11515
        %v11795 = vpack.c.b16 %v11518, %v11517
        %v11796 = vpack.c.b16 %v11520, %v11519
        %v11797 = vpack.c.b16 %v11522, %v11521
        %v11798 = vpack.c.b16 %v11524, %v11523
        %v11799 = vpack.c.b16 %v11526, %v11525
        %v11800 = vpack.c.b16 %v11528, %v11527
        %v11801 = vpack.c.b16 %v11530, %v11529
        %v11802 = vpack.c.b16 %v11532, %v11531
        %v11803 = vpack.c.b16 %v11534, %v11533
        %v11804 = vpack.c.b16 %v11536, %v11535
        %v11805 = vpack.c.b16 %v11538, %v11537
        %v11806 = vpack.c.b16 %v11540, %v11539
        %v11807 = vpack.c.b16 %v11542, %v11541
        %v11808 = vpack.c.b16 %v11544, %v11543
        %v11809 = vpack.c.b16 %v11546, %v11545
        %v11810 = vpack.c.b16 %v11548, %v11547
        %v11811 = vpack.c.b16 %v11550, %v11549
        %v11812 = vpack.c.b16 %v11552, %v11551
        %v11813 = vpack.c.b16 %v11554, %v11553
        %v11814 = vpack.c.b16 %v11556, %v11555
        %v11815 = vpack.c.b16 %v11558, %v11557
        %v11816 = vpack.c.b16 %v11560, %v11559
        %12073 = vmatprep.subr.bf16.mxu0 0
        %12074 = vmatpush1.bf16.msra.mxu0 %v11561
        %12075 = vmatprep.subr.bf16.mxu0 0
        %12076 = vmatpush1.bf16.msra.mxu0 %v11562
        %12077 = vmatprep.subr.bf16.mxu0 0
        %12078 = vmatpush1.bf16.msra.mxu0 %v11563
        %12079 = vmatprep.subr.bf16.mxu0 0
        %12080 = vmatpush1.bf16.msra.mxu0 %v11564
        %12081 = vmatprep.subr.bf16.mxu0 0
        %12082 = vmatpush1.bf16.msra.mxu0 %v11565
        %12083 = vmatprep.subr.bf16.mxu0 0
        %12084 = vmatpush1.bf16.msra.mxu0 %v11566
        %12085 = vmatprep.subr.bf16.mxu0 0
        %12086 = vmatpush1.bf16.msra.mxu0 %v11567
        %12087 = vmatprep.subr.bf16.mxu0 0
        %12088 = vmatpush1.bf16.msra.mxu0 %v11568
        %12089 = vmatprep.subr.bf16.mxu0 0
        %12090 = vmatpush1.bf16.msra.mxu0 %v11569
        %12091 = vmatprep.subr.bf16.mxu0 0
        %12092 = vmatpush1.bf16.msra.mxu0 %v11570
        %12093 = vmatprep.subr.bf16.mxu0 0
        %12094 = vmatpush1.bf16.msra.mxu0 %v11571
        %12095 = vmatprep.subr.bf16.mxu0 0
        %12096 = vmatpush1.bf16.msra.mxu0 %v11572
        %12097 = vmatprep.subr.bf16.mxu0 0
        %12098 = vmatpush1.bf16.msra.mxu0 %v11573
        %12099 = vmatprep.subr.bf16.mxu0 0
        %12100 = vmatpush1.bf16.msra.mxu0 %v11574
        %12101 = vmatprep.subr.bf16.mxu0 0
        %12102 = vmatpush1.bf16.msra.mxu0 %v11575
        %12103 = vmatprep.subr.bf16.mxu0 0
        %12104 = vmatpush1.bf16.msra.mxu0 %v11576
        %12105 = vmatprep.mubr.bf16.mxu0 %v9803
        %12106 = vmatmul.mubr.bf16.gmra.mrb[0].mxu0 %v9799
        %v12107 = vpop.f32.mrb[0].mxu0
        %v12108 = vadd.f32 %v10536, %v12107
        %v12109 = vpop.f32.mrb[0].mxu0
        %v12110 = vpop.f32.mrb[0].mxu0
        %v12111 = vpop.f32.mrb[0].mxu0
        %12112 = vdwg.mxu0
        %12113 = vmatprep.subr.bf16.mxu0 0
        %12114 = vmatpush1.bf16.msra.mxu0 %v11577
        %12115 = vmatprep.subr.bf16.mxu0 0
        %12116 = vmatpush1.bf16.msra.mxu0 %v11578
        %12117 = vmatprep.subr.bf16.mxu0 0
        %12118 = vmatpush1.bf16.msra.mxu0 %v11579
        %12119 = vmatprep.subr.bf16.mxu0 0
        %12120 = vmatpush1.bf16.msra.mxu0 %v11580
        %12121 = vmatprep.subr.bf16.mxu0 0
        %12122 = vmatpush1.bf16.msra.mxu0 %v11581
        %12123 = vmatprep.subr.bf16.mxu0 0
        %12124 = vmatpush1.bf16.msra.mxu0 %v11582
        %12125 = vmatprep.subr.bf16.mxu0 0
        %12126 = vmatpush1.bf16.msra.mxu0 %v11583
        %12127 = vmatprep.subr.bf16.mxu0 0
        %12128 = vmatpush1.bf16.msra.mxu0 %v11584
        %12129 = vmatprep.subr.bf16.mxu0 0
        %12130 = vmatpush1.bf16.msra.mxu0 %v11585
        %12131 = vmatprep.subr.bf16.mxu0 0
        %12132 = vmatpush1.bf16.msra.mxu0 %v11586
        %12133 = vmatprep.subr.bf16.mxu0 0
        %12134 = vmatpush1.bf16.msra.mxu0 %v11587
        %12135 = vmatprep.subr.bf16.mxu0 0
        %12136 = vmatpush1.bf16.msra.mxu0 %v11588
        %12137 = vmatprep.subr.bf16.mxu0 0
        %12138 = vmatpush1.bf16.msra.mxu0 %v11589
        %12139 = vmatprep.subr.bf16.mxu0 0
        %12140 = vmatpush1.bf16.msra.mxu0 %v11590
        %12141 = vmatprep.subr.bf16.mxu0 0
        %12142 = vmatpush1.bf16.msra.mxu0 %v11591
        %12143 = vmatprep.subr.bf16.mxu0 0
        %12144 = vmatpush1.bf16.msra.mxu0 %v11592
        %12145 = vmatprep.mubr.bf16.mxu0 %v9811
        %12146 = vmatmul.mubr.bf16.gmra.mrb[0].mxu0 %v9807
        %v12147 = vpop.f32.mrb[0].mxu0
        %v12148 = vadd.f32 %v12108, %v12147
        %v12149 = vpop.f32.mrb[0].mxu0
        %v12150 = vpop.f32.mrb[0].mxu0
        %v12151 = vpop.f32.mrb[0].mxu0
        %12152 = vdwg.mxu0
        %12153 = vmatprep.subr.bf16.mxu0 0
        %12154 = vmatpush1.bf16.msra.mxu0 %v11593
        %12155 = vmatprep.subr.bf16.mxu0 0
        %12156 = vmatpush1.bf16.msra.mxu0 %v11594
        %12157 = vmatprep.subr.bf16.mxu0 0
        %12158 = vmatpush1.bf16.msra.mxu0 %v11595
        %12159 = vmatprep.subr.bf16.mxu0 0
        %12160 = vmatpush1.bf16.msra.mxu0 %v11596
        %12161 = vmatprep.subr.bf16.mxu0 0
        %12162 = vmatpush1.bf16.msra.mxu0 %v11597
        %12163 = vmatprep.subr.bf16.mxu0 0
        %12164 = vmatpush1.bf16.msra.mxu0 %v11598
        %12165 = vmatprep.subr.bf16.mxu0 0
        %12166 = vmatpush1.bf16.msra.mxu0 %v11599
        %12167 = vmatprep.subr.bf16.mxu0 0
        %12168 = vmatpush1.bf16.msra.mxu0 %v11600
        %12169 = vmatprep.subr.bf16.mxu0 0
        %12170 = vmatpush1.bf16.msra.mxu0 %v11601
        %12171 = vmatprep.subr.bf16.mxu0 0
        %12172 = vmatpush1.bf16.msra.mxu0 %v11602
        %12173 = vmatprep.subr.bf16.mxu0 0
        %12174 = vmatpush1.bf16.msra.mxu0 %v11603
        %12175 = vmatprep.subr.bf16.mxu0 0
        %12176 = vmatpush1.bf16.msra.mxu0 %v11604
        %12177 = vmatprep.subr.bf16.mxu0 0
        %12178 = vmatpush1.bf16.msra.mxu0 %v11605
        %12179 = vmatprep.subr.bf16.mxu0 0
        %12180 = vmatpush1.bf16.msra.mxu0 %v11606
        %12181 = vmatprep.subr.bf16.mxu0 0
        %12182 = vmatpush1.bf16.msra.mxu0 %v11607
        %12183 = vmatprep.subr.bf16.mxu0 0
        %12184 = vmatpush1.bf16.msra.mxu0 %v11608
        %12185 = vmatprep.mubr.bf16.mxu0 %v9819
        %12186 = vmatmul.mubr.bf16.gmra.mrb[0].mxu0 %v9815
        %v12187 = vpop.f32.mrb[0].mxu0
        %v12188 = vadd.f32 %v12148, %v12187
        %v12189 = vpop.f32.mrb[0].mxu0
        %v12190 = vpop.f32.mrb[0].mxu0
        %v12191 = vpop.f32.mrb[0].mxu0
        %12192 = vdwg.mxu0
        %12193 = vmatprep.subr.bf16.mxu0 0
        %12194 = vmatpush1.bf16.msra.mxu0 %v11609
        %12195 = vmatprep.subr.bf16.mxu0 0
        %12196 = vmatpush1.bf16.msra.mxu0 %v11610
        %12197 = vmatprep.subr.bf16.mxu0 0
        %12198 = vmatpush1.bf16.msra.mxu0 %v11611
        %12199 = vmatprep.subr.bf16.mxu0 0
        %12200 = vmatpush1.bf16.msra.mxu0 %v11612
        %12201 = vmatprep.subr.bf16.mxu0 0
        %12202 = vmatpush1.bf16.msra.mxu0 %v11613
        %12203 = vmatprep.subr.bf16.mxu0 0
        %12204 = vmatpush1.bf16.msra.mxu0 %v11614
        %12205 = vmatprep.subr.bf16.mxu0 0
        %12206 = vmatpush1.bf16.msra.mxu0 %v11615
        %12207 = vmatprep.subr.bf16.mxu0 0
        %12208 = vmatpush1.bf16.msra.mxu0 %v11616
        %12209 = vmatprep.subr.bf16.mxu0 0
        %12210 = vmatpush1.bf16.msra.mxu0 %v11617
        %12211 = vmatprep.subr.bf16.mxu0 0
        %12212 = vmatpush1.bf16.msra.mxu0 %v11618
        %12213 = vmatprep.subr.bf16.mxu0 0
        %12214 = vmatpush1.bf16.msra.mxu0 %v11619
        %12215 = vmatprep.subr.bf16.mxu0 0
        %12216 = vmatpush1.bf16.msra.mxu0 %v11620
        %12217 = vmatprep.subr.bf16.mxu0 0
        %12218 = vmatpush1.bf16.msra.mxu0 %v11621
        %12219 = vmatprep.subr.bf16.mxu0 0
        %12220 = vmatpush1.bf16.msra.mxu0 %v11622
        %12221 = vmatprep.subr.bf16.mxu0 0
        %12222 = vmatpush1.bf16.msra.mxu0 %v11623
        %12223 = vmatprep.subr.bf16.mxu0 0
        %12224 = vmatpush1.bf16.msra.mxu0 %v11624
        %12225 = vmatprep.mubr.bf16.mxu0 %v9827
        %12226 = vmatmul.mubr.bf16.gmra.mrb[0].mxu0 %v9823
        %v12227 = vpop.f32.mrb[0].mxu0
        %v12228 = vadd.f32 %v12188, %v12227
        %v12229 = vpop.f32.mrb[0].mxu0
        %v12230 = vpop.f32.mrb[0].mxu0
        %v12231 = vpop.f32.mrb[0].mxu0
        %12232 = vdwg.mxu0
        %12233 = vmatprep.subr.bf16.mxu0 0
        %12234 = vmatpush1.bf16.msra.mxu0 %v11625
        %12235 = vmatprep.subr.bf16.mxu0 0
        %12236 = vmatpush1.bf16.msra.mxu0 %v11626
        %12237 = vmatprep.subr.bf16.mxu0 0
        %12238 = vmatpush1.bf16.msra.mxu0 %v11627
        %12239 = vmatprep.subr.bf16.mxu0 0
        %12240 = vmatpush1.bf16.msra.mxu0 %v11628
        %12241 = vmatprep.subr.bf16.mxu0 0
        %12242 = vmatpush1.bf16.msra.mxu0 %v11629
        %12243 = vmatprep.subr.bf16.mxu0 0
        %12244 = vmatpush1.bf16.msra.mxu0 %v11630
        %12245 = vmatprep.subr.bf16.mxu0 0
        %12246 = vmatpush1.bf16.msra.mxu0 %v11631
        %12247 = vmatprep.subr.bf16.mxu0 0
        %12248 = vmatpush1.bf16.msra.mxu0 %v11632
        %12249 = vmatprep.subr.bf16.mxu0 0
        %12250 = vmatpush1.bf16.msra.mxu0 %v11633
        %12251 = vmatprep.subr.bf16.mxu0 0
        %12252 = vmatpush1.bf16.msra.mxu0 %v11634
        %12253 = vmatprep.subr.bf16.mxu0 0
        %12254 = vmatpush1.bf16.msra.mxu0 %v11635
        %12255 = vmatprep.subr.bf16.mxu0 0
        %12256 = vmatpush1.bf16.msra.mxu0 %v11636
        %12257 = vmatprep.subr.bf16.mxu0 0
        %12258 = vmatpush1.bf16.msra.mxu0 %v11637
        %12259 = vmatprep.subr.bf16.mxu0 0
        %12260 = vmatpush1.bf16.msra.mxu0 %v11638
        %12261 = vmatprep.subr.bf16.mxu0 0
        %12262 = vmatpush1.bf16.msra.mxu0 %v11639
        %12263 = vmatprep.subr.bf16.mxu0 0
        %12264 = vmatpush1.bf16.msra.mxu0 %v11640
        %12265 = vmatprep.mubr.bf16.mxu0 %v9868
        %12266 = vmatmul.mubr.bf16.gmra.mrb[0].mxu0 %v9864
        %v12267 = vpop.f32.mrb[0].mxu0
        %v12268 = vadd.f32 %v12228, %v12267
        %v12269 = vpop.f32.mrb[0].mxu0
        %v12270 = vpop.f32.mrb[0].mxu0
        %v12271 = vpop.f32.mrb[0].mxu0
        %12272 = vdwg.mxu0
        %12273 = vmatprep.subr.bf16.mxu0 0
        %12274 = vmatpush1.bf16.msra.mxu0 %v11641
        %12275 = vmatprep.subr.bf16.mxu0 0
        %12276 = vmatpush1.bf16.msra.mxu0 %v11642
        %12277 = vmatprep.subr.bf16.mxu0 0
        %12278 = vmatpush1.bf16.msra.mxu0 %v11643
        %12279 = vmatprep.subr.bf16.mxu0 0
        %12280 = vmatpush1.bf16.msra.mxu0 %v11644
        %12281 = vmatprep.subr.bf16.mxu0 0
        %12282 = vmatpush1.bf16.msra.mxu0 %v11645
        %12283 = vmatprep.subr.bf16.mxu0 0
        %12284 = vmatpush1.bf16.msra.mxu0 %v11646
        %12285 = vmatprep.subr.bf16.mxu0 0
        %12286 = vmatpush1.bf16.msra.mxu0 %v11647
        %12287 = vmatprep.subr.bf16.mxu0 0
        %12288 = vmatpush1.bf16.msra.mxu0 %v11648
        %12289 = vmatprep.subr.bf16.mxu0 0
        %12290 = vmatpush1.bf16.msra.mxu0 %v11649
        %12291 = vmatprep.subr.bf16.mxu0 0
        %12292 = vmatpush1.bf16.msra.mxu0 %v11650
        %12293 = vmatprep.subr.bf16.mxu0 0
        %12294 = vmatpush1.bf16.msra.mxu0 %v11651
        %12295 = vmatprep.subr.bf16.mxu0 0
        %12296 = vmatpush1.bf16.msra.mxu0 %v11652
        %12297 = vmatprep.subr.bf16.mxu0 0
        %12298 = vmatpush1.bf16.msra.mxu0 %v11653
        %12299 = vmatprep.subr.bf16.mxu0 0
        %12300 = vmatpush1.bf16.msra.mxu0 %v11654
        %12301 = vmatprep.subr.bf16.mxu0 0
        %12302 = vmatpush1.bf16.msra.mxu0 %v11655
        %12303 = vmatprep.subr.bf16.mxu0 0
        %12304 = vmatpush1.bf16.msra.mxu0 %v11656
        %12305 = vmatprep.mubr.bf16.mxu0 %v9876
        %12306 = vmatmul.mubr.bf16.gmra.mrb[0].mxu0 %v9872
        %v12307 = vpop.f32.mrb[0].mxu0
        %v12308 = vadd.f32 %v12268, %v12307
        %v12309 = vpop.f32.mrb[0].mxu0
        %v12310 = vpop.f32.mrb[0].mxu0
        %v12311 = vpop.f32.mrb[0].mxu0
        %12312 = vdwg.mxu0
        %12313 = vmatprep.subr.bf16.mxu0 0
        %12314 = vmatpush1.bf16.msra.mxu0 %v11657
        %12315 = vmatprep.subr.bf16.mxu0 0
        %12316 = vmatpush1.bf16.msra.mxu0 %v11658
        %12317 = vmatprep.subr.bf16.mxu0 0
        %12318 = vmatpush1.bf16.msra.mxu0 %v11659
        %12319 = vmatprep.subr.bf16.mxu0 0
        %12320 = vmatpush1.bf16.msra.mxu0 %v11660
        %12321 = vmatprep.subr.bf16.mxu0 0
        %12322 = vmatpush1.bf16.msra.mxu0 %v11661
        %12323 = vmatprep.subr.bf16.mxu0 0
        %12324 = vmatpush1.bf16.msra.mxu0 %v11662
        %12325 = vmatprep.subr.bf16.mxu0 0
        %12326 = vmatpush1.bf16.msra.mxu0 %v11663
        %12327 = vmatprep.subr.bf16.mxu0 0
        %12328 = vmatpush1.bf16.msra.mxu0 %v11664
        %12329 = vmatprep.subr.bf16.mxu0 0
        %12330 = vmatpush1.bf16.msra.mxu0 %v11665
        %12331 = vmatprep.subr.bf16.mxu0 0
        %12332 = vmatpush1.bf16.msra.mxu0 %v11666
        %12333 = vmatprep.subr.bf16.mxu0 0
        %12334 = vmatpush1.bf16.msra.mxu0 %v11667
        %12335 = vmatprep.subr.bf16.mxu0 0
        %12336 = vmatpush1.bf16.msra.mxu0 %v11668
        %12337 = vmatprep.subr.bf16.mxu0 0
        %12338 = vmatpush1.bf16.msra.mxu0 %v11669
        %12339 = vmatprep.subr.bf16.mxu0 0
        %12340 = vmatpush1.bf16.msra.mxu0 %v11670
        %12341 = vmatprep.subr.bf16.mxu0 0
        %12342 = vmatpush1.bf16.msra.mxu0 %v11671
        %12343 = vmatprep.subr.bf16.mxu0 0
        %12344 = vmatpush1.bf16.msra.mxu0 %v11672
        %12345 = vmatprep.mubr.bf16.mxu0 %v9884
        %12346 = vmatmul.mubr.bf16.gmra.mrb[0].mxu0 %v9880
        %v12347 = vpop.f32.mrb[0].mxu0
        %v12348 = vadd.f32 %v12308, %v12347
        %v12349 = vpop.f32.mrb[0].mxu0
        %v12350 = vpop.f32.mrb[0].mxu0
        %v12351 = vpop.f32.mrb[0].mxu0
        %12352 = vdwg.mxu0
        %12353 = vmatprep.subr.bf16.mxu0 0
        %12354 = vmatpush1.bf16.msra.mxu0 %v11673
        %12355 = vmatprep.subr.bf16.mxu0 0
        %12356 = vmatpush1.bf16.msra.mxu0 %v11674
        %12357 = vmatprep.subr.bf16.mxu0 0
        %12358 = vmatpush1.bf16.msra.mxu0 %v11675
        %12359 = vmatprep.subr.bf16.mxu0 0
        %12360 = vmatpush1.bf16.msra.mxu0 %v11676
        %12361 = vmatprep.subr.bf16.mxu0 0
        %12362 = vmatpush1.bf16.msra.mxu0 %v11677
        %12363 = vmatprep.subr.bf16.mxu0 0
        %12364 = vmatpush1.bf16.msra.mxu0 %v11678
        %12365 = vmatprep.subr.bf16.mxu0 0
        %12366 = vmatpush1.bf16.msra.mxu0 %v11679
        %12367 = vmatprep.subr.bf16.mxu0 0
        %12368 = vmatpush1.bf16.msra.mxu0 %v11680
        %12369 = vmatprep.subr.bf16.mxu0 0
        %12370 = vmatpush1.bf16.msra.mxu0 %v11681
        %12371 = vmatprep.subr.bf16.mxu0 0
        %12372 = vmatpush1.bf16.msra.mxu0 %v11682
        %12373 = vmatprep.subr.bf16.mxu0 0
        %12374 = vmatpush1.bf16.msra.mxu0 %v11683
        %12375 = vmatprep.subr.bf16.mxu0 0
        %12376 = vmatpush1.bf16.msra.mxu0 %v11684
        %12377 = vmatprep.subr.bf16.mxu0 0
        %12378 = vmatpush1.bf16.msra.mxu0 %v11685
        %12379 = vmatprep.subr.bf16.mxu0 0
        %12380 = vmatpush1.bf16.msra.mxu0 %v11686
        %12381 = vmatprep.subr.bf16.mxu0 0
        %12382 = vmatpush1.bf16.msra.mxu0 %v11687
        %12383 = vmatprep.subr.bf16.mxu0 0
        %12384 = vmatpush1.bf16.msra.mxu0 %v11688
        %12385 = vmatprep.mubr.bf16.mxu0 %v9892
        %12386 = vmatmul.mubr.bf16.gmra.mrb[0].mxu0 %v9888
        %v12387 = vpop.f32.mrb[0].mxu0
        %v12388 = vadd.f32 %v12348, %v12387
        %v12389 = vpop.f32.mrb[0].mxu0
        %v12390 = vpop.f32.mrb[0].mxu0
        %v12391 = vpop.f32.mrb[0].mxu0
        %12392 = vdwg.mxu0
        %12393 = vmatprep.subr.bf16.mxu0 0
        %12394 = vmatpush1.bf16.msra.mxu0 %v11689
        %12395 = vmatprep.subr.bf16.mxu0 0
        %12396 = vmatpush1.bf16.msra.mxu0 %v11690
        %12397 = vmatprep.subr.bf16.mxu0 0
        %12398 = vmatpush1.bf16.msra.mxu0 %v11691
        %12399 = vmatprep.subr.bf16.mxu0 0
        %12400 = vmatpush1.bf16.msra.mxu0 %v11692
        %12401 = vmatprep.subr.bf16.mxu0 0
        %12402 = vmatpush1.bf16.msra.mxu0 %v11693
        %12403 = vmatprep.subr.bf16.mxu0 0
        %12404 = vmatpush1.bf16.msra.mxu0 %v11694
        %12405 = vmatprep.subr.bf16.mxu0 0
        %12406 = vmatpush1.bf16.msra.mxu0 %v11695
        %12407 = vmatprep.subr.bf16.mxu0 0
        %12408 = vmatpush1.bf16.msra.mxu0 %v11696
        %12409 = vmatprep.subr.bf16.mxu0 0
        %12410 = vmatpush1.bf16.msra.mxu0 %v11697
        %12411 = vmatprep.subr.bf16.mxu0 0
        %12412 = vmatpush1.bf16.msra.mxu0 %v11698
        %12413 = vmatprep.subr.bf16.mxu0 0
        %12414 = vmatpush1.bf16.msra.mxu0 %v11699
        %12415 = vmatprep.subr.bf16.mxu0 0
        %12416 = vmatpush1.bf16.msra.mxu0 %v11700
        %12417 = vmatprep.subr.bf16.mxu0 0
        %12418 = vmatpush1.bf16.msra.mxu0 %v11701
        %12419 = vmatprep.subr.bf16.mxu0 0
        %12420 = vmatpush1.bf16.msra.mxu0 %v11702
        %12421 = vmatprep.subr.bf16.mxu0 0
        %12422 = vmatpush1.bf16.msra.mxu0 %v11703
        %12423 = vmatprep.subr.bf16.mxu0 0
        %12424 = vmatpush1.bf16.msra.mxu0 %v11704
        %12425 = vmatprep.mubr.bf16.mxu0 %v9933
        %12426 = vmatmul.mubr.bf16.gmra.mrb[0].mxu0 %v9929
        %v12427 = vpop.f32.mrb[0].mxu0
        %v12428 = vadd.f32 %v12388, %v12427
        %v12429 = vpop.f32.mrb[0].mxu0
        %v12430 = vpop.f32.mrb[0].mxu0
        %v12431 = vpop.f32.mrb[0].mxu0
        %12432 = vdwg.mxu0
        %12433 = vmatprep.subr.bf16.mxu0 0
        %12434 = vmatpush1.bf16.msra.mxu0 %v11705
        %12435 = vmatprep.subr.bf16.mxu0 0
        %12436 = vmatpush1.bf16.msra.mxu0 %v11706
        %12437 = vmatprep.subr.bf16.mxu0 0
        %12438 = vmatpush1.bf16.msra.mxu0 %v11707
        %12439 = vmatprep.subr.bf16.mxu0 0
        %12440 = vmatpush1.bf16.msra.mxu0 %v11708
        %12441 = vmatprep.subr.bf16.mxu0 0
        %12442 = vmatpush1.bf16.msra.mxu0 %v11709
        %12443 = vmatprep.subr.bf16.mxu0 0
        %12444 = vmatpush1.bf16.msra.mxu0 %v11710
        %12445 = vmatprep.subr.bf16.mxu0 0
        %12446 = vmatpush1.bf16.msra.mxu0 %v11711
        %12447 = vmatprep.subr.bf16.mxu0 0
        %12448 = vmatpush1.bf16.msra.mxu0 %v11712
        %12449 = vmatprep.subr.bf16.mxu0 0
        %12450 = vmatpush1.bf16.msra.mxu0 %v11713
        %12451 = vmatprep.subr.bf16.mxu0 0
        %12452 = vmatpush1.bf16.msra.mxu0 %v11714
        %12453 = vmatprep.subr.bf16.mxu0 0
        %12454 = vmatpush1.bf16.msra.mxu0 %v11715
        %12455 = vmatprep.subr.bf16.mxu0 0
        %12456 = vmatpush1.bf16.msra.mxu0 %v11716
        %12457 = vmatprep.subr.bf16.mxu0 0
        %12458 = vmatpush1.bf16.msra.mxu0 %v11717
        %12459 = vmatprep.subr.bf16.mxu0 0
        %12460 = vmatpush1.bf16.msra.mxu0 %v11718
        %12461 = vmatprep.subr.bf16.mxu0 0
        %12462 = vmatpush1.bf16.msra.mxu0 %v11719
        %12463 = vmatprep.subr.bf16.mxu0 0
        %12464 = vmatpush1.bf16.msra.mxu0 %v11720
        %12465 = vmatprep.mubr.bf16.mxu0 %v9941
        %12466 = vmatmul.mubr.bf16.gmra.mrb[0].mxu0 %v9937
        %v12467 = vpop.f32.mrb[0].mxu0
        %v12468 = vadd.f32 %v12428, %v12467
        %v12469 = vpop.f32.mrb[0].mxu0
        %v12470 = vpop.f32.mrb[0].mxu0
        %v12471 = vpop.f32.mrb[0].mxu0
        %12472 = vdwg.mxu0
        %12473 = vmatprep.subr.bf16.mxu0 0
        %12474 = vmatpush1.bf16.msra.mxu0 %v11721
        %12475 = vmatprep.subr.bf16.mxu0 0
        %12476 = vmatpush1.bf16.msra.mxu0 %v11722
        %12477 = vmatprep.subr.bf16.mxu0 0
        %12478 = vmatpush1.bf16.msra.mxu0 %v11723
        %12479 = vmatprep.subr.bf16.mxu0 0
        %12480 = vmatpush1.bf16.msra.mxu0 %v11724
        %12481 = vmatprep.subr.bf16.mxu0 0
        %12482 = vmatpush1.bf16.msra.mxu0 %v11725
        %12483 = vmatprep.subr.bf16.mxu0 0
        %12484 = vmatpush1.bf16.msra.mxu0 %v11726
        %12485 = vmatprep.subr.bf16.mxu0 0
        %12486 = vmatpush1.bf16.msra.mxu0 %v11727
        %12487 = vmatprep.subr.bf16.mxu0 0
        %12488 = vmatpush1.bf16.msra.mxu0 %v11728
        %12489 = vmatprep.subr.bf16.mxu0 0
        %12490 = vmatpush1.bf16.msra.mxu0 %v11729
        %12491 = vmatprep.subr.bf16.mxu0 0
        %12492 = vmatpush1.bf16.msra.mxu0 %v11730
        %12493 = vmatprep.subr.bf16.mxu0 0
        %12494 = vmatpush1.bf16.msra.mxu0 %v11731
        %12495 = vmatprep.subr.bf16.mxu0 0
        %12496 = vmatpush1.bf16.msra.mxu0 %v11732
        %12497 = vmatprep.subr.bf16.mxu0 0
        %12498 = vmatpush1.bf16.msra.mxu0 %v11733
        %12499 = vmatprep.subr.bf16.mxu0 0
        %12500 = vmatpush1.bf16.msra.mxu0 %v11734
        %12501 = vmatprep.subr.bf16.mxu0 0
        %12502 = vmatpush1.bf16.msra.mxu0 %v11735
        %12503 = vmatprep.subr.bf16.mxu0 0
        %12504 = vmatpush1.bf16.msra.mxu0 %v11736
        %12505 = vmatprep.mubr.bf16.mxu0 %v9949
        %12506 = vmatmul.mubr.bf16.gmra.mrb[0].mxu0 %v9945
        %v12507 = vpop.f32.mrb[0].mxu0
        %v12508 = vadd.f32 %v12468, %v12507
        %v12509 = vpop.f32.mrb[0].mxu0
        %v12510 = vpop.f32.mrb[0].mxu0
        %v12511 = vpop.f32.mrb[0].mxu0
        %12512 = vdwg.mxu0
        %12513 = vmatprep.subr.bf16.mxu0 0
        %12514 = vmatpush1.bf16.msra.mxu0 %v11737
        %12515 = vmatprep.subr.bf16.mxu0 0
        %12516 = vmatpush1.bf16.msra.mxu0 %v11738
        %12517 = vmatprep.subr.bf16.mxu0 0
        %12518 = vmatpush1.bf16.msra.mxu0 %v11739
        %12519 = vmatprep.subr.bf16.mxu0 0
        %12520 = vmatpush1.bf16.msra.mxu0 %v11740
        %12521 = vmatprep.subr.bf16.mxu0 0
        %12522 = vmatpush1.bf16.msra.mxu0 %v11741
        %12523 = vmatprep.subr.bf16.mxu0 0
        %12524 = vmatpush1.bf16.msra.mxu0 %v11742
        %12525 = vmatprep.subr.bf16.mxu0 0
        %12526 = vmatpush1.bf16.msra.mxu0 %v11743
        %12527 = vmatprep.subr.bf16.mxu0 0
        %12528 = vmatpush1.bf16.msra.mxu0 %v11744
        %12529 = vmatprep.subr.bf16.mxu0 0
        %12530 = vmatpush1.bf16.msra.mxu0 %v11745
        %12531 = vmatprep.subr.bf16.mxu0 0
        %12532 = vmatpush1.bf16.msra.mxu0 %v11746
        %12533 = vmatprep.subr.bf16.mxu0 0
        %12534 = vmatpush1.bf16.msra.mxu0 %v11747
        %12535 = vmatprep.subr.bf16.mxu0 0
        %12536 = vmatpush1.bf16.msra.mxu0 %v11748
        %12537 = vmatprep.subr.bf16.mxu0 0
        %12538 = vmatpush1.bf16.msra.mxu0 %v11749
        %12539 = vmatprep.subr.bf16.mxu0 0
        %12540 = vmatpush1.bf16.msra.mxu0 %v11750
        %12541 = vmatprep.subr.bf16.mxu0 0
        %12542 = vmatpush1.bf16.msra.mxu0 %v11751
        %12543 = vmatprep.subr.bf16.mxu0 0
        %12544 = vmatpush1.bf16.msra.mxu0 %v11752
        %12545 = vmatprep.mubr.bf16.mxu0 %v9957
        %12546 = vmatmul.mubr.bf16.gmra.mrb[0].mxu0 %v9953
        %v12547 = vpop.f32.mrb[0].mxu0
        %v12548 = vadd.f32 %v12508, %v12547
        %v12549 = vpop.f32.mrb[0].mxu0
        %v12550 = vpop.f32.mrb[0].mxu0
        %v12551 = vpop.f32.mrb[0].mxu0
        %12552 = vdwg.mxu0
        %12553 = vmatprep.subr.bf16.mxu0 0
        %12554 = vmatpush1.bf16.msra.mxu0 %v11753
        %12555 = vmatprep.subr.bf16.mxu0 0
        %12556 = vmatpush1.bf16.msra.mxu0 %v11754
        %12557 = vmatprep.subr.bf16.mxu0 0
        %12558 = vmatpush1.bf16.msra.mxu0 %v11755
        %12559 = vmatprep.subr.bf16.mxu0 0
        %12560 = vmatpush1.bf16.msra.mxu0 %v11756
        %12561 = vmatprep.subr.bf16.mxu0 0
        %12562 = vmatpush1.bf16.msra.mxu0 %v11757
        %12563 = vmatprep.subr.bf16.mxu0 0
        %12564 = vmatpush1.bf16.msra.mxu0 %v11758
        %12565 = vmatprep.subr.bf16.mxu0 0
        %12566 = vmatpush1.bf16.msra.mxu0 %v11759
        %12567 = vmatprep.subr.bf16.mxu0 0
        %12568 = vmatpush1.bf16.msra.mxu0 %v11760
        %12569 = vmatprep.subr.bf16.mxu0 0
        %12570 = vmatpush1.bf16.msra.mxu0 %v11761
        %12571 = vmatprep.subr.bf16.mxu0 0
        %12572 = vmatpush1.bf16.msra.mxu0 %v11762
        %12573 = vmatprep.subr.bf16.mxu0 0
        %12574 = vmatpush1.bf16.msra.mxu0 %v11763
        %12575 = vmatprep.subr.bf16.mxu0 0
        %12576 = vmatpush1.bf16.msra.mxu0 %v11764
        %12577 = vmatprep.subr.bf16.mxu0 0
        %12578 = vmatpush1.bf16.msra.mxu0 %v11765
        %12579 = vmatprep.subr.bf16.mxu0 0
        %12580 = vmatpush1.bf16.msra.mxu0 %v11766
        %12581 = vmatprep.subr.bf16.mxu0 0
        %12582 = vmatpush1.bf16.msra.mxu0 %v11767
        %12583 = vmatprep.subr.bf16.mxu0 0
        %12584 = vmatpush1.bf16.msra.mxu0 %v11768
        %12585 = vmatprep.mubr.bf16.mxu0 %v9998
        %12586 = vmatmul.mubr.bf16.gmra.mrb[0].mxu0 %v9994
        %v12587 = vpop.f32.mrb[0].mxu0
        %v12588 = vadd.f32 %v12548, %v12587
        %v12589 = vpop.f32.mrb[0].mxu0
        %v12590 = vpop.f32.mrb[0].mxu0
        %v12591 = vpop.f32.mrb[0].mxu0
        %12592 = vdwg.mxu0
        %12593 = vmatprep.subr.bf16.mxu0 0
        %12594 = vmatpush1.bf16.msra.mxu0 %v11769
        %12595 = vmatprep.subr.bf16.mxu0 0
        %12596 = vmatpush1.bf16.msra.mxu0 %v11770
        %12597 = vmatprep.subr.bf16.mxu0 0
        %12598 = vmatpush1.bf16.msra.mxu0 %v11771
        %12599 = vmatprep.subr.bf16.mxu0 0
        %12600 = vmatpush1.bf16.msra.mxu0 %v11772
        %12601 = vmatprep.subr.bf16.mxu0 0
        %12602 = vmatpush1.bf16.msra.mxu0 %v11773
        %12603 = vmatprep.subr.bf16.mxu0 0
        %12604 = vmatpush1.bf16.msra.mxu0 %v11774
        %12605 = vmatprep.subr.bf16.mxu0 0
        %12606 = vmatpush1.bf16.msra.mxu0 %v11775
        %12607 = vmatprep.subr.bf16.mxu0 0
        %12608 = vmatpush1.bf16.msra.mxu0 %v11776
        %12609 = vmatprep.subr.bf16.mxu0 0
        %12610 = vmatpush1.bf16.msra.mxu0 %v11777
        %12611 = vmatprep.subr.bf16.mxu0 0
        %12612 = vmatpush1.bf16.msra.mxu0 %v11778
        %12613 = vmatprep.subr.bf16.mxu0 0
        %12614 = vmatpush1.bf16.msra.mxu0 %v11779
        %12615 = vmatprep.subr.bf16.mxu0 0
        %12616 = vmatpush1.bf16.msra.mxu0 %v11780
        %12617 = vmatprep.subr.bf16.mxu0 0
        %12618 = vmatpush1.bf16.msra.mxu0 %v11781
        %12619 = vmatprep.subr.bf16.mxu0 0
        %12620 = vmatpush1.bf16.msra.mxu0 %v11782
        %12621 = vmatprep.subr.bf16.mxu0 0
        %12622 = vmatpush1.bf16.msra.mxu0 %v11783
        %12623 = vmatprep.subr.bf16.mxu0 0
        %12624 = vmatpush1.bf16.msra.mxu0 %v11784
        %12625 = vmatprep.mubr.bf16.mxu0 %v10006
        %12626 = vmatmul.mubr.bf16.gmra.mrb[0].mxu0 %v10002
        %v12627 = vpop.f32.mrb[0].mxu0
        %v12628 = vadd.f32 %v12588, %v12627
        %v12629 = vpop.f32.mrb[0].mxu0
        %v12630 = vpop.f32.mrb[0].mxu0
        %v12631 = vpop.f32.mrb[0].mxu0
        %12632 = vdwg.mxu0
        %12633 = vmatprep.subr.bf16.mxu0 0
        %12634 = vmatpush1.bf16.msra.mxu0 %v11785
        %12635 = vmatprep.subr.bf16.mxu0 0
        %12636 = vmatpush1.bf16.msra.mxu0 %v11786
        %12637 = vmatprep.subr.bf16.mxu0 0
        %12638 = vmatpush1.bf16.msra.mxu0 %v11787
        %12639 = vmatprep.subr.bf16.mxu0 0
        %12640 = vmatpush1.bf16.msra.mxu0 %v11788
        %12641 = vmatprep.subr.bf16.mxu0 0
        %12642 = vmatpush1.bf16.msra.mxu0 %v11789
        %12643 = vmatprep.subr.bf16.mxu0 0
        %12644 = vmatpush1.bf16.msra.mxu0 %v11790
        %12645 = vmatprep.subr.bf16.mxu0 0
        %12646 = vmatpush1.bf16.msra.mxu0 %v11791
        %12647 = vmatprep.subr.bf16.mxu0 0
        %12648 = vmatpush1.bf16.msra.mxu0 %v11792
        %12649 = vmatprep.subr.bf16.mxu0 0
        %12650 = vmatpush1.bf16.msra.mxu0 %v11793
        %12651 = vmatprep.subr.bf16.mxu0 0
        %12652 = vmatpush1.bf16.msra.mxu0 %v11794
        %12653 = vmatprep.subr.bf16.mxu0 0
        %12654 = vmatpush1.bf16.msra.mxu0 %v11795
        %12655 = vmatprep.subr.bf16.mxu0 0
        %12656 = vmatpush1.bf16.msra.mxu0 %v11796
        %12657 = vmatprep.subr.bf16.mxu0 0
        %12658 = vmatpush1.bf16.msra.mxu0 %v11797
        %12659 = vmatprep.subr.bf16.mxu0 0
        %12660 = vmatpush1.bf16.msra.mxu0 %v11798
        %12661 = vmatprep.subr.bf16.mxu0 0
        %12662 = vmatpush1.bf16.msra.mxu0 %v11799
        %12663 = vmatprep.subr.bf16.mxu0 0
        %12664 = vmatpush1.bf16.msra.mxu0 %v11800
        %12665 = vmatprep.mubr.bf16.mxu0 %v10014
        %12666 = vmatmul.mubr.bf16.gmra.mrb[0].mxu0 %v10010
        %v12667 = vpop.f32.mrb[0].mxu0
        %v12668 = vadd.f32 %v12628, %v12667
        %v12669 = vpop.f32.mrb[0].mxu0
        %v12670 = vpop.f32.mrb[0].mxu0
        %v12671 = vpop.f32.mrb[0].mxu0
        %12672 = vdwg.mxu0
        %12673 = vmatprep.subr.bf16.mxu0 0
        %12674 = vmatpush1.bf16.msra.mxu0 %v11801
        %12675 = vmatprep.subr.bf16.mxu0 0
        %12676 = vmatpush1.bf16.msra.mxu0 %v11802
        %12677 = vmatprep.subr.bf16.mxu0 0
        %12678 = vmatpush1.bf16.msra.mxu0 %v11803
        %12679 = vmatprep.subr.bf16.mxu0 0
        %12680 = vmatpush1.bf16.msra.mxu0 %v11804
        %12681 = vmatprep.subr.bf16.mxu0 0
        %12682 = vmatpush1.bf16.msra.mxu0 %v11805
        %12683 = vmatprep.subr.bf16.mxu0 0
        %12684 = vmatpush1.bf16.msra.mxu0 %v11806
        %12685 = vmatprep.subr.bf16.mxu0 0
        %12686 = vmatpush1.bf16.msra.mxu0 %v11807
        %12687 = vmatprep.subr.bf16.mxu0 0
        %12688 = vmatpush1.bf16.msra.mxu0 %v11808
        %12689 = vmatprep.subr.bf16.mxu0 0
        %12690 = vmatpush1.bf16.msra.mxu0 %v11809
        %12691 = vmatprep.subr.bf16.mxu0 0
        %12692 = vmatpush1.bf16.msra.mxu0 %v11810
        %12693 = vmatprep.subr.bf16.mxu0 0
        %12694 = vmatpush1.bf16.msra.mxu0 %v11811
        %12695 = vmatprep.subr.bf16.mxu0 0
        %12696 = vmatpush1.bf16.msra.mxu0 %v11812
        %12697 = vmatprep.subr.bf16.mxu0 0
        %12698 = vmatpush1.bf16.msra.mxu0 %v11813
        %12699 = vmatprep.subr.bf16.mxu0 0
        %12700 = vmatpush1.bf16.msra.mxu0 %v11814
        %12701 = vmatprep.subr.bf16.mxu0 0
        %12702 = vmatpush1.bf16.msra.mxu0 %v11815
        %12703 = vmatprep.subr.bf16.mxu0 0
        %12704 = vmatpush1.bf16.msra.mxu0 %v11816
        %12705 = vmatprep.mubr.bf16.mxu0 %v10022
        %12706 = vmatmul.mubr.bf16.gmra.mrb[0].mxu0 %v10018
        %v12707 = vpop.f32.mrb[0].mxu0
        %v12708 = vadd.f32 %v12668, %v12707
        %v12709 = vpop.f32.mrb[0].mxu0
        %v12710 = vpop.f32.mrb[0].mxu0
        %v12711 = vpop.f32.mrb[0].mxu0
        %12712 = vdwg.mxu0
        %vm12713 = vcmask 253952
        %12714 = vst.msk [vmem:[%s324] sm:$0x1] %vm12713, %v12708
        %s12715 = sand.u32 %s225, 1
        %s12716 = scalar_lea.sflag [#allocation5], %s12715
        %s12717 = sand.u32 %s225, 1
        %s12718 = scalar_lea.vmem [#allocation4], %s12717
        // Predicated region
        $region57: #{encoder_forward.1} parent=55 // pred_check
          %p12719 = pneg %p235
        $region58: #{encoder_forward.1} parent=55 // pred_check_branch
          %12721 = sbr.rel (%p12719) target = $region60
        $region59: #{encoder_forward.1} parent=55 // pred_region
          %s12723 = ssub.s32 16, 16
          %12724 = vsyncadd %s12716, %s12723
          %s12725 = smul.addr %s23, 16
          %s12726 = scalar_lea.hbm %s9, %s12725
          %s12728 = sshll.u32 %s12718, 4
          %s12729 = int_to_ptr.vmem [resolvable:$true] %s12728
          %12731 = dma.vmem_to_hbm [thread:$0]  %s12729, 16, %s12726, %s12716
        $region60: #{encoder_forward.1} parent=55 // pred_fallthru
          _
      $region56: #{encoder_forward.1} parent=5 // pred_fallthru
        _
      %p12732 = scmp.le.s32.totalorder 2, %s18
      // Predicated region
      $region61: #{encoder_forward.1} parent=5 // pred_check
        %p12733 = pneg %p12732
      $region62: #{encoder_forward.1} parent=5 // pred_check_branch
        %12735 = sbr.rel (%p12733) target = $region64
      $region63: #{encoder_forward.1} parent=5 // pred_region
        %s12736 = ssub.s32 %s18, 2
        // Predicated region
        $region65: #{encoder_forward.1} parent=63 // pred_check
          %p12737 = pneg %p241
        $region66: #{encoder_forward.1} parent=63 // pred_check_branch
          %12739 = sbr.rel (%p12737) target = $region68
        $region67: #{encoder_forward.1} parent=63 // pred_region
          %s12740 = sand.u32 %s226, 1
          %s12741 = scalar_lea.sflag [#allocation5], %s12740
          %s12742 = sand.u32 %s226, 1
          %s12743 = scalar_lea.vmem [#allocation4], %s12742
          %12744 = dma.done %s12741, 16
        $region68: #{encoder_forward.1} parent=63 // pred_fallthru
          _
      $region64: #{encoder_forward.1} parent=5 // pred_fallthru
        _
    $region6: #{encoder_forward.1} parent=1 // loop_footer
      %s22 = sadd.s32 1, %s18
    $region7: #{encoder_forward.1} parent=1 // loop_footer_branch
      %17 = sbr.rel target = $region3
    $region8: #{encoder_forward.1} parent=1 // loop_exit
      _
    %12745 = vsyncpa [#allocation5], 1
    %s12746 = scalar_lea.sflag [#allocation5], 1
    %12747 = vsyncpa %s12746, 1

</llo_original>
